<compile_context>
chip_gen: v7x
topology: tpu7x:2x2x1
jax: 0.10.0
libtpu: 0.0.40
codegen_flags: <defaults>
</compile_context>

<pallas_src>
import functools
import math

import jax
import jax.numpy as jnp
from jax import lax
from jax.experimental import pallas as pl
from jax.experimental.pallas import tpu as pltpu

N_EMBD = 384   # from the module spec
N_HEAD = 12    # from the module spec
LN_EPS = 1e-5  # torch.nn.LayerNorm default


# ----------------------------- in-kernel helpers -----------------------------

def _layernorm(v, g, b):
    mu = jnp.mean(v, axis=-1, keepdims=True)
    c = v - mu
    var = jnp.mean(c * c, axis=-1, keepdims=True)
    return c * lax.rsqrt(var + LN_EPS) * g + b


# ----------------------------- fused block kernel -----------------------------

def _block_kernel(x_ref, wqkv_ref, bqkv_ref, wo_ref, bo_ref,
                  wfc1_ref, bfc1_ref, wfc2_ref, bfc2_ref,
                  ln1g_ref, ln1b_ref, ln2g_ref, ln2b_ref,
                  out_ref, *, B, L, n_head, scale):
    # TODO(synk): attn_drop / resid_drop are identity here (eval-mode semantics, no RNG).
    E = x_ref.shape[1]
    D = E // n_head

    x = x_ref[...]                                    # (M, E) f32 residual path
    xb = x.astype(jnp.bfloat16)

    # ---- fused K|Q|V projection: one (E, 3E) bf16 matmul, f32 accumulation ----
    qkv = jnp.dot(xb, wqkv_ref[...], preferred_element_type=jnp.float32) + bqkv_ref[...]

    # ---- multi-head attention (matches the PyTorch module exactly):
    #   scores = K @ Q^T / sqrt(E / H), softmax over the LAST axis, ctx = softmax @ V.
    # Static unroll over (batch, head); bf16 MXU operands, f32 softmax.
    ctx_rows = []
    for b in range(B):
        r0, r1 = b * L, (b + 1) * L
        kb = qkv[r0:r1, 0:E].astype(jnp.bfloat16)
        qb = qkv[r0:r1, E:2 * E].astype(jnp.bfloat16)
        vb = qkv[r0:r1, 2 * E:3 * E].astype(jnp.bfloat16)
        head_ctx = []
        for h in range(n_head):
            c0, c1 = h * D, (h + 1) * D
            kh, qh, vh = kb[:, c0:c1], qb[:, c0:c1], vb[:, c0:c1]
            # K @ Q^T without materializing a transpose.
            s = lax.dot_general(kh, qh, (((1,), (1,)), ((), ())),
                                preferred_element_type=jnp.float32) * scale
            m = jnp.max(s, axis=-1, keepdims=True)
            p = jnp.exp(s - m)
            inv = pl.reciprocal(jnp.sum(p, axis=-1, keepdims=True), approx=True)
            attn = (p * inv).astype(jnp.bfloat16)
            head_ctx.append(jnp.dot(attn, vh, preferred_element_type=jnp.float32))
        ctx_rows.append(jnp.concatenate(head_ctx, axis=-1))        # (L, E)
    ctx = jnp.concatenate(ctx_rows, axis=0)                        # (M, E) f32

    # ---- out projection + first residual add (x = x + attn(x)) ----
    y = x + jnp.dot(ctx.astype(jnp.bfloat16), wo_ref[...],
                    preferred_element_type=jnp.float32) + bo_ref[...]

    # ---- ln1 -> fc1 -> exact-erf GELU -> fc2 -> second residual add ----
    h = _layernorm(y, ln1g_ref[...], ln1b_ref[...])
    h = jnp.dot(h.astype(jnp.bfloat16), wfc1_ref[...],
                preferred_element_type=jnp.float32) + bfc1_ref[...]
    h = 0.5 * h * (1.0 + lax.erf(h * (1.0 / math.sqrt(2.0))))      # F.gelu default (erf)
    y = y + jnp.dot(h.astype(jnp.bfloat16), wfc2_ref[...],
                    preferred_element_type=jnp.float32) + bfc2_ref[...]

    # ---- final ln2 ----
    out_ref[...] = _layernorm(y, ln2g_ref[...], ln2b_ref[...]).astype(out_ref.dtype)


# ----------------------------- Block forward (wrapper) -----------------------------

def block_forward(x, p, n_head):
    B, L, E = x.shape
    M = B * L
    assert E % n_head == 0
    assert M % 8 == 0 and E % 128 == 0, (M, E)
    # whole-block-in-VMEM design: weights (~3.4 MiB bf16) + activations must fit comfortably
    assert M <= 1024, "single-kernel VMEM-resident design assumes small B*L"

    x2d = x.reshape(M, E)
    scale = 1.0 / math.sqrt(E / n_head)

    vmem = pl.BlockSpec(memory_space=pltpu.MemorySpace.VMEM)   # whole array in VMEM
    args = (
        x2d,
        p["w_qkv"], p["b_qkv"].reshape(1, 3 * E),
        p["wo"],    p["bo"].reshape(1, E),
        p["w_fc1"], p["b_fc1"].reshape(1, 4 * E),
        p["w_fc2"], p["b_fc2"].reshape(1, E),
        p["ln1_g"].reshape(1, E), p["ln1_b"].reshape(1, E),
        p["ln2_g"].reshape(1, E), p["ln2_b"].reshape(1, E),
    )

    out = pl.pallas_call(
        functools.partial(_block_kernel, B=B, L=L, n_head=n_head, scale=scale),
        out_shape=jax.ShapeDtypeStruct((M, E), jnp.float32),
        in_specs=[vmem] * len(args),
        out_specs=vmem,
    )(*args)
    return out.reshape(B, L, E)


# ----------------------------- pure-JAX reference (sanity check) -----------------------------
# Mirrors the kernel's precision choices (bf16 MXU operands, f32 accumulation / LN / softmax)
# so the comparison isolates genuine bugs rather than quantization noise.

def _ref_block(x, p, n_head):
    def bf(a):
        return a.astype(jnp.bfloat16).astype(jnp.float32)

    def mm(a, w):
        return jnp.dot(bf(a), w.astype(jnp.float32))

    def ln(v, g, b):
        mu = jnp.mean(v, -1, keepdims=True)
        var = jnp.mean((v - mu) ** 2, -1, keepdims=True)
        return (v - mu) * lax.rsqrt(var + LN_EPS) * g + b

    B, L, E = x.shape
    D = E // n_head
    x2d = x.reshape(B * L, E).astype(jnp.float32)

    qkv = mm(x2d, p["w_qkv"]) + p["b_qkv"]
    k, q, v = jnp.split(qkv.reshape(B, L, 3 * E), 3, axis=-1)
    k = bf(k).reshape(B, L, n_head, D).transpose(0, 2, 1, 3)
    q = bf(q).reshape(B, L, n_head, D).transpose(0, 2, 1, 3)
    v = bf(v).reshape(B, L, n_head, D).transpose(0, 2, 1, 3)
    # scores = K @ Q^T, softmax over last axis (exactly as in the PyTorch module)
    s = jnp.einsum("bhid,bhjd->bhij", k, q) / math.sqrt(E / n_head)
    a = jax.nn.softmax(s, axis=-1)
    ctx = jnp.einsum("bhij,bhjd->bhid", bf(a), v).transpose(0, 2, 1, 3).reshape(B * L, E)

    y = x2d + mm(ctx, p["wo"]) + p["bo"]
    h = ln(y, p["ln1_g"], p["ln1_b"])
    h = jax.nn.gelu(mm(h, p["w_fc1"]) + p["b_fc1"], approximate=False)
    y = y + mm(h, p["w_fc2"]) + p["b_fc2"]
    return ln(y, p["ln2_g"], p["ln2_b"]).reshape(B, L, E)


# ----------------------------- params -----------------------------

def init_params(key, n_embd):
    E = n_embd

    def nrm(k, shape, std=0.02):
        return (std * jax.random.normal(k, shape)).astype(jnp.float32)

    ks = jax.random.split(key, 12)
    w_qkv = jnp.concatenate(
        [nrm(ks[0], (E, E)), nrm(ks[1], (E, E)), nrm(ks[2], (E, E))], axis=1)  # [K | Q | V]
    b_qkv = jnp.concatenate(
        [nrm(ks[3], (E,)), nrm(ks[4], (E,)), nrm(ks[5], (E,))], axis=0)
    return {
        # matmul weights stored bf16 (native MXU operand dtype); everything else f32
        "w_qkv": w_qkv.astype(jnp.bfloat16), "b_qkv": b_qkv,
        "wo": nrm(ks[6], (E, E)).astype(jnp.bfloat16), "bo": nrm(ks[7], (E,)),
        "w_fc1": nrm(ks[8], (E, 4 * E)).astype(jnp.bfloat16), "b_fc1": nrm(ks[9], (4 * E,)),
        "w_fc2": nrm(ks[10], (4 * E, E)).astype(jnp.bfloat16), "b_fc2": nrm(ks[11], (E,)),
        "ln1_g": jnp.ones((E,), jnp.float32) + 0.1 * nrm(ks[0], (E,), std=1.0),
        "ln1_b": 0.1 * nrm(ks[1], (E,), std=1.0),
        "ln2_g": jnp.ones((E,), jnp.float32) + 0.1 * nrm(ks[2], (E,), std=1.0),
        "ln2_b": 0.1 * nrm(ks[3], (E,), std=1.0),
    }


# ----------------------------- main -----------------------------

if __name__ == "__main__":
    B, L = 2, 8   # small shapes; n_embd / n_head fixed by the module spec

    key = jax.random.PRNGKey(0)
    pkey, xkey = jax.random.split(key)
    params = init_params(pkey, N_EMBD)
    x = jax.random.normal(xkey, (B, L, N_EMBD), dtype=jnp.float32)

    fwd = jax.jit(functools.partial(block_forward, n_head=N_HEAD))
    out = fwd(x, params)
    jax.block_until_ready(out)

    ref = _ref_block(x, params, N_HEAD)
    assert out.shape == (B, L, N_EMBD)
    max_err = float(jnp.max(jnp.abs(out - ref)))
    assert jnp.allclose(out, ref, atol=2e-2, rtol=2e-2), max_err

    print("KERNEL_OK")
</pallas_src>

<mosaic_0001>
module attributes {stable_mosaic.version = 11 : i64} {
  func.func @_block_kernel(%arg0: memref<16x384xf32, #tpu.memory_space<vmem>>, %arg1: memref<384x1152xbf16, #tpu.memory_space<vmem>>, %arg2: memref<1x1152xf32, #tpu.memory_space<vmem>>, %arg3: memref<384x384xbf16, #tpu.memory_space<vmem>>, %arg4: memref<1x384xf32, #tpu.memory_space<vmem>>, %arg5: memref<384x1536xbf16, #tpu.memory_space<vmem>>, %arg6: memref<1x1536xf32, #tpu.memory_space<vmem>>, %arg7: memref<1536x384xbf16, #tpu.memory_space<vmem>>, %arg8: memref<1x384xf32, #tpu.memory_space<vmem>>, %arg9: memref<1x384xf32, #tpu.memory_space<vmem>>, %arg10: memref<1x384xf32, #tpu.memory_space<vmem>>, %arg11: memref<1x384xf32, #tpu.memory_space<vmem>>, %arg12: memref<1x384xf32, #tpu.memory_space<vmem>>, %arg13: memref<16x384xf32, #tpu.memory_space<vmem>>) attributes {dimension_semantics = [], scalar_prefetch = 0 : i64, scratch_operands = 0 : i64, tpu.core_type = #tpu.core_type<tc>} {
    %c0 = arith.constant 0 : index
    %c0_0 = arith.constant 0 : index
    %0 = vector.load %arg0[%c0, %c0_0] : memref<16x384xf32, #tpu.memory_space<vmem>>, vector<16x384xf32>
    %1 = arith.truncf %0 : vector<16x384xf32> to vector<16x384xbf16>
    %c0_1 = arith.constant 0 : index
    %c0_2 = arith.constant 0 : index
    %2 = vector.load %arg1[%c0_1, %c0_2] : memref<384x1152xbf16, #tpu.memory_space<vmem>>, vector<384x1152xbf16>
    %cst = arith.constant dense<0.000000e+00> : vector<16x1152xf32>
    %3 = tpu.matmul %1, %2, %cst {dimension_numbers = #tpu.dot_dimension_numbers<[1], [0], [0], [1], [0, 0, 1, 1], [], []>} : vector<16x384xbf16>, vector<384x1152xbf16>, vector<16x1152xf32> -> vector<16x1152xf32>
    %c0_3 = arith.constant 0 : index
    %c0_4 = arith.constant 0 : index
    %4 = vector.load %arg2[%c0_3, %c0_4] : memref<1x1152xf32, #tpu.memory_space<vmem>>, vector<1x1152xf32>
    %5 = vector.broadcast %4 : vector<1x1152xf32> to vector<16x1152xf32>
    %6 = arith.addf %3, %5 : vector<16x1152xf32>
    %7 = vector.extract_strided_slice %6 {offsets = [0, 0], sizes = [8, 384], strides = [1, 1]} : vector<16x1152xf32> to vector<8x384xf32>
    %8 = arith.truncf %7 : vector<8x384xf32> to vector<8x384xbf16>
    %9 = vector.extract_strided_slice %6 {offsets = [0, 384], sizes = [8, 384], strides = [1, 1]} : vector<16x1152xf32> to vector<8x384xf32>
    %10 = arith.truncf %9 : vector<8x384xf32> to vector<8x384xbf16>
    %11 = vector.extract_strided_slice %6 {offsets = [0, 768], sizes = [8, 384], strides = [1, 1]} : vector<16x1152xf32> to vector<8x384xf32>
    %12 = arith.truncf %11 : vector<8x384xf32> to vector<8x384xbf16>
    %13 = vector.extract_strided_slice %8 {offsets = [0, 0], sizes = [8, 32], strides = [1, 1]} : vector<8x384xbf16> to vector<8x32xbf16>
    %14 = vector.extract_strided_slice %10 {offsets = [0, 0], sizes = [8, 32], strides = [1, 1]} : vector<8x384xbf16> to vector<8x32xbf16>
    %15 = vector.extract_strided_slice %12 {offsets = [0, 0], sizes = [8, 32], strides = [1, 1]} : vector<8x384xbf16> to vector<8x32xbf16>
    %cst_5 = arith.constant dense<0.000000e+00> : vector<8x8xf32>
    %16 = tpu.matmul %13, %14, %cst_5 {dimension_numbers = #tpu.dot_dimension_numbers<[1], [1], [0], [0], [0, 0, 1, 0], [], []>} : vector<8x32xbf16>, vector<8x32xbf16>, vector<8x8xf32> -> vector<8x8xf32>
    %cst_6 = arith.constant 0.176776692 : f32
    %17 = vector.broadcast %cst_6 : f32 to vector<8x8xf32>
    %18 = arith.mulf %16, %17 : vector<8x8xf32>
    %cst_7 = arith.constant dense<0xFF800000> : vector<8xf32>
    %19 = vector.multi_reduction <maximumf>, %18, %cst_7 [1] : vector<8x8xf32> to vector<8xf32>
    %20 = vector.shape_cast %19 : vector<8xf32> to vector<8x1xf32>
    %21 = vector.broadcast %20 : vector<8x1xf32> to vector<8x8xf32>
    %22 = arith.subf %18, %21 : vector<8x8xf32>
    %23 = math.exp %22 : vector<8x8xf32>
    %cst_8 = arith.constant dense<0.000000e+00> : vector<8xf32>
    %24 = vector.multi_reduction <add>, %23, %cst_8 [1] : vector<8x8xf32> to vector<8xf32>
    %25 = vector.shape_cast %24 : vector<8xf32> to vector<8x1xf32>
    %26 = tpu.reciprocal %25 {approx = true} : vector<8x1xf32> -> vector<8x1xf32>
    %27 = vector.broadcast %26 : vector<8x1xf32> to vector<8x8xf32>
    %28 = arith.mulf %23, %27 : vector<8x8xf32>
    %29 = arith.truncf %28 : vector<8x8xf32> to vector<8x8xbf16>
    %cst_9 = arith.constant dense<0.000000e+00> : vector<8x32xf32>
    %30 = tpu.matmul %29, %15, %cst_9 {dimension_numbers = #tpu.dot_dimension_numbers<[1], [0], [0], [1], [0, 0, 1, 1], [], []>} : vector<8x8xbf16>, vector<8x32xbf16>, vector<8x32xf32> -> vector<8x32xf32>
    %31 = vector.extract_strided_slice %8 {offsets = [0, 32], sizes = [8, 32], strides = [1, 1]} : vector<8x384xbf16> to vector<8x32xbf16>
    %32 = vector.extract_strided_slice %10 {offsets = [0, 32], sizes = [8, 32], strides = [1, 1]} : vector<8x384xbf16> to vector<8x32xbf16>
    %33 = vector.extract_strided_slice %12 {offsets = [0, 32], sizes = [8, 32], strides = [1, 1]} : vector<8x384xbf16> to vector<8x32xbf16>
    %cst_10 = arith.constant dense<0.000000e+00> : vector<8x8xf32>
    %34 = tpu.matmul %31, %32, %cst_10 {dimension_numbers = #tpu.dot_dimension_numbers<[1], [1], [0], [0], [0, 0, 1, 0], [], []>} : vector<8x32xbf16>, vector<8x32xbf16>, vector<8x8xf32> -> vector<8x8xf32>
    %cst_11 = arith.constant 0.176776692 : f32
    %35 = vector.broadcast %cst_11 : f32 to vector<8x8xf32>
    %36 = arith.mulf %34, %35 : vector<8x8xf32>
    %cst_12 = arith.constant dense<0xFF800000> : vector<8xf32>
    %37 = vector.multi_reduction <maximumf>, %36, %cst_12 [1] : vector<8x8xf32> to vector<8xf32>
    %38 = vector.shape_cast %37 : vector<8xf32> to vector<8x1xf32>
    %39 = vector.broadcast %38 : vector<8x1xf32> to vector<8x8xf32>
    %40 = arith.subf %36, %39 : vector<8x8xf32>
    %41 = math.exp %40 : vector<8x8xf32>
    %cst_13 = arith.constant dense<0.000000e+00> : vector<8xf32>
    %42 = vector.multi_reduction <add>, %41, %cst_13 [1] : vector<8x8xf32> to vector<8xf32>
    %43 = vector.shape_cast %42 : vector<8xf32> to vector<8x1xf32>
    %44 = tpu.reciprocal %43 {approx = true} : vector<8x1xf32> -> vector<8x1xf32>
    %45 = vector.broadcast %44 : vector<8x1xf32> to vector<8x8xf32>
    %46 = arith.mulf %41, %45 : vector<8x8xf32>
    %47 = arith.truncf %46 : vector<8x8xf32> to vector<8x8xbf16>
    %cst_14 = arith.constant dense<0.000000e+00> : vector<8x32xf32>
    %48 = tpu.matmul %47, %33, %cst_14 {dimension_numbers = #tpu.dot_dimension_numbers<[1], [0], [0], [1], [0, 0, 1, 1], [], []>} : vector<8x8xbf16>, vector<8x32xbf16>, vector<8x32xf32> -> vector<8x32xf32>
    %49 = vector.extract_strided_slice %8 {offsets = [0, 64], sizes = [8, 32], strides = [1, 1]} : vector<8x384xbf16> to vector<8x32xbf16>
    %50 = vector.extract_strided_slice %10 {offsets = [0, 64], sizes = [8, 32], strides = [1, 1]} : vector<8x384xbf16> to vector<8x32xbf16>
    %51 = vector.extract_strided_slice %12 {offsets = [0, 64], sizes = [8, 32], strides = [1, 1]} : vector<8x384xbf16> to vector<8x32xbf16>
    %cst_15 = arith.constant dense<0.000000e+00> : vector<8x8xf32>
    %52 = tpu.matmul %49, %50, %cst_15 {dimension_numbers = #tpu.dot_dimension_numbers<[1], [1], [0], [0], [0, 0, 1, 0], [], []>} : vector<8x32xbf16>, vector<8x32xbf16>, vector<8x8xf32> -> vector<8x8xf32>
    %cst_16 = arith.constant 0.176776692 : f32
    %53 = vector.broadcast %cst_16 : f32 to vector<8x8xf32>
    %54 = arith.mulf %52, %53 : vector<8x8xf32>
    %cst_17 = arith.constant dense<0xFF800000> : vector<8xf32>
    %55 = vector.multi_reduction <maximumf>, %54, %cst_17 [1] : vector<8x8xf32> to vector<8xf32>
    %56 = vector.shape_cast %55 : vector<8xf32> to vector<8x1xf32>
    %57 = vector.broadcast %56 : vector<8x1xf32> to vector<8x8xf32>
    %58 = arith.subf %54, %57 : vector<8x8xf32>
    %59 = math.exp %58 : vector<8x8xf32>
    %cst_18 = arith.constant dense<0.000000e+00> : vector<8xf32>
    %60 = vector.multi_reduction <add>, %59, %cst_18 [1] : vector<8x8xf32> to vector<8xf32>
    %61 = vector.shape_cast %60 : vector<8xf32> to vector<8x1xf32>
    %62 = tpu.reciprocal %61 {approx = true} : vector<8x1xf32> -> vector<8x1xf32>
    %63 = vector.broadcast %62 : vector<8x1xf32> to vector<8x8xf32>
    %64 = arith.mulf %59, %63 : vector<8x8xf32>
    %65 = arith.truncf %64 : vector<8x8xf32> to vector<8x8xbf16>
    %cst_19 = arith.constant dense<0.000000e+00> : vector<8x32xf32>
    %66 = tpu.matmul %65, %51, %cst_19 {dimension_numbers = #tpu.dot_dimension_numbers<[1], [0], [0], [1], [0, 0, 1, 1], [], []>} : vector<8x8xbf16>, vector<8x32xbf16>, vector<8x32xf32> -> vector<8x32xf32>
    %67 = vector.extract_strided_slice %8 {offsets = [0, 96], sizes = [8, 32], strides = [1, 1]} : vector<8x384xbf16> to vector<8x32xbf16>
    %68 = vector.extract_strided_slice %10 {offsets = [0, 96], sizes = [8, 32], strides = [1, 1]} : vector<8x384xbf16> to vector<8x32xbf16>
    %69 = vector.extract_strided_slice %12 {offsets = [0, 96], sizes = [8, 32], strides = [1, 1]} : vector<8x384xbf16> to vector<8x32xbf16>
    %cst_20 = arith.constant dense<0.000000e+00> : vector<8x8xf32>
    %70 = tpu.matmul %67, %68, %cst_20 {dimension_numbers = #tpu.dot_dimension_numbers<[1], [1], [0], [0], [0, 0, 1, 0], [], []>} : vector<8x32xbf16>, vector<8x32xbf16>, vector<8x8xf32> -> vector<8x8xf32>
    %cst_21 = arith.constant 0.176776692 : f32
    %71 = vector.broadcast %cst_21 : f32 to vector<8x8xf32>
    %72 = arith.mulf %70, %71 : vector<8x8xf32>
    %cst_22 = arith.constant dense<0xFF800000> : vector<8xf32>
    %73 = vector.multi_reduction <maximumf>, %72, %cst_22 [1] : vector<8x8xf32> to vector<8xf32>
    %74 = vector.shape_cast %73 : vector<8xf32> to vector<8x1xf32>
    %75 = vector.broadcast %74 : vector<8x1xf32> to vector<8x8xf32>
    %76 = arith.subf %72, %75 : vector<8x8xf32>
    %77 = math.exp %76 : vector<8x8xf32>
    %cst_23 = arith.constant dense<0.000000e+00> : vector<8xf32>
    %78 = vector.multi_reduction <add>, %77, %cst_23 [1] : vector<8x8xf32> to vector<8xf32>
    %79 = vector.shape_cast %78 : vector<8xf32> to vector<8x1xf32>
    %80 = tpu.reciprocal %79 {approx = true} : vector<8x1xf32> -> vector<8x1xf32>
    %81 = vector.broadcast %80 : vector<8x1xf32> to vector<8x8xf32>
    %82 = arith.mulf %77, %81 : vector<8x8xf32>
    %83 = arith.truncf %82 : vector<8x8xf32> to vector<8x8xbf16>
    %cst_24 = arith.constant dense<0.000000e+00> : vector<8x32xf32>
    %84 = tpu.matmul %83, %69, %cst_24 {dimension_numbers = #tpu.dot_dimension_numbers<[1], [0], [0], [1], [0, 0, 1, 1], [], []>} : vector<8x8xbf16>, vector<8x32xbf16>, vector<8x32xf32> -> vector<8x32xf32>
    %85 = vector.extract_strided_slice %8 {offsets = [0, 128], sizes = [8, 32], strides = [1, 1]} : vector<8x384xbf16> to vector<8x32xbf16>
    %86 = vector.extract_strided_slice %10 {offsets = [0, 128], sizes = [8, 32], strides = [1, 1]} : vector<8x384xbf16> to vector<8x32xbf16>
    %87 = vector.extract_strided_slice %12 {offsets = [0, 128], sizes = [8, 32], strides = [1, 1]} : vector<8x384xbf16> to vector<8x32xbf16>
    %cst_25 = arith.constant dense<0.000000e+00> : vector<8x8xf32>
    %88 = tpu.matmul %85, %86, %cst_25 {dimension_numbers = #tpu.dot_dimension_numbers<[1], [1], [0], [0], [0, 0, 1, 0], [], []>} : vector<8x32xbf16>, vector<8x32xbf16>, vector<8x8xf32> -> vector<8x8xf32>
    %cst_26 = arith.constant 0.176776692 : f32
    %89 = vector.broadcast %cst_26 : f32 to vector<8x8xf32>
    %90 = arith.mulf %88, %89 : vector<8x8xf32>
    %cst_27 = arith.constant dense<0xFF800000> : vector<8xf32>
    %91 = vector.multi_reduction <maximumf>, %90, %cst_27 [1] : vector<8x8xf32> to vector<8xf32>
    %92 = vector.shape_cast %91 : vector<8xf32> to vector<8x1xf32>
    %93 = vector.broadcast %92 : vector<8x1xf32> to vector<8x8xf32>
    %94 = arith.subf %90, %93 : vector<8x8xf32>
    %95 = math.exp %94 : vector<8x8xf32>
    %cst_28 = arith.constant dense<0.000000e+00> : vector<8xf32>
    %96 = vector.multi_reduction <add>, %95, %cst_28 [1] : vector<8x8xf32> to vector<8xf32>
    %97 = vector.shape_cast %96 : vector<8xf32> to vector<8x1xf32>
    %98 = tpu.reciprocal %97 {approx = true} : vector<8x1xf32> -> vector<8x1xf32>
    %99 = vector.broadcast %98 : vector<8x1xf32> to vector<8x8xf32>
    %100 = arith.mulf %95, %99 : vector<8x8xf32>
    %101 = arith.truncf %100 : vector<8x8xf32> to vector<8x8xbf16>
    %cst_29 = arith.constant dense<0.000000e+00> : vector<8x32xf32>
    %102 = tpu.matmul %101, %87, %cst_29 {dimension_numbers = #tpu.dot_dimension_numbers<[1], [0], [0], [1], [0, 0, 1, 1], [], []>} : vector<8x8xbf16>, vector<8x32xbf16>, vector<8x32xf32> -> vector<8x32xf32>
    %103 = vector.extract_strided_slice %8 {offsets = [0, 160], sizes = [8, 32], strides = [1, 1]} : vector<8x384xbf16> to vector<8x32xbf16>
    %104 = vector.extract_strided_slice %10 {offsets = [0, 160], sizes = [8, 32], strides = [1, 1]} : vector<8x384xbf16> to vector<8x32xbf16>
    %105 = vector.extract_strided_slice %12 {offsets = [0, 160], sizes = [8, 32], strides = [1, 1]} : vector<8x384xbf16> to vector<8x32xbf16>
    %cst_30 = arith.constant dense<0.000000e+00> : vector<8x8xf32>
    %106 = tpu.matmul %103, %104, %cst_30 {dimension_numbers = #tpu.dot_dimension_numbers<[1], [1], [0], [0], [0, 0, 1, 0], [], []>} : vector<8x32xbf16>, vector<8x32xbf16>, vector<8x8xf32> -> vector<8x8xf32>
    %cst_31 = arith.constant 0.176776692 : f32
    %107 = vector.broadcast %cst_31 : f32 to vector<8x8xf32>
    %108 = arith.mulf %106, %107 : vector<8x8xf32>
    %cst_32 = arith.constant dense<0xFF800000> : vector<8xf32>
    %109 = vector.multi_reduction <maximumf>, %108, %cst_32 [1] : vector<8x8xf32> to vector<8xf32>
    %110 = vector.shape_cast %109 : vector<8xf32> to vector<8x1xf32>
    %111 = vector.broadcast %110 : vector<8x1xf32> to vector<8x8xf32>
    %112 = arith.subf %108, %111 : vector<8x8xf32>
    %113 = math.exp %112 : vector<8x8xf32>
    %cst_33 = arith.constant dense<0.000000e+00> : vector<8xf32>
    %114 = vector.multi_reduction <add>, %113, %cst_33 [1] : vector<8x8xf32> to vector<8xf32>
    %115 = vector.shape_cast %114 : vector<8xf32> to vector<8x1xf32>
    %116 = tpu.reciprocal %115 {approx = true} : vector<8x1xf32> -> vector<8x1xf32>
    %117 = vector.broadcast %116 : vector<8x1xf32> to vector<8x8xf32>
    %118 = arith.mulf %113, %117 : vector<8x8xf32>
    %119 = arith.truncf %118 : vector<8x8xf32> to vector<8x8xbf16>
    %cst_34 = arith.constant dense<0.000000e+00> : vector<8x32xf32>
    %120 = tpu.matmul %119, %105, %cst_34 {dimension_numbers = #tpu.dot_dimension_numbers<[1], [0], [0], [1], [0, 0, 1, 1], [], []>} : vector<8x8xbf16>, vector<8x32xbf16>, vector<8x32xf32> -> vector<8x32xf32>
    %121 = vector.extract_strided_slice %8 {offsets = [0, 192], sizes = [8, 32], strides = [1, 1]} : vector<8x384xbf16> to vector<8x32xbf16>
    %122 = vector.extract_strided_slice %10 {offsets = [0, 192], sizes = [8, 32], strides = [1, 1]} : vector<8x384xbf16> to vector<8x32xbf16>
    %123 = vector.extract_strided_slice %12 {offsets = [0, 192], sizes = [8, 32], strides = [1, 1]} : vector<8x384xbf16> to vector<8x32xbf16>
    %cst_35 = arith.constant dense<0.000000e+00> : vector<8x8xf32>
    %124 = tpu.matmul %121, %122, %cst_35 {dimension_numbers = #tpu.dot_dimension_numbers<[1], [1], [0], [0], [0, 0, 1, 0], [], []>} : vector<8x32xbf16>, vector<8x32xbf16>, vector<8x8xf32> -> vector<8x8xf32>
    %cst_36 = arith.constant 0.176776692 : f32
    %125 = vector.broadcast %cst_36 : f32 to vector<8x8xf32>
    %126 = arith.mulf %124, %125 : vector<8x8xf32>
    %cst_37 = arith.constant dense<0xFF800000> : vector<8xf32>
    %127 = vector.multi_reduction <maximumf>, %126, %cst_37 [1] : vector<8x8xf32> to vector<8xf32>
    %128 = vector.shape_cast %127 : vector<8xf32> to vector<8x1xf32>
    %129 = vector.broadcast %128 : vector<8x1xf32> to vector<8x8xf32>
    %130 = arith.subf %126, %129 : vector<8x8xf32>
    %131 = math.exp %130 : vector<8x8xf32>
    %cst_38 = arith.constant dense<0.000000e+00> : vector<8xf32>
    %132 = vector.multi_reduction <add>, %131, %cst_38 [1] : vector<8x8xf32> to vector<8xf32>
    %133 = vector.shape_cast %132 : vector<8xf32> to vector<8x1xf32>
    %134 = tpu.reciprocal %133 {approx = true} : vector<8x1xf32> -> vector<8x1xf32>
    %135 = vector.broadcast %134 : vector<8x1xf32> to vector<8x8xf32>
    %136 = arith.mulf %131, %135 : vector<8x8xf32>
    %137 = arith.truncf %136 : vector<8x8xf32> to vector<8x8xbf16>
    %cst_39 = arith.constant dense<0.000000e+00> : vector<8x32xf32>
    %138 = tpu.matmul %137, %123, %cst_39 {dimension_numbers = #tpu.dot_dimension_numbers<[1], [0], [0], [1], [0, 0, 1, 1], [], []>} : vector<8x8xbf16>, vector<8x32xbf16>, vector<8x32xf32> -> vector<8x32xf32>
    %139 = vector.extract_strided_slice %8 {offsets = [0, 224], sizes = [8, 32], strides = [1, 1]} : vector<8x384xbf16> to vector<8x32xbf16>
    %140 = vector.extract_strided_slice %10 {offsets = [0, 224], sizes = [8, 32], strides = [1, 1]} : vector<8x384xbf16> to vector<8x32xbf16>
    %141 = vector.extract_strided_slice %12 {offsets = [0, 224], sizes = [8, 32], strides = [1, 1]} : vector<8x384xbf16> to vector<8x32xbf16>
    %cst_40 = arith.constant dense<0.000000e+00> : vector<8x8xf32>
    %142 = tpu.matmul %139, %140, %cst_40 {dimension_numbers = #tpu.dot_dimension_numbers<[1], [1], [0], [0], [0, 0, 1, 0], [], []>} : vector<8x32xbf16>, vector<8x32xbf16>, vector<8x8xf32> -> vector<8x8xf32>
    %cst_41 = arith.constant 0.176776692 : f32
    %143 = vector.broadcast %cst_41 : f32 to vector<8x8xf32>
    %144 = arith.mulf %142, %143 : vector<8x8xf32>
    %cst_42 = arith.constant dense<0xFF800000> : vector<8xf32>
    %145 = vector.multi_reduction <maximumf>, %144, %cst_42 [1] : vector<8x8xf32> to vector<8xf32>
    %146 = vector.shape_cast %145 : vector<8xf32> to vector<8x1xf32>
    %147 = vector.broadcast %146 : vector<8x1xf32> to vector<8x8xf32>
    %148 = arith.subf %144, %147 : vector<8x8xf32>
    %149 = math.exp %148 : vector<8x8xf32>
    %cst_43 = arith.constant dense<0.000000e+00> : vector<8xf32>
    %150 = vector.multi_reduction <add>, %149, %cst_43 [1] : vector<8x8xf32> to vector<8xf32>
    %151 = vector.shape_cast %150 : vector<8xf32> to vector<8x1xf32>
    %152 = tpu.reciprocal %151 {approx = true} : vector<8x1xf32> -> vector<8x1xf32>
    %153 = vector.broadcast %152 : vector<8x1xf32> to vector<8x8xf32>
    %154 = arith.mulf %149, %153 : vector<8x8xf32>
    %155 = arith.truncf %154 : vector<8x8xf32> to vector<8x8xbf16>
    %cst_44 = arith.constant dense<0.000000e+00> : vector<8x32xf32>
    %156 = tpu.matmul %155, %141, %cst_44 {dimension_numbers = #tpu.dot_dimension_numbers<[1], [0], [0], [1], [0, 0, 1, 1], [], []>} : vector<8x8xbf16>, vector<8x32xbf16>, vector<8x32xf32> -> vector<8x32xf32>
    %157 = vector.extract_strided_slice %8 {offsets = [0, 256], sizes = [8, 32], strides = [1, 1]} : vector<8x384xbf16> to vector<8x32xbf16>
    %158 = vector.extract_strided_slice %10 {offsets = [0, 256], sizes = [8, 32], strides = [1, 1]} : vector<8x384xbf16> to vector<8x32xbf16>
    %159 = vector.extract_strided_slice %12 {offsets = [0, 256], sizes = [8, 32], strides = [1, 1]} : vector<8x384xbf16> to vector<8x32xbf16>
    %cst_45 = arith.constant dense<0.000000e+00> : vector<8x8xf32>
    %160 = tpu.matmul %157, %158, %cst_45 {dimension_numbers = #tpu.dot_dimension_numbers<[1], [1], [0], [0], [0, 0, 1, 0], [], []>} : vector<8x32xbf16>, vector<8x32xbf16>, vector<8x8xf32> -> vector<8x8xf32>
    %cst_46 = arith.constant 0.176776692 : f32
    %161 = vector.broadcast %cst_46 : f32 to vector<8x8xf32>
    %162 = arith.mulf %160, %161 : vector<8x8xf32>
    %cst_47 = arith.constant dense<0xFF800000> : vector<8xf32>
    %163 = vector.multi_reduction <maximumf>, %162, %cst_47 [1] : vector<8x8xf32> to vector<8xf32>
    %164 = vector.shape_cast %163 : vector<8xf32> to vector<8x1xf32>
    %165 = vector.broadcast %164 : vector<8x1xf32> to vector<8x8xf32>
    %166 = arith.subf %162, %165 : vector<8x8xf32>
    %167 = math.exp %166 : vector<8x8xf32>
    %cst_48 = arith.constant dense<0.000000e+00> : vector<8xf32>
    %168 = vector.multi_reduction <add>, %167, %cst_48 [1] : vector<8x8xf32> to vector<8xf32>
    %169 = vector.shape_cast %168 : vector<8xf32> to vector<8x1xf32>
    %170 = tpu.reciprocal %169 {approx = true} : vector<8x1xf32> -> vector<8x1xf32>
    %171 = vector.broadcast %170 : vector<8x1xf32> to vector<8x8xf32>
    %172 = arith.mulf %167, %171 : vector<8x8xf32>
    %173 = arith.truncf %172 : vector<8x8xf32> to vector<8x8xbf16>
    %cst_49 = arith.constant dense<0.000000e+00> : vector<8x32xf32>
    %174 = tpu.matmul %173, %159, %cst_49 {dimension_numbers = #tpu.dot_dimension_numbers<[1], [0], [0], [1], [0, 0, 1, 1], [], []>} : vector<8x8xbf16>, vector<8x32xbf16>, vector<8x32xf32> -> vector<8x32xf32>
    %175 = vector.extract_strided_slice %8 {offsets = [0, 288], sizes = [8, 32], strides = [1, 1]} : vector<8x384xbf16> to vector<8x32xbf16>
    %176 = vector.extract_strided_slice %10 {offsets = [0, 288], sizes = [8, 32], strides = [1, 1]} : vector<8x384xbf16> to vector<8x32xbf16>
    %177 = vector.extract_strided_slice %12 {offsets = [0, 288], sizes = [8, 32], strides = [1, 1]} : vector<8x384xbf16> to vector<8x32xbf16>
    %cst_50 = arith.constant dense<0.000000e+00> : vector<8x8xf32>
    %178 = tpu.matmul %175, %176, %cst_50 {dimension_numbers = #tpu.dot_dimension_numbers<[1], [1], [0], [0], [0, 0, 1, 0], [], []>} : vector<8x32xbf16>, vector<8x32xbf16>, vector<8x8xf32> -> vector<8x8xf32>
    %cst_51 = arith.constant 0.176776692 : f32
    %179 = vector.broadcast %cst_51 : f32 to vector<8x8xf32>
    %180 = arith.mulf %178, %179 : vector<8x8xf32>
    %cst_52 = arith.constant dense<0xFF800000> : vector<8xf32>
    %181 = vector.multi_reduction <maximumf>, %180, %cst_52 [1] : vector<8x8xf32> to vector<8xf32>
    %182 = vector.shape_cast %181 : vector<8xf32> to vector<8x1xf32>
    %183 = vector.broadcast %182 : vector<8x1xf32> to vector<8x8xf32>
    %184 = arith.subf %180, %183 : vector<8x8xf32>
    %185 = math.exp %184 : vector<8x8xf32>
    %cst_53 = arith.constant dense<0.000000e+00> : vector<8xf32>
    %186 = vector.multi_reduction <add>, %185, %cst_53 [1] : vector<8x8xf32> to vector<8xf32>
    %187 = vector.shape_cast %186 : vector<8xf32> to vector<8x1xf32>
    %188 = tpu.reciprocal %187 {approx = true} : vector<8x1xf32> -> vector<8x1xf32>
    %189 = vector.broadcast %188 : vector<8x1xf32> to vector<8x8xf32>
    %190 = arith.mulf %185, %189 : vector<8x8xf32>
    %191 = arith.truncf %190 : vector<8x8xf32> to vector<8x8xbf16>
    %cst_54 = arith.constant dense<0.000000e+00> : vector<8x32xf32>
    %192 = tpu.matmul %191, %177, %cst_54 {dimension_numbers = #tpu.dot_dimension_numbers<[1], [0], [0], [1], [0, 0, 1, 1], [], []>} : vector<8x8xbf16>, vector<8x32xbf16>, vector<8x32xf32> -> vector<8x32xf32>
    %193 = vector.extract_strided_slice %8 {offsets = [0, 320], sizes = [8, 32], strides = [1, 1]} : vector<8x384xbf16> to vector<8x32xbf16>
    %194 = vector.extract_strided_slice %10 {offsets = [0, 320], sizes = [8, 32], strides = [1, 1]} : vector<8x384xbf16> to vector<8x32xbf16>
    %195 = vector.extract_strided_slice %12 {offsets = [0, 320], sizes = [8, 32], strides = [1, 1]} : vector<8x384xbf16> to vector<8x32xbf16>
    %cst_55 = arith.constant dense<0.000000e+00> : vector<8x8xf32>
    %196 = tpu.matmul %193, %194, %cst_55 {dimension_numbers = #tpu.dot_dimension_numbers<[1], [1], [0], [0], [0, 0, 1, 0], [], []>} : vector<8x32xbf16>, vector<8x32xbf16>, vector<8x8xf32> -> vector<8x8xf32>
    %cst_56 = arith.constant 0.176776692 : f32
    %197 = vector.broadcast %cst_56 : f32 to vector<8x8xf32>
    %198 = arith.mulf %196, %197 : vector<8x8xf32>
    %cst_57 = arith.constant dense<0xFF800000> : vector<8xf32>
    %199 = vector.multi_reduction <maximumf>, %198, %cst_57 [1] : vector<8x8xf32> to vector<8xf32>
    %200 = vector.shape_cast %199 : vector<8xf32> to vector<8x1xf32>
    %201 = vector.broadcast %200 : vector<8x1xf32> to vector<8x8xf32>
    %202 = arith.subf %198, %201 : vector<8x8xf32>
    %203 = math.exp %202 : vector<8x8xf32>
    %cst_58 = arith.constant dense<0.000000e+00> : vector<8xf32>
    %204 = vector.multi_reduction <add>, %203, %cst_58 [1] : vector<8x8xf32> to vector<8xf32>
    %205 = vector.shape_cast %204 : vector<8xf32> to vector<8x1xf32>
    %206 = tpu.reciprocal %205 {approx = true} : vector<8x1xf32> -> vector<8x1xf32>
    %207 = vector.broadcast %206 : vector<8x1xf32> to vector<8x8xf32>
    %208 = arith.mulf %203, %207 : vector<8x8xf32>
    %209 = arith.truncf %208 : vector<8x8xf32> to vector<8x8xbf16>
    %cst_59 = arith.constant dense<0.000000e+00> : vector<8x32xf32>
    %210 = tpu.matmul %209, %195, %cst_59 {dimension_numbers = #tpu.dot_dimension_numbers<[1], [0], [0], [1], [0, 0, 1, 1], [], []>} : vector<8x8xbf16>, vector<8x32xbf16>, vector<8x32xf32> -> vector<8x32xf32>
    %211 = vector.extract_strided_slice %8 {offsets = [0, 352], sizes = [8, 32], strides = [1, 1]} : vector<8x384xbf16> to vector<8x32xbf16>
    %212 = vector.extract_strided_slice %10 {offsets = [0, 352], sizes = [8, 32], strides = [1, 1]} : vector<8x384xbf16> to vector<8x32xbf16>
    %213 = vector.extract_strided_slice %12 {offsets = [0, 352], sizes = [8, 32], strides = [1, 1]} : vector<8x384xbf16> to vector<8x32xbf16>
    %cst_60 = arith.constant dense<0.000000e+00> : vector<8x8xf32>
    %214 = tpu.matmul %211, %212, %cst_60 {dimension_numbers = #tpu.dot_dimension_numbers<[1], [1], [0], [0], [0, 0, 1, 0], [], []>} : vector<8x32xbf16>, vector<8x32xbf16>, vector<8x8xf32> -> vector<8x8xf32>
    %cst_61 = arith.constant 0.176776692 : f32
    %215 = vector.broadcast %cst_61 : f32 to vector<8x8xf32>
    %216 = arith.mulf %214, %215 : vector<8x8xf32>
    %cst_62 = arith.constant dense<0xFF800000> : vector<8xf32>
    %217 = vector.multi_reduction <maximumf>, %216, %cst_62 [1] : vector<8x8xf32> to vector<8xf32>
    %218 = vector.shape_cast %217 : vector<8xf32> to vector<8x1xf32>
    %219 = vector.broadcast %218 : vector<8x1xf32> to vector<8x8xf32>
    %220 = arith.subf %216, %219 : vector<8x8xf32>
    %221 = math.exp %220 : vector<8x8xf32>
    %cst_63 = arith.constant dense<0.000000e+00> : vector<8xf32>
    %222 = vector.multi_reduction <add>, %221, %cst_63 [1] : vector<8x8xf32> to vector<8xf32>
    %223 = vector.shape_cast %222 : vector<8xf32> to vector<8x1xf32>
    %224 = tpu.reciprocal %223 {approx = true} : vector<8x1xf32> -> vector<8x1xf32>
    %225 = vector.broadcast %224 : vector<8x1xf32> to vector<8x8xf32>
    %226 = arith.mulf %221, %225 : vector<8x8xf32>
    %227 = arith.truncf %226 : vector<8x8xf32> to vector<8x8xbf16>
    %cst_64 = arith.constant dense<0.000000e+00> : vector<8x32xf32>
    %228 = tpu.matmul %227, %213, %cst_64 {dimension_numbers = #tpu.dot_dimension_numbers<[1], [0], [0], [1], [0, 0, 1, 1], [], []>} : vector<8x8xbf16>, vector<8x32xbf16>, vector<8x32xf32> -> vector<8x32xf32>
    %229 = tpu.concatenate %30, %48, %66, %84, %102, %120, %138, %156, %174, %192, %210, %228 in 1 : vector<8x32xf32>, vector<8x32xf32>, vector<8x32xf32>, vector<8x32xf32>, vector<8x32xf32>, vector<8x32xf32>, vector<8x32xf32>, vector<8x32xf32>, vector<8x32xf32>, vector<8x32xf32>, vector<8x32xf32>, vector<8x32xf32> -> vector<8x384xf32>
    %230 = vector.extract_strided_slice %6 {offsets = [8, 0], sizes = [8, 384], strides = [1, 1]} : vector<16x1152xf32> to vector<8x384xf32>
    %231 = arith.truncf %230 : vector<8x384xf32> to vector<8x384xbf16>
    %232 = vector.extract_strided_slice %6 {offsets = [8, 384], sizes = [8, 384], strides = [1, 1]} : vector<16x1152xf32> to vector<8x384xf32>
    %233 = arith.truncf %232 : vector<8x384xf32> to vector<8x384xbf16>
    %234 = vector.extract_strided_slice %6 {offsets = [8, 768], sizes = [8, 384], strides = [1, 1]} : vector<16x1152xf32> to vector<8x384xf32>
    %235 = arith.truncf %234 : vector<8x384xf32> to vector<8x384xbf16>
    %236 = vector.extract_strided_slice %231 {offsets = [0, 0], sizes = [8, 32], strides = [1, 1]} : vector<8x384xbf16> to vector<8x32xbf16>
    %237 = vector.extract_strided_slice %233 {offsets = [0, 0], sizes = [8, 32], strides = [1, 1]} : vector<8x384xbf16> to vector<8x32xbf16>
    %238 = vector.extract_strided_slice %235 {offsets = [0, 0], sizes = [8, 32], strides = [1, 1]} : vector<8x384xbf16> to vector<8x32xbf16>
    %cst_65 = arith.constant dense<0.000000e+00> : vector<8x8xf32>
    %239 = tpu.matmul %236, %237, %cst_65 {dimension_numbers = #tpu.dot_dimension_numbers<[1], [1], [0], [0], [0, 0, 1, 0], [], []>} : vector<8x32xbf16>, vector<8x32xbf16>, vector<8x8xf32> -> vector<8x8xf32>
    %cst_66 = arith.constant 0.176776692 : f32
    %240 = vector.broadcast %cst_66 : f32 to vector<8x8xf32>
    %241 = arith.mulf %239, %240 : vector<8x8xf32>
    %cst_67 = arith.constant dense<0xFF800000> : vector<8xf32>
    %242 = vector.multi_reduction <maximumf>, %241, %cst_67 [1] : vector<8x8xf32> to vector<8xf32>
    %243 = vector.shape_cast %242 : vector<8xf32> to vector<8x1xf32>
    %244 = vector.broadcast %243 : vector<8x1xf32> to vector<8x8xf32>
    %245 = arith.subf %241, %244 : vector<8x8xf32>
    %246 = math.exp %245 : vector<8x8xf32>
    %cst_68 = arith.constant dense<0.000000e+00> : vector<8xf32>
    %247 = vector.multi_reduction <add>, %246, %cst_68 [1] : vector<8x8xf32> to vector<8xf32>
    %248 = vector.shape_cast %247 : vector<8xf32> to vector<8x1xf32>
    %249 = tpu.reciprocal %248 {approx = true} : vector<8x1xf32> -> vector<8x1xf32>
    %250 = vector.broadcast %249 : vector<8x1xf32> to vector<8x8xf32>
    %251 = arith.mulf %246, %250 : vector<8x8xf32>
    %252 = arith.truncf %251 : vector<8x8xf32> to vector<8x8xbf16>
    %cst_69 = arith.constant dense<0.000000e+00> : vector<8x32xf32>
    %253 = tpu.matmul %252, %238, %cst_69 {dimension_numbers = #tpu.dot_dimension_numbers<[1], [0], [0], [1], [0, 0, 1, 1], [], []>} : vector<8x8xbf16>, vector<8x32xbf16>, vector<8x32xf32> -> vector<8x32xf32>
    %254 = vector.extract_strided_slice %231 {offsets = [0, 32], sizes = [8, 32], strides = [1, 1]} : vector<8x384xbf16> to vector<8x32xbf16>
    %255 = vector.extract_strided_slice %233 {offsets = [0, 32], sizes = [8, 32], strides = [1, 1]} : vector<8x384xbf16> to vector<8x32xbf16>
    %256 = vector.extract_strided_slice %235 {offsets = [0, 32], sizes = [8, 32], strides = [1, 1]} : vector<8x384xbf16> to vector<8x32xbf16>
    %cst_70 = arith.constant dense<0.000000e+00> : vector<8x8xf32>
    %257 = tpu.matmul %254, %255, %cst_70 {dimension_numbers = #tpu.dot_dimension_numbers<[1], [1], [0], [0], [0, 0, 1, 0], [], []>} : vector<8x32xbf16>, vector<8x32xbf16>, vector<8x8xf32> -> vector<8x8xf32>
    %cst_71 = arith.constant 0.176776692 : f32
    %258 = vector.broadcast %cst_71 : f32 to vector<8x8xf32>
    %259 = arith.mulf %257, %258 : vector<8x8xf32>
    %cst_72 = arith.constant dense<0xFF800000> : vector<8xf32>
    %260 = vector.multi_reduction <maximumf>, %259, %cst_72 [1] : vector<8x8xf32> to vector<8xf32>
    %261 = vector.shape_cast %260 : vector<8xf32> to vector<8x1xf32>
    %262 = vector.broadcast %261 : vector<8x1xf32> to vector<8x8xf32>
    %263 = arith.subf %259, %262 : vector<8x8xf32>
    %264 = math.exp %263 : vector<8x8xf32>
    %cst_73 = arith.constant dense<0.000000e+00> : vector<8xf32>
    %265 = vector.multi_reduction <add>, %264, %cst_73 [1] : vector<8x8xf32> to vector<8xf32>
    %266 = vector.shape_cast %265 : vector<8xf32> to vector<8x1xf32>
    %267 = tpu.reciprocal %266 {approx = true} : vector<8x1xf32> -> vector<8x1xf32>
    %268 = vector.broadcast %267 : vector<8x1xf32> to vector<8x8xf32>
    %269 = arith.mulf %264, %268 : vector<8x8xf32>
    %270 = arith.truncf %269 : vector<8x8xf32> to vector<8x8xbf16>
    %cst_74 = arith.constant dense<0.000000e+00> : vector<8x32xf32>
    %271 = tpu.matmul %270, %256, %cst_74 {dimension_numbers = #tpu.dot_dimension_numbers<[1], [0], [0], [1], [0, 0, 1, 1], [], []>} : vector<8x8xbf16>, vector<8x32xbf16>, vector<8x32xf32> -> vector<8x32xf32>
    %272 = vector.extract_strided_slice %231 {offsets = [0, 64], sizes = [8, 32], strides = [1, 1]} : vector<8x384xbf16> to vector<8x32xbf16>
    %273 = vector.extract_strided_slice %233 {offsets = [0, 64], sizes = [8, 32], strides = [1, 1]} : vector<8x384xbf16> to vector<8x32xbf16>
    %274 = vector.extract_strided_slice %235 {offsets = [0, 64], sizes = [8, 32], strides = [1, 1]} : vector<8x384xbf16> to vector<8x32xbf16>
    %cst_75 = arith.constant dense<0.000000e+00> : vector<8x8xf32>
    %275 = tpu.matmul %272, %273, %cst_75 {dimension_numbers = #tpu.dot_dimension_numbers<[1], [1], [0], [0], [0, 0, 1, 0], [], []>} : vector<8x32xbf16>, vector<8x32xbf16>, vector<8x8xf32> -> vector<8x8xf32>
    %cst_76 = arith.constant 0.176776692 : f32
    %276 = vector.broadcast %cst_76 : f32 to vector<8x8xf32>
    %277 = arith.mulf %275, %276 : vector<8x8xf32>
    %cst_77 = arith.constant dense<0xFF800000> : vector<8xf32>
    %278 = vector.multi_reduction <maximumf>, %277, %cst_77 [1] : vector<8x8xf32> to vector<8xf32>
    %279 = vector.shape_cast %278 : vector<8xf32> to vector<8x1xf32>
    %280 = vector.broadcast %279 : vector<8x1xf32> to vector<8x8xf32>
    %281 = arith.subf %277, %280 : vector<8x8xf32>
    %282 = math.exp %281 : vector<8x8xf32>
    %cst_78 = arith.constant dense<0.000000e+00> : vector<8xf32>
    %283 = vector.multi_reduction <add>, %282, %cst_78 [1] : vector<8x8xf32> to vector<8xf32>
    %284 = vector.shape_cast %283 : vector<8xf32> to vector<8x1xf32>
    %285 = tpu.reciprocal %284 {approx = true} : vector<8x1xf32> -> vector<8x1xf32>
    %286 = vector.broadcast %285 : vector<8x1xf32> to vector<8x8xf32>
    %287 = arith.mulf %282, %286 : vector<8x8xf32>
    %288 = arith.truncf %287 : vector<8x8xf32> to vector<8x8xbf16>
    %cst_79 = arith.constant dense<0.000000e+00> : vector<8x32xf32>
    %289 = tpu.matmul %288, %274, %cst_79 {dimension_numbers = #tpu.dot_dimension_numbers<[1], [0], [0], [1], [0, 0, 1, 1], [], []>} : vector<8x8xbf16>, vector<8x32xbf16>, vector<8x32xf32> -> vector<8x32xf32>
    %290 = vector.extract_strided_slice %231 {offsets = [0, 96], sizes = [8, 32], strides = [1, 1]} : vector<8x384xbf16> to vector<8x32xbf16>
    %291 = vector.extract_strided_slice %233 {offsets = [0, 96], sizes = [8, 32], strides = [1, 1]} : vector<8x384xbf16> to vector<8x32xbf16>
    %292 = vector.extract_strided_slice %235 {offsets = [0, 96], sizes = [8, 32], strides = [1, 1]} : vector<8x384xbf16> to vector<8x32xbf16>
    %cst_80 = arith.constant dense<0.000000e+00> : vector<8x8xf32>
    %293 = tpu.matmul %290, %291, %cst_80 {dimension_numbers = #tpu.dot_dimension_numbers<[1], [1], [0], [0], [0, 0, 1, 0], [], []>} : vector<8x32xbf16>, vector<8x32xbf16>, vector<8x8xf32> -> vector<8x8xf32>
    %cst_81 = arith.constant 0.176776692 : f32
    %294 = vector.broadcast %cst_81 : f32 to vector<8x8xf32>
    %295 = arith.mulf %293, %294 : vector<8x8xf32>
    %cst_82 = arith.constant dense<0xFF800000> : vector<8xf32>
    %296 = vector.multi_reduction <maximumf>, %295, %cst_82 [1] : vector<8x8xf32> to vector<8xf32>
    %297 = vector.shape_cast %296 : vector<8xf32> to vector<8x1xf32>
    %298 = vector.broadcast %297 : vector<8x1xf32> to vector<8x8xf32>
    %299 = arith.subf %295, %298 : vector<8x8xf32>
    %300 = math.exp %299 : vector<8x8xf32>
    %cst_83 = arith.constant dense<0.000000e+00> : vector<8xf32>
    %301 = vector.multi_reduction <add>, %300, %cst_83 [1] : vector<8x8xf32> to vector<8xf32>
    %302 = vector.shape_cast %301 : vector<8xf32> to vector<8x1xf32>
    %303 = tpu.reciprocal %302 {approx = true} : vector<8x1xf32> -> vector<8x1xf32>
    %304 = vector.broadcast %303 : vector<8x1xf32> to vector<8x8xf32>
    %305 = arith.mulf %300, %304 : vector<8x8xf32>
    %306 = arith.truncf %305 : vector<8x8xf32> to vector<8x8xbf16>
    %cst_84 = arith.constant dense<0.000000e+00> : vector<8x32xf32>
    %307 = tpu.matmul %306, %292, %cst_84 {dimension_numbers = #tpu.dot_dimension_numbers<[1], [0], [0], [1], [0, 0, 1, 1], [], []>} : vector<8x8xbf16>, vector<8x32xbf16>, vector<8x32xf32> -> vector<8x32xf32>
    %308 = vector.extract_strided_slice %231 {offsets = [0, 128], sizes = [8, 32], strides = [1, 1]} : vector<8x384xbf16> to vector<8x32xbf16>
    %309 = vector.extract_strided_slice %233 {offsets = [0, 128], sizes = [8, 32], strides = [1, 1]} : vector<8x384xbf16> to vector<8x32xbf16>
    %310 = vector.extract_strided_slice %235 {offsets = [0, 128], sizes = [8, 32], strides = [1, 1]} : vector<8x384xbf16> to vector<8x32xbf16>
    %cst_85 = arith.constant dense<0.000000e+00> : vector<8x8xf32>
    %311 = tpu.matmul %308, %309, %cst_85 {dimension_numbers = #tpu.dot_dimension_numbers<[1], [1], [0], [0], [0, 0, 1, 0], [], []>} : vector<8x32xbf16>, vector<8x32xbf16>, vector<8x8xf32> -> vector<8x8xf32>
    %cst_86 = arith.constant 0.176776692 : f32
    %312 = vector.broadcast %cst_86 : f32 to vector<8x8xf32>
    %313 = arith.mulf %311, %312 : vector<8x8xf32>
    %cst_87 = arith.constant dense<0xFF800000> : vector<8xf32>
    %314 = vector.multi_reduction <maximumf>, %313, %cst_87 [1] : vector<8x8xf32> to vector<8xf32>
    %315 = vector.shape_cast %314 : vector<8xf32> to vector<8x1xf32>
    %316 = vector.broadcast %315 : vector<8x1xf32> to vector<8x8xf32>
    %317 = arith.subf %313, %316 : vector<8x8xf32>
    %318 = math.exp %317 : vector<8x8xf32>
    %cst_88 = arith.constant dense<0.000000e+00> : vector<8xf32>
    %319 = vector.multi_reduction <add>, %318, %cst_88 [1] : vector<8x8xf32> to vector<8xf32>
    %320 = vector.shape_cast %319 : vector<8xf32> to vector<8x1xf32>
    %321 = tpu.reciprocal %320 {approx = true} : vector<8x1xf32> -> vector<8x1xf32>
    %322 = vector.broadcast %321 : vector<8x1xf32> to vector<8x8xf32>
    %323 = arith.mulf %318, %322 : vector<8x8xf32>
    %324 = arith.truncf %323 : vector<8x8xf32> to vector<8x8xbf16>
    %cst_89 = arith.constant dense<0.000000e+00> : vector<8x32xf32>
    %325 = tpu.matmul %324, %310, %cst_89 {dimension_numbers = #tpu.dot_dimension_numbers<[1], [0], [0], [1], [0, 0, 1, 1], [], []>} : vector<8x8xbf16>, vector<8x32xbf16>, vector<8x32xf32> -> vector<8x32xf32>
    %326 = vector.extract_strided_slice %231 {offsets = [0, 160], sizes = [8, 32], strides = [1, 1]} : vector<8x384xbf16> to vector<8x32xbf16>
    %327 = vector.extract_strided_slice %233 {offsets = [0, 160], sizes = [8, 32], strides = [1, 1]} : vector<8x384xbf16> to vector<8x32xbf16>
    %328 = vector.extract_strided_slice %235 {offsets = [0, 160], sizes = [8, 32], strides = [1, 1]} : vector<8x384xbf16> to vector<8x32xbf16>
    %cst_90 = arith.constant dense<0.000000e+00> : vector<8x8xf32>
    %329 = tpu.matmul %326, %327, %cst_90 {dimension_numbers = #tpu.dot_dimension_numbers<[1], [1], [0], [0], [0, 0, 1, 0], [], []>} : vector<8x32xbf16>, vector<8x32xbf16>, vector<8x8xf32> -> vector<8x8xf32>
    %cst_91 = arith.constant 0.176776692 : f32
    %330 = vector.broadcast %cst_91 : f32 to vector<8x8xf32>
    %331 = arith.mulf %329, %330 : vector<8x8xf32>
    %cst_92 = arith.constant dense<0xFF800000> : vector<8xf32>
    %332 = vector.multi_reduction <maximumf>, %331, %cst_92 [1] : vector<8x8xf32> to vector<8xf32>
    %333 = vector.shape_cast %332 : vector<8xf32> to vector<8x1xf32>
    %334 = vector.broadcast %333 : vector<8x1xf32> to vector<8x8xf32>
    %335 = arith.subf %331, %334 : vector<8x8xf32>
    %336 = math.exp %335 : vector<8x8xf32>
    %cst_93 = arith.constant dense<0.000000e+00> : vector<8xf32>
    %337 = vector.multi_reduction <add>, %336, %cst_93 [1] : vector<8x8xf32> to vector<8xf32>
    %338 = vector.shape_cast %337 : vector<8xf32> to vector<8x1xf32>
    %339 = tpu.reciprocal %338 {approx = true} : vector<8x1xf32> -> vector<8x1xf32>
    %340 = vector.broadcast %339 : vector<8x1xf32> to vector<8x8xf32>
    %341 = arith.mulf %336, %340 : vector<8x8xf32>
    %342 = arith.truncf %341 : vector<8x8xf32> to vector<8x8xbf16>
    %cst_94 = arith.constant dense<0.000000e+00> : vector<8x32xf32>
    %343 = tpu.matmul %342, %328, %cst_94 {dimension_numbers = #tpu.dot_dimension_numbers<[1], [0], [0], [1], [0, 0, 1, 1], [], []>} : vector<8x8xbf16>, vector<8x32xbf16>, vector<8x32xf32> -> vector<8x32xf32>
    %344 = vector.extract_strided_slice %231 {offsets = [0, 192], sizes = [8, 32], strides = [1, 1]} : vector<8x384xbf16> to vector<8x32xbf16>
    %345 = vector.extract_strided_slice %233 {offsets = [0, 192], sizes = [8, 32], strides = [1, 1]} : vector<8x384xbf16> to vector<8x32xbf16>
    %346 = vector.extract_strided_slice %235 {offsets = [0, 192], sizes = [8, 32], strides = [1, 1]} : vector<8x384xbf16> to vector<8x32xbf16>
    %cst_95 = arith.constant dense<0.000000e+00> : vector<8x8xf32>
    %347 = tpu.matmul %344, %345, %cst_95 {dimension_numbers = #tpu.dot_dimension_numbers<[1], [1], [0], [0], [0, 0, 1, 0], [], []>} : vector<8x32xbf16>, vector<8x32xbf16>, vector<8x8xf32> -> vector<8x8xf32>
    %cst_96 = arith.constant 0.176776692 : f32
    %348 = vector.broadcast %cst_96 : f32 to vector<8x8xf32>
    %349 = arith.mulf %347, %348 : vector<8x8xf32>
    %cst_97 = arith.constant dense<0xFF800000> : vector<8xf32>
    %350 = vector.multi_reduction <maximumf>, %349, %cst_97 [1] : vector<8x8xf32> to vector<8xf32>
    %351 = vector.shape_cast %350 : vector<8xf32> to vector<8x1xf32>
    %352 = vector.broadcast %351 : vector<8x1xf32> to vector<8x8xf32>
    %353 = arith.subf %349, %352 : vector<8x8xf32>
    %354 = math.exp %353 : vector<8x8xf32>
    %cst_98 = arith.constant dense<0.000000e+00> : vector<8xf32>
    %355 = vector.multi_reduction <add>, %354, %cst_98 [1] : vector<8x8xf32> to vector<8xf32>
    %356 = vector.shape_cast %355 : vector<8xf32> to vector<8x1xf32>
    %357 = tpu.reciprocal %356 {approx = true} : vector<8x1xf32> -> vector<8x1xf32>
    %358 = vector.broadcast %357 : vector<8x1xf32> to vector<8x8xf32>
    %359 = arith.mulf %354, %358 : vector<8x8xf32>
    %360 = arith.truncf %359 : vector<8x8xf32> to vector<8x8xbf16>
    %cst_99 = arith.constant dense<0.000000e+00> : vector<8x32xf32>
    %361 = tpu.matmul %360, %346, %cst_99 {dimension_numbers = #tpu.dot_dimension_numbers<[1], [0], [0], [1], [0, 0, 1, 1], [], []>} : vector<8x8xbf16>, vector<8x32xbf16>, vector<8x32xf32> -> vector<8x32xf32>
    %362 = vector.extract_strided_slice %231 {offsets = [0, 224], sizes = [8, 32], strides = [1, 1]} : vector<8x384xbf16> to vector<8x32xbf16>
    %363 = vector.extract_strided_slice %233 {offsets = [0, 224], sizes = [8, 32], strides = [1, 1]} : vector<8x384xbf16> to vector<8x32xbf16>
    %364 = vector.extract_strided_slice %235 {offsets = [0, 224], sizes = [8, 32], strides = [1, 1]} : vector<8x384xbf16> to vector<8x32xbf16>
    %cst_100 = arith.constant dense<0.000000e+00> : vector<8x8xf32>
    %365 = tpu.matmul %362, %363, %cst_100 {dimension_numbers = #tpu.dot_dimension_numbers<[1], [1], [0], [0], [0, 0, 1, 0], [], []>} : vector<8x32xbf16>, vector<8x32xbf16>, vector<8x8xf32> -> vector<8x8xf32>
    %cst_101 = arith.constant 0.176776692 : f32
    %366 = vector.broadcast %cst_101 : f32 to vector<8x8xf32>
    %367 = arith.mulf %365, %366 : vector<8x8xf32>
    %cst_102 = arith.constant dense<0xFF800000> : vector<8xf32>
    %368 = vector.multi_reduction <maximumf>, %367, %cst_102 [1] : vector<8x8xf32> to vector<8xf32>
    %369 = vector.shape_cast %368 : vector<8xf32> to vector<8x1xf32>
    %370 = vector.broadcast %369 : vector<8x1xf32> to vector<8x8xf32>
    %371 = arith.subf %367, %370 : vector<8x8xf32>
    %372 = math.exp %371 : vector<8x8xf32>
    %cst_103 = arith.constant dense<0.000000e+00> : vector<8xf32>
    %373 = vector.multi_reduction <add>, %372, %cst_103 [1] : vector<8x8xf32> to vector<8xf32>
    %374 = vector.shape_cast %373 : vector<8xf32> to vector<8x1xf32>
    %375 = tpu.reciprocal %374 {approx = true} : vector<8x1xf32> -> vector<8x1xf32>
    %376 = vector.broadcast %375 : vector<8x1xf32> to vector<8x8xf32>
    %377 = arith.mulf %372, %376 : vector<8x8xf32>
    %378 = arith.truncf %377 : vector<8x8xf32> to vector<8x8xbf16>
    %cst_104 = arith.constant dense<0.000000e+00> : vector<8x32xf32>
    %379 = tpu.matmul %378, %364, %cst_104 {dimension_numbers = #tpu.dot_dimension_numbers<[1], [0], [0], [1], [0, 0, 1, 1], [], []>} : vector<8x8xbf16>, vector<8x32xbf16>, vector<8x32xf32> -> vector<8x32xf32>
    %380 = vector.extract_strided_slice %231 {offsets = [0, 256], sizes = [8, 32], strides = [1, 1]} : vector<8x384xbf16> to vector<8x32xbf16>
    %381 = vector.extract_strided_slice %233 {offsets = [0, 256], sizes = [8, 32], strides = [1, 1]} : vector<8x384xbf16> to vector<8x32xbf16>
    %382 = vector.extract_strided_slice %235 {offsets = [0, 256], sizes = [8, 32], strides = [1, 1]} : vector<8x384xbf16> to vector<8x32xbf16>
    %cst_105 = arith.constant dense<0.000000e+00> : vector<8x8xf32>
    %383 = tpu.matmul %380, %381, %cst_105 {dimension_numbers = #tpu.dot_dimension_numbers<[1], [1], [0], [0], [0, 0, 1, 0], [], []>} : vector<8x32xbf16>, vector<8x32xbf16>, vector<8x8xf32> -> vector<8x8xf32>
    %cst_106 = arith.constant 0.176776692 : f32
    %384 = vector.broadcast %cst_106 : f32 to vector<8x8xf32>
    %385 = arith.mulf %383, %384 : vector<8x8xf32>
    %cst_107 = arith.constant dense<0xFF800000> : vector<8xf32>
    %386 = vector.multi_reduction <maximumf>, %385, %cst_107 [1] : vector<8x8xf32> to vector<8xf32>
    %387 = vector.shape_cast %386 : vector<8xf32> to vector<8x1xf32>
    %388 = vector.broadcast %387 : vector<8x1xf32> to vector<8x8xf32>
    %389 = arith.subf %385, %388 : vector<8x8xf32>
    %390 = math.exp %389 : vector<8x8xf32>
    %cst_108 = arith.constant dense<0.000000e+00> : vector<8xf32>
    %391 = vector.multi_reduction <add>, %390, %cst_108 [1] : vector<8x8xf32> to vector<8xf32>
    %392 = vector.shape_cast %391 : vector<8xf32> to vector<8x1xf32>
    %393 = tpu.reciprocal %392 {approx = true} : vector<8x1xf32> -> vector<8x1xf32>
    %394 = vector.broadcast %393 : vector<8x1xf32> to vector<8x8xf32>
    %395 = arith.mulf %390, %394 : vector<8x8xf32>
    %396 = arith.truncf %395 : vector<8x8xf32> to vector<8x8xbf16>
    %cst_109 = arith.constant dense<0.000000e+00> : vector<8x32xf32>
    %397 = tpu.matmul %396, %382, %cst_109 {dimension_numbers = #tpu.dot_dimension_numbers<[1], [0], [0], [1], [0, 0, 1, 1], [], []>} : vector<8x8xbf16>, vector<8x32xbf16>, vector<8x32xf32> -> vector<8x32xf32>
    %398 = vector.extract_strided_slice %231 {offsets = [0, 288], sizes = [8, 32], strides = [1, 1]} : vector<8x384xbf16> to vector<8x32xbf16>
    %399 = vector.extract_strided_slice %233 {offsets = [0, 288], sizes = [8, 32], strides = [1, 1]} : vector<8x384xbf16> to vector<8x32xbf16>
    %400 = vector.extract_strided_slice %235 {offsets = [0, 288], sizes = [8, 32], strides = [1, 1]} : vector<8x384xbf16> to vector<8x32xbf16>
    %cst_110 = arith.constant dense<0.000000e+00> : vector<8x8xf32>
    %401 = tpu.matmul %398, %399, %cst_110 {dimension_numbers = #tpu.dot_dimension_numbers<[1], [1], [0], [0], [0, 0, 1, 0], [], []>} : vector<8x32xbf16>, vector<8x32xbf16>, vector<8x8xf32> -> vector<8x8xf32>
    %cst_111 = arith.constant 0.176776692 : f32
    %402 = vector.broadcast %cst_111 : f32 to vector<8x8xf32>
    %403 = arith.mulf %401, %402 : vector<8x8xf32>
    %cst_112 = arith.constant dense<0xFF800000> : vector<8xf32>
    %404 = vector.multi_reduction <maximumf>, %403, %cst_112 [1] : vector<8x8xf32> to vector<8xf32>
    %405 = vector.shape_cast %404 : vector<8xf32> to vector<8x1xf32>
    %406 = vector.broadcast %405 : vector<8x1xf32> to vector<8x8xf32>
    %407 = arith.subf %403, %406 : vector<8x8xf32>
    %408 = math.exp %407 : vector<8x8xf32>
    %cst_113 = arith.constant dense<0.000000e+00> : vector<8xf32>
    %409 = vector.multi_reduction <add>, %408, %cst_113 [1] : vector<8x8xf32> to vector<8xf32>
    %410 = vector.shape_cast %409 : vector<8xf32> to vector<8x1xf32>
    %411 = tpu.reciprocal %410 {approx = true} : vector<8x1xf32> -> vector<8x1xf32>
    %412 = vector.broadcast %411 : vector<8x1xf32> to vector<8x8xf32>
    %413 = arith.mulf %408, %412 : vector<8x8xf32>
    %414 = arith.truncf %413 : vector<8x8xf32> to vector<8x8xbf16>
    %cst_114 = arith.constant dense<0.000000e+00> : vector<8x32xf32>
    %415 = tpu.matmul %414, %400, %cst_114 {dimension_numbers = #tpu.dot_dimension_numbers<[1], [0], [0], [1], [0, 0, 1, 1], [], []>} : vector<8x8xbf16>, vector<8x32xbf16>, vector<8x32xf32> -> vector<8x32xf32>
    %416 = vector.extract_strided_slice %231 {offsets = [0, 320], sizes = [8, 32], strides = [1, 1]} : vector<8x384xbf16> to vector<8x32xbf16>
    %417 = vector.extract_strided_slice %233 {offsets = [0, 320], sizes = [8, 32], strides = [1, 1]} : vector<8x384xbf16> to vector<8x32xbf16>
    %418 = vector.extract_strided_slice %235 {offsets = [0, 320], sizes = [8, 32], strides = [1, 1]} : vector<8x384xbf16> to vector<8x32xbf16>
    %cst_115 = arith.constant dense<0.000000e+00> : vector<8x8xf32>
    %419 = tpu.matmul %416, %417, %cst_115 {dimension_numbers = #tpu.dot_dimension_numbers<[1], [1], [0], [0], [0, 0, 1, 0], [], []>} : vector<8x32xbf16>, vector<8x32xbf16>, vector<8x8xf32> -> vector<8x8xf32>
    %cst_116 = arith.constant 0.176776692 : f32
    %420 = vector.broadcast %cst_116 : f32 to vector<8x8xf32>
    %421 = arith.mulf %419, %420 : vector<8x8xf32>
    %cst_117 = arith.constant dense<0xFF800000> : vector<8xf32>
    %422 = vector.multi_reduction <maximumf>, %421, %cst_117 [1] : vector<8x8xf32> to vector<8xf32>
    %423 = vector.shape_cast %422 : vector<8xf32> to vector<8x1xf32>
    %424 = vector.broadcast %423 : vector<8x1xf32> to vector<8x8xf32>
    %425 = arith.subf %421, %424 : vector<8x8xf32>
    %426 = math.exp %425 : vector<8x8xf32>
    %cst_118 = arith.constant dense<0.000000e+00> : vector<8xf32>
    %427 = vector.multi_reduction <add>, %426, %cst_118 [1] : vector<8x8xf32> to vector<8xf32>
    %428 = vector.shape_cast %427 : vector<8xf32> to vector<8x1xf32>
    %429 = tpu.reciprocal %428 {approx = true} : vector<8x1xf32> -> vector<8x1xf32>
    %430 = vector.broadcast %429 : vector<8x1xf32> to vector<8x8xf32>
    %431 = arith.mulf %426, %430 : vector<8x8xf32>
    %432 = arith.truncf %431 : vector<8x8xf32> to vector<8x8xbf16>
    %cst_119 = arith.constant dense<0.000000e+00> : vector<8x32xf32>
    %433 = tpu.matmul %432, %418, %cst_119 {dimension_numbers = #tpu.dot_dimension_numbers<[1], [0], [0], [1], [0, 0, 1, 1], [], []>} : vector<8x8xbf16>, vector<8x32xbf16>, vector<8x32xf32> -> vector<8x32xf32>
    %434 = vector.extract_strided_slice %231 {offsets = [0, 352], sizes = [8, 32], strides = [1, 1]} : vector<8x384xbf16> to vector<8x32xbf16>
    %435 = vector.extract_strided_slice %233 {offsets = [0, 352], sizes = [8, 32], strides = [1, 1]} : vector<8x384xbf16> to vector<8x32xbf16>
    %436 = vector.extract_strided_slice %235 {offsets = [0, 352], sizes = [8, 32], strides = [1, 1]} : vector<8x384xbf16> to vector<8x32xbf16>
    %cst_120 = arith.constant dense<0.000000e+00> : vector<8x8xf32>
    %437 = tpu.matmul %434, %435, %cst_120 {dimension_numbers = #tpu.dot_dimension_numbers<[1], [1], [0], [0], [0, 0, 1, 0], [], []>} : vector<8x32xbf16>, vector<8x32xbf16>, vector<8x8xf32> -> vector<8x8xf32>
    %cst_121 = arith.constant 0.176776692 : f32
    %438 = vector.broadcast %cst_121 : f32 to vector<8x8xf32>
    %439 = arith.mulf %437, %438 : vector<8x8xf32>
    %cst_122 = arith.constant dense<0xFF800000> : vector<8xf32>
    %440 = vector.multi_reduction <maximumf>, %439, %cst_122 [1] : vector<8x8xf32> to vector<8xf32>
    %441 = vector.shape_cast %440 : vector<8xf32> to vector<8x1xf32>
    %442 = vector.broadcast %441 : vector<8x1xf32> to vector<8x8xf32>
    %443 = arith.subf %439, %442 : vector<8x8xf32>
    %444 = math.exp %443 : vector<8x8xf32>
    %cst_123 = arith.constant dense<0.000000e+00> : vector<8xf32>
    %445 = vector.multi_reduction <add>, %444, %cst_123 [1] : vector<8x8xf32> to vector<8xf32>
    %446 = vector.shape_cast %445 : vector<8xf32> to vector<8x1xf32>
    %447 = tpu.reciprocal %446 {approx = true} : vector<8x1xf32> -> vector<8x1xf32>
    %448 = vector.broadcast %447 : vector<8x1xf32> to vector<8x8xf32>
    %449 = arith.mulf %444, %448 : vector<8x8xf32>
    %450 = arith.truncf %449 : vector<8x8xf32> to vector<8x8xbf16>
    %cst_124 = arith.constant dense<0.000000e+00> : vector<8x32xf32>
    %451 = tpu.matmul %450, %436, %cst_124 {dimension_numbers = #tpu.dot_dimension_numbers<[1], [0], [0], [1], [0, 0, 1, 1], [], []>} : vector<8x8xbf16>, vector<8x32xbf16>, vector<8x32xf32> -> vector<8x32xf32>
    %452 = tpu.concatenate %253, %271, %289, %307, %325, %343, %361, %379, %397, %415, %433, %451 in 1 : vector<8x32xf32>, vector<8x32xf32>, vector<8x32xf32>, vector<8x32xf32>, vector<8x32xf32>, vector<8x32xf32>, vector<8x32xf32>, vector<8x32xf32>, vector<8x32xf32>, vector<8x32xf32>, vector<8x32xf32>, vector<8x32xf32> -> vector<8x384xf32>
    %453 = tpu.concatenate %229, %452 in 0 : vector<8x384xf32>, vector<8x384xf32> -> vector<16x384xf32>
    %454 = arith.truncf %453 : vector<16x384xf32> to vector<16x384xbf16>
    %c0_125 = arith.constant 0 : index
    %c0_126 = arith.constant 0 : index
    %455 = vector.load %arg3[%c0_125, %c0_126] : memref<384x384xbf16, #tpu.memory_space<vmem>>, vector<384x384xbf16>
    %cst_127 = arith.constant dense<0.000000e+00> : vector<16x384xf32>
    %456 = tpu.matmul %454, %455, %cst_127 {dimension_numbers = #tpu.dot_dimension_numbers<[1], [0], [0], [1], [0, 0, 1, 1], [], []>} : vector<16x384xbf16>, vector<384x384xbf16>, vector<16x384xf32> -> vector<16x384xf32>
    %457 = arith.addf %0, %456 : vector<16x384xf32>
    %c0_128 = arith.constant 0 : index
    %c0_129 = arith.constant 0 : index
    %458 = vector.load %arg4[%c0_128, %c0_129] : memref<1x384xf32, #tpu.memory_space<vmem>>, vector<1x384xf32>
    %459 = vector.broadcast %458 : vector<1x384xf32> to vector<16x384xf32>
    %460 = arith.addf %457, %459 : vector<16x384xf32>
    %c0_130 = arith.constant 0 : index
    %c0_131 = arith.constant 0 : index
    %461 = vector.load %arg9[%c0_130, %c0_131] : memref<1x384xf32, #tpu.memory_space<vmem>>, vector<1x384xf32>
    %c0_132 = arith.constant 0 : index
    %c0_133 = arith.constant 0 : index
    %462 = vector.load %arg10[%c0_132, %c0_133] : memref<1x384xf32, #tpu.memory_space<vmem>>, vector<1x384xf32>
    %cst_134 = arith.constant dense<0.000000e+00> : vector<16xf32>
    %463 = vector.multi_reduction <add>, %460, %cst_134 [1] : vector<16x384xf32> to vector<16xf32>
    %464 = vector.shape_cast %463 : vector<16xf32> to vector<16x1xf32>
    %cst_135 = arith.constant 3.840000e+02 : f32
    %465 = vector.broadcast %cst_135 : f32 to vector<16x1xf32>
    %466 = arith.divf %464, %465 : vector<16x1xf32>
    %467 = vector.broadcast %466 : vector<16x1xf32> to vector<16x384xf32>
    %468 = arith.subf %460, %467 : vector<16x384xf32>
    %469 = arith.mulf %468, %468 : vector<16x384xf32>
    %cst_136 = arith.constant dense<0.000000e+00> : vector<16xf32>
    %470 = vector.multi_reduction <add>, %469, %cst_136 [1] : vector<16x384xf32> to vector<16xf32>
    %471 = vector.shape_cast %470 : vector<16xf32> to vector<16x1xf32>
    %cst_137 = arith.constant 3.840000e+02 : f32
    %472 = vector.broadcast %cst_137 : f32 to vector<16x1xf32>
    %473 = arith.divf %471, %472 : vector<16x1xf32>
    %cst_138 = arith.constant 9.99999974E-6 : f32
    %474 = vector.broadcast %cst_138 : f32 to vector<16x1xf32>
    %475 = arith.addf %473, %474 : vector<16x1xf32>
    %476 = math.rsqrt %475 : vector<16x1xf32>
    %477 = vector.broadcast %476 : vector<16x1xf32> to vector<16x384xf32>
    %478 = arith.mulf %468, %477 : vector<16x384xf32>
    %479 = vector.broadcast %461 : vector<1x384xf32> to vector<16x384xf32>
    %480 = arith.mulf %478, %479 : vector<16x384xf32>
    %481 = vector.broadcast %462 : vector<1x384xf32> to vector<16x384xf32>
    %482 = arith.addf %480, %481 : vector<16x384xf32>
    %483 = arith.truncf %482 : vector<16x384xf32> to vector<16x384xbf16>
    %c0_139 = arith.constant 0 : index
    %c0_140 = arith.constant 0 : index
    %484 = vector.load %arg5[%c0_139, %c0_140] : memref<384x1536xbf16, #tpu.memory_space<vmem>>, vector<384x1536xbf16>
    %cst_141 = arith.constant dense<0.000000e+00> : vector<16x1536xf32>
    %485 = tpu.matmul %483, %484, %cst_141 {dimension_numbers = #tpu.dot_dimension_numbers<[1], [0], [0], [1], [0, 0, 1, 1], [], []>} : vector<16x384xbf16>, vector<384x1536xbf16>, vector<16x1536xf32> -> vector<16x1536xf32>
    %c0_142 = arith.constant 0 : index
    %c0_143 = arith.constant 0 : index
    %486 = vector.load %arg6[%c0_142, %c0_143] : memref<1x1536xf32, #tpu.memory_space<vmem>>, vector<1x1536xf32>
    %487 = vector.broadcast %486 : vector<1x1536xf32> to vector<16x1536xf32>
    %488 = arith.addf %485, %487 : vector<16x1536xf32>
    %cst_144 = arith.constant 5.000000e-01 : f32
    %489 = vector.broadcast %cst_144 : f32 to vector<16x1536xf32>
    %490 = arith.mulf %489, %488 : vector<16x1536xf32>
    %cst_145 = arith.constant 0.707106769 : f32
    %491 = vector.broadcast %cst_145 : f32 to vector<16x1536xf32>
    %492 = arith.mulf %488, %491 : vector<16x1536xf32>
    %493 = math.erf %492 : vector<16x1536xf32>
    %cst_146 = arith.constant 1.000000e+00 : f32
    %494 = vector.broadcast %cst_146 : f32 to vector<16x1536xf32>
    %495 = arith.addf %494, %493 : vector<16x1536xf32>
    %496 = arith.mulf %490, %495 : vector<16x1536xf32>
    %497 = arith.truncf %496 : vector<16x1536xf32> to vector<16x1536xbf16>
    %c0_147 = arith.constant 0 : index
    %c0_148 = arith.constant 0 : index
    %498 = vector.load %arg7[%c0_147, %c0_148] : memref<1536x384xbf16, #tpu.memory_space<vmem>>, vector<1536x384xbf16>
    %cst_149 = arith.constant dense<0.000000e+00> : vector<16x384xf32>
    %499 = tpu.matmul %497, %498, %cst_149 {dimension_numbers = #tpu.dot_dimension_numbers<[1], [0], [0], [1], [0, 0, 1, 1], [], []>} : vector<16x1536xbf16>, vector<1536x384xbf16>, vector<16x384xf32> -> vector<16x384xf32>
    %500 = arith.addf %460, %499 : vector<16x384xf32>
    %c0_150 = arith.constant 0 : index
    %c0_151 = arith.constant 0 : index
    %501 = vector.load %arg8[%c0_150, %c0_151] : memref<1x384xf32, #tpu.memory_space<vmem>>, vector<1x384xf32>
    %502 = vector.broadcast %501 : vector<1x384xf32> to vector<16x384xf32>
    %503 = arith.addf %500, %502 : vector<16x384xf32>
    %c0_152 = arith.constant 0 : index
    %c0_153 = arith.constant 0 : index
    %504 = vector.load %arg11[%c0_152, %c0_153] : memref<1x384xf32, #tpu.memory_space<vmem>>, vector<1x384xf32>
    %c0_154 = arith.constant 0 : index
    %c0_155 = arith.constant 0 : index
    %505 = vector.load %arg12[%c0_154, %c0_155] : memref<1x384xf32, #tpu.memory_space<vmem>>, vector<1x384xf32>
    %cst_156 = arith.constant dense<0.000000e+00> : vector<16xf32>
    %506 = vector.multi_reduction <add>, %503, %cst_156 [1] : vector<16x384xf32> to vector<16xf32>
    %507 = vector.shape_cast %506 : vector<16xf32> to vector<16x1xf32>
    %cst_157 = arith.constant 3.840000e+02 : f32
    %508 = vector.broadcast %cst_157 : f32 to vector<16x1xf32>
    %509 = arith.divf %507, %508 : vector<16x1xf32>
    %510 = vector.broadcast %509 : vector<16x1xf32> to vector<16x384xf32>
    %511 = arith.subf %503, %510 : vector<16x384xf32>
    %512 = arith.mulf %511, %511 : vector<16x384xf32>
    %cst_158 = arith.constant dense<0.000000e+00> : vector<16xf32>
    %513 = vector.multi_reduction <add>, %512, %cst_158 [1] : vector<16x384xf32> to vector<16xf32>
    %514 = vector.shape_cast %513 : vector<16xf32> to vector<16x1xf32>
    %cst_159 = arith.constant 3.840000e+02 : f32
    %515 = vector.broadcast %cst_159 : f32 to vector<16x1xf32>
    %516 = arith.divf %514, %515 : vector<16x1xf32>
    %cst_160 = arith.constant 9.99999974E-6 : f32
    %517 = vector.broadcast %cst_160 : f32 to vector<16x1xf32>
    %518 = arith.addf %516, %517 : vector<16x1xf32>
    %519 = math.rsqrt %518 : vector<16x1xf32>
    %520 = vector.broadcast %519 : vector<16x1xf32> to vector<16x384xf32>
    %521 = arith.mulf %511, %520 : vector<16x384xf32>
    %522 = vector.broadcast %504 : vector<1x384xf32> to vector<16x384xf32>
    %523 = arith.mulf %521, %522 : vector<16x384xf32>
    %524 = vector.broadcast %505 : vector<1x384xf32> to vector<16x384xf32>
    %525 = arith.addf %523, %524 : vector<16x384xf32>
    %c0_161 = arith.constant 0 : index
    %c0_162 = arith.constant 0 : index
    %526 = vector.load %arg13[%c0_161, %c0_162] : memref<16x384xf32, #tpu.memory_space<vmem>>, vector<16x384xf32>
    tpu.vector_store %arg13[%c0_161, %c0_162], %525 {strides = array<i32>} : memref<16x384xf32, #tpu.memory_space<vmem>>, vector<16x384xf32>,
    return
  }
}

</mosaic_0001>

<llo_original>
// kernel: block_forward.1
$region0: #{block_forward.1}
  #allocation0 [shape = 'u32[]', space=smem, size = 0x4, offset = 0x4, fixed_abs, tag = 'smem constant byte address 0x4 - core index']
  #allocation1 [shape = 'u32[144,128]{1,0:T(1,128)}', space=vmem, size = 0x12000, scoped, tag = 'internal scratch']
  %s0 = inlined_call_operand.hbm [shape: f32[16,384], index: 0, kind: input, shape index: {}]
  %s1 = inlined_call_operand.hbm [shape: bf16[384,1152], index: 1, kind: input, shape index: {}]
  %s2 = inlined_call_operand.vmem [shape: f32[1,1152], index: 2, kind: input, shape index: {}]
  %s3 = inlined_call_operand.hbm [shape: bf16[384,384], index: 3, kind: input, shape index: {}]
  %s4 = inlined_call_operand.vmem [shape: f32[1,384], index: 4, kind: input, shape index: {}]
  %s5 = inlined_call_operand.hbm [shape: bf16[384,1536], index: 5, kind: input, shape index: {}]
  %s6 = inlined_call_operand.vmem [shape: f32[1,1536], index: 6, kind: input, shape index: {}]
  %s7 = inlined_call_operand.hbm [shape: bf16[1536,384], index: 7, kind: input, shape index: {}]
  %s8 = inlined_call_operand.vmem [shape: f32[1,384], index: 8, kind: input, shape index: {}]
  %s9 = inlined_call_operand.vmem [shape: f32[1,384], index: 9, kind: input, shape index: {}]
  %s10 = inlined_call_operand.vmem [shape: f32[1,384], index: 10, kind: input, shape index: {}]
  %s11 = inlined_call_operand.vmem [shape: f32[1,384], index: 11, kind: input, shape index: {}]
  %s12 = inlined_call_operand.vmem [shape: f32[1,384], index: 12, kind: input, shape index: {}]
  %s13 = inlined_call_operand.hbm [shape: f32[16,384], index: 13, kind: output, shape index: {}]
  %s14 = sld [smem:[#allocation0]]
  $region82: #{block_forward.1} parent=0
    _
  %s16 = ssub.s32 1, %s14
  %s17 = scalar_select 0, %s16, %s14
  $region1: #{block_forward.1} parent=0
    #allocation2 [shape = 'u8[24576]{0}', space=vmem, size = 0x6000, scoped, tag = 'input window, operand 0, single buffered']
    #allocation3 [shape = 's32[1]{0}', space=sflag, size = 0x4, scoped, tag = 'scoped memory for block_forward.1']
    #allocation4 [shape = 's32[1]{0}', space=sflag, size = 0x4, scoped, tag = 'scoped memory for block_forward.1']
    #allocation5 [shape = 'u8[884736]{0}', space=vmem, size = 0xd8000, scoped, tag = 'input window, operand 1, single buffered']
    #allocation6 [shape = 's32[1]{0}', space=sflag, size = 0x4, scoped, tag = 'scoped memory for block_forward.1']
    #allocation7 [shape = 'u8[294912]{0}', space=vmem, size = 0x48000, scoped, tag = 'input window, operand 3, single buffered']
    #allocation8 [shape = 'u8[1179648]{0}', space=vmem, size = 0x120000, scoped, tag = 'input window, operand 5, single buffered']
    #allocation9 [shape = 's32[1]{0}', space=sflag, size = 0x4, scoped, tag = 'scoped memory for block_forward.1']
    #allocation10 [shape = 'u8[1179648]{0}', space=vmem, size = 0x120000, scoped, tag = 'input window, operand 7, single buffered']
    #allocation11 [shape = 'u8[24576]{0}', space=vmem, size = 0x6000, scoped, tag = 'output window, operand 0, single buffered']
    %18 = vsyncpa [#allocation3], 0
    %19 = vsyncpa [#allocation6], 0
    %20 = vsyncpa [#allocation9], 0
    %21 = vsyncpa [#allocation4], 0
    // Predicated region
    $region2: #{block_forward.1} parent=1 // pred_check
      _
    $region3: #{block_forward.1} parent=1 // pred_check_branch
      %23 = sbr.rel (0) target = $region5
    $region4: #{block_forward.1} parent=1 // pred_region
      %s25 = ssub.s32 768, 768
      %26 = vsyncadd [#allocation3], %s25
      %s27 = sshll.u32 [#allocation2], 4
      %s28 = int_to_ptr.vmem [resolvable:$true] %s27
      %33 = dma.hbm_to_vmem [thread:$0]  %s0, 768, %s28, [#allocation3], 384, 384, 24
    $region5: #{block_forward.1} parent=1 // pred_fallthru
      _
    // Predicated region
    $region6: #{block_forward.1} parent=1 // pred_check
      _
    $region7: #{block_forward.1} parent=1 // pred_check_branch
      %35 = sbr.rel (0) target = $region9
    $region8: #{block_forward.1} parent=1 // pred_region
      %s37 = ssub.s32 27648, 27648
      %38 = vsyncadd [#allocation6], %s37
      %s39 = sshll.u32 [#allocation5], 4
      %s40 = int_to_ptr.vmem [resolvable:$true] %s39
      %45 = dma.hbm_to_vmem [thread:$0]  %s1, 27648, %s40, [#allocation6], 576, 576, 36
    $region9: #{block_forward.1} parent=1 // pred_fallthru
      _
    // Predicated region
    $region10: #{block_forward.1} parent=1 // pred_check
      _
    $region11: #{block_forward.1} parent=1 // pred_check_branch
      %47 = sbr.rel (0) target = $region13
    $region12: #{block_forward.1} parent=1 // pred_region
      _
    $region13: #{block_forward.1} parent=1 // pred_fallthru
      _
    // Predicated region
    $region14: #{block_forward.1} parent=1 // pred_check
      _
    $region15: #{block_forward.1} parent=1 // pred_check_branch
      %49 = sbr.rel (0) target = $region17
    $region16: #{block_forward.1} parent=1 // pred_region
      %s51 = ssub.s32 9216, 9216
      %52 = vsyncadd [#allocation6], %s51
      %s53 = sshll.u32 [#allocation7], 4
      %s54 = int_to_ptr.vmem [resolvable:$true] %s53
      %59 = dma.hbm_to_vmem [thread:$0]  %s3, 9216, %s54, [#allocation6], 192, 192, 12
    $region17: #{block_forward.1} parent=1 // pred_fallthru
      _
    // Predicated region
    $region18: #{block_forward.1} parent=1 // pred_check
      _
    $region19: #{block_forward.1} parent=1 // pred_check_branch
      %61 = sbr.rel (0) target = $region21
    $region20: #{block_forward.1} parent=1 // pred_region
      _
    $region21: #{block_forward.1} parent=1 // pred_fallthru
      _
    // Predicated region
    $region22: #{block_forward.1} parent=1 // pred_check
      _
    $region23: #{block_forward.1} parent=1 // pred_check_branch
      %63 = sbr.rel (0) target = $region25
    $region24: #{block_forward.1} parent=1 // pred_region
      %s65 = ssub.s32 36864, 36864
      %66 = vsyncadd [#allocation9], %s65
      %s67 = sshll.u32 [#allocation8], 4
      %s68 = int_to_ptr.vmem [resolvable:$true] %s67
      %73 = dma.hbm_to_vmem [thread:$0]  %s5, 36864, %s68, [#allocation9], 768, 768, 48
    $region25: #{block_forward.1} parent=1 // pred_fallthru
      _
    // Predicated region
    $region26: #{block_forward.1} parent=1 // pred_check
      _
    $region27: #{block_forward.1} parent=1 // pred_check_branch
      %75 = sbr.rel (0) target = $region29
    $region28: #{block_forward.1} parent=1 // pred_region
      _
    $region29: #{block_forward.1} parent=1 // pred_fallthru
      _
    // Predicated region
    $region30: #{block_forward.1} parent=1 // pred_check
      _
    $region31: #{block_forward.1} parent=1 // pred_check_branch
      %77 = sbr.rel (0) target = $region33
    $region32: #{block_forward.1} parent=1 // pred_region
      %s79 = ssub.s32 36864, 36864
      %80 = vsyncadd [#allocation9], %s79
      %s81 = sshll.u32 [#allocation10], 4
      %s82 = int_to_ptr.vmem [resolvable:$true] %s81
      %87 = dma.hbm_to_vmem [thread:$0]  %s7, 36864, %s82, [#allocation9], 192, 192, 12
    $region33: #{block_forward.1} parent=1 // pred_fallthru
      _
    // Predicated region
    $region34: #{block_forward.1} parent=1 // pred_check
      _
    $region35: #{block_forward.1} parent=1 // pred_check_branch
      %89 = sbr.rel (0) target = $region37
    $region36: #{block_forward.1} parent=1 // pred_region
      _
    $region37: #{block_forward.1} parent=1 // pred_fallthru
      _
    // Predicated region
    $region38: #{block_forward.1} parent=1 // pred_check
      _
    $region39: #{block_forward.1} parent=1 // pred_check_branch
      %91 = sbr.rel (0) target = $region41
    $region40: #{block_forward.1} parent=1 // pred_region
      _
    $region41: #{block_forward.1} parent=1 // pred_fallthru
      _
    // Predicated region
    $region42: #{block_forward.1} parent=1 // pred_check
      _
    $region43: #{block_forward.1} parent=1 // pred_check_branch
      %93 = sbr.rel (0) target = $region45
    $region44: #{block_forward.1} parent=1 // pred_region
      _
    $region45: #{block_forward.1} parent=1 // pred_fallthru
      _
    // Predicated region
    $region46: #{block_forward.1} parent=1 // pred_check
      _
    $region47: #{block_forward.1} parent=1 // pred_check_branch
      %95 = sbr.rel (0) target = $region49
    $region48: #{block_forward.1} parent=1 // pred_region
      _
    $region49: #{block_forward.1} parent=1 // pred_fallthru
      _
    // Predicated region
    $region50: #{block_forward.1} parent=1 // pred_check
      _
    $region51: #{block_forward.1} parent=1 // pred_check_branch
      %97 = sbr.rel (0) target = $region53
    $region52: #{block_forward.1} parent=1 // pred_region
      _
    $region53: #{block_forward.1} parent=1 // pred_fallthru
      _
    // Predicated region
    $region54: #{block_forward.1} parent=1 // pred_check
      _
    $region55: #{block_forward.1} parent=1 // pred_check_branch
      %99 = sbr.rel (0) target = $region57
    $region56: #{block_forward.1} parent=1 // pred_region
      %100 = dma.done [#allocation3], 768
    $region57: #{block_forward.1} parent=1 // pred_fallthru
      _
    // Predicated region
    $region58: #{block_forward.1} parent=1 // pred_check
      _
    $region59: #{block_forward.1} parent=1 // pred_check_branch
      %102 = sbr.rel (0) target = $region61
    $region60: #{block_forward.1} parent=1 // pred_region
      %103 = dma.done [#allocation6], 27648
    $region61: #{block_forward.1} parent=1 // pred_fallthru
      _
    // Predicated region
    $region62: #{block_forward.1} parent=1 // pred_check
      _
    $region63: #{block_forward.1} parent=1 // pred_check_branch
      %105 = sbr.rel (0) target = $region65
    $region64: #{block_forward.1} parent=1 // pred_region
      %106 = dma.done [#allocation6], 9216
    $region65: #{block_forward.1} parent=1 // pred_fallthru
      _
    // Predicated region
    $region66: #{block_forward.1} parent=1 // pred_check
      _
    $region67: #{block_forward.1} parent=1 // pred_check_branch
      %108 = sbr.rel (0) target = $region69
    $region68: #{block_forward.1} parent=1 // pred_region
      %109 = dma.done [#allocation9], 36864
    $region69: #{block_forward.1} parent=1 // pred_fallthru
      _
    // Predicated region
    $region70: #{block_forward.1} parent=1 // pred_check
      _
    $region71: #{block_forward.1} parent=1 // pred_check_branch
      %111 = sbr.rel (0) target = $region73
    $region72: #{block_forward.1} parent=1 // pred_region
      %112 = dma.done [#allocation9], 36864
    $region73: #{block_forward.1} parent=1 // pred_fallthru
      _
    %v114 = vld [vmem:[#allocation2] sm:$0xff]
    %v115 = vld [vmem:[#allocation2 + $0x8] sm:$0xff]
    %v116 = vld [vmem:[#allocation2 + $0x10] sm:$0xff]
    %v117 = vld [vmem:[#allocation2 + $0x18] sm:$0xff]
    %v118 = vld [vmem:[#allocation2 + $0x20] sm:$0xff]
    %v119 = vld [vmem:[#allocation2 + $0x28] sm:$0xff]
    %v120 = vpack.c.bf16 %v117, %v114
    %v121 = vpack.c.bf16 %v118, %v115
    %v122 = vpack.c.bf16 %v119, %v116
    %v123 = vld [vmem:[#allocation5] sm:$0xff]
    %v124 = vld [vmem:[#allocation5 + $0x8] sm:$0xff]
    %v125 = vld [vmem:[#allocation5 + $0x10] sm:$0xff]
    %v126 = vld [vmem:[#allocation5 + $0x18] sm:$0xff]
    %v127 = vld [vmem:[#allocation5 + $0x20] sm:$0xf]
    %v128 = vld [vmem:[#allocation5 + $0x24] sm:$0xff]
    %v129 = vld [vmem:[#allocation5 + $0x2c] sm:$0xff]
    %v130 = vld [vmem:[#allocation5 + $0x34] sm:$0xff]
    %v131 = vld [vmem:[#allocation5 + $0x3c] sm:$0xff]
    %v132 = vld [vmem:[#allocation5 + $0x44] sm:$0xf]
    %v133 = vld [vmem:[#allocation5 + $0x48] sm:$0xff]
    %v134 = vld [vmem:[#allocation5 + $0x50] sm:$0xff]
    %v135 = vld [vmem:[#allocation5 + $0x58] sm:$0xff]
    %v136 = vld [vmem:[#allocation5 + $0x60] sm:$0xff]
    %v137 = vld [vmem:[#allocation5 + $0x68] sm:$0xf]
    %v138 = vld [vmem:[#allocation5 + $0x6c] sm:$0xff]
    %v139 = vld [vmem:[#allocation5 + $0x74] sm:$0xff]
    %v140 = vld [vmem:[#allocation5 + $0x7c] sm:$0xff]
    %v141 = vld [vmem:[#allocation5 + $0x84] sm:$0xff]
    %v142 = vld [vmem:[#allocation5 + $0x8c] sm:$0xf]
    %v143 = vld [vmem:[#allocation5 + $0x90] sm:$0xff]
    %v144 = vld [vmem:[#allocation5 + $0x98] sm:$0xff]
    %v145 = vld [vmem:[#allocation5 + $0xa0] sm:$0xff]
    %v146 = vld [vmem:[#allocation5 + $0xa8] sm:$0xff]
    %v147 = vld [vmem:[#allocation5 + $0xb0] sm:$0xf]
    %v148 = vld [vmem:[#allocation5 + $0xb4] sm:$0xff]
    %v149 = vld [vmem:[#allocation5 + $0xbc] sm:$0xff]
    %v150 = vld [vmem:[#allocation5 + $0xc4] sm:$0xff]
    %v151 = vld [vmem:[#allocation5 + $0xcc] sm:$0xff]
    %v152 = vld [vmem:[#allocation5 + $0xd4] sm:$0xf]
    %v153 = vld [vmem:[#allocation5 + $0xd8] sm:$0xff]
    %v154 = vld [vmem:[#allocation5 + $0xe0] sm:$0xff]
    %v155 = vld [vmem:[#allocation5 + $0xe8] sm:$0xff]
    %v156 = vld [vmem:[#allocation5 + $0xf0] sm:$0xff]
    %v157 = vld [vmem:[#allocation5 + $0xf8] sm:$0xf]
    %v158 = vld [vmem:[#allocation5 + $0xfc] sm:$0xff]
    %v159 = vld [vmem:[#allocation5 + $0x104] sm:$0xff]
    %v160 = vld [vmem:[#allocation5 + $0x10c] sm:$0xff]
    %v161 = vld [vmem:[#allocation5 + $0x114] sm:$0xff]
    %v162 = vld [vmem:[#allocation5 + $0x11c] sm:$0xf]
    %v163 = vld [vmem:[#allocation5 + $0x120] sm:$0xff]
    %v164 = vld [vmem:[#allocation5 + $0x128] sm:$0xff]
    %v165 = vld [vmem:[#allocation5 + $0x130] sm:$0xff]
    %v166 = vld [vmem:[#allocation5 + $0x138] sm:$0xff]
    %v167 = vld [vmem:[#allocation5 + $0x140] sm:$0xf]
    %v168 = vld [vmem:[#allocation5 + $0x144] sm:$0xff]
    %v169 = vld [vmem:[#allocation5 + $0x14c] sm:$0xff]
    %v170 = vld [vmem:[#allocation5 + $0x154] sm:$0xff]
    %v171 = vld [vmem:[#allocation5 + $0x15c] sm:$0xff]
    %v172 = vld [vmem:[#allocation5 + $0x164] sm:$0xf]
    %v173 = vld [vmem:[#allocation5 + $0x168] sm:$0xff]
    %v174 = vld [vmem:[#allocation5 + $0x170] sm:$0xff]
    %v175 = vld [vmem:[#allocation5 + $0x178] sm:$0xff]
    %v176 = vld [vmem:[#allocation5 + $0x180] sm:$0xff]
    %v177 = vld [vmem:[#allocation5 + $0x188] sm:$0xf]
    %v178 = vld [vmem:[#allocation5 + $0x18c] sm:$0xff]
    %v179 = vld [vmem:[#allocation5 + $0x194] sm:$0xff]
    %v180 = vld [vmem:[#allocation5 + $0x19c] sm:$0xff]
    %v181 = vld [vmem:[#allocation5 + $0x1a4] sm:$0xff]
    %v182 = vld [vmem:[#allocation5 + $0x1ac] sm:$0xf]
    %v183 = vld [vmem:[#allocation5 + $0x1b0] sm:$0xff]
    %v184 = vld [vmem:[#allocation5 + $0x1b8] sm:$0xff]
    %v185 = vld [vmem:[#allocation5 + $0x1c0] sm:$0xff]
    %v186 = vld [vmem:[#allocation5 + $0x1c8] sm:$0xff]
    %v187 = vld [vmem:[#allocation5 + $0x1d0] sm:$0xf]
    %v188 = vld [vmem:[#allocation5 + $0x1d4] sm:$0xff]
    %v189 = vld [vmem:[#allocation5 + $0x1dc] sm:$0xff]
    %v190 = vld [vmem:[#allocation5 + $0x1e4] sm:$0xff]
    %v191 = vld [vmem:[#allocation5 + $0x1ec] sm:$0xff]
    %v192 = vld [vmem:[#allocation5 + $0x1f4] sm:$0xf]
    %v193 = vld [vmem:[#allocation5 + $0x1f8] sm:$0xff]
    %v194 = vld [vmem:[#allocation5 + $0x200] sm:$0xff]
    %v195 = vld [vmem:[#allocation5 + $0x208] sm:$0xff]
    %v196 = vld [vmem:[#allocation5 + $0x210] sm:$0xff]
    %v197 = vld [vmem:[#allocation5 + $0x218] sm:$0xf]
    %v198 = vld [vmem:[#allocation5 + $0x21c] sm:$0xff]
    %v199 = vld [vmem:[#allocation5 + $0x224] sm:$0xff]
    %v200 = vld [vmem:[#allocation5 + $0x22c] sm:$0xff]
    %v201 = vld [vmem:[#allocation5 + $0x234] sm:$0xff]
    %v202 = vld [vmem:[#allocation5 + $0x23c] sm:$0xf]
    %v203 = vld [vmem:[#allocation5 + $0x240] sm:$0xff]
    %v204 = vld [vmem:[#allocation5 + $0x248] sm:$0xff]
    %v205 = vld [vmem:[#allocation5 + $0x250] sm:$0xff]
    %v206 = vld [vmem:[#allocation5 + $0x258] sm:$0xff]
    %v207 = vld [vmem:[#allocation5 + $0x260] sm:$0xf]
    %v208 = vld [vmem:[#allocation5 + $0x264] sm:$0xff]
    %v209 = vld [vmem:[#allocation5 + $0x26c] sm:$0xff]
    %v210 = vld [vmem:[#allocation5 + $0x274] sm:$0xff]
    %v211 = vld [vmem:[#allocation5 + $0x27c] sm:$0xff]
    %v212 = vld [vmem:[#allocation5 + $0x284] sm:$0xf]
    %v213 = vld [vmem:[#allocation5 + $0x288] sm:$0xff]
    %v214 = vld [vmem:[#allocation5 + $0x290] sm:$0xff]
    %v215 = vld [vmem:[#allocation5 + $0x298] sm:$0xff]
    %v216 = vld [vmem:[#allocation5 + $0x2a0] sm:$0xff]
    %v217 = vld [vmem:[#allocation5 + $0x2a8] sm:$0xf]
    %v218 = vld [vmem:[#allocation5 + $0x2ac] sm:$0xff]
    %v219 = vld [vmem:[#allocation5 + $0x2b4] sm:$0xff]
    %v220 = vld [vmem:[#allocation5 + $0x2bc] sm:$0xff]
    %v221 = vld [vmem:[#allocation5 + $0x2c4] sm:$0xff]
    %v222 = vld [vmem:[#allocation5 + $0x2cc] sm:$0xf]
    %v223 = vld [vmem:[#allocation5 + $0x2d0] sm:$0xff]
    %v224 = vld [vmem:[#allocation5 + $0x2d8] sm:$0xff]
    %v225 = vld [vmem:[#allocation5 + $0x2e0] sm:$0xff]
    %v226 = vld [vmem:[#allocation5 + $0x2e8] sm:$0xff]
    %v227 = vld [vmem:[#allocation5 + $0x2f0] sm:$0xf]
    %v228 = vld [vmem:[#allocation5 + $0x2f4] sm:$0xff]
    %v229 = vld [vmem:[#allocation5 + $0x2fc] sm:$0xff]
    %v230 = vld [vmem:[#allocation5 + $0x304] sm:$0xff]
    %v231 = vld [vmem:[#allocation5 + $0x30c] sm:$0xff]
    %v232 = vld [vmem:[#allocation5 + $0x314] sm:$0xf]
    %v233 = vld [vmem:[#allocation5 + $0x318] sm:$0xff]
    %v234 = vld [vmem:[#allocation5 + $0x320] sm:$0xff]
    %v235 = vld [vmem:[#allocation5 + $0x328] sm:$0xff]
    %v236 = vld [vmem:[#allocation5 + $0x330] sm:$0xff]
    %v237 = vld [vmem:[#allocation5 + $0x338] sm:$0xf]
    %v238 = vld [vmem:[#allocation5 + $0x33c] sm:$0xff]
    %v239 = vld [vmem:[#allocation5 + $0x344] sm:$0xff]
    %v240 = vld [vmem:[#allocation5 + $0x34c] sm:$0xff]
    %v241 = vld [vmem:[#allocation5 + $0x354] sm:$0xff]
    %v242 = vld [vmem:[#allocation5 + $0x35c] sm:$0xf]
    %v243 = vld [vmem:[#allocation5 + $0x360] sm:$0xff]
    %v244 = vld [vmem:[#allocation5 + $0x368] sm:$0xff]
    %v245 = vld [vmem:[#allocation5 + $0x370] sm:$0xff]
    %v246 = vld [vmem:[#allocation5 + $0x378] sm:$0xff]
    %v247 = vld [vmem:[#allocation5 + $0x380] sm:$0xf]
    %v248 = vld [vmem:[#allocation5 + $0x384] sm:$0xff]
    %v249 = vld [vmem:[#allocation5 + $0x38c] sm:$0xff]
    %v250 = vld [vmem:[#allocation5 + $0x394] sm:$0xff]
    %v251 = vld [vmem:[#allocation5 + $0x39c] sm:$0xff]
    %v252 = vld [vmem:[#allocation5 + $0x3a4] sm:$0xf]
    %v253 = vld [vmem:[#allocation5 + $0x3a8] sm:$0xff]
    %v254 = vld [vmem:[#allocation5 + $0x3b0] sm:$0xff]
    %v255 = vld [vmem:[#allocation5 + $0x3b8] sm:$0xff]
    %v256 = vld [vmem:[#allocation5 + $0x3c0] sm:$0xff]
    %v257 = vld [vmem:[#allocation5 + $0x3c8] sm:$0xf]
    %v258 = vld [vmem:[#allocation5 + $0x3cc] sm:$0xff]
    %v259 = vld [vmem:[#allocation5 + $0x3d4] sm:$0xff]
    %v260 = vld [vmem:[#allocation5 + $0x3dc] sm:$0xff]
    %v261 = vld [vmem:[#allocation5 + $0x3e4] sm:$0xff]
    %v262 = vld [vmem:[#allocation5 + $0x3ec] sm:$0xf]
    %v263 = vld [vmem:[#allocation5 + $0x3f0] sm:$0xff]
    %v264 = vld [vmem:[#allocation5 + $0x3f8] sm:$0xff]
    %v265 = vld [vmem:[#allocation5 + $0x400] sm:$0xff]
    %v266 = vld [vmem:[#allocation5 + $0x408] sm:$0xff]
    %v267 = vld [vmem:[#allocation5 + $0x410] sm:$0xf]
    %v268 = vld [vmem:[#allocation5 + $0x414] sm:$0xff]
    %v269 = vld [vmem:[#allocation5 + $0x41c] sm:$0xff]
    %v270 = vld [vmem:[#allocation5 + $0x424] sm:$0xff]
    %v271 = vld [vmem:[#allocation5 + $0x42c] sm:$0xff]
    %v272 = vld [vmem:[#allocation5 + $0x434] sm:$0xf]
    %v273 = vld [vmem:[#allocation5 + $0x438] sm:$0xff]
    %v274 = vld [vmem:[#allocation5 + $0x440] sm:$0xff]
    %v275 = vld [vmem:[#allocation5 + $0x448] sm:$0xff]
    %v276 = vld [vmem:[#allocation5 + $0x450] sm:$0xff]
    %v277 = vld [vmem:[#allocation5 + $0x458] sm:$0xf]
    %v278 = vld [vmem:[#allocation5 + $0x45c] sm:$0xff]
    %v279 = vld [vmem:[#allocation5 + $0x464] sm:$0xff]
    %v280 = vld [vmem:[#allocation5 + $0x46c] sm:$0xff]
    %v281 = vld [vmem:[#allocation5 + $0x474] sm:$0xff]
    %v282 = vld [vmem:[#allocation5 + $0x47c] sm:$0xf]
    %v283 = vld [vmem:[#allocation5 + $0x480] sm:$0xff]
    %v284 = vld [vmem:[#allocation5 + $0x488] sm:$0xff]
    %v285 = vld [vmem:[#allocation5 + $0x490] sm:$0xff]
    %v286 = vld [vmem:[#allocation5 + $0x498] sm:$0xff]
    %v287 = vld [vmem:[#allocation5 + $0x4a0] sm:$0xf]
    %v288 = vld [vmem:[#allocation5 + $0x4a4] sm:$0xff]
    %v289 = vld [vmem:[#allocation5 + $0x4ac] sm:$0xff]
    %v290 = vld [vmem:[#allocation5 + $0x4b4] sm:$0xff]
    %v291 = vld [vmem:[#allocation5 + $0x4bc] sm:$0xff]
    %v292 = vld [vmem:[#allocation5 + $0x4c4] sm:$0xf]
    %v293 = vld [vmem:[#allocation5 + $0x4c8] sm:$0xff]
    %v294 = vld [vmem:[#allocation5 + $0x4d0] sm:$0xff]
    %v295 = vld [vmem:[#allocation5 + $0x4d8] sm:$0xff]
    %v296 = vld [vmem:[#allocation5 + $0x4e0] sm:$0xff]
    %v297 = vld [vmem:[#allocation5 + $0x4e8] sm:$0xf]
    %v298 = vld [vmem:[#allocation5 + $0x4ec] sm:$0xff]
    %v299 = vld [vmem:[#allocation5 + $0x4f4] sm:$0xff]
    %v300 = vld [vmem:[#allocation5 + $0x4fc] sm:$0xff]
    %v301 = vld [vmem:[#allocation5 + $0x504] sm:$0xff]
    %v302 = vld [vmem:[#allocation5 + $0x50c] sm:$0xf]
    %v303 = vld [vmem:[#allocation5 + $0x510] sm:$0xff]
    %v304 = vld [vmem:[#allocation5 + $0x518] sm:$0xff]
    %v305 = vld [vmem:[#allocation5 + $0x520] sm:$0xff]
    %v306 = vld [vmem:[#allocation5 + $0x528] sm:$0xff]
    %v307 = vld [vmem:[#allocation5 + $0x530] sm:$0xf]
    %v308 = vld [vmem:[#allocation5 + $0x534] sm:$0xff]
    %v309 = vld [vmem:[#allocation5 + $0x53c] sm:$0xff]
    %v310 = vld [vmem:[#allocation5 + $0x544] sm:$0xff]
    %v311 = vld [vmem:[#allocation5 + $0x54c] sm:$0xff]
    %v312 = vld [vmem:[#allocation5 + $0x554] sm:$0xf]
    %v313 = vld [vmem:[#allocation5 + $0x558] sm:$0xff]
    %v314 = vld [vmem:[#allocation5 + $0x560] sm:$0xff]
    %v315 = vld [vmem:[#allocation5 + $0x568] sm:$0xff]
    %v316 = vld [vmem:[#allocation5 + $0x570] sm:$0xff]
    %v317 = vld [vmem:[#allocation5 + $0x578] sm:$0xf]
    %v318 = vld [vmem:[#allocation5 + $0x57c] sm:$0xff]
    %v319 = vld [vmem:[#allocation5 + $0x584] sm:$0xff]
    %v320 = vld [vmem:[#allocation5 + $0x58c] sm:$0xff]
    %v321 = vld [vmem:[#allocation5 + $0x594] sm:$0xff]
    %v322 = vld [vmem:[#allocation5 + $0x59c] sm:$0xf]
    %v323 = vld [vmem:[#allocation5 + $0x5a0] sm:$0xff]
    %v324 = vld [vmem:[#allocation5 + $0x5a8] sm:$0xff]
    %v325 = vld [vmem:[#allocation5 + $0x5b0] sm:$0xff]
    %v326 = vld [vmem:[#allocation5 + $0x5b8] sm:$0xff]
    %v327 = vld [vmem:[#allocation5 + $0x5c0] sm:$0xf]
    %v328 = vld [vmem:[#allocation5 + $0x5c4] sm:$0xff]
    %v329 = vld [vmem:[#allocation5 + $0x5cc] sm:$0xff]
    %v330 = vld [vmem:[#allocation5 + $0x5d4] sm:$0xff]
    %v331 = vld [vmem:[#allocation5 + $0x5dc] sm:$0xff]
    %v332 = vld [vmem:[#allocation5 + $0x5e4] sm:$0xf]
    %v333 = vld [vmem:[#allocation5 + $0x5e8] sm:$0xff]
    %v334 = vld [vmem:[#allocation5 + $0x5f0] sm:$0xff]
    %v335 = vld [vmem:[#allocation5 + $0x5f8] sm:$0xff]
    %v336 = vld [vmem:[#allocation5 + $0x600] sm:$0xff]
    %v337 = vld [vmem:[#allocation5 + $0x608] sm:$0xf]
    %v338 = vld [vmem:[#allocation5 + $0x60c] sm:$0xff]
    %v339 = vld [vmem:[#allocation5 + $0x614] sm:$0xff]
    %v340 = vld [vmem:[#allocation5 + $0x61c] sm:$0xff]
    %v341 = vld [vmem:[#allocation5 + $0x624] sm:$0xff]
    %v342 = vld [vmem:[#allocation5 + $0x62c] sm:$0xf]
    %v343 = vld [vmem:[#allocation5 + $0x630] sm:$0xff]
    %v344 = vld [vmem:[#allocation5 + $0x638] sm:$0xff]
    %v345 = vld [vmem:[#allocation5 + $0x640] sm:$0xff]
    %v346 = vld [vmem:[#allocation5 + $0x648] sm:$0xff]
    %v347 = vld [vmem:[#allocation5 + $0x650] sm:$0xf]
    %v348 = vld [vmem:[#allocation5 + $0x654] sm:$0xff]
    %v349 = vld [vmem:[#allocation5 + $0x65c] sm:$0xff]
    %v350 = vld [vmem:[#allocation5 + $0x664] sm:$0xff]
    %v351 = vld [vmem:[#allocation5 + $0x66c] sm:$0xff]
    %v352 = vld [vmem:[#allocation5 + $0x674] sm:$0xf]
    %v353 = vld [vmem:[#allocation5 + $0x678] sm:$0xff]
    %v354 = vld [vmem:[#allocation5 + $0x680] sm:$0xff]
    %v355 = vld [vmem:[#allocation5 + $0x688] sm:$0xff]
    %v356 = vld [vmem:[#allocation5 + $0x690] sm:$0xff]
    %v357 = vld [vmem:[#allocation5 + $0x698] sm:$0xf]
    %v358 = vld [vmem:[#allocation5 + $0x69c] sm:$0xff]
    %v359 = vld [vmem:[#allocation5 + $0x6a4] sm:$0xff]
    %v360 = vld [vmem:[#allocation5 + $0x6ac] sm:$0xff]
    %v361 = vld [vmem:[#allocation5 + $0x6b4] sm:$0xff]
    %v362 = vld [vmem:[#allocation5 + $0x6bc] sm:$0xf]
    %v363 = vld [vmem:[%s2] sm:$0xff]
    %v364 = vld [vmem:[%s2 + $0x8] sm:$0x1]
    %v367 = vlaneseq
    %v368 = vshrl.u32 %v367, 7
    %v369 = vsub.s32 0, %v368
    %v370 = vrot.slane %v363, %v369
    %v371 = vlaneseq
    %v372 = vshrl.u32 %v371, 7
    %v373 = vsub.s32 1, %v372
    %v374 = vrot.slane %v363, %v373
    %v375 = vlaneseq
    %v376 = vshrl.u32 %v375, 7
    %v377 = vsub.s32 2, %v376
    %v378 = vrot.slane %v363, %v377
    %v379 = vlaneseq
    %v380 = vshrl.u32 %v379, 7
    %v381 = vsub.s32 3, %v380
    %v382 = vrot.slane %v363, %v381
    %v383 = vlaneseq
    %v384 = vshrl.u32 %v383, 7
    %v385 = vsub.s32 4, %v384
    %v386 = vrot.slane %v363, %v385
    %v387 = vlaneseq
    %v388 = vshrl.u32 %v387, 7
    %v389 = vsub.s32 5, %v388
    %v390 = vrot.slane %v363, %v389
    %v391 = vlaneseq
    %v392 = vshrl.u32 %v391, 7
    %v393 = vsub.s32 6, %v392
    %v394 = vrot.slane %v363, %v393
    %v395 = vlaneseq
    %v396 = vshrl.u32 %v395, 7
    %v397 = vsub.s32 7, %v396
    %v398 = vrot.slane %v363, %v397
    %v399 = vlaneseq
    %v400 = vshrl.u32 %v399, 7
    %v401 = vsub.s32 0, %v400
    %v402 = vrot.slane %v364, %v401
    %v652 = vunpack.c.l.b16 %v123
    %v653 = vunpack.c.h.b16 %v123
    %v654 = vunpack.c.l.b16 %v124
    %v655 = vunpack.c.h.b16 %v124
    %v656 = vunpack.c.l.b16 %v125
    %v657 = vunpack.c.h.b16 %v125
    %v658 = vunpack.c.l.b16 %v126
    %v659 = vunpack.c.h.b16 %v126
    %v660 = vunpack.c.l.b16 %v127
    %v661 = vunpack.c.l.b16 %v128
    %v662 = vunpack.c.h.b16 %v128
    %v663 = vunpack.c.l.b16 %v129
    %v664 = vunpack.c.h.b16 %v129
    %v665 = vunpack.c.l.b16 %v130
    %v666 = vunpack.c.h.b16 %v130
    %v667 = vunpack.c.l.b16 %v131
    %v668 = vunpack.c.h.b16 %v131
    %v669 = vunpack.c.l.b16 %v132
    %v670 = vunpack.c.l.b16 %v133
    %v671 = vunpack.c.h.b16 %v133
    %v672 = vunpack.c.l.b16 %v134
    %v673 = vunpack.c.h.b16 %v134
    %v674 = vunpack.c.l.b16 %v135
    %v675 = vunpack.c.h.b16 %v135
    %v676 = vunpack.c.l.b16 %v136
    %v677 = vunpack.c.h.b16 %v136
    %v678 = vunpack.c.l.b16 %v137
    %v679 = vunpack.c.l.b16 %v138
    %v680 = vunpack.c.h.b16 %v138
    %v681 = vunpack.c.l.b16 %v139
    %v682 = vunpack.c.h.b16 %v139
    %v683 = vunpack.c.l.b16 %v140
    %v684 = vunpack.c.h.b16 %v140
    %v685 = vunpack.c.l.b16 %v141
    %v686 = vunpack.c.h.b16 %v141
    %v687 = vunpack.c.l.b16 %v142
    %v688 = vunpack.c.l.b16 %v143
    %v689 = vunpack.c.h.b16 %v143
    %v690 = vunpack.c.l.b16 %v144
    %v691 = vunpack.c.h.b16 %v144
    %v692 = vunpack.c.l.b16 %v145
    %v693 = vunpack.c.h.b16 %v145
    %v694 = vunpack.c.l.b16 %v146
    %v695 = vunpack.c.h.b16 %v146
    %v696 = vunpack.c.l.b16 %v147
    %v697 = vunpack.c.l.b16 %v148
    %v698 = vunpack.c.h.b16 %v148
    %v699 = vunpack.c.l.b16 %v149
    %v700 = vunpack.c.h.b16 %v149
    %v701 = vunpack.c.l.b16 %v150
    %v702 = vunpack.c.h.b16 %v150
    %v703 = vunpack.c.l.b16 %v151
    %v704 = vunpack.c.h.b16 %v151
    %v705 = vunpack.c.l.b16 %v152
    %v706 = vunpack.c.l.b16 %v153
    %v707 = vunpack.c.h.b16 %v153
    %v708 = vunpack.c.l.b16 %v154
    %v709 = vunpack.c.h.b16 %v154
    %v710 = vunpack.c.l.b16 %v155
    %v711 = vunpack.c.h.b16 %v155
    %v712 = vunpack.c.l.b16 %v156
    %v713 = vunpack.c.h.b16 %v156
    %v714 = vunpack.c.l.b16 %v157
    %v715 = vunpack.c.l.b16 %v158
    %v716 = vunpack.c.h.b16 %v158
    %v717 = vunpack.c.l.b16 %v159
    %v718 = vunpack.c.h.b16 %v159
    %v719 = vunpack.c.l.b16 %v160
    %v720 = vunpack.c.h.b16 %v160
    %v721 = vunpack.c.l.b16 %v161
    %v722 = vunpack.c.h.b16 %v161
    %v723 = vunpack.c.l.b16 %v162
    %v724 = vunpack.c.l.b16 %v163
    %v725 = vunpack.c.h.b16 %v163
    %v726 = vunpack.c.l.b16 %v164
    %v727 = vunpack.c.h.b16 %v164
    %v728 = vunpack.c.l.b16 %v165
    %v729 = vunpack.c.h.b16 %v165
    %v730 = vunpack.c.l.b16 %v166
    %v731 = vunpack.c.h.b16 %v166
    %v732 = vunpack.c.l.b16 %v167
    %v733 = vunpack.c.l.b16 %v168
    %v734 = vunpack.c.h.b16 %v168
    %v735 = vunpack.c.l.b16 %v169
    %v736 = vunpack.c.h.b16 %v169
    %v737 = vunpack.c.l.b16 %v170
    %v738 = vunpack.c.h.b16 %v170
    %v739 = vunpack.c.l.b16 %v171
    %v740 = vunpack.c.h.b16 %v171
    %v741 = vunpack.c.l.b16 %v172
    %v742 = vunpack.c.l.b16 %v173
    %v743 = vunpack.c.h.b16 %v173
    %v744 = vunpack.c.l.b16 %v174
    %v745 = vunpack.c.h.b16 %v174
    %v746 = vunpack.c.l.b16 %v175
    %v747 = vunpack.c.h.b16 %v175
    %v748 = vunpack.c.l.b16 %v176
    %v749 = vunpack.c.h.b16 %v176
    %v750 = vunpack.c.l.b16 %v177
    %v751 = vunpack.c.l.b16 %v178
    %v752 = vunpack.c.h.b16 %v178
    %v753 = vunpack.c.l.b16 %v179
    %v754 = vunpack.c.h.b16 %v179
    %v755 = vunpack.c.l.b16 %v180
    %v756 = vunpack.c.h.b16 %v180
    %v757 = vunpack.c.l.b16 %v181
    %v758 = vunpack.c.h.b16 %v181
    %v759 = vunpack.c.l.b16 %v182
    %v760 = vunpack.c.l.b16 %v183
    %v761 = vunpack.c.h.b16 %v183
    %v762 = vunpack.c.l.b16 %v184
    %v763 = vunpack.c.h.b16 %v184
    %v764 = vunpack.c.l.b16 %v185
    %v765 = vunpack.c.h.b16 %v185
    %v766 = vunpack.c.l.b16 %v186
    %v767 = vunpack.c.h.b16 %v186
    %v768 = vunpack.c.l.b16 %v187
    %v769 = vunpack.c.l.b16 %v188
    %v770 = vunpack.c.h.b16 %v188
    %v771 = vunpack.c.l.b16 %v189
    %v772 = vunpack.c.h.b16 %v189
    %v773 = vunpack.c.l.b16 %v190
    %v774 = vunpack.c.h.b16 %v190
    %v775 = vunpack.c.l.b16 %v191
    %v776 = vunpack.c.h.b16 %v191
    %v777 = vunpack.c.l.b16 %v192
    %v778 = vunpack.c.l.b16 %v193
    %v779 = vunpack.c.h.b16 %v193
    %v780 = vunpack.c.l.b16 %v194
    %v781 = vunpack.c.h.b16 %v194
    %v782 = vunpack.c.l.b16 %v195
    %v783 = vunpack.c.h.b16 %v195
    %v784 = vunpack.c.l.b16 %v196
    %v785 = vunpack.c.h.b16 %v196
    %v786 = vunpack.c.l.b16 %v197
    %v787 = vunpack.c.l.b16 %v198
    %v788 = vunpack.c.h.b16 %v198
    %v789 = vunpack.c.l.b16 %v199
    %v790 = vunpack.c.h.b16 %v199
    %v791 = vunpack.c.l.b16 %v200
    %v792 = vunpack.c.h.b16 %v200
    %v793 = vunpack.c.l.b16 %v201
    %v794 = vunpack.c.h.b16 %v201
    %v795 = vunpack.c.l.b16 %v202
    %v796 = vunpack.c.l.b16 %v203
    %v797 = vunpack.c.h.b16 %v203
    %v798 = vunpack.c.l.b16 %v204
    %v799 = vunpack.c.h.b16 %v204
    %v800 = vunpack.c.l.b16 %v205
    %v801 = vunpack.c.h.b16 %v205
    %v802 = vunpack.c.l.b16 %v206
    %v803 = vunpack.c.h.b16 %v206
    %v804 = vunpack.c.l.b16 %v207
    %v805 = vunpack.c.l.b16 %v208
    %v806 = vunpack.c.h.b16 %v208
    %v807 = vunpack.c.l.b16 %v209
    %v808 = vunpack.c.h.b16 %v209
    %v809 = vunpack.c.l.b16 %v210
    %v810 = vunpack.c.h.b16 %v210
    %v811 = vunpack.c.l.b16 %v211
    %v812 = vunpack.c.h.b16 %v211
    %v813 = vunpack.c.l.b16 %v212
    %v814 = vunpack.c.l.b16 %v213
    %v815 = vunpack.c.h.b16 %v213
    %v816 = vunpack.c.l.b16 %v214
    %v817 = vunpack.c.h.b16 %v214
    %v818 = vunpack.c.l.b16 %v215
    %v819 = vunpack.c.h.b16 %v215
    %v820 = vunpack.c.l.b16 %v216
    %v821 = vunpack.c.h.b16 %v216
    %v822 = vunpack.c.l.b16 %v217
    %v823 = vunpack.c.l.b16 %v218
    %v824 = vunpack.c.h.b16 %v218
    %v825 = vunpack.c.l.b16 %v219
    %v826 = vunpack.c.h.b16 %v219
    %v827 = vunpack.c.l.b16 %v220
    %v828 = vunpack.c.h.b16 %v220
    %v829 = vunpack.c.l.b16 %v221
    %v830 = vunpack.c.h.b16 %v221
    %v831 = vunpack.c.l.b16 %v222
    %v832 = vunpack.c.l.b16 %v223
    %v833 = vunpack.c.h.b16 %v223
    %v834 = vunpack.c.l.b16 %v224
    %v835 = vunpack.c.h.b16 %v224
    %v836 = vunpack.c.l.b16 %v225
    %v837 = vunpack.c.h.b16 %v225
    %v838 = vunpack.c.l.b16 %v226
    %v839 = vunpack.c.h.b16 %v226
    %v840 = vunpack.c.l.b16 %v227
    %v841 = vunpack.c.l.b16 %v228
    %v842 = vunpack.c.h.b16 %v228
    %v843 = vunpack.c.l.b16 %v229
    %v844 = vunpack.c.h.b16 %v229
    %v845 = vunpack.c.l.b16 %v230
    %v846 = vunpack.c.h.b16 %v230
    %v847 = vunpack.c.l.b16 %v231
    %v848 = vunpack.c.h.b16 %v231
    %v849 = vunpack.c.l.b16 %v232
    %v850 = vunpack.c.l.b16 %v233
    %v851 = vunpack.c.h.b16 %v233
    %v852 = vunpack.c.l.b16 %v234
    %v853 = vunpack.c.h.b16 %v234
    %v854 = vunpack.c.l.b16 %v235
    %v855 = vunpack.c.h.b16 %v235
    %v856 = vunpack.c.l.b16 %v236
    %v857 = vunpack.c.h.b16 %v236
    %v858 = vunpack.c.l.b16 %v237
    %v859 = vunpack.c.l.b16 %v238
    %v860 = vunpack.c.h.b16 %v238
    %v861 = vunpack.c.l.b16 %v239
    %v862 = vunpack.c.h.b16 %v239
    %v863 = vunpack.c.l.b16 %v240
    %v864 = vunpack.c.h.b16 %v240
    %v865 = vunpack.c.l.b16 %v241
    %v866 = vunpack.c.h.b16 %v241
    %v867 = vunpack.c.l.b16 %v242
    %v868 = vunpack.c.l.b16 %v243
    %v869 = vunpack.c.h.b16 %v243
    %v870 = vunpack.c.l.b16 %v244
    %v871 = vunpack.c.h.b16 %v244
    %v872 = vunpack.c.l.b16 %v245
    %v873 = vunpack.c.h.b16 %v245
    %v874 = vunpack.c.l.b16 %v246
    %v875 = vunpack.c.h.b16 %v246
    %v876 = vunpack.c.l.b16 %v247
    %v877 = vunpack.c.l.b16 %v248
    %v878 = vunpack.c.h.b16 %v248
    %v879 = vunpack.c.l.b16 %v249
    %v880 = vunpack.c.h.b16 %v249
    %v881 = vunpack.c.l.b16 %v250
    %v882 = vunpack.c.h.b16 %v250
    %v883 = vunpack.c.l.b16 %v251
    %v884 = vunpack.c.h.b16 %v251
    %v885 = vunpack.c.l.b16 %v252
    %v886 = vunpack.c.l.b16 %v253
    %v887 = vunpack.c.h.b16 %v253
    %v888 = vunpack.c.l.b16 %v254
    %v889 = vunpack.c.h.b16 %v254
    %v890 = vunpack.c.l.b16 %v255
    %v891 = vunpack.c.h.b16 %v255
    %v892 = vunpack.c.l.b16 %v256
    %v893 = vunpack.c.h.b16 %v256
    %v894 = vunpack.c.l.b16 %v257
    %v895 = vunpack.c.l.b16 %v258
    %v896 = vunpack.c.h.b16 %v258
    %v897 = vunpack.c.l.b16 %v259
    %v898 = vunpack.c.h.b16 %v259
    %v899 = vunpack.c.l.b16 %v260
    %v900 = vunpack.c.h.b16 %v260
    %v901 = vunpack.c.l.b16 %v261
    %v902 = vunpack.c.h.b16 %v261
    %v903 = vunpack.c.l.b16 %v262
    %v904 = vunpack.c.l.b16 %v263
    %v905 = vunpack.c.h.b16 %v263
    %v906 = vunpack.c.l.b16 %v264
    %v907 = vunpack.c.h.b16 %v264
    %v908 = vunpack.c.l.b16 %v265
    %v909 = vunpack.c.h.b16 %v265
    %v910 = vunpack.c.l.b16 %v266
    %v911 = vunpack.c.h.b16 %v266
    %v912 = vunpack.c.l.b16 %v267
    %v913 = vunpack.c.l.b16 %v268
    %v914 = vunpack.c.h.b16 %v268
    %v915 = vunpack.c.l.b16 %v269
    %v916 = vunpack.c.h.b16 %v269
    %v917 = vunpack.c.l.b16 %v270
    %v918 = vunpack.c.h.b16 %v270
    %v919 = vunpack.c.l.b16 %v271
    %v920 = vunpack.c.h.b16 %v271
    %v921 = vunpack.c.l.b16 %v272
    %v922 = vunpack.c.l.b16 %v273
    %v923 = vunpack.c.h.b16 %v273
    %v924 = vunpack.c.l.b16 %v274
    %v925 = vunpack.c.h.b16 %v274
    %v926 = vunpack.c.l.b16 %v275
    %v927 = vunpack.c.h.b16 %v275
    %v928 = vunpack.c.l.b16 %v276
    %v929 = vunpack.c.h.b16 %v276
    %v930 = vunpack.c.l.b16 %v277
    %v931 = vunpack.c.l.b16 %v278
    %v932 = vunpack.c.h.b16 %v278
    %v933 = vunpack.c.l.b16 %v279
    %v934 = vunpack.c.h.b16 %v279
    %v935 = vunpack.c.l.b16 %v280
    %v936 = vunpack.c.h.b16 %v280
    %v937 = vunpack.c.l.b16 %v281
    %v938 = vunpack.c.h.b16 %v281
    %v939 = vunpack.c.l.b16 %v282
    %v940 = vunpack.c.l.b16 %v283
    %v941 = vunpack.c.h.b16 %v283
    %v942 = vunpack.c.l.b16 %v284
    %v943 = vunpack.c.h.b16 %v284
    %v944 = vunpack.c.l.b16 %v285
    %v945 = vunpack.c.h.b16 %v285
    %v946 = vunpack.c.l.b16 %v286
    %v947 = vunpack.c.h.b16 %v286
    %v948 = vunpack.c.l.b16 %v287
    %v949 = vunpack.c.l.b16 %v288
    %v950 = vunpack.c.h.b16 %v288
    %v951 = vunpack.c.l.b16 %v289
    %v952 = vunpack.c.h.b16 %v289
    %v953 = vunpack.c.l.b16 %v290
    %v954 = vunpack.c.h.b16 %v290
    %v955 = vunpack.c.l.b16 %v291
    %v956 = vunpack.c.h.b16 %v291
    %v957 = vunpack.c.l.b16 %v292
    %v958 = vunpack.c.l.b16 %v293
    %v959 = vunpack.c.h.b16 %v293
    %v960 = vunpack.c.l.b16 %v294
    %v961 = vunpack.c.h.b16 %v294
    %v962 = vunpack.c.l.b16 %v295
    %v963 = vunpack.c.h.b16 %v295
    %v964 = vunpack.c.l.b16 %v296
    %v965 = vunpack.c.h.b16 %v296
    %v966 = vunpack.c.l.b16 %v297
    %v967 = vunpack.c.l.b16 %v298
    %v968 = vunpack.c.h.b16 %v298
    %v969 = vunpack.c.l.b16 %v299
    %v970 = vunpack.c.h.b16 %v299
    %v971 = vunpack.c.l.b16 %v300
    %v972 = vunpack.c.h.b16 %v300
    %v973 = vunpack.c.l.b16 %v301
    %v974 = vunpack.c.h.b16 %v301
    %v975 = vunpack.c.l.b16 %v302
    %v976 = vunpack.c.l.b16 %v303
    %v977 = vunpack.c.h.b16 %v303
    %v978 = vunpack.c.l.b16 %v304
    %v979 = vunpack.c.h.b16 %v304
    %v980 = vunpack.c.l.b16 %v305
    %v981 = vunpack.c.h.b16 %v305
    %v982 = vunpack.c.l.b16 %v306
    %v983 = vunpack.c.h.b16 %v306
    %v984 = vunpack.c.l.b16 %v307
    %v985 = vunpack.c.l.b16 %v308
    %v986 = vunpack.c.h.b16 %v308
    %v987 = vunpack.c.l.b16 %v309
    %v988 = vunpack.c.h.b16 %v309
    %v989 = vunpack.c.l.b16 %v310
    %v990 = vunpack.c.h.b16 %v310
    %v991 = vunpack.c.l.b16 %v311
    %v992 = vunpack.c.h.b16 %v311
    %v993 = vunpack.c.l.b16 %v312
    %v994 = vunpack.c.l.b16 %v313
    %v995 = vunpack.c.h.b16 %v313
    %v996 = vunpack.c.l.b16 %v314
    %v997 = vunpack.c.h.b16 %v314
    %v998 = vunpack.c.l.b16 %v315
    %v999 = vunpack.c.h.b16 %v315
    %v1000 = vunpack.c.l.b16 %v316
    %v1001 = vunpack.c.h.b16 %v316
    %v1002 = vunpack.c.l.b16 %v317
    %v1003 = vunpack.c.l.b16 %v318
    %v1004 = vunpack.c.h.b16 %v318
    %v1005 = vunpack.c.l.b16 %v319
    %v1006 = vunpack.c.h.b16 %v319
    %v1007 = vunpack.c.l.b16 %v320
    %v1008 = vunpack.c.h.b16 %v320
    %v1009 = vunpack.c.l.b16 %v321
    %v1010 = vunpack.c.h.b16 %v321
    %v1011 = vunpack.c.l.b16 %v322
    %v1012 = vunpack.c.l.b16 %v323
    %v1013 = vunpack.c.h.b16 %v323
    %v1014 = vunpack.c.l.b16 %v324
    %v1015 = vunpack.c.h.b16 %v324
    %v1016 = vunpack.c.l.b16 %v325
    %v1017 = vunpack.c.h.b16 %v325
    %v1018 = vunpack.c.l.b16 %v326
    %v1019 = vunpack.c.h.b16 %v326
    %v1020 = vunpack.c.l.b16 %v327
    %v1021 = vunpack.c.l.b16 %v328
    %v1022 = vunpack.c.h.b16 %v328
    %v1023 = vunpack.c.l.b16 %v329
    %v1024 = vunpack.c.h.b16 %v329
    %v1025 = vunpack.c.l.b16 %v330
    %v1026 = vunpack.c.h.b16 %v330
    %v1027 = vunpack.c.l.b16 %v331
    %v1028 = vunpack.c.h.b16 %v331
    %v1029 = vunpack.c.l.b16 %v332
    %v1030 = vunpack.c.l.b16 %v333
    %v1031 = vunpack.c.h.b16 %v333
    %v1032 = vunpack.c.l.b16 %v334
    %v1033 = vunpack.c.h.b16 %v334
    %v1034 = vunpack.c.l.b16 %v335
    %v1035 = vunpack.c.h.b16 %v335
    %v1036 = vunpack.c.l.b16 %v336
    %v1037 = vunpack.c.h.b16 %v336
    %v1038 = vunpack.c.l.b16 %v337
    %v1039 = vunpack.c.l.b16 %v338
    %v1040 = vunpack.c.h.b16 %v338
    %v1041 = vunpack.c.l.b16 %v339
    %v1042 = vunpack.c.h.b16 %v339
    %v1043 = vunpack.c.l.b16 %v340
    %v1044 = vunpack.c.h.b16 %v340
    %v1045 = vunpack.c.l.b16 %v341
    %v1046 = vunpack.c.h.b16 %v341
    %v1047 = vunpack.c.l.b16 %v342
    %v1048 = vunpack.c.l.b16 %v343
    %v1049 = vunpack.c.h.b16 %v343
    %v1050 = vunpack.c.l.b16 %v344
    %v1051 = vunpack.c.h.b16 %v344
    %v1052 = vunpack.c.l.b16 %v345
    %v1053 = vunpack.c.h.b16 %v345
    %v1054 = vunpack.c.l.b16 %v346
    %v1055 = vunpack.c.h.b16 %v346
    %v1056 = vunpack.c.l.b16 %v347
    %v1057 = vunpack.c.l.b16 %v348
    %v1058 = vunpack.c.h.b16 %v348
    %v1059 = vunpack.c.l.b16 %v349
    %v1060 = vunpack.c.h.b16 %v349
    %v1061 = vunpack.c.l.b16 %v350
    %v1062 = vunpack.c.h.b16 %v350
    %v1063 = vunpack.c.l.b16 %v351
    %v1064 = vunpack.c.h.b16 %v351
    %v1065 = vunpack.c.l.b16 %v352
    %v1066 = vunpack.c.l.b16 %v353
    %v1067 = vunpack.c.h.b16 %v353
    %v1068 = vunpack.c.l.b16 %v354
    %v1069 = vunpack.c.h.b16 %v354
    %v1070 = vunpack.c.l.b16 %v355
    %v1071 = vunpack.c.h.b16 %v355
    %v1072 = vunpack.c.l.b16 %v356
    %v1073 = vunpack.c.h.b16 %v356
    %v1074 = vunpack.c.l.b16 %v357
    %v1075 = vunpack.c.l.b16 %v358
    %v1076 = vunpack.c.h.b16 %v358
    %v1077 = vunpack.c.l.b16 %v359
    %v1078 = vunpack.c.h.b16 %v359
    %v1079 = vunpack.c.l.b16 %v360
    %v1080 = vunpack.c.h.b16 %v360
    %v1081 = vunpack.c.l.b16 %v361
    %v1082 = vunpack.c.h.b16 %v361
    %v1083 = vunpack.c.l.b16 %v362
    %v1084 = vpack.c.b16 %v661, %v652
    %v1085 = vpack.c.b16 %v662, %v653
    %v1086 = vpack.c.b16 %v663, %v654
    %v1087 = vpack.c.b16 %v664, %v655
    %v1088 = vpack.c.b16 %v665, %v656
    %v1089 = vpack.c.b16 %v666, %v657
    %v1090 = vpack.c.b16 %v667, %v658
    %v1091 = vpack.c.b16 %v668, %v659
    %v1092 = vpack.c.b16 %v669, %v660
    %v1093 = vpack.c.b16 %v679, %v670
    %v1094 = vpack.c.b16 %v680, %v671
    %v1095 = vpack.c.b16 %v681, %v672
    %v1096 = vpack.c.b16 %v682, %v673
    %v1097 = vpack.c.b16 %v683, %v674
    %v1098 = vpack.c.b16 %v684, %v675
    %v1099 = vpack.c.b16 %v685, %v676
    %v1100 = vpack.c.b16 %v686, %v677
    %v1101 = vpack.c.b16 %v687, %v678
    %v1102 = vpack.c.b16 %v697, %v688
    %v1103 = vpack.c.b16 %v698, %v689
    %v1104 = vpack.c.b16 %v699, %v690
    %v1105 = vpack.c.b16 %v700, %v691
    %v1106 = vpack.c.b16 %v701, %v692
    %v1107 = vpack.c.b16 %v702, %v693
    %v1108 = vpack.c.b16 %v703, %v694
    %v1109 = vpack.c.b16 %v704, %v695
    %v1110 = vpack.c.b16 %v705, %v696
    %v1111 = vpack.c.b16 %v715, %v706
    %v1112 = vpack.c.b16 %v716, %v707
    %v1113 = vpack.c.b16 %v717, %v708
    %v1114 = vpack.c.b16 %v718, %v709
    %v1115 = vpack.c.b16 %v719, %v710
    %v1116 = vpack.c.b16 %v720, %v711
    %v1117 = vpack.c.b16 %v721, %v712
    %v1118 = vpack.c.b16 %v722, %v713
    %v1119 = vpack.c.b16 %v723, %v714
    %v1120 = vpack.c.b16 %v733, %v724
    %v1121 = vpack.c.b16 %v734, %v725
    %v1122 = vpack.c.b16 %v735, %v726
    %v1123 = vpack.c.b16 %v736, %v727
    %v1124 = vpack.c.b16 %v737, %v728
    %v1125 = vpack.c.b16 %v738, %v729
    %v1126 = vpack.c.b16 %v739, %v730
    %v1127 = vpack.c.b16 %v740, %v731
    %v1128 = vpack.c.b16 %v741, %v732
    %v1129 = vpack.c.b16 %v751, %v742
    %v1130 = vpack.c.b16 %v752, %v743
    %v1131 = vpack.c.b16 %v753, %v744
    %v1132 = vpack.c.b16 %v754, %v745
    %v1133 = vpack.c.b16 %v755, %v746
    %v1134 = vpack.c.b16 %v756, %v747
    %v1135 = vpack.c.b16 %v757, %v748
    %v1136 = vpack.c.b16 %v758, %v749
    %v1137 = vpack.c.b16 %v759, %v750
    %v1138 = vpack.c.b16 %v769, %v760
    %v1139 = vpack.c.b16 %v770, %v761
    %v1140 = vpack.c.b16 %v771, %v762
    %v1141 = vpack.c.b16 %v772, %v763
    %v1142 = vpack.c.b16 %v773, %v764
    %v1143 = vpack.c.b16 %v774, %v765
    %v1144 = vpack.c.b16 %v775, %v766
    %v1145 = vpack.c.b16 %v776, %v767
    %v1146 = vpack.c.b16 %v777, %v768
    %v1147 = vpack.c.b16 %v787, %v778
    %v1148 = vpack.c.b16 %v788, %v779
    %v1149 = vpack.c.b16 %v789, %v780
    %v1150 = vpack.c.b16 %v790, %v781
    %v1151 = vpack.c.b16 %v791, %v782
    %v1152 = vpack.c.b16 %v792, %v783
    %v1153 = vpack.c.b16 %v793, %v784
    %v1154 = vpack.c.b16 %v794, %v785
    %v1155 = vpack.c.b16 %v795, %v786
    %v1156 = vpack.c.b16 %v805, %v796
    %v1157 = vpack.c.b16 %v806, %v797
    %v1158 = vpack.c.b16 %v807, %v798
    %v1159 = vpack.c.b16 %v808, %v799
    %v1160 = vpack.c.b16 %v809, %v800
    %v1161 = vpack.c.b16 %v810, %v801
    %v1162 = vpack.c.b16 %v811, %v802
    %v1163 = vpack.c.b16 %v812, %v803
    %v1164 = vpack.c.b16 %v813, %v804
    %v1165 = vpack.c.b16 %v823, %v814
    %v1166 = vpack.c.b16 %v824, %v815
    %v1167 = vpack.c.b16 %v825, %v816
    %v1168 = vpack.c.b16 %v826, %v817
    %v1169 = vpack.c.b16 %v827, %v818
    %v1170 = vpack.c.b16 %v828, %v819
    %v1171 = vpack.c.b16 %v829, %v820
    %v1172 = vpack.c.b16 %v830, %v821
    %v1173 = vpack.c.b16 %v831, %v822
    %v1174 = vpack.c.b16 %v841, %v832
    %v1175 = vpack.c.b16 %v842, %v833
    %v1176 = vpack.c.b16 %v843, %v834
    %v1177 = vpack.c.b16 %v844, %v835
    %v1178 = vpack.c.b16 %v845, %v836
    %v1179 = vpack.c.b16 %v846, %v837
    %v1180 = vpack.c.b16 %v847, %v838
    %v1181 = vpack.c.b16 %v848, %v839
    %v1182 = vpack.c.b16 %v849, %v840
    %v1183 = vpack.c.b16 %v859, %v850
    %v1184 = vpack.c.b16 %v860, %v851
    %v1185 = vpack.c.b16 %v861, %v852
    %v1186 = vpack.c.b16 %v862, %v853
    %v1187 = vpack.c.b16 %v863, %v854
    %v1188 = vpack.c.b16 %v864, %v855
    %v1189 = vpack.c.b16 %v865, %v856
    %v1190 = vpack.c.b16 %v866, %v857
    %v1191 = vpack.c.b16 %v867, %v858
    %v1192 = vpack.c.b16 %v877, %v868
    %v1193 = vpack.c.b16 %v878, %v869
    %v1194 = vpack.c.b16 %v879, %v870
    %v1195 = vpack.c.b16 %v880, %v871
    %v1196 = vpack.c.b16 %v881, %v872
    %v1197 = vpack.c.b16 %v882, %v873
    %v1198 = vpack.c.b16 %v883, %v874
    %v1199 = vpack.c.b16 %v884, %v875
    %v1200 = vpack.c.b16 %v885, %v876
    %v1201 = vpack.c.b16 %v895, %v886
    %v1202 = vpack.c.b16 %v896, %v887
    %v1203 = vpack.c.b16 %v897, %v888
    %v1204 = vpack.c.b16 %v898, %v889
    %v1205 = vpack.c.b16 %v899, %v890
    %v1206 = vpack.c.b16 %v900, %v891
    %v1207 = vpack.c.b16 %v901, %v892
    %v1208 = vpack.c.b16 %v902, %v893
    %v1209 = vpack.c.b16 %v903, %v894
    %v1210 = vpack.c.b16 %v913, %v904
    %v1211 = vpack.c.b16 %v914, %v905
    %v1212 = vpack.c.b16 %v915, %v906
    %v1213 = vpack.c.b16 %v916, %v907
    %v1214 = vpack.c.b16 %v917, %v908
    %v1215 = vpack.c.b16 %v918, %v909
    %v1216 = vpack.c.b16 %v919, %v910
    %v1217 = vpack.c.b16 %v920, %v911
    %v1218 = vpack.c.b16 %v921, %v912
    %v1219 = vpack.c.b16 %v931, %v922
    %v1220 = vpack.c.b16 %v932, %v923
    %v1221 = vpack.c.b16 %v933, %v924
    %v1222 = vpack.c.b16 %v934, %v925
    %v1223 = vpack.c.b16 %v935, %v926
    %v1224 = vpack.c.b16 %v936, %v927
    %v1225 = vpack.c.b16 %v937, %v928
    %v1226 = vpack.c.b16 %v938, %v929
    %v1227 = vpack.c.b16 %v939, %v930
    %v1228 = vpack.c.b16 %v949, %v940
    %v1229 = vpack.c.b16 %v950, %v941
    %v1230 = vpack.c.b16 %v951, %v942
    %v1231 = vpack.c.b16 %v952, %v943
    %v1232 = vpack.c.b16 %v953, %v944
    %v1233 = vpack.c.b16 %v954, %v945
    %v1234 = vpack.c.b16 %v955, %v946
    %v1235 = vpack.c.b16 %v956, %v947
    %v1236 = vpack.c.b16 %v957, %v948
    %v1237 = vpack.c.b16 %v967, %v958
    %v1238 = vpack.c.b16 %v968, %v959
    %v1239 = vpack.c.b16 %v969, %v960
    %v1240 = vpack.c.b16 %v970, %v961
    %v1241 = vpack.c.b16 %v971, %v962
    %v1242 = vpack.c.b16 %v972, %v963
    %v1243 = vpack.c.b16 %v973, %v964
    %v1244 = vpack.c.b16 %v974, %v965
    %v1245 = vpack.c.b16 %v975, %v966
    %v1246 = vpack.c.b16 %v985, %v976
    %v1247 = vpack.c.b16 %v986, %v977
    %v1248 = vpack.c.b16 %v987, %v978
    %v1249 = vpack.c.b16 %v988, %v979
    %v1250 = vpack.c.b16 %v989, %v980
    %v1251 = vpack.c.b16 %v990, %v981
    %v1252 = vpack.c.b16 %v991, %v982
    %v1253 = vpack.c.b16 %v992, %v983
    %v1254 = vpack.c.b16 %v993, %v984
    %v1255 = vpack.c.b16 %v1003, %v994
    %v1256 = vpack.c.b16 %v1004, %v995
    %v1257 = vpack.c.b16 %v1005, %v996
    %v1258 = vpack.c.b16 %v1006, %v997
    %v1259 = vpack.c.b16 %v1007, %v998
    %v1260 = vpack.c.b16 %v1008, %v999
    %v1261 = vpack.c.b16 %v1009, %v1000
    %v1262 = vpack.c.b16 %v1010, %v1001
    %v1263 = vpack.c.b16 %v1011, %v1002
    %v1264 = vpack.c.b16 %v1021, %v1012
    %v1265 = vpack.c.b16 %v1022, %v1013
    %v1266 = vpack.c.b16 %v1023, %v1014
    %v1267 = vpack.c.b16 %v1024, %v1015
    %v1268 = vpack.c.b16 %v1025, %v1016
    %v1269 = vpack.c.b16 %v1026, %v1017
    %v1270 = vpack.c.b16 %v1027, %v1018
    %v1271 = vpack.c.b16 %v1028, %v1019
    %v1272 = vpack.c.b16 %v1029, %v1020
    %v1273 = vpack.c.b16 %v1039, %v1030
    %v1274 = vpack.c.b16 %v1040, %v1031
    %v1275 = vpack.c.b16 %v1041, %v1032
    %v1276 = vpack.c.b16 %v1042, %v1033
    %v1277 = vpack.c.b16 %v1043, %v1034
    %v1278 = vpack.c.b16 %v1044, %v1035
    %v1279 = vpack.c.b16 %v1045, %v1036
    %v1280 = vpack.c.b16 %v1046, %v1037
    %v1281 = vpack.c.b16 %v1047, %v1038
    %v1282 = vpack.c.b16 %v1057, %v1048
    %v1283 = vpack.c.b16 %v1058, %v1049
    %v1284 = vpack.c.b16 %v1059, %v1050
    %v1285 = vpack.c.b16 %v1060, %v1051
    %v1286 = vpack.c.b16 %v1061, %v1052
    %v1287 = vpack.c.b16 %v1062, %v1053
    %v1288 = vpack.c.b16 %v1063, %v1054
    %v1289 = vpack.c.b16 %v1064, %v1055
    %v1290 = vpack.c.b16 %v1065, %v1056
    %v1291 = vpack.c.b16 %v1075, %v1066
    %v1292 = vpack.c.b16 %v1076, %v1067
    %v1293 = vpack.c.b16 %v1077, %v1068
    %v1294 = vpack.c.b16 %v1078, %v1069
    %v1295 = vpack.c.b16 %v1079, %v1070
    %v1296 = vpack.c.b16 %v1080, %v1071
    %v1297 = vpack.c.b16 %v1081, %v1072
    %v1298 = vpack.c.b16 %v1082, %v1073
    %v1299 = vpack.c.b16 %v1083, %v1074
    %1516 = vmatprep.subr.bf16.mxu0 %v1085
    %1517 = vmatpush1.bf16.msra.mxu0 %v1084
    %1518 = vmatprep.subr.bf16.mxu0 %v1094
    %1519 = vmatpush1.bf16.msra.mxu0 %v1093
    %1520 = vmatprep.subr.bf16.mxu0 %v1103
    %1521 = vmatpush1.bf16.msra.mxu0 %v1102
    %1522 = vmatprep.subr.bf16.mxu0 %v1112
    %1523 = vmatpush1.bf16.msra.mxu0 %v1111
    %1524 = vmatprep.subr.bf16.mxu0 %v1121
    %1525 = vmatpush1.bf16.msra.mxu0 %v1120
    %1526 = vmatprep.subr.bf16.mxu0 %v1130
    %1527 = vmatpush1.bf16.msra.mxu0 %v1129
    %1528 = vmatprep.subr.bf16.mxu0 %v1139
    %1529 = vmatpush1.bf16.msra.mxu0 %v1138
    %1530 = vmatprep.subr.bf16.mxu0 %v1148
    %1531 = vmatpush1.bf16.msra.mxu0 %v1147
    %1532 = vmatprep.subr.bf16.mxu0 %v1157
    %1533 = vmatpush1.bf16.msra.mxu0 %v1156
    %1534 = vmatprep.subr.bf16.mxu0 %v1166
    %1535 = vmatpush1.bf16.msra.mxu0 %v1165
    %1536 = vmatprep.subr.bf16.mxu0 %v1175
    %1537 = vmatpush1.bf16.msra.mxu0 %v1174
    %1538 = vmatprep.subr.bf16.mxu0 %v1184
    %1539 = vmatpush1.bf16.msra.mxu0 %v1183
    %1540 = vmatprep.subr.bf16.mxu0 %v1193
    %1541 = vmatpush1.bf16.msra.mxu0 %v1192
    %1542 = vmatprep.subr.bf16.mxu0 %v1202
    %1543 = vmatpush1.bf16.msra.mxu0 %v1201
    %1544 = vmatprep.subr.bf16.mxu0 %v1211
    %1545 = vmatpush1.bf16.msra.mxu0 %v1210
    %1546 = vmatprep.subr.bf16.mxu0 %v1220
    %1547 = vmatpush1.bf16.msra.mxu0 %v1219
    %1548 = vmatprep.mubr.bf16.mxu0 %v121
    %1549 = vmatmul.mubr.bf16.gmra.mrb[0].mxu0 %v120
    %v1550 = vpop.f32.mrb[0].mxu0
    %v1551 = vadd.f32 %v370, %v1550
    %v1552 = vpop.f32.mrb[0].mxu0
    %v1553 = vadd.f32 %v374, %v1552
    %v1554 = vpop.f32.mrb[0].mxu0
    %v1555 = vadd.f32 %v370, %v1554
    %v1556 = vpop.f32.mrb[0].mxu0
    %v1557 = vadd.f32 %v374, %v1556
    %1558 = vdwg.mxu0
    %1559 = vmatprep.subr.bf16.mxu0 %v1229
    %1560 = vmatpush1.bf16.msra.mxu0 %v1228
    %1561 = vmatprep.subr.bf16.mxu0 %v1238
    %1562 = vmatpush1.bf16.msra.mxu0 %v1237
    %1563 = vmatprep.subr.bf16.mxu0 %v1247
    %1564 = vmatpush1.bf16.msra.mxu0 %v1246
    %1565 = vmatprep.subr.bf16.mxu0 %v1256
    %1566 = vmatpush1.bf16.msra.mxu0 %v1255
    %1567 = vmatprep.subr.bf16.mxu0 %v1265
    %1568 = vmatpush1.bf16.msra.mxu0 %v1264
    %1569 = vmatprep.subr.bf16.mxu0 %v1274
    %1570 = vmatpush1.bf16.msra.mxu0 %v1273
    %1571 = vmatprep.subr.bf16.mxu0 %v1283
    %1572 = vmatpush1.bf16.msra.mxu0 %v1282
    %1573 = vmatprep.subr.bf16.mxu0 %v1292
    %1574 = vmatpush1.bf16.msra.mxu0 %v1291
    %1575 = vmatprep.subr.bf16.mxu0 0
    %1576 = vmatpush1.bf16.msra.mxu0 0
    %1577 = vmatprep.subr.bf16.mxu0 0
    %1578 = vmatpush1.bf16.msra.mxu0 0
    %1579 = vmatprep.subr.bf16.mxu0 0
    %1580 = vmatpush1.bf16.msra.mxu0 0
    %1581 = vmatprep.subr.bf16.mxu0 0
    %1582 = vmatpush1.bf16.msra.mxu0 0
    %1583 = vmatprep.subr.bf16.mxu0 0
    %1584 = vmatpush1.bf16.msra.mxu0 0
    %1585 = vmatprep.subr.bf16.mxu0 0
    %1586 = vmatpush1.bf16.msra.mxu0 0
    %1587 = vmatprep.subr.bf16.mxu0 0
    %1588 = vmatpush1.bf16.msra.mxu0 0
    %1589 = vmatprep.subr.bf16.mxu0 0
    %1590 = vmatpush1.bf16.msra.mxu0 0
    %1591 = vmatprep.mubr.bf16.mxu0 0
    %1592 = vmatmul.mubr.bf16.gmra.mrb[0].mxu0 %v122
    %v1593 = vpop.f32.mrb[0].mxu0
    %v1594 = vadd.f32 %v1551, %v1593
    %v1595 = vpop.f32.mrb[0].mxu0
    %v1596 = vadd.f32 %v1553, %v1595
    %v1597 = vpop.f32.mrb[0].mxu0
    %v1598 = vadd.f32 %v1555, %v1597
    %v1599 = vpop.f32.mrb[0].mxu0
    %v1600 = vadd.f32 %v1557, %v1599
    %1601 = vdwg.mxu0
    %1602 = vmatprep.subr.bf16.mxu0 %v1087
    %1603 = vmatpush1.bf16.msra.mxu0 %v1086
    %1604 = vmatprep.subr.bf16.mxu0 %v1096
    %1605 = vmatpush1.bf16.msra.mxu0 %v1095
    %1606 = vmatprep.subr.bf16.mxu0 %v1105
    %1607 = vmatpush1.bf16.msra.mxu0 %v1104
    %1608 = vmatprep.subr.bf16.mxu0 %v1114
    %1609 = vmatpush1.bf16.msra.mxu0 %v1113
    %1610 = vmatprep.subr.bf16.mxu0 %v1123
    %1611 = vmatpush1.bf16.msra.mxu0 %v1122
    %1612 = vmatprep.subr.bf16.mxu0 %v1132
    %1613 = vmatpush1.bf16.msra.mxu0 %v1131
    %1614 = vmatprep.subr.bf16.mxu0 %v1141
    %1615 = vmatpush1.bf16.msra.mxu0 %v1140
    %1616 = vmatprep.subr.bf16.mxu0 %v1150
    %1617 = vmatpush1.bf16.msra.mxu0 %v1149
    %1618 = vmatprep.subr.bf16.mxu0 %v1159
    %1619 = vmatpush1.bf16.msra.mxu0 %v1158
    %1620 = vmatprep.subr.bf16.mxu0 %v1168
    %1621 = vmatpush1.bf16.msra.mxu0 %v1167
    %1622 = vmatprep.subr.bf16.mxu0 %v1177
    %1623 = vmatpush1.bf16.msra.mxu0 %v1176
    %1624 = vmatprep.subr.bf16.mxu0 %v1186
    %1625 = vmatpush1.bf16.msra.mxu0 %v1185
    %1626 = vmatprep.subr.bf16.mxu0 %v1195
    %1627 = vmatpush1.bf16.msra.mxu0 %v1194
    %1628 = vmatprep.subr.bf16.mxu0 %v1204
    %1629 = vmatpush1.bf16.msra.mxu0 %v1203
    %1630 = vmatprep.subr.bf16.mxu0 %v1213
    %1631 = vmatpush1.bf16.msra.mxu0 %v1212
    %1632 = vmatprep.subr.bf16.mxu0 %v1222
    %1633 = vmatpush1.bf16.msra.mxu0 %v1221
    %1634 = vmatprep.mubr.bf16.mxu0 %v121
    %1635 = vmatmul.mubr.bf16.gmra.mrb[0].mxu0 %v120
    %v1636 = vpop.f32.mrb[0].mxu0
    %v1637 = vadd.f32 %v378, %v1636
    %v1638 = vpop.f32.mrb[0].mxu0
    %v1639 = vadd.f32 %v382, %v1638
    %v1640 = vpop.f32.mrb[0].mxu0
    %v1641 = vadd.f32 %v378, %v1640
    %v1642 = vpop.f32.mrb[0].mxu0
    %v1643 = vadd.f32 %v382, %v1642
    %1644 = vdwg.mxu0
    %1645 = vmatprep.subr.bf16.mxu0 %v1231
    %1646 = vmatpush1.bf16.msra.mxu0 %v1230
    %1647 = vmatprep.subr.bf16.mxu0 %v1240
    %1648 = vmatpush1.bf16.msra.mxu0 %v1239
    %1649 = vmatprep.subr.bf16.mxu0 %v1249
    %1650 = vmatpush1.bf16.msra.mxu0 %v1248
    %1651 = vmatprep.subr.bf16.mxu0 %v1258
    %1652 = vmatpush1.bf16.msra.mxu0 %v1257
    %1653 = vmatprep.subr.bf16.mxu0 %v1267
    %1654 = vmatpush1.bf16.msra.mxu0 %v1266
    %1655 = vmatprep.subr.bf16.mxu0 %v1276
    %1656 = vmatpush1.bf16.msra.mxu0 %v1275
    %1657 = vmatprep.subr.bf16.mxu0 %v1285
    %1658 = vmatpush1.bf16.msra.mxu0 %v1284
    %1659 = vmatprep.subr.bf16.mxu0 %v1294
    %1660 = vmatpush1.bf16.msra.mxu0 %v1293
    %1661 = vmatprep.subr.bf16.mxu0 0
    %1662 = vmatpush1.bf16.msra.mxu0 0
    %1663 = vmatprep.subr.bf16.mxu0 0
    %1664 = vmatpush1.bf16.msra.mxu0 0
    %1665 = vmatprep.subr.bf16.mxu0 0
    %1666 = vmatpush1.bf16.msra.mxu0 0
    %1667 = vmatprep.subr.bf16.mxu0 0
    %1668 = vmatpush1.bf16.msra.mxu0 0
    %1669 = vmatprep.subr.bf16.mxu0 0
    %1670 = vmatpush1.bf16.msra.mxu0 0
    %1671 = vmatprep.subr.bf16.mxu0 0
    %1672 = vmatpush1.bf16.msra.mxu0 0
    %1673 = vmatprep.subr.bf16.mxu0 0
    %1674 = vmatpush1.bf16.msra.mxu0 0
    %1675 = vmatprep.subr.bf16.mxu0 0
    %1676 = vmatpush1.bf16.msra.mxu0 0
    %1677 = vmatprep.mubr.bf16.mxu0 0
    %1678 = vmatmul.mubr.bf16.gmra.mrb[0].mxu0 %v122
    %v1679 = vpop.f32.mrb[0].mxu0
    %v1680 = vadd.f32 %v1637, %v1679
    %v1681 = vpop.f32.mrb[0].mxu0
    %v1682 = vadd.f32 %v1639, %v1681
    %v1683 = vpop.f32.mrb[0].mxu0
    %v1684 = vadd.f32 %v1641, %v1683
    %v1685 = vpop.f32.mrb[0].mxu0
    %v1686 = vadd.f32 %v1643, %v1685
    %1687 = vdwg.mxu0
    %1688 = vmatprep.subr.bf16.mxu0 %v1089
    %1689 = vmatpush1.bf16.msra.mxu0 %v1088
    %1690 = vmatprep.subr.bf16.mxu0 %v1098
    %1691 = vmatpush1.bf16.msra.mxu0 %v1097
    %1692 = vmatprep.subr.bf16.mxu0 %v1107
    %1693 = vmatpush1.bf16.msra.mxu0 %v1106
    %1694 = vmatprep.subr.bf16.mxu0 %v1116
    %1695 = vmatpush1.bf16.msra.mxu0 %v1115
    %1696 = vmatprep.subr.bf16.mxu0 %v1125
    %1697 = vmatpush1.bf16.msra.mxu0 %v1124
    %1698 = vmatprep.subr.bf16.mxu0 %v1134
    %1699 = vmatpush1.bf16.msra.mxu0 %v1133
    %1700 = vmatprep.subr.bf16.mxu0 %v1143
    %1701 = vmatpush1.bf16.msra.mxu0 %v1142
    %1702 = vmatprep.subr.bf16.mxu0 %v1152
    %1703 = vmatpush1.bf16.msra.mxu0 %v1151
    %1704 = vmatprep.subr.bf16.mxu0 %v1161
    %1705 = vmatpush1.bf16.msra.mxu0 %v1160
    %1706 = vmatprep.subr.bf16.mxu0 %v1170
    %1707 = vmatpush1.bf16.msra.mxu0 %v1169
    %1708 = vmatprep.subr.bf16.mxu0 %v1179
    %1709 = vmatpush1.bf16.msra.mxu0 %v1178
    %1710 = vmatprep.subr.bf16.mxu0 %v1188
    %1711 = vmatpush1.bf16.msra.mxu0 %v1187
    %1712 = vmatprep.subr.bf16.mxu0 %v1197
    %1713 = vmatpush1.bf16.msra.mxu0 %v1196
    %1714 = vmatprep.subr.bf16.mxu0 %v1206
    %1715 = vmatpush1.bf16.msra.mxu0 %v1205
    %1716 = vmatprep.subr.bf16.mxu0 %v1215
    %1717 = vmatpush1.bf16.msra.mxu0 %v1214
    %1718 = vmatprep.subr.bf16.mxu0 %v1224
    %1719 = vmatpush1.bf16.msra.mxu0 %v1223
    %1720 = vmatprep.mubr.bf16.mxu0 %v121
    %1721 = vmatmul.mubr.bf16.gmra.mrb[0].mxu0 %v120
    %v1722 = vpop.f32.mrb[0].mxu0
    %v1723 = vadd.f32 %v386, %v1722
    %v1724 = vpop.f32.mrb[0].mxu0
    %v1725 = vadd.f32 %v390, %v1724
    %v1726 = vpop.f32.mrb[0].mxu0
    %v1727 = vadd.f32 %v386, %v1726
    %v1728 = vpop.f32.mrb[0].mxu0
    %v1729 = vadd.f32 %v390, %v1728
    %1730 = vdwg.mxu0
    %1731 = vmatprep.subr.bf16.mxu0 %v1233
    %1732 = vmatpush1.bf16.msra.mxu0 %v1232
    %1733 = vmatprep.subr.bf16.mxu0 %v1242
    %1734 = vmatpush1.bf16.msra.mxu0 %v1241
    %1735 = vmatprep.subr.bf16.mxu0 %v1251
    %1736 = vmatpush1.bf16.msra.mxu0 %v1250
    %1737 = vmatprep.subr.bf16.mxu0 %v1260
    %1738 = vmatpush1.bf16.msra.mxu0 %v1259
    %1739 = vmatprep.subr.bf16.mxu0 %v1269
    %1740 = vmatpush1.bf16.msra.mxu0 %v1268
    %1741 = vmatprep.subr.bf16.mxu0 %v1278
    %1742 = vmatpush1.bf16.msra.mxu0 %v1277
    %1743 = vmatprep.subr.bf16.mxu0 %v1287
    %1744 = vmatpush1.bf16.msra.mxu0 %v1286
    %1745 = vmatprep.subr.bf16.mxu0 %v1296
    %1746 = vmatpush1.bf16.msra.mxu0 %v1295
    %1747 = vmatprep.subr.bf16.mxu0 0
    %1748 = vmatpush1.bf16.msra.mxu0 0
    %1749 = vmatprep.subr.bf16.mxu0 0
    %1750 = vmatpush1.bf16.msra.mxu0 0
    %1751 = vmatprep.subr.bf16.mxu0 0
    %1752 = vmatpush1.bf16.msra.mxu0 0
    %1753 = vmatprep.subr.bf16.mxu0 0
    %1754 = vmatpush1.bf16.msra.mxu0 0
    %1755 = vmatprep.subr.bf16.mxu0 0
    %1756 = vmatpush1.bf16.msra.mxu0 0
    %1757 = vmatprep.subr.bf16.mxu0 0
    %1758 = vmatpush1.bf16.msra.mxu0 0
    %1759 = vmatprep.subr.bf16.mxu0 0
    %1760 = vmatpush1.bf16.msra.mxu0 0
    %1761 = vmatprep.subr.bf16.mxu0 0
    %1762 = vmatpush1.bf16.msra.mxu0 0
    %1763 = vmatprep.mubr.bf16.mxu0 0
    %1764 = vmatmul.mubr.bf16.gmra.mrb[0].mxu0 %v122
    %v1765 = vpop.f32.mrb[0].mxu0
    %v1766 = vadd.f32 %v1723, %v1765
    %v1767 = vpop.f32.mrb[0].mxu0
    %v1768 = vadd.f32 %v1725, %v1767
    %v1769 = vpop.f32.mrb[0].mxu0
    %v1770 = vadd.f32 %v1727, %v1769
    %v1771 = vpop.f32.mrb[0].mxu0
    %v1772 = vadd.f32 %v1729, %v1771
    %1773 = vdwg.mxu0
    %1774 = vmatprep.subr.bf16.mxu0 %v1091
    %1775 = vmatpush1.bf16.msra.mxu0 %v1090
    %1776 = vmatprep.subr.bf16.mxu0 %v1100
    %1777 = vmatpush1.bf16.msra.mxu0 %v1099
    %1778 = vmatprep.subr.bf16.mxu0 %v1109
    %1779 = vmatpush1.bf16.msra.mxu0 %v1108
    %1780 = vmatprep.subr.bf16.mxu0 %v1118
    %1781 = vmatpush1.bf16.msra.mxu0 %v1117
    %1782 = vmatprep.subr.bf16.mxu0 %v1127
    %1783 = vmatpush1.bf16.msra.mxu0 %v1126
    %1784 = vmatprep.subr.bf16.mxu0 %v1136
    %1785 = vmatpush1.bf16.msra.mxu0 %v1135
    %1786 = vmatprep.subr.bf16.mxu0 %v1145
    %1787 = vmatpush1.bf16.msra.mxu0 %v1144
    %1788 = vmatprep.subr.bf16.mxu0 %v1154
    %1789 = vmatpush1.bf16.msra.mxu0 %v1153
    %1790 = vmatprep.subr.bf16.mxu0 %v1163
    %1791 = vmatpush1.bf16.msra.mxu0 %v1162
    %1792 = vmatprep.subr.bf16.mxu0 %v1172
    %1793 = vmatpush1.bf16.msra.mxu0 %v1171
    %1794 = vmatprep.subr.bf16.mxu0 %v1181
    %1795 = vmatpush1.bf16.msra.mxu0 %v1180
    %1796 = vmatprep.subr.bf16.mxu0 %v1190
    %1797 = vmatpush1.bf16.msra.mxu0 %v1189
    %1798 = vmatprep.subr.bf16.mxu0 %v1199
    %1799 = vmatpush1.bf16.msra.mxu0 %v1198
    %1800 = vmatprep.subr.bf16.mxu0 %v1208
    %1801 = vmatpush1.bf16.msra.mxu0 %v1207
    %1802 = vmatprep.subr.bf16.mxu0 %v1217
    %1803 = vmatpush1.bf16.msra.mxu0 %v1216
    %1804 = vmatprep.subr.bf16.mxu0 %v1226
    %1805 = vmatpush1.bf16.msra.mxu0 %v1225
    %1806 = vmatprep.mubr.bf16.mxu0 %v121
    %1807 = vmatmul.mubr.bf16.gmra.mrb[0].mxu0 %v120
    %v1808 = vpop.f32.mrb[0].mxu0
    %v1809 = vadd.f32 %v394, %v1808
    %v1810 = vpop.f32.mrb[0].mxu0
    %v1811 = vadd.f32 %v398, %v1810
    %v1812 = vpop.f32.mrb[0].mxu0
    %v1813 = vadd.f32 %v394, %v1812
    %v1814 = vpop.f32.mrb[0].mxu0
    %v1815 = vadd.f32 %v398, %v1814
    %1816 = vdwg.mxu0
    %1817 = vmatprep.subr.bf16.mxu0 %v1235
    %1818 = vmatpush1.bf16.msra.mxu0 %v1234
    %1819 = vmatprep.subr.bf16.mxu0 %v1244
    %1820 = vmatpush1.bf16.msra.mxu0 %v1243
    %1821 = vmatprep.subr.bf16.mxu0 %v1253
    %1822 = vmatpush1.bf16.msra.mxu0 %v1252
    %1823 = vmatprep.subr.bf16.mxu0 %v1262
    %1824 = vmatpush1.bf16.msra.mxu0 %v1261
    %1825 = vmatprep.subr.bf16.mxu0 %v1271
    %1826 = vmatpush1.bf16.msra.mxu0 %v1270
    %1827 = vmatprep.subr.bf16.mxu0 %v1280
    %1828 = vmatpush1.bf16.msra.mxu0 %v1279
    %1829 = vmatprep.subr.bf16.mxu0 %v1289
    %1830 = vmatpush1.bf16.msra.mxu0 %v1288
    %1831 = vmatprep.subr.bf16.mxu0 %v1298
    %1832 = vmatpush1.bf16.msra.mxu0 %v1297
    %1833 = vmatprep.subr.bf16.mxu0 0
    %1834 = vmatpush1.bf16.msra.mxu0 0
    %1835 = vmatprep.subr.bf16.mxu0 0
    %1836 = vmatpush1.bf16.msra.mxu0 0
    %1837 = vmatprep.subr.bf16.mxu0 0
    %1838 = vmatpush1.bf16.msra.mxu0 0
    %1839 = vmatprep.subr.bf16.mxu0 0
    %1840 = vmatpush1.bf16.msra.mxu0 0
    %1841 = vmatprep.subr.bf16.mxu0 0
    %1842 = vmatpush1.bf16.msra.mxu0 0
    %1843 = vmatprep.subr.bf16.mxu0 0
    %1844 = vmatpush1.bf16.msra.mxu0 0
    %1845 = vmatprep.subr.bf16.mxu0 0
    %1846 = vmatpush1.bf16.msra.mxu0 0
    %1847 = vmatprep.subr.bf16.mxu0 0
    %1848 = vmatpush1.bf16.msra.mxu0 0
    %1849 = vmatprep.mubr.bf16.mxu0 0
    %1850 = vmatmul.mubr.bf16.gmra.mrb[0].mxu0 %v122
    %v1851 = vpop.f32.mrb[0].mxu0
    %v1852 = vadd.f32 %v1809, %v1851
    %v1853 = vpop.f32.mrb[0].mxu0
    %v1854 = vadd.f32 %v1811, %v1853
    %v1855 = vpop.f32.mrb[0].mxu0
    %v1856 = vadd.f32 %v1813, %v1855
    %v1857 = vpop.f32.mrb[0].mxu0
    %v1858 = vadd.f32 %v1815, %v1857
    %1859 = vdwg.mxu0
    %1860 = vmatprep.subr.bf16.mxu0 0
    %1861 = vmatpush1.bf16.msra.mxu0 %v1092
    %1862 = vmatprep.subr.bf16.mxu0 0
    %1863 = vmatpush1.bf16.msra.mxu0 %v1101
    %1864 = vmatprep.subr.bf16.mxu0 0
    %1865 = vmatpush1.bf16.msra.mxu0 %v1110
    %1866 = vmatprep.subr.bf16.mxu0 0
    %1867 = vmatpush1.bf16.msra.mxu0 %v1119
    %1868 = vmatprep.subr.bf16.mxu0 0
    %1869 = vmatpush1.bf16.msra.mxu0 %v1128
    %1870 = vmatprep.subr.bf16.mxu0 0
    %1871 = vmatpush1.bf16.msra.mxu0 %v1137
    %1872 = vmatprep.subr.bf16.mxu0 0
    %1873 = vmatpush1.bf16.msra.mxu0 %v1146
    %1874 = vmatprep.subr.bf16.mxu0 0
    %1875 = vmatpush1.bf16.msra.mxu0 %v1155
    %1876 = vmatprep.subr.bf16.mxu0 0
    %1877 = vmatpush1.bf16.msra.mxu0 %v1164
    %1878 = vmatprep.subr.bf16.mxu0 0
    %1879 = vmatpush1.bf16.msra.mxu0 %v1173
    %1880 = vmatprep.subr.bf16.mxu0 0
    %1881 = vmatpush1.bf16.msra.mxu0 %v1182
    %1882 = vmatprep.subr.bf16.mxu0 0
    %1883 = vmatpush1.bf16.msra.mxu0 %v1191
    %1884 = vmatprep.subr.bf16.mxu0 0
    %1885 = vmatpush1.bf16.msra.mxu0 %v1200
    %1886 = vmatprep.subr.bf16.mxu0 0
    %1887 = vmatpush1.bf16.msra.mxu0 %v1209
    %1888 = vmatprep.subr.bf16.mxu0 0
    %1889 = vmatpush1.bf16.msra.mxu0 %v1218
    %1890 = vmatprep.subr.bf16.mxu0 0
    %1891 = vmatpush1.bf16.msra.mxu0 %v1227
    %1892 = vmatprep.mubr.bf16.mxu0 %v121
    %1893 = vmatmul.mubr.bf16.gmra.mrb[0].mxu0 %v120
    %v1894 = vpop.f32.mrb[0].mxu0
    %v1895 = vadd.f32 %v402, %v1894
    %v1896 = vpop.f32.mrb[0].mxu0
    %v1897 = vpop.f32.mrb[0].mxu0
    %v1898 = vadd.f32 %v402, %v1897
    %v1899 = vpop.f32.mrb[0].mxu0
    %1900 = vdwg.mxu0
    %1901 = vmatprep.subr.bf16.mxu0 0
    %1902 = vmatpush1.bf16.msra.mxu0 %v1236
    %1903 = vmatprep.subr.bf16.mxu0 0
    %1904 = vmatpush1.bf16.msra.mxu0 %v1245
    %1905 = vmatprep.subr.bf16.mxu0 0
    %1906 = vmatpush1.bf16.msra.mxu0 %v1254
    %1907 = vmatprep.subr.bf16.mxu0 0
    %1908 = vmatpush1.bf16.msra.mxu0 %v1263
    %1909 = vmatprep.subr.bf16.mxu0 0
    %1910 = vmatpush1.bf16.msra.mxu0 %v1272
    %1911 = vmatprep.subr.bf16.mxu0 0
    %1912 = vmatpush1.bf16.msra.mxu0 %v1281
    %1913 = vmatprep.subr.bf16.mxu0 0
    %1914 = vmatpush1.bf16.msra.mxu0 %v1290
    %1915 = vmatprep.subr.bf16.mxu0 0
    %1916 = vmatpush1.bf16.msra.mxu0 %v1299
    %1917 = vmatprep.subr.bf16.mxu0 0
    %1918 = vmatpush1.bf16.msra.mxu0 0
    %1919 = vmatprep.subr.bf16.mxu0 0
    %1920 = vmatpush1.bf16.msra.mxu0 0
    %1921 = vmatprep.subr.bf16.mxu0 0
    %1922 = vmatpush1.bf16.msra.mxu0 0
    %1923 = vmatprep.subr.bf16.mxu0 0
    %1924 = vmatpush1.bf16.msra.mxu0 0
    %1925 = vmatprep.subr.bf16.mxu0 0
    %1926 = vmatpush1.bf16.msra.mxu0 0
    %1927 = vmatprep.subr.bf16.mxu0 0
    %1928 = vmatpush1.bf16.msra.mxu0 0
    %1929 = vmatprep.subr.bf16.mxu0 0
    %1930 = vmatpush1.bf16.msra.mxu0 0
    %1931 = vmatprep.subr.bf16.mxu0 0
    %1932 = vmatpush1.bf16.msra.mxu0 0
    %1933 = vmatprep.mubr.bf16.mxu0 0
    %1934 = vmatmul.mubr.bf16.gmra.mrb[0].mxu0 %v122
    %v1935 = vpop.f32.mrb[0].mxu0
    %v1936 = vadd.f32 %v1895, %v1935
    %v1937 = vpop.f32.mrb[0].mxu0
    %v1938 = vpop.f32.mrb[0].mxu0
    %v1939 = vadd.f32 %v1898, %v1938
    %v1940 = vpop.f32.mrb[0].mxu0
    %1941 = vdwg.mxu0
    %v1942 = vpack.c.bf16 %v1594, %v1594
    %v1943 = vpack.c.bf16 %v1596, %v1596
    %v1944 = vpack.c.bf16 %v1680, %v1680
    %v1945 = vpack.c.bf16 %v1682, %v1682
    %v1946 = vpack.c.bf16 %v1766, %v1766
    %v1947 = vpack.c.bf16 %v1768, %v1768
    %v1948 = vpack.c.bf16 %v1852, %v1852
    %v1949 = vpack.c.bf16 %v1854, %v1854
    %v1950 = vpack.c.bf16 %v1936, %v1936
    %vm1951 = vcmask 261120
    %v1953 = vsel %vm1951, %v1942, 0
    %v1956 = vsel %vm1951, %v1945, 0
    %1958 = vmatprep.subr.bf16.mxu0 0
    %1959 = vmatpush1.bf16.xpose.msra.mxu0 %v1956
    %1960 = vmatprep.subr.bf16.mxu0 0
    %1961 = vmatpush1.bf16.xpose.msra.mxu0 0
    %1962 = vmatprep.subr.bf16.mxu0 0
    %1963 = vmatpush1.bf16.xpose.msra.mxu0 0
    %1964 = vmatprep.subr.bf16.mxu0 0
    %1965 = vmatpush1.bf16.xpose.msra.mxu0 0
    %1966 = vmatprep.subr.bf16.mxu0 0
    %1967 = vmatpush1.bf16.xpose.msra.mxu0 0
    %1968 = vmatprep.subr.bf16.mxu0 0
    %1969 = vmatpush1.bf16.xpose.msra.mxu0 0
    %1970 = vmatprep.subr.bf16.mxu0 0
    %1971 = vmatpush1.bf16.xpose.msra.mxu0 0
    %1972 = vmatprep.subr.bf16.mxu0 0
    %1973 = vmatpush1.bf16.xpose.msra.mxu0 0
    %1974 = vmatprep.subr.bf16.mxu0 0
    %1975 = vmatpush1.bf16.xpose.msra.mxu0 0
    %1976 = vmatprep.subr.bf16.mxu0 0
    %1977 = vmatpush1.bf16.xpose.msra.mxu0 0
    %1978 = vmatprep.subr.bf16.mxu0 0
    %1979 = vmatpush1.bf16.xpose.msra.mxu0 0
    %1980 = vmatprep.subr.bf16.mxu0 0
    %1981 = vmatpush1.bf16.xpose.msra.mxu0 0
    %1982 = vmatprep.subr.bf16.mxu0 0
    %1983 = vmatpush1.bf16.xpose.msra.mxu0 0
    %1984 = vmatprep.subr.bf16.mxu0 0
    %1985 = vmatpush1.bf16.xpose.msra.mxu0 0
    %1986 = vmatprep.subr.bf16.mxu0 0
    %1987 = vmatpush1.bf16.xpose.msra.mxu0 0
    %1988 = vmatprep.subr.bf16.mxu0 0
    %1989 = vmatpush1.bf16.xpose.msra.mxu0 0
    %1990 = vmatprep.mubr.bf16.mxu0 0
    %1991 = vmatmul.mubr.bf16.gmra.mrb[0].mxu0 %v1953
    %v1992 = vpop.f32.mrb[0].mxu0
    %v1993 = vadd.f32 0.0, %v1992
    %v1994 = vpop.f32.mrb[0].mxu0
    %v1995 = vpop.f32.mrb[0].mxu0
    %v1996 = vpop.f32.mrb[0].mxu0
    %1997 = vdwg.mxu0
    %v1998 = vmul.f32 %v1993, 0.17677669
    %vm1999 = vcmask 64512
    %v2000 = vsel %vm1999, %v1998, -inf
    %2001 = vmax.xlane.f32.xlu0 %v2000
    %v2002 = vpop.xlane.xlu0 %2001
    %v2003 = vsub.f32 %v1998, %v2002
    %v2004 = vmul.f32 %v2003, 1.442695
    %v2005 = vpow.pop %v2004
    %v2006 = vsel %vm1999, %v2005, 0.0
    %2007 = vadd.xlane.f32.xlu0 %v2006
    %v2008 = vpop.xlane.xlu0 %2007
    %v2009 = vrcp.pop %v2008
    %v2010 = vmul.f32 %v2005, %v2009
    %v2011 = vpack.c.bf16 %v2010, %v2010
    %v2013 = vsel %vm1999, %v2011, 0
    %vm2015 = vcmask 1043456
    %v2017 = vsel %vm2015, %v1948, 0
    %2019 = vmatprep.subr.bf16.mxu0 0
    %2020 = vmatpush1.bf16.msra.mxu0 %v2017
    %2021 = vmatprep.subr.bf16.mxu0 0
    %2022 = vmatpush1.bf16.msra.mxu0 0
    %2023 = vmatprep.subr.bf16.mxu0 0
    %2024 = vmatpush1.bf16.msra.mxu0 0
    %2025 = vmatprep.subr.bf16.mxu0 0
    %2026 = vmatpush1.bf16.msra.mxu0 0
    %2027 = vmatprep.subr.bf16.mxu0 0
    %2028 = vmatpush1.bf16.msra.mxu0 0
    %2029 = vmatprep.subr.bf16.mxu0 0
    %2030 = vmatpush1.bf16.msra.mxu0 0
    %2031 = vmatprep.subr.bf16.mxu0 0
    %2032 = vmatpush1.bf16.msra.mxu0 0
    %2033 = vmatprep.subr.bf16.mxu0 0
    %2034 = vmatpush1.bf16.msra.mxu0 0
    %2035 = vmatprep.subr.bf16.mxu0 0
    %2036 = vmatpush1.bf16.msra.mxu0 0
    %2037 = vmatprep.subr.bf16.mxu0 0
    %2038 = vmatpush1.bf16.msra.mxu0 0
    %2039 = vmatprep.subr.bf16.mxu0 0
    %2040 = vmatpush1.bf16.msra.mxu0 0
    %2041 = vmatprep.subr.bf16.mxu0 0
    %2042 = vmatpush1.bf16.msra.mxu0 0
    %2043 = vmatprep.subr.bf16.mxu0 0
    %2044 = vmatpush1.bf16.msra.mxu0 0
    %2045 = vmatprep.subr.bf16.mxu0 0
    %2046 = vmatpush1.bf16.msra.mxu0 0
    %2047 = vmatprep.subr.bf16.mxu0 0
    %2048 = vmatpush1.bf16.msra.mxu0 0
    %2049 = vmatprep.subr.bf16.mxu0 0
    %2050 = vmatpush1.bf16.msra.mxu0 0
    %2051 = vmatprep.mubr.bf16.mxu0 0
    %2052 = vmatmul.mubr.bf16.gmra.mrb[0].mxu0 %v2013
    %v2053 = vpop.f32.mrb[0].mxu0
    %v2054 = vadd.f32 0.0, %v2053
    %v2055 = vpop.f32.mrb[0].mxu0
    %v2056 = vpop.f32.mrb[0].mxu0
    %v2057 = vpop.f32.mrb[0].mxu0
    %2058 = vdwg.mxu0
    %2060 = vrot.lane.b32.xlu0 %v1942, 96
    %v2061 = vpop.permute.xlu0 %2060
    %2063 = vrot.lane.b32.xlu0 %v1945, 96
    %v2064 = vpop.permute.xlu0 %2063
    %v2066 = vsel %vm1951, %v2061, 0
    %v2069 = vsel %vm1951, %v2064, 0
    %2071 = vmatprep.subr.bf16.mxu0 0
    %2072 = vmatpush1.bf16.xpose.msra.mxu0 %v2069
    %2073 = vmatprep.subr.bf16.mxu0 0
    %2074 = vmatpush1.bf16.xpose.msra.mxu0 0
    %2075 = vmatprep.subr.bf16.mxu0 0
    %2076 = vmatpush1.bf16.xpose.msra.mxu0 0
    %2077 = vmatprep.subr.bf16.mxu0 0
    %2078 = vmatpush1.bf16.xpose.msra.mxu0 0
    %2079 = vmatprep.subr.bf16.mxu0 0
    %2080 = vmatpush1.bf16.xpose.msra.mxu0 0
    %2081 = vmatprep.subr.bf16.mxu0 0
    %2082 = vmatpush1.bf16.xpose.msra.mxu0 0
    %2083 = vmatprep.subr.bf16.mxu0 0
    %2084 = vmatpush1.bf16.xpose.msra.mxu0 0
    %2085 = vmatprep.subr.bf16.mxu0 0
    %2086 = vmatpush1.bf16.xpose.msra.mxu0 0
    %2087 = vmatprep.subr.bf16.mxu0 0
    %2088 = vmatpush1.bf16.xpose.msra.mxu0 0
    %2089 = vmatprep.subr.bf16.mxu0 0
    %2090 = vmatpush1.bf16.xpose.msra.mxu0 0
    %2091 = vmatprep.subr.bf16.mxu0 0
    %2092 = vmatpush1.bf16.xpose.msra.mxu0 0
    %2093 = vmatprep.subr.bf16.mxu0 0
    %2094 = vmatpush1.bf16.xpose.msra.mxu0 0
    %2095 = vmatprep.subr.bf16.mxu0 0
    %2096 = vmatpush1.bf16.xpose.msra.mxu0 0
    %2097 = vmatprep.subr.bf16.mxu0 0
    %2098 = vmatpush1.bf16.xpose.msra.mxu0 0
    %2099 = vmatprep.subr.bf16.mxu0 0
    %2100 = vmatpush1.bf16.xpose.msra.mxu0 0
    %2101 = vmatprep.subr.bf16.mxu0 0
    %2102 = vmatpush1.bf16.xpose.msra.mxu0 0
    %2103 = vmatprep.mubr.bf16.mxu0 0
    %2104 = vmatmul.mubr.bf16.gmra.mrb[0].mxu0 %v2066
    %v2105 = vpop.f32.mrb[0].mxu0
    %v2106 = vadd.f32 0.0, %v2105
    %v2107 = vpop.f32.mrb[0].mxu0
    %v2108 = vpop.f32.mrb[0].mxu0
    %v2109 = vpop.f32.mrb[0].mxu0
    %2110 = vdwg.mxu0
    %v2111 = vmul.f32 %v2106, 0.17677669
    %v2112 = vsel %vm1999, %v2111, -inf
    %2113 = vmax.xlane.f32.xlu0 %v2112
    %v2114 = vpop.xlane.xlu0 %2113
    %v2115 = vsub.f32 %v2111, %v2114
    %v2116 = vmul.f32 %v2115, 1.442695
    %v2117 = vpow.pop %v2116
    %v2118 = vsel %vm1999, %v2117, 0.0
    %2119 = vadd.xlane.f32.xlu0 %v2118
    %v2120 = vpop.xlane.xlu0 %2119
    %v2121 = vrcp.pop %v2120
    %v2122 = vmul.f32 %v2117, %v2121
    %v2123 = vpack.c.bf16 %v2122, %v2122
    %2125 = vrot.lane.b32.xlu0 %v1948, 96
    %v2126 = vpop.permute.xlu0 %2125
    %v2128 = vsel %vm1999, %v2123, 0
    %v2131 = vsel %vm2015, %v2126, 0
    %2133 = vmatprep.subr.bf16.mxu0 0
    %2134 = vmatpush1.bf16.msra.mxu0 %v2131
    %2135 = vmatprep.subr.bf16.mxu0 0
    %2136 = vmatpush1.bf16.msra.mxu0 0
    %2137 = vmatprep.subr.bf16.mxu0 0
    %2138 = vmatpush1.bf16.msra.mxu0 0
    %2139 = vmatprep.subr.bf16.mxu0 0
    %2140 = vmatpush1.bf16.msra.mxu0 0
    %2141 = vmatprep.subr.bf16.mxu0 0
    %2142 = vmatpush1.bf16.msra.mxu0 0
    %2143 = vmatprep.subr.bf16.mxu0 0
    %2144 = vmatpush1.bf16.msra.mxu0 0
    %2145 = vmatprep.subr.bf16.mxu0 0
    %2146 = vmatpush1.bf16.msra.mxu0 0
    %2147 = vmatprep.subr.bf16.mxu0 0
    %2148 = vmatpush1.bf16.msra.mxu0 0
    %2149 = vmatprep.subr.bf16.mxu0 0
    %2150 = vmatpush1.bf16.msra.mxu0 0
    %2151 = vmatprep.subr.bf16.mxu0 0
    %2152 = vmatpush1.bf16.msra.mxu0 0
    %2153 = vmatprep.subr.bf16.mxu0 0
    %2154 = vmatpush1.bf16.msra.mxu0 0
    %2155 = vmatprep.subr.bf16.mxu0 0
    %2156 = vmatpush1.bf16.msra.mxu0 0
    %2157 = vmatprep.subr.bf16.mxu0 0
    %2158 = vmatpush1.bf16.msra.mxu0 0
    %2159 = vmatprep.subr.bf16.mxu0 0
    %2160 = vmatpush1.bf16.msra.mxu0 0
    %2161 = vmatprep.subr.bf16.mxu0 0
    %2162 = vmatpush1.bf16.msra.mxu0 0
    %2163 = vmatprep.subr.bf16.mxu0 0
    %2164 = vmatpush1.bf16.msra.mxu0 0
    %2165 = vmatprep.mubr.bf16.mxu0 0
    %2166 = vmatmul.mubr.bf16.gmra.mrb[0].mxu0 %v2128
    %v2167 = vpop.f32.mrb[0].mxu0
    %v2168 = vadd.f32 0.0, %v2167
    %v2169 = vpop.f32.mrb[0].mxu0
    %v2170 = vpop.f32.mrb[0].mxu0
    %v2171 = vpop.f32.mrb[0].mxu0
    %2172 = vdwg.mxu0
    %2173 = vrot.lane.b32.xlu0 %v1942, 64
    %v2174 = vpop.permute.xlu0 %2173
    %2175 = vrot.lane.b32.xlu0 %v1945, 64
    %v2176 = vpop.permute.xlu0 %2175
    %v2178 = vsel %vm1951, %v2174, 0
    %v2181 = vsel %vm1951, %v2176, 0
    %2183 = vmatprep.subr.bf16.mxu0 0
    %2184 = vmatpush1.bf16.xpose.msra.mxu0 %v2181
    %2185 = vmatprep.subr.bf16.mxu0 0
    %2186 = vmatpush1.bf16.xpose.msra.mxu0 0
    %2187 = vmatprep.subr.bf16.mxu0 0
    %2188 = vmatpush1.bf16.xpose.msra.mxu0 0
    %2189 = vmatprep.subr.bf16.mxu0 0
    %2190 = vmatpush1.bf16.xpose.msra.mxu0 0
    %2191 = vmatprep.subr.bf16.mxu0 0
    %2192 = vmatpush1.bf16.xpose.msra.mxu0 0
    %2193 = vmatprep.subr.bf16.mxu0 0
    %2194 = vmatpush1.bf16.xpose.msra.mxu0 0
    %2195 = vmatprep.subr.bf16.mxu0 0
    %2196 = vmatpush1.bf16.xpose.msra.mxu0 0
    %2197 = vmatprep.subr.bf16.mxu0 0
    %2198 = vmatpush1.bf16.xpose.msra.mxu0 0
    %2199 = vmatprep.subr.bf16.mxu0 0
    %2200 = vmatpush1.bf16.xpose.msra.mxu0 0
    %2201 = vmatprep.subr.bf16.mxu0 0
    %2202 = vmatpush1.bf16.xpose.msra.mxu0 0
    %2203 = vmatprep.subr.bf16.mxu0 0
    %2204 = vmatpush1.bf16.xpose.msra.mxu0 0
    %2205 = vmatprep.subr.bf16.mxu0 0
    %2206 = vmatpush1.bf16.xpose.msra.mxu0 0
    %2207 = vmatprep.subr.bf16.mxu0 0
    %2208 = vmatpush1.bf16.xpose.msra.mxu0 0
    %2209 = vmatprep.subr.bf16.mxu0 0
    %2210 = vmatpush1.bf16.xpose.msra.mxu0 0
    %2211 = vmatprep.subr.bf16.mxu0 0
    %2212 = vmatpush1.bf16.xpose.msra.mxu0 0
    %2213 = vmatprep.subr.bf16.mxu0 0
    %2214 = vmatpush1.bf16.xpose.msra.mxu0 0
    %2215 = vmatprep.mubr.bf16.mxu0 0
    %2216 = vmatmul.mubr.bf16.gmra.mrb[0].mxu0 %v2178
    %v2217 = vpop.f32.mrb[0].mxu0
    %v2218 = vadd.f32 0.0, %v2217
    %v2219 = vpop.f32.mrb[0].mxu0
    %v2220 = vpop.f32.mrb[0].mxu0
    %v2221 = vpop.f32.mrb[0].mxu0
    %2222 = vdwg.mxu0
    %v2223 = vmul.f32 %v2218, 0.17677669
    %v2224 = vsel %vm1999, %v2223, -inf
    %2225 = vmax.xlane.f32.xlu0 %v2224
    %v2226 = vpop.xlane.xlu0 %2225
    %v2227 = vsub.f32 %v2223, %v2226
    %v2228 = vmul.f32 %v2227, 1.442695
    %v2229 = vpow.pop %v2228
    %v2230 = vsel %vm1999, %v2229, 0.0
    %2231 = vadd.xlane.f32.xlu0 %v2230
    %v2232 = vpop.xlane.xlu0 %2231
    %v2233 = vrcp.pop %v2232
    %v2234 = vmul.f32 %v2229, %v2233
    %v2235 = vpack.c.bf16 %v2234, %v2234
    %2236 = vrot.lane.b32.xlu0 %v1948, 64
    %v2237 = vpop.permute.xlu0 %2236
    %v2239 = vsel %vm1999, %v2235, 0
    %v2242 = vsel %vm2015, %v2237, 0
    %2244 = vmatprep.subr.bf16.mxu0 0
    %2245 = vmatpush1.bf16.msra.mxu0 %v2242
    %2246 = vmatprep.subr.bf16.mxu0 0
    %2247 = vmatpush1.bf16.msra.mxu0 0
    %2248 = vmatprep.subr.bf16.mxu0 0
    %2249 = vmatpush1.bf16.msra.mxu0 0
    %2250 = vmatprep.subr.bf16.mxu0 0
    %2251 = vmatpush1.bf16.msra.mxu0 0
    %2252 = vmatprep.subr.bf16.mxu0 0
    %2253 = vmatpush1.bf16.msra.mxu0 0
    %2254 = vmatprep.subr.bf16.mxu0 0
    %2255 = vmatpush1.bf16.msra.mxu0 0
    %2256 = vmatprep.subr.bf16.mxu0 0
    %2257 = vmatpush1.bf16.msra.mxu0 0
    %2258 = vmatprep.subr.bf16.mxu0 0
    %2259 = vmatpush1.bf16.msra.mxu0 0
    %2260 = vmatprep.subr.bf16.mxu0 0
    %2261 = vmatpush1.bf16.msra.mxu0 0
    %2262 = vmatprep.subr.bf16.mxu0 0
    %2263 = vmatpush1.bf16.msra.mxu0 0
    %2264 = vmatprep.subr.bf16.mxu0 0
    %2265 = vmatpush1.bf16.msra.mxu0 0
    %2266 = vmatprep.subr.bf16.mxu0 0
    %2267 = vmatpush1.bf16.msra.mxu0 0
    %2268 = vmatprep.subr.bf16.mxu0 0
    %2269 = vmatpush1.bf16.msra.mxu0 0
    %2270 = vmatprep.subr.bf16.mxu0 0
    %2271 = vmatpush1.bf16.msra.mxu0 0
    %2272 = vmatprep.subr.bf16.mxu0 0
    %2273 = vmatpush1.bf16.msra.mxu0 0
    %2274 = vmatprep.subr.bf16.mxu0 0
    %2275 = vmatpush1.bf16.msra.mxu0 0
    %2276 = vmatprep.mubr.bf16.mxu0 0
    %2277 = vmatmul.mubr.bf16.gmra.mrb[0].mxu0 %v2239
    %v2278 = vpop.f32.mrb[0].mxu0
    %v2279 = vadd.f32 0.0, %v2278
    %v2280 = vpop.f32.mrb[0].mxu0
    %v2281 = vpop.f32.mrb[0].mxu0
    %v2282 = vpop.f32.mrb[0].mxu0
    %2283 = vdwg.mxu0
    %2284 = vrot.lane.b32.xlu0 %v1942, 32
    %v2285 = vpop.permute.xlu0 %2284
    %2286 = vrot.lane.b32.xlu0 %v1945, 32
    %v2287 = vpop.permute.xlu0 %2286
    %v2289 = vsel %vm1951, %v2285, 0
    %v2292 = vsel %vm1951, %v2287, 0
    %2294 = vmatprep.subr.bf16.mxu0 0
    %2295 = vmatpush1.bf16.xpose.msra.mxu0 %v2292
    %2296 = vmatprep.subr.bf16.mxu0 0
    %2297 = vmatpush1.bf16.xpose.msra.mxu0 0
    %2298 = vmatprep.subr.bf16.mxu0 0
    %2299 = vmatpush1.bf16.xpose.msra.mxu0 0
    %2300 = vmatprep.subr.bf16.mxu0 0
    %2301 = vmatpush1.bf16.xpose.msra.mxu0 0
    %2302 = vmatprep.subr.bf16.mxu0 0
    %2303 = vmatpush1.bf16.xpose.msra.mxu0 0
    %2304 = vmatprep.subr.bf16.mxu0 0
    %2305 = vmatpush1.bf16.xpose.msra.mxu0 0
    %2306 = vmatprep.subr.bf16.mxu0 0
    %2307 = vmatpush1.bf16.xpose.msra.mxu0 0
    %2308 = vmatprep.subr.bf16.mxu0 0
    %2309 = vmatpush1.bf16.xpose.msra.mxu0 0
    %2310 = vmatprep.subr.bf16.mxu0 0
    %2311 = vmatpush1.bf16.xpose.msra.mxu0 0
    %2312 = vmatprep.subr.bf16.mxu0 0
    %2313 = vmatpush1.bf16.xpose.msra.mxu0 0
    %2314 = vmatprep.subr.bf16.mxu0 0
    %2315 = vmatpush1.bf16.xpose.msra.mxu0 0
    %2316 = vmatprep.subr.bf16.mxu0 0
    %2317 = vmatpush1.bf16.xpose.msra.mxu0 0
    %2318 = vmatprep.subr.bf16.mxu0 0
    %2319 = vmatpush1.bf16.xpose.msra.mxu0 0
    %2320 = vmatprep.subr.bf16.mxu0 0
    %2321 = vmatpush1.bf16.xpose.msra.mxu0 0
    %2322 = vmatprep.subr.bf16.mxu0 0
    %2323 = vmatpush1.bf16.xpose.msra.mxu0 0
    %2324 = vmatprep.subr.bf16.mxu0 0
    %2325 = vmatpush1.bf16.xpose.msra.mxu0 0
    %2326 = vmatprep.mubr.bf16.mxu0 0
    %2327 = vmatmul.mubr.bf16.gmra.mrb[0].mxu0 %v2289
    %v2328 = vpop.f32.mrb[0].mxu0
    %v2329 = vadd.f32 0.0, %v2328
    %v2330 = vpop.f32.mrb[0].mxu0
    %v2331 = vpop.f32.mrb[0].mxu0
    %v2332 = vpop.f32.mrb[0].mxu0
    %2333 = vdwg.mxu0
    %v2334 = vmul.f32 %v2329, 0.17677669
    %v2335 = vsel %vm1999, %v2334, -inf
    %2336 = vmax.xlane.f32.xlu0 %v2335
    %v2337 = vpop.xlane.xlu0 %2336
    %v2338 = vsub.f32 %v2334, %v2337
    %v2339 = vmul.f32 %v2338, 1.442695
    %v2340 = vpow.pop %v2339
    %v2341 = vsel %vm1999, %v2340, 0.0
    %2342 = vadd.xlane.f32.xlu0 %v2341
    %v2343 = vpop.xlane.xlu0 %2342
    %v2344 = vrcp.pop %v2343
    %v2345 = vmul.f32 %v2340, %v2344
    %v2346 = vpack.c.bf16 %v2345, %v2345
    %2347 = vrot.lane.b32.xlu0 %v1948, 32
    %v2348 = vpop.permute.xlu0 %2347
    %v2350 = vsel %vm1999, %v2346, 0
    %v2353 = vsel %vm2015, %v2348, 0
    %2355 = vmatprep.subr.bf16.mxu0 0
    %2356 = vmatpush1.bf16.msra.mxu0 %v2353
    %2357 = vmatprep.subr.bf16.mxu0 0
    %2358 = vmatpush1.bf16.msra.mxu0 0
    %2359 = vmatprep.subr.bf16.mxu0 0
    %2360 = vmatpush1.bf16.msra.mxu0 0
    %2361 = vmatprep.subr.bf16.mxu0 0
    %2362 = vmatpush1.bf16.msra.mxu0 0
    %2363 = vmatprep.subr.bf16.mxu0 0
    %2364 = vmatpush1.bf16.msra.mxu0 0
    %2365 = vmatprep.subr.bf16.mxu0 0
    %2366 = vmatpush1.bf16.msra.mxu0 0
    %2367 = vmatprep.subr.bf16.mxu0 0
    %2368 = vmatpush1.bf16.msra.mxu0 0
    %2369 = vmatprep.subr.bf16.mxu0 0
    %2370 = vmatpush1.bf16.msra.mxu0 0
    %2371 = vmatprep.subr.bf16.mxu0 0
    %2372 = vmatpush1.bf16.msra.mxu0 0
    %2373 = vmatprep.subr.bf16.mxu0 0
    %2374 = vmatpush1.bf16.msra.mxu0 0
    %2375 = vmatprep.subr.bf16.mxu0 0
    %2376 = vmatpush1.bf16.msra.mxu0 0
    %2377 = vmatprep.subr.bf16.mxu0 0
    %2378 = vmatpush1.bf16.msra.mxu0 0
    %2379 = vmatprep.subr.bf16.mxu0 0
    %2380 = vmatpush1.bf16.msra.mxu0 0
    %2381 = vmatprep.subr.bf16.mxu0 0
    %2382 = vmatpush1.bf16.msra.mxu0 0
    %2383 = vmatprep.subr.bf16.mxu0 0
    %2384 = vmatpush1.bf16.msra.mxu0 0
    %2385 = vmatprep.subr.bf16.mxu0 0
    %2386 = vmatpush1.bf16.msra.mxu0 0
    %2387 = vmatprep.mubr.bf16.mxu0 0
    %2388 = vmatmul.mubr.bf16.gmra.mrb[0].mxu0 %v2350
    %v2389 = vpop.f32.mrb[0].mxu0
    %v2390 = vadd.f32 0.0, %v2389
    %v2391 = vpop.f32.mrb[0].mxu0
    %v2392 = vpop.f32.mrb[0].mxu0
    %v2393 = vpop.f32.mrb[0].mxu0
    %2394 = vdwg.mxu0
    %v2396 = vsel %vm1951, %v1943, 0
    %v2399 = vsel %vm1951, %v1946, 0
    %2401 = vmatprep.subr.bf16.mxu0 0
    %2402 = vmatpush1.bf16.xpose.msra.mxu0 %v2399
    %2403 = vmatprep.subr.bf16.mxu0 0
    %2404 = vmatpush1.bf16.xpose.msra.mxu0 0
    %2405 = vmatprep.subr.bf16.mxu0 0
    %2406 = vmatpush1.bf16.xpose.msra.mxu0 0
    %2407 = vmatprep.subr.bf16.mxu0 0
    %2408 = vmatpush1.bf16.xpose.msra.mxu0 0
    %2409 = vmatprep.subr.bf16.mxu0 0
    %2410 = vmatpush1.bf16.xpose.msra.mxu0 0
    %2411 = vmatprep.subr.bf16.mxu0 0
    %2412 = vmatpush1.bf16.xpose.msra.mxu0 0
    %2413 = vmatprep.subr.bf16.mxu0 0
    %2414 = vmatpush1.bf16.xpose.msra.mxu0 0
    %2415 = vmatprep.subr.bf16.mxu0 0
    %2416 = vmatpush1.bf16.xpose.msra.mxu0 0
    %2417 = vmatprep.subr.bf16.mxu0 0
    %2418 = vmatpush1.bf16.xpose.msra.mxu0 0
    %2419 = vmatprep.subr.bf16.mxu0 0
    %2420 = vmatpush1.bf16.xpose.msra.mxu0 0
    %2421 = vmatprep.subr.bf16.mxu0 0
    %2422 = vmatpush1.bf16.xpose.msra.mxu0 0
    %2423 = vmatprep.subr.bf16.mxu0 0
    %2424 = vmatpush1.bf16.xpose.msra.mxu0 0
    %2425 = vmatprep.subr.bf16.mxu0 0
    %2426 = vmatpush1.bf16.xpose.msra.mxu0 0
    %2427 = vmatprep.subr.bf16.mxu0 0
    %2428 = vmatpush1.bf16.xpose.msra.mxu0 0
    %2429 = vmatprep.subr.bf16.mxu0 0
    %2430 = vmatpush1.bf16.xpose.msra.mxu0 0
    %2431 = vmatprep.subr.bf16.mxu0 0
    %2432 = vmatpush1.bf16.xpose.msra.mxu0 0
    %2433 = vmatprep.mubr.bf16.mxu0 0
    %2434 = vmatmul.mubr.bf16.gmra.mrb[0].mxu0 %v2396
    %v2435 = vpop.f32.mrb[0].mxu0
    %v2436 = vadd.f32 0.0, %v2435
    %v2437 = vpop.f32.mrb[0].mxu0
    %v2438 = vpop.f32.mrb[0].mxu0
    %v2439 = vpop.f32.mrb[0].mxu0
    %2440 = vdwg.mxu0
    %v2441 = vmul.f32 %v2436, 0.17677669
    %v2442 = vsel %vm1999, %v2441, -inf
    %2443 = vmax.xlane.f32.xlu0 %v2442
    %v2444 = vpop.xlane.xlu0 %2443
    %v2445 = vsub.f32 %v2441, %v2444
    %v2446 = vmul.f32 %v2445, 1.442695
    %v2447 = vpow.pop %v2446
    %v2448 = vsel %vm1999, %v2447, 0.0
    %2449 = vadd.xlane.f32.xlu0 %v2448
    %v2450 = vpop.xlane.xlu0 %2449
    %v2451 = vrcp.pop %v2450
    %v2452 = vmul.f32 %v2447, %v2451
    %v2453 = vpack.c.bf16 %v2452, %v2452
    %v2455 = vsel %vm1999, %v2453, 0
    %v2458 = vsel %vm2015, %v1949, 0
    %2460 = vmatprep.subr.bf16.mxu0 0
    %2461 = vmatpush1.bf16.msra.mxu0 %v2458
    %2462 = vmatprep.subr.bf16.mxu0 0
    %2463 = vmatpush1.bf16.msra.mxu0 0
    %2464 = vmatprep.subr.bf16.mxu0 0
    %2465 = vmatpush1.bf16.msra.mxu0 0
    %2466 = vmatprep.subr.bf16.mxu0 0
    %2467 = vmatpush1.bf16.msra.mxu0 0
    %2468 = vmatprep.subr.bf16.mxu0 0
    %2469 = vmatpush1.bf16.msra.mxu0 0
    %2470 = vmatprep.subr.bf16.mxu0 0
    %2471 = vmatpush1.bf16.msra.mxu0 0
    %2472 = vmatprep.subr.bf16.mxu0 0
    %2473 = vmatpush1.bf16.msra.mxu0 0
    %2474 = vmatprep.subr.bf16.mxu0 0
    %2475 = vmatpush1.bf16.msra.mxu0 0
    %2476 = vmatprep.subr.bf16.mxu0 0
    %2477 = vmatpush1.bf16.msra.mxu0 0
    %2478 = vmatprep.subr.bf16.mxu0 0
    %2479 = vmatpush1.bf16.msra.mxu0 0
    %2480 = vmatprep.subr.bf16.mxu0 0
    %2481 = vmatpush1.bf16.msra.mxu0 0
    %2482 = vmatprep.subr.bf16.mxu0 0
    %2483 = vmatpush1.bf16.msra.mxu0 0
    %2484 = vmatprep.subr.bf16.mxu0 0
    %2485 = vmatpush1.bf16.msra.mxu0 0
    %2486 = vmatprep.subr.bf16.mxu0 0
    %2487 = vmatpush1.bf16.msra.mxu0 0
    %2488 = vmatprep.subr.bf16.mxu0 0
    %2489 = vmatpush1.bf16.msra.mxu0 0
    %2490 = vmatprep.subr.bf16.mxu0 0
    %2491 = vmatpush1.bf16.msra.mxu0 0
    %2492 = vmatprep.mubr.bf16.mxu0 0
    %2493 = vmatmul.mubr.bf16.gmra.mrb[0].mxu0 %v2455
    %v2494 = vpop.f32.mrb[0].mxu0
    %v2495 = vadd.f32 0.0, %v2494
    %v2496 = vpop.f32.mrb[0].mxu0
    %v2497 = vpop.f32.mrb[0].mxu0
    %v2498 = vpop.f32.mrb[0].mxu0
    %2499 = vdwg.mxu0
    %2501 = vrot.lane.b32.xlu0 %v1943, 96
    %v2502 = vpop.permute.xlu0 %2501
    %2504 = vrot.lane.b32.xlu0 %v1946, 96
    %v2505 = vpop.permute.xlu0 %2504
    %v2507 = vsel %vm1951, %v2502, 0
    %v2510 = vsel %vm1951, %v2505, 0
    %2512 = vmatprep.subr.bf16.mxu0 0
    %2513 = vmatpush1.bf16.xpose.msra.mxu0 %v2510
    %2514 = vmatprep.subr.bf16.mxu0 0
    %2515 = vmatpush1.bf16.xpose.msra.mxu0 0
    %2516 = vmatprep.subr.bf16.mxu0 0
    %2517 = vmatpush1.bf16.xpose.msra.mxu0 0
    %2518 = vmatprep.subr.bf16.mxu0 0
    %2519 = vmatpush1.bf16.xpose.msra.mxu0 0
    %2520 = vmatprep.subr.bf16.mxu0 0
    %2521 = vmatpush1.bf16.xpose.msra.mxu0 0
    %2522 = vmatprep.subr.bf16.mxu0 0
    %2523 = vmatpush1.bf16.xpose.msra.mxu0 0
    %2524 = vmatprep.subr.bf16.mxu0 0
    %2525 = vmatpush1.bf16.xpose.msra.mxu0 0
    %2526 = vmatprep.subr.bf16.mxu0 0
    %2527 = vmatpush1.bf16.xpose.msra.mxu0 0
    %2528 = vmatprep.subr.bf16.mxu0 0
    %2529 = vmatpush1.bf16.xpose.msra.mxu0 0
    %2530 = vmatprep.subr.bf16.mxu0 0
    %2531 = vmatpush1.bf16.xpose.msra.mxu0 0
    %2532 = vmatprep.subr.bf16.mxu0 0
    %2533 = vmatpush1.bf16.xpose.msra.mxu0 0
    %2534 = vmatprep.subr.bf16.mxu0 0
    %2535 = vmatpush1.bf16.xpose.msra.mxu0 0
    %2536 = vmatprep.subr.bf16.mxu0 0
    %2537 = vmatpush1.bf16.xpose.msra.mxu0 0
    %2538 = vmatprep.subr.bf16.mxu0 0
    %2539 = vmatpush1.bf16.xpose.msra.mxu0 0
    %2540 = vmatprep.subr.bf16.mxu0 0
    %2541 = vmatpush1.bf16.xpose.msra.mxu0 0
    %2542 = vmatprep.subr.bf16.mxu0 0
    %2543 = vmatpush1.bf16.xpose.msra.mxu0 0
    %2544 = vmatprep.mubr.bf16.mxu0 0
    %2545 = vmatmul.mubr.bf16.gmra.mrb[0].mxu0 %v2507
    %v2546 = vpop.f32.mrb[0].mxu0
    %v2547 = vadd.f32 0.0, %v2546
    %v2548 = vpop.f32.mrb[0].mxu0
    %v2549 = vpop.f32.mrb[0].mxu0
    %v2550 = vpop.f32.mrb[0].mxu0
    %2551 = vdwg.mxu0
    %v2552 = vmul.f32 %v2547, 0.17677669
    %v2553 = vsel %vm1999, %v2552, -inf
    %2554 = vmax.xlane.f32.xlu0 %v2553
    %v2555 = vpop.xlane.xlu0 %2554
    %v2556 = vsub.f32 %v2552, %v2555
    %v2557 = vmul.f32 %v2556, 1.442695
    %v2558 = vpow.pop %v2557
    %v2559 = vsel %vm1999, %v2558, 0.0
    %2560 = vadd.xlane.f32.xlu0 %v2559
    %v2561 = vpop.xlane.xlu0 %2560
    %v2562 = vrcp.pop %v2561
    %v2563 = vmul.f32 %v2558, %v2562
    %v2564 = vpack.c.bf16 %v2563, %v2563
    %2566 = vrot.lane.b32.xlu0 %v1949, 96
    %v2567 = vpop.permute.xlu0 %2566
    %v2569 = vsel %vm1999, %v2564, 0
    %v2572 = vsel %vm2015, %v2567, 0
    %2574 = vmatprep.subr.bf16.mxu0 0
    %2575 = vmatpush1.bf16.msra.mxu0 %v2572
    %2576 = vmatprep.subr.bf16.mxu0 0
    %2577 = vmatpush1.bf16.msra.mxu0 0
    %2578 = vmatprep.subr.bf16.mxu0 0
    %2579 = vmatpush1.bf16.msra.mxu0 0
    %2580 = vmatprep.subr.bf16.mxu0 0
    %2581 = vmatpush1.bf16.msra.mxu0 0
    %2582 = vmatprep.subr.bf16.mxu0 0
    %2583 = vmatpush1.bf16.msra.mxu0 0
    %2584 = vmatprep.subr.bf16.mxu0 0
    %2585 = vmatpush1.bf16.msra.mxu0 0
    %2586 = vmatprep.subr.bf16.mxu0 0
    %2587 = vmatpush1.bf16.msra.mxu0 0
    %2588 = vmatprep.subr.bf16.mxu0 0
    %2589 = vmatpush1.bf16.msra.mxu0 0
    %2590 = vmatprep.subr.bf16.mxu0 0
    %2591 = vmatpush1.bf16.msra.mxu0 0
    %2592 = vmatprep.subr.bf16.mxu0 0
    %2593 = vmatpush1.bf16.msra.mxu0 0
    %2594 = vmatprep.subr.bf16.mxu0 0
    %2595 = vmatpush1.bf16.msra.mxu0 0
    %2596 = vmatprep.subr.bf16.mxu0 0
    %2597 = vmatpush1.bf16.msra.mxu0 0
    %2598 = vmatprep.subr.bf16.mxu0 0
    %2599 = vmatpush1.bf16.msra.mxu0 0
    %2600 = vmatprep.subr.bf16.mxu0 0
    %2601 = vmatpush1.bf16.msra.mxu0 0
    %2602 = vmatprep.subr.bf16.mxu0 0
    %2603 = vmatpush1.bf16.msra.mxu0 0
    %2604 = vmatprep.subr.bf16.mxu0 0
    %2605 = vmatpush1.bf16.msra.mxu0 0
    %2606 = vmatprep.mubr.bf16.mxu0 0
    %2607 = vmatmul.mubr.bf16.gmra.mrb[0].mxu0 %v2569
    %v2608 = vpop.f32.mrb[0].mxu0
    %v2609 = vadd.f32 0.0, %v2608
    %v2610 = vpop.f32.mrb[0].mxu0
    %v2611 = vpop.f32.mrb[0].mxu0
    %v2612 = vpop.f32.mrb[0].mxu0
    %2613 = vdwg.mxu0
    %2614 = vrot.lane.b32.xlu0 %v1943, 64
    %v2615 = vpop.permute.xlu0 %2614
    %2616 = vrot.lane.b32.xlu0 %v1946, 64
    %v2617 = vpop.permute.xlu0 %2616
    %v2619 = vsel %vm1951, %v2615, 0
    %v2622 = vsel %vm1951, %v2617, 0
    %2624 = vmatprep.subr.bf16.mxu0 0
    %2625 = vmatpush1.bf16.xpose.msra.mxu0 %v2622
    %2626 = vmatprep.subr.bf16.mxu0 0
    %2627 = vmatpush1.bf16.xpose.msra.mxu0 0
    %2628 = vmatprep.subr.bf16.mxu0 0
    %2629 = vmatpush1.bf16.xpose.msra.mxu0 0
    %2630 = vmatprep.subr.bf16.mxu0 0
    %2631 = vmatpush1.bf16.xpose.msra.mxu0 0
    %2632 = vmatprep.subr.bf16.mxu0 0
    %2633 = vmatpush1.bf16.xpose.msra.mxu0 0
    %2634 = vmatprep.subr.bf16.mxu0 0
    %2635 = vmatpush1.bf16.xpose.msra.mxu0 0
    %2636 = vmatprep.subr.bf16.mxu0 0
    %2637 = vmatpush1.bf16.xpose.msra.mxu0 0
    %2638 = vmatprep.subr.bf16.mxu0 0
    %2639 = vmatpush1.bf16.xpose.msra.mxu0 0
    %2640 = vmatprep.subr.bf16.mxu0 0
    %2641 = vmatpush1.bf16.xpose.msra.mxu0 0
    %2642 = vmatprep.subr.bf16.mxu0 0
    %2643 = vmatpush1.bf16.xpose.msra.mxu0 0
    %2644 = vmatprep.subr.bf16.mxu0 0
    %2645 = vmatpush1.bf16.xpose.msra.mxu0 0
    %2646 = vmatprep.subr.bf16.mxu0 0
    %2647 = vmatpush1.bf16.xpose.msra.mxu0 0
    %2648 = vmatprep.subr.bf16.mxu0 0
    %2649 = vmatpush1.bf16.xpose.msra.mxu0 0
    %2650 = vmatprep.subr.bf16.mxu0 0
    %2651 = vmatpush1.bf16.xpose.msra.mxu0 0
    %2652 = vmatprep.subr.bf16.mxu0 0
    %2653 = vmatpush1.bf16.xpose.msra.mxu0 0
    %2654 = vmatprep.subr.bf16.mxu0 0
    %2655 = vmatpush1.bf16.xpose.msra.mxu0 0
    %2656 = vmatprep.mubr.bf16.mxu0 0
    %2657 = vmatmul.mubr.bf16.gmra.mrb[0].mxu0 %v2619
    %v2658 = vpop.f32.mrb[0].mxu0
    %v2659 = vadd.f32 0.0, %v2658
    %v2660 = vpop.f32.mrb[0].mxu0
    %v2661 = vpop.f32.mrb[0].mxu0
    %v2662 = vpop.f32.mrb[0].mxu0
    %2663 = vdwg.mxu0
    %v2664 = vmul.f32 %v2659, 0.17677669
    %v2665 = vsel %vm1999, %v2664, -inf
    %2666 = vmax.xlane.f32.xlu0 %v2665
    %v2667 = vpop.xlane.xlu0 %2666
    %v2668 = vsub.f32 %v2664, %v2667
    %v2669 = vmul.f32 %v2668, 1.442695
    %v2670 = vpow.pop %v2669
    %v2671 = vsel %vm1999, %v2670, 0.0
    %2672 = vadd.xlane.f32.xlu0 %v2671
    %v2673 = vpop.xlane.xlu0 %2672
    %v2674 = vrcp.pop %v2673
    %v2675 = vmul.f32 %v2670, %v2674
    %v2676 = vpack.c.bf16 %v2675, %v2675
    %2677 = vrot.lane.b32.xlu0 %v1949, 64
    %v2678 = vpop.permute.xlu0 %2677
    %v2680 = vsel %vm1999, %v2676, 0
    %v2683 = vsel %vm2015, %v2678, 0
    %2685 = vmatprep.subr.bf16.mxu0 0
    %2686 = vmatpush1.bf16.msra.mxu0 %v2683
    %2687 = vmatprep.subr.bf16.mxu0 0
    %2688 = vmatpush1.bf16.msra.mxu0 0
    %2689 = vmatprep.subr.bf16.mxu0 0
    %2690 = vmatpush1.bf16.msra.mxu0 0
    %2691 = vmatprep.subr.bf16.mxu0 0
    %2692 = vmatpush1.bf16.msra.mxu0 0
    %2693 = vmatprep.subr.bf16.mxu0 0
    %2694 = vmatpush1.bf16.msra.mxu0 0
    %2695 = vmatprep.subr.bf16.mxu0 0
    %2696 = vmatpush1.bf16.msra.mxu0 0
    %2697 = vmatprep.subr.bf16.mxu0 0
    %2698 = vmatpush1.bf16.msra.mxu0 0
    %2699 = vmatprep.subr.bf16.mxu0 0
    %2700 = vmatpush1.bf16.msra.mxu0 0
    %2701 = vmatprep.subr.bf16.mxu0 0
    %2702 = vmatpush1.bf16.msra.mxu0 0
    %2703 = vmatprep.subr.bf16.mxu0 0
    %2704 = vmatpush1.bf16.msra.mxu0 0
    %2705 = vmatprep.subr.bf16.mxu0 0
    %2706 = vmatpush1.bf16.msra.mxu0 0
    %2707 = vmatprep.subr.bf16.mxu0 0
    %2708 = vmatpush1.bf16.msra.mxu0 0
    %2709 = vmatprep.subr.bf16.mxu0 0
    %2710 = vmatpush1.bf16.msra.mxu0 0
    %2711 = vmatprep.subr.bf16.mxu0 0
    %2712 = vmatpush1.bf16.msra.mxu0 0
    %2713 = vmatprep.subr.bf16.mxu0 0
    %2714 = vmatpush1.bf16.msra.mxu0 0
    %2715 = vmatprep.subr.bf16.mxu0 0
    %2716 = vmatpush1.bf16.msra.mxu0 0
    %2717 = vmatprep.mubr.bf16.mxu0 0
    %2718 = vmatmul.mubr.bf16.gmra.mrb[0].mxu0 %v2680
    %v2719 = vpop.f32.mrb[0].mxu0
    %v2720 = vadd.f32 0.0, %v2719
    %v2721 = vpop.f32.mrb[0].mxu0
    %v2722 = vpop.f32.mrb[0].mxu0
    %v2723 = vpop.f32.mrb[0].mxu0
    %2724 = vdwg.mxu0
    %2725 = vrot.lane.b32.xlu0 %v1943, 32
    %v2726 = vpop.permute.xlu0 %2725
    %2727 = vrot.lane.b32.xlu0 %v1946, 32
    %v2728 = vpop.permute.xlu0 %2727
    %v2730 = vsel %vm1951, %v2726, 0
    %v2733 = vsel %vm1951, %v2728, 0
    %2735 = vmatprep.subr.bf16.mxu0 0
    %2736 = vmatpush1.bf16.xpose.msra.mxu0 %v2733
    %2737 = vmatprep.subr.bf16.mxu0 0
    %2738 = vmatpush1.bf16.xpose.msra.mxu0 0
    %2739 = vmatprep.subr.bf16.mxu0 0
    %2740 = vmatpush1.bf16.xpose.msra.mxu0 0
    %2741 = vmatprep.subr.bf16.mxu0 0
    %2742 = vmatpush1.bf16.xpose.msra.mxu0 0
    %2743 = vmatprep.subr.bf16.mxu0 0
    %2744 = vmatpush1.bf16.xpose.msra.mxu0 0
    %2745 = vmatprep.subr.bf16.mxu0 0
    %2746 = vmatpush1.bf16.xpose.msra.mxu0 0
    %2747 = vmatprep.subr.bf16.mxu0 0
    %2748 = vmatpush1.bf16.xpose.msra.mxu0 0
    %2749 = vmatprep.subr.bf16.mxu0 0
    %2750 = vmatpush1.bf16.xpose.msra.mxu0 0
    %2751 = vmatprep.subr.bf16.mxu0 0
    %2752 = vmatpush1.bf16.xpose.msra.mxu0 0
    %2753 = vmatprep.subr.bf16.mxu0 0
    %2754 = vmatpush1.bf16.xpose.msra.mxu0 0
    %2755 = vmatprep.subr.bf16.mxu0 0
    %2756 = vmatpush1.bf16.xpose.msra.mxu0 0
    %2757 = vmatprep.subr.bf16.mxu0 0
    %2758 = vmatpush1.bf16.xpose.msra.mxu0 0
    %2759 = vmatprep.subr.bf16.mxu0 0
    %2760 = vmatpush1.bf16.xpose.msra.mxu0 0
    %2761 = vmatprep.subr.bf16.mxu0 0
    %2762 = vmatpush1.bf16.xpose.msra.mxu0 0
    %2763 = vmatprep.subr.bf16.mxu0 0
    %2764 = vmatpush1.bf16.xpose.msra.mxu0 0
    %2765 = vmatprep.subr.bf16.mxu0 0
    %2766 = vmatpush1.bf16.xpose.msra.mxu0 0
    %2767 = vmatprep.mubr.bf16.mxu0 0
    %2768 = vmatmul.mubr.bf16.gmra.mrb[0].mxu0 %v2730
    %v2769 = vpop.f32.mrb[0].mxu0
    %v2770 = vadd.f32 0.0, %v2769
    %v2771 = vpop.f32.mrb[0].mxu0
    %v2772 = vpop.f32.mrb[0].mxu0
    %v2773 = vpop.f32.mrb[0].mxu0
    %2774 = vdwg.mxu0
    %v2775 = vmul.f32 %v2770, 0.17677669
    %v2776 = vsel %vm1999, %v2775, -inf
    %2777 = vmax.xlane.f32.xlu0 %v2776
    %v2778 = vpop.xlane.xlu0 %2777
    %v2779 = vsub.f32 %v2775, %v2778
    %v2780 = vmul.f32 %v2779, 1.442695
    %v2781 = vpow.pop %v2780
    %v2782 = vsel %vm1999, %v2781, 0.0
    %2783 = vadd.xlane.f32.xlu0 %v2782
    %v2784 = vpop.xlane.xlu0 %2783
    %v2785 = vrcp.pop %v2784
    %v2786 = vmul.f32 %v2781, %v2785
    %v2787 = vpack.c.bf16 %v2786, %v2786
    %2788 = vrot.lane.b32.xlu0 %v1949, 32
    %v2789 = vpop.permute.xlu0 %2788
    %v2791 = vsel %vm1999, %v2787, 0
    %v2794 = vsel %vm2015, %v2789, 0
    %2796 = vmatprep.subr.bf16.mxu0 0
    %2797 = vmatpush1.bf16.msra.mxu0 %v2794
    %2798 = vmatprep.subr.bf16.mxu0 0
    %2799 = vmatpush1.bf16.msra.mxu0 0
    %2800 = vmatprep.subr.bf16.mxu0 0
    %2801 = vmatpush1.bf16.msra.mxu0 0
    %2802 = vmatprep.subr.bf16.mxu0 0
    %2803 = vmatpush1.bf16.msra.mxu0 0
    %2804 = vmatprep.subr.bf16.mxu0 0
    %2805 = vmatpush1.bf16.msra.mxu0 0
    %2806 = vmatprep.subr.bf16.mxu0 0
    %2807 = vmatpush1.bf16.msra.mxu0 0
    %2808 = vmatprep.subr.bf16.mxu0 0
    %2809 = vmatpush1.bf16.msra.mxu0 0
    %2810 = vmatprep.subr.bf16.mxu0 0
    %2811 = vmatpush1.bf16.msra.mxu0 0
    %2812 = vmatprep.subr.bf16.mxu0 0
    %2813 = vmatpush1.bf16.msra.mxu0 0
    %2814 = vmatprep.subr.bf16.mxu0 0
    %2815 = vmatpush1.bf16.msra.mxu0 0
    %2816 = vmatprep.subr.bf16.mxu0 0
    %2817 = vmatpush1.bf16.msra.mxu0 0
    %2818 = vmatprep.subr.bf16.mxu0 0
    %2819 = vmatpush1.bf16.msra.mxu0 0
    %2820 = vmatprep.subr.bf16.mxu0 0
    %2821 = vmatpush1.bf16.msra.mxu0 0
    %2822 = vmatprep.subr.bf16.mxu0 0
    %2823 = vmatpush1.bf16.msra.mxu0 0
    %2824 = vmatprep.subr.bf16.mxu0 0
    %2825 = vmatpush1.bf16.msra.mxu0 0
    %2826 = vmatprep.subr.bf16.mxu0 0
    %2827 = vmatpush1.bf16.msra.mxu0 0
    %2828 = vmatprep.mubr.bf16.mxu0 0
    %2829 = vmatmul.mubr.bf16.gmra.mrb[0].mxu0 %v2791
    %v2830 = vpop.f32.mrb[0].mxu0
    %v2831 = vadd.f32 0.0, %v2830
    %v2832 = vpop.f32.mrb[0].mxu0
    %v2833 = vpop.f32.mrb[0].mxu0
    %v2834 = vpop.f32.mrb[0].mxu0
    %2835 = vdwg.mxu0
    %v2837 = vsel %vm1951, %v1944, 0
    %v2840 = vsel %vm1951, %v1947, 0
    %2842 = vmatprep.subr.bf16.mxu0 0
    %2843 = vmatpush1.bf16.xpose.msra.mxu0 %v2840
    %2844 = vmatprep.subr.bf16.mxu0 0
    %2845 = vmatpush1.bf16.xpose.msra.mxu0 0
    %2846 = vmatprep.subr.bf16.mxu0 0
    %2847 = vmatpush1.bf16.xpose.msra.mxu0 0
    %2848 = vmatprep.subr.bf16.mxu0 0
    %2849 = vmatpush1.bf16.xpose.msra.mxu0 0
    %2850 = vmatprep.subr.bf16.mxu0 0
    %2851 = vmatpush1.bf16.xpose.msra.mxu0 0
    %2852 = vmatprep.subr.bf16.mxu0 0
    %2853 = vmatpush1.bf16.xpose.msra.mxu0 0
    %2854 = vmatprep.subr.bf16.mxu0 0
    %2855 = vmatpush1.bf16.xpose.msra.mxu0 0
    %2856 = vmatprep.subr.bf16.mxu0 0
    %2857 = vmatpush1.bf16.xpose.msra.mxu0 0
    %2858 = vmatprep.subr.bf16.mxu0 0
    %2859 = vmatpush1.bf16.xpose.msra.mxu0 0
    %2860 = vmatprep.subr.bf16.mxu0 0
    %2861 = vmatpush1.bf16.xpose.msra.mxu0 0
    %2862 = vmatprep.subr.bf16.mxu0 0
    %2863 = vmatpush1.bf16.xpose.msra.mxu0 0
    %2864 = vmatprep.subr.bf16.mxu0 0
    %2865 = vmatpush1.bf16.xpose.msra.mxu0 0
    %2866 = vmatprep.subr.bf16.mxu0 0
    %2867 = vmatpush1.bf16.xpose.msra.mxu0 0
    %2868 = vmatprep.subr.bf16.mxu0 0
    %2869 = vmatpush1.bf16.xpose.msra.mxu0 0
    %2870 = vmatprep.subr.bf16.mxu0 0
    %2871 = vmatpush1.bf16.xpose.msra.mxu0 0
    %2872 = vmatprep.subr.bf16.mxu0 0
    %2873 = vmatpush1.bf16.xpose.msra.mxu0 0
    %2874 = vmatprep.mubr.bf16.mxu0 0
    %2875 = vmatmul.mubr.bf16.gmra.mrb[0].mxu0 %v2837
    %v2876 = vpop.f32.mrb[0].mxu0
    %v2877 = vadd.f32 0.0, %v2876
    %v2878 = vpop.f32.mrb[0].mxu0
    %v2879 = vpop.f32.mrb[0].mxu0
    %v2880 = vpop.f32.mrb[0].mxu0
    %2881 = vdwg.mxu0
    %v2882 = vmul.f32 %v2877, 0.17677669
    %v2883 = vsel %vm1999, %v2882, -inf
    %2884 = vmax.xlane.f32.xlu0 %v2883
    %v2885 = vpop.xlane.xlu0 %2884
    %v2886 = vsub.f32 %v2882, %v2885
    %v2887 = vmul.f32 %v2886, 1.442695
    %v2888 = vpow.pop %v2887
    %v2889 = vsel %vm1999, %v2888, 0.0
    %2890 = vadd.xlane.f32.xlu0 %v2889
    %v2891 = vpop.xlane.xlu0 %2890
    %v2892 = vrcp.pop %v2891
    %v2893 = vmul.f32 %v2888, %v2892
    %v2894 = vpack.c.bf16 %v2893, %v2893
    %v2896 = vsel %vm1999, %v2894, 0
    %v2899 = vsel %vm2015, %v1950, 0
    %2901 = vmatprep.subr.bf16.mxu0 0
    %2902 = vmatpush1.bf16.msra.mxu0 %v2899
    %2903 = vmatprep.subr.bf16.mxu0 0
    %2904 = vmatpush1.bf16.msra.mxu0 0
    %2905 = vmatprep.subr.bf16.mxu0 0
    %2906 = vmatpush1.bf16.msra.mxu0 0
    %2907 = vmatprep.subr.bf16.mxu0 0
    %2908 = vmatpush1.bf16.msra.mxu0 0
    %2909 = vmatprep.subr.bf16.mxu0 0
    %2910 = vmatpush1.bf16.msra.mxu0 0
    %2911 = vmatprep.subr.bf16.mxu0 0
    %2912 = vmatpush1.bf16.msra.mxu0 0
    %2913 = vmatprep.subr.bf16.mxu0 0
    %2914 = vmatpush1.bf16.msra.mxu0 0
    %2915 = vmatprep.subr.bf16.mxu0 0
    %2916 = vmatpush1.bf16.msra.mxu0 0
    %2917 = vmatprep.subr.bf16.mxu0 0
    %2918 = vmatpush1.bf16.msra.mxu0 0
    %2919 = vmatprep.subr.bf16.mxu0 0
    %2920 = vmatpush1.bf16.msra.mxu0 0
    %2921 = vmatprep.subr.bf16.mxu0 0
    %2922 = vmatpush1.bf16.msra.mxu0 0
    %2923 = vmatprep.subr.bf16.mxu0 0
    %2924 = vmatpush1.bf16.msra.mxu0 0
    %2925 = vmatprep.subr.bf16.mxu0 0
    %2926 = vmatpush1.bf16.msra.mxu0 0
    %2927 = vmatprep.subr.bf16.mxu0 0
    %2928 = vmatpush1.bf16.msra.mxu0 0
    %2929 = vmatprep.subr.bf16.mxu0 0
    %2930 = vmatpush1.bf16.msra.mxu0 0
    %2931 = vmatprep.subr.bf16.mxu0 0
    %2932 = vmatpush1.bf16.msra.mxu0 0
    %2933 = vmatprep.mubr.bf16.mxu0 0
    %2934 = vmatmul.mubr.bf16.gmra.mrb[0].mxu0 %v2896
    %v2935 = vpop.f32.mrb[0].mxu0
    %v2936 = vadd.f32 0.0, %v2935
    %v2937 = vpop.f32.mrb[0].mxu0
    %v2938 = vpop.f32.mrb[0].mxu0
    %v2939 = vpop.f32.mrb[0].mxu0
    %2940 = vdwg.mxu0
    %2942 = vrot.lane.b32.xlu0 %v1944, 96
    %v2943 = vpop.permute.xlu0 %2942
    %2945 = vrot.lane.b32.xlu0 %v1947, 96
    %v2946 = vpop.permute.xlu0 %2945
    %v2948 = vsel %vm1951, %v2943, 0
    %v2951 = vsel %vm1951, %v2946, 0
    %2953 = vmatprep.subr.bf16.mxu0 0
    %2954 = vmatpush1.bf16.xpose.msra.mxu0 %v2951
    %2955 = vmatprep.subr.bf16.mxu0 0
    %2956 = vmatpush1.bf16.xpose.msra.mxu0 0
    %2957 = vmatprep.subr.bf16.mxu0 0
    %2958 = vmatpush1.bf16.xpose.msra.mxu0 0
    %2959 = vmatprep.subr.bf16.mxu0 0
    %2960 = vmatpush1.bf16.xpose.msra.mxu0 0
    %2961 = vmatprep.subr.bf16.mxu0 0
    %2962 = vmatpush1.bf16.xpose.msra.mxu0 0
    %2963 = vmatprep.subr.bf16.mxu0 0
    %2964 = vmatpush1.bf16.xpose.msra.mxu0 0
    %2965 = vmatprep.subr.bf16.mxu0 0
    %2966 = vmatpush1.bf16.xpose.msra.mxu0 0
    %2967 = vmatprep.subr.bf16.mxu0 0
    %2968 = vmatpush1.bf16.xpose.msra.mxu0 0
    %2969 = vmatprep.subr.bf16.mxu0 0
    %2970 = vmatpush1.bf16.xpose.msra.mxu0 0
    %2971 = vmatprep.subr.bf16.mxu0 0
    %2972 = vmatpush1.bf16.xpose.msra.mxu0 0
    %2973 = vmatprep.subr.bf16.mxu0 0
    %2974 = vmatpush1.bf16.xpose.msra.mxu0 0
    %2975 = vmatprep.subr.bf16.mxu0 0
    %2976 = vmatpush1.bf16.xpose.msra.mxu0 0
    %2977 = vmatprep.subr.bf16.mxu0 0
    %2978 = vmatpush1.bf16.xpose.msra.mxu0 0
    %2979 = vmatprep.subr.bf16.mxu0 0
    %2980 = vmatpush1.bf16.xpose.msra.mxu0 0
    %2981 = vmatprep.subr.bf16.mxu0 0
    %2982 = vmatpush1.bf16.xpose.msra.mxu0 0
    %2983 = vmatprep.subr.bf16.mxu0 0
    %2984 = vmatpush1.bf16.xpose.msra.mxu0 0
    %2985 = vmatprep.mubr.bf16.mxu0 0
    %2986 = vmatmul.mubr.bf16.gmra.mrb[0].mxu0 %v2948
    %v2987 = vpop.f32.mrb[0].mxu0
    %v2988 = vadd.f32 0.0, %v2987
    %v2989 = vpop.f32.mrb[0].mxu0
    %v2990 = vpop.f32.mrb[0].mxu0
    %v2991 = vpop.f32.mrb[0].mxu0
    %2992 = vdwg.mxu0
    %v2993 = vmul.f32 %v2988, 0.17677669
    %v2994 = vsel %vm1999, %v2993, -inf
    %2995 = vmax.xlane.f32.xlu0 %v2994
    %v2996 = vpop.xlane.xlu0 %2995
    %v2997 = vsub.f32 %v2993, %v2996
    %v2998 = vmul.f32 %v2997, 1.442695
    %v2999 = vpow.pop %v2998
    %v3000 = vsel %vm1999, %v2999, 0.0
    %3001 = vadd.xlane.f32.xlu0 %v3000
    %v3002 = vpop.xlane.xlu0 %3001
    %v3003 = vrcp.pop %v3002
    %v3004 = vmul.f32 %v2999, %v3003
    %v3005 = vpack.c.bf16 %v3004, %v3004
    %3007 = vrot.lane.b32.xlu0 %v1950, 96
    %v3008 = vpop.permute.xlu0 %3007
    %v3010 = vsel %vm1999, %v3005, 0
    %v3013 = vsel %vm2015, %v3008, 0
    %3015 = vmatprep.subr.bf16.mxu0 0
    %3016 = vmatpush1.bf16.msra.mxu0 %v3013
    %3017 = vmatprep.subr.bf16.mxu0 0
    %3018 = vmatpush1.bf16.msra.mxu0 0
    %3019 = vmatprep.subr.bf16.mxu0 0
    %3020 = vmatpush1.bf16.msra.mxu0 0
    %3021 = vmatprep.subr.bf16.mxu0 0
    %3022 = vmatpush1.bf16.msra.mxu0 0
    %3023 = vmatprep.subr.bf16.mxu0 0
    %3024 = vmatpush1.bf16.msra.mxu0 0
    %3025 = vmatprep.subr.bf16.mxu0 0
    %3026 = vmatpush1.bf16.msra.mxu0 0
    %3027 = vmatprep.subr.bf16.mxu0 0
    %3028 = vmatpush1.bf16.msra.mxu0 0
    %3029 = vmatprep.subr.bf16.mxu0 0
    %3030 = vmatpush1.bf16.msra.mxu0 0
    %3031 = vmatprep.subr.bf16.mxu0 0
    %3032 = vmatpush1.bf16.msra.mxu0 0
    %3033 = vmatprep.subr.bf16.mxu0 0
    %3034 = vmatpush1.bf16.msra.mxu0 0
    %3035 = vmatprep.subr.bf16.mxu0 0
    %3036 = vmatpush1.bf16.msra.mxu0 0
    %3037 = vmatprep.subr.bf16.mxu0 0
    %3038 = vmatpush1.bf16.msra.mxu0 0
    %3039 = vmatprep.subr.bf16.mxu0 0
    %3040 = vmatpush1.bf16.msra.mxu0 0
    %3041 = vmatprep.subr.bf16.mxu0 0
    %3042 = vmatpush1.bf16.msra.mxu0 0
    %3043 = vmatprep.subr.bf16.mxu0 0
    %3044 = vmatpush1.bf16.msra.mxu0 0
    %3045 = vmatprep.subr.bf16.mxu0 0
    %3046 = vmatpush1.bf16.msra.mxu0 0
    %3047 = vmatprep.mubr.bf16.mxu0 0
    %3048 = vmatmul.mubr.bf16.gmra.mrb[0].mxu0 %v3010
    %v3049 = vpop.f32.mrb[0].mxu0
    %v3050 = vadd.f32 0.0, %v3049
    %v3051 = vpop.f32.mrb[0].mxu0
    %v3052 = vpop.f32.mrb[0].mxu0
    %v3053 = vpop.f32.mrb[0].mxu0
    %3054 = vdwg.mxu0
    %3055 = vrot.lane.b32.xlu0 %v1944, 64
    %v3056 = vpop.permute.xlu0 %3055
    %3057 = vrot.lane.b32.xlu0 %v1947, 64
    %v3058 = vpop.permute.xlu0 %3057
    %v3060 = vsel %vm1951, %v3056, 0
    %v3063 = vsel %vm1951, %v3058, 0
    %3065 = vmatprep.subr.bf16.mxu0 0
    %3066 = vmatpush1.bf16.xpose.msra.mxu0 %v3063
    %3067 = vmatprep.subr.bf16.mxu0 0
    %3068 = vmatpush1.bf16.xpose.msra.mxu0 0
    %3069 = vmatprep.subr.bf16.mxu0 0
    %3070 = vmatpush1.bf16.xpose.msra.mxu0 0
    %3071 = vmatprep.subr.bf16.mxu0 0
    %3072 = vmatpush1.bf16.xpose.msra.mxu0 0
    %3073 = vmatprep.subr.bf16.mxu0 0
    %3074 = vmatpush1.bf16.xpose.msra.mxu0 0
    %3075 = vmatprep.subr.bf16.mxu0 0
    %3076 = vmatpush1.bf16.xpose.msra.mxu0 0
    %3077 = vmatprep.subr.bf16.mxu0 0
    %3078 = vmatpush1.bf16.xpose.msra.mxu0 0
    %3079 = vmatprep.subr.bf16.mxu0 0
    %3080 = vmatpush1.bf16.xpose.msra.mxu0 0
    %3081 = vmatprep.subr.bf16.mxu0 0
    %3082 = vmatpush1.bf16.xpose.msra.mxu0 0
    %3083 = vmatprep.subr.bf16.mxu0 0
    %3084 = vmatpush1.bf16.xpose.msra.mxu0 0
    %3085 = vmatprep.subr.bf16.mxu0 0
    %3086 = vmatpush1.bf16.xpose.msra.mxu0 0
    %3087 = vmatprep.subr.bf16.mxu0 0
    %3088 = vmatpush1.bf16.xpose.msra.mxu0 0
    %3089 = vmatprep.subr.bf16.mxu0 0
    %3090 = vmatpush1.bf16.xpose.msra.mxu0 0
    %3091 = vmatprep.subr.bf16.mxu0 0
    %3092 = vmatpush1.bf16.xpose.msra.mxu0 0
    %3093 = vmatprep.subr.bf16.mxu0 0
    %3094 = vmatpush1.bf16.xpose.msra.mxu0 0
    %3095 = vmatprep.subr.bf16.mxu0 0
    %3096 = vmatpush1.bf16.xpose.msra.mxu0 0
    %3097 = vmatprep.mubr.bf16.mxu0 0
    %3098 = vmatmul.mubr.bf16.gmra.mrb[0].mxu0 %v3060
    %v3099 = vpop.f32.mrb[0].mxu0
    %v3100 = vadd.f32 0.0, %v3099
    %v3101 = vpop.f32.mrb[0].mxu0
    %v3102 = vpop.f32.mrb[0].mxu0
    %v3103 = vpop.f32.mrb[0].mxu0
    %3104 = vdwg.mxu0
    %v3105 = vmul.f32 %v3100, 0.17677669
    %v3106 = vsel %vm1999, %v3105, -inf
    %3107 = vmax.xlane.f32.xlu0 %v3106
    %v3108 = vpop.xlane.xlu0 %3107
    %v3109 = vsub.f32 %v3105, %v3108
    %v3110 = vmul.f32 %v3109, 1.442695
    %v3111 = vpow.pop %v3110
    %v3112 = vsel %vm1999, %v3111, 0.0
    %3113 = vadd.xlane.f32.xlu0 %v3112
    %v3114 = vpop.xlane.xlu0 %3113
    %v3115 = vrcp.pop %v3114
    %v3116 = vmul.f32 %v3111, %v3115
    %v3117 = vpack.c.bf16 %v3116, %v3116
    %3118 = vrot.lane.b32.xlu0 %v1950, 64
    %v3119 = vpop.permute.xlu0 %3118
    %v3121 = vsel %vm1999, %v3117, 0
    %v3124 = vsel %vm2015, %v3119, 0
    %3126 = vmatprep.subr.bf16.mxu0 0
    %3127 = vmatpush1.bf16.msra.mxu0 %v3124
    %3128 = vmatprep.subr.bf16.mxu0 0
    %3129 = vmatpush1.bf16.msra.mxu0 0
    %3130 = vmatprep.subr.bf16.mxu0 0
    %3131 = vmatpush1.bf16.msra.mxu0 0
    %3132 = vmatprep.subr.bf16.mxu0 0
    %3133 = vmatpush1.bf16.msra.mxu0 0
    %3134 = vmatprep.subr.bf16.mxu0 0
    %3135 = vmatpush1.bf16.msra.mxu0 0
    %3136 = vmatprep.subr.bf16.mxu0 0
    %3137 = vmatpush1.bf16.msra.mxu0 0
    %3138 = vmatprep.subr.bf16.mxu0 0
    %3139 = vmatpush1.bf16.msra.mxu0 0
    %3140 = vmatprep.subr.bf16.mxu0 0
    %3141 = vmatpush1.bf16.msra.mxu0 0
    %3142 = vmatprep.subr.bf16.mxu0 0
    %3143 = vmatpush1.bf16.msra.mxu0 0
    %3144 = vmatprep.subr.bf16.mxu0 0
    %3145 = vmatpush1.bf16.msra.mxu0 0
    %3146 = vmatprep.subr.bf16.mxu0 0
    %3147 = vmatpush1.bf16.msra.mxu0 0
    %3148 = vmatprep.subr.bf16.mxu0 0
    %3149 = vmatpush1.bf16.msra.mxu0 0
    %3150 = vmatprep.subr.bf16.mxu0 0
    %3151 = vmatpush1.bf16.msra.mxu0 0
    %3152 = vmatprep.subr.bf16.mxu0 0
    %3153 = vmatpush1.bf16.msra.mxu0 0
    %3154 = vmatprep.subr.bf16.mxu0 0
    %3155 = vmatpush1.bf16.msra.mxu0 0
    %3156 = vmatprep.subr.bf16.mxu0 0
    %3157 = vmatpush1.bf16.msra.mxu0 0
    %3158 = vmatprep.mubr.bf16.mxu0 0
    %3159 = vmatmul.mubr.bf16.gmra.mrb[0].mxu0 %v3121
    %v3160 = vpop.f32.mrb[0].mxu0
    %v3161 = vadd.f32 0.0, %v3160
    %v3162 = vpop.f32.mrb[0].mxu0
    %v3163 = vpop.f32.mrb[0].mxu0
    %v3164 = vpop.f32.mrb[0].mxu0
    %3165 = vdwg.mxu0
    %3166 = vrot.lane.b32.xlu0 %v1944, 32
    %v3167 = vpop.permute.xlu0 %3166
    %3168 = vrot.lane.b32.xlu0 %v1947, 32
    %v3169 = vpop.permute.xlu0 %3168
    %v3171 = vsel %vm1951, %v3167, 0
    %v3174 = vsel %vm1951, %v3169, 0
    %3176 = vmatprep.subr.bf16.mxu0 0
    %3177 = vmatpush1.bf16.xpose.msra.mxu0 %v3174
    %3178 = vmatprep.subr.bf16.mxu0 0
    %3179 = vmatpush1.bf16.xpose.msra.mxu0 0
    %3180 = vmatprep.subr.bf16.mxu0 0
    %3181 = vmatpush1.bf16.xpose.msra.mxu0 0
    %3182 = vmatprep.subr.bf16.mxu0 0
    %3183 = vmatpush1.bf16.xpose.msra.mxu0 0
    %3184 = vmatprep.subr.bf16.mxu0 0
    %3185 = vmatpush1.bf16.xpose.msra.mxu0 0
    %3186 = vmatprep.subr.bf16.mxu0 0
    %3187 = vmatpush1.bf16.xpose.msra.mxu0 0
    %3188 = vmatprep.subr.bf16.mxu0 0
    %3189 = vmatpush1.bf16.xpose.msra.mxu0 0
    %3190 = vmatprep.subr.bf16.mxu0 0
    %3191 = vmatpush1.bf16.xpose.msra.mxu0 0
    %3192 = vmatprep.subr.bf16.mxu0 0
    %3193 = vmatpush1.bf16.xpose.msra.mxu0 0
    %3194 = vmatprep.subr.bf16.mxu0 0
    %3195 = vmatpush1.bf16.xpose.msra.mxu0 0
    %3196 = vmatprep.subr.bf16.mxu0 0
    %3197 = vmatpush1.bf16.xpose.msra.mxu0 0
    %3198 = vmatprep.subr.bf16.mxu0 0
    %3199 = vmatpush1.bf16.xpose.msra.mxu0 0
    %3200 = vmatprep.subr.bf16.mxu0 0
    %3201 = vmatpush1.bf16.xpose.msra.mxu0 0
    %3202 = vmatprep.subr.bf16.mxu0 0
    %3203 = vmatpush1.bf16.xpose.msra.mxu0 0
    %3204 = vmatprep.subr.bf16.mxu0 0
    %3205 = vmatpush1.bf16.xpose.msra.mxu0 0
    %3206 = vmatprep.subr.bf16.mxu0 0
    %3207 = vmatpush1.bf16.xpose.msra.mxu0 0
    %3208 = vmatprep.mubr.bf16.mxu0 0
    %3209 = vmatmul.mubr.bf16.gmra.mrb[0].mxu0 %v3171
    %v3210 = vpop.f32.mrb[0].mxu0
    %v3211 = vadd.f32 0.0, %v3210
    %v3212 = vpop.f32.mrb[0].mxu0
    %v3213 = vpop.f32.mrb[0].mxu0
    %v3214 = vpop.f32.mrb[0].mxu0
    %3215 = vdwg.mxu0
    %v3216 = vmul.f32 %v3211, 0.17677669
    %v3217 = vsel %vm1999, %v3216, -inf
    %3218 = vmax.xlane.f32.xlu0 %v3217
    %v3219 = vpop.xlane.xlu0 %3218
    %v3220 = vsub.f32 %v3216, %v3219
    %v3221 = vmul.f32 %v3220, 1.442695
    %v3222 = vpow.pop %v3221
    %v3223 = vsel %vm1999, %v3222, 0.0
    %3224 = vadd.xlane.f32.xlu0 %v3223
    %v3225 = vpop.xlane.xlu0 %3224
    %v3226 = vrcp.pop %v3225
    %v3227 = vmul.f32 %v3222, %v3226
    %v3228 = vpack.c.bf16 %v3227, %v3227
    %3229 = vrot.lane.b32.xlu0 %v1950, 32
    %v3230 = vpop.permute.xlu0 %3229
    %v3232 = vsel %vm1999, %v3228, 0
    %v3235 = vsel %vm2015, %v3230, 0
    %3237 = vmatprep.subr.bf16.mxu0 0
    %3238 = vmatpush1.bf16.msra.mxu0 %v3235
    %3239 = vmatprep.subr.bf16.mxu0 0
    %3240 = vmatpush1.bf16.msra.mxu0 0
    %3241 = vmatprep.subr.bf16.mxu0 0
    %3242 = vmatpush1.bf16.msra.mxu0 0
    %3243 = vmatprep.subr.bf16.mxu0 0
    %3244 = vmatpush1.bf16.msra.mxu0 0
    %3245 = vmatprep.subr.bf16.mxu0 0
    %3246 = vmatpush1.bf16.msra.mxu0 0
    %3247 = vmatprep.subr.bf16.mxu0 0
    %3248 = vmatpush1.bf16.msra.mxu0 0
    %3249 = vmatprep.subr.bf16.mxu0 0
    %3250 = vmatpush1.bf16.msra.mxu0 0
    %3251 = vmatprep.subr.bf16.mxu0 0
    %3252 = vmatpush1.bf16.msra.mxu0 0
    %3253 = vmatprep.subr.bf16.mxu0 0
    %3254 = vmatpush1.bf16.msra.mxu0 0
    %3255 = vmatprep.subr.bf16.mxu0 0
    %3256 = vmatpush1.bf16.msra.mxu0 0
    %3257 = vmatprep.subr.bf16.mxu0 0
    %3258 = vmatpush1.bf16.msra.mxu0 0
    %3259 = vmatprep.subr.bf16.mxu0 0
    %3260 = vmatpush1.bf16.msra.mxu0 0
    %3261 = vmatprep.subr.bf16.mxu0 0
    %3262 = vmatpush1.bf16.msra.mxu0 0
    %3263 = vmatprep.subr.bf16.mxu0 0
    %3264 = vmatpush1.bf16.msra.mxu0 0
    %3265 = vmatprep.subr.bf16.mxu0 0
    %3266 = vmatpush1.bf16.msra.mxu0 0
    %3267 = vmatprep.subr.bf16.mxu0 0
    %3268 = vmatpush1.bf16.msra.mxu0 0
    %3269 = vmatprep.mubr.bf16.mxu0 0
    %3270 = vmatmul.mubr.bf16.gmra.mrb[0].mxu0 %v3232
    %v3271 = vpop.f32.mrb[0].mxu0
    %v3272 = vadd.f32 0.0, %v3271
    %v3273 = vpop.f32.mrb[0].mxu0
    %v3274 = vpop.f32.mrb[0].mxu0
    %v3275 = vpop.f32.mrb[0].mxu0
    %3276 = vdwg.mxu0
    %3278 = vrot.lane.b32.xlu0 %v2168, 32
    %v3279 = vpop.permute.xlu0 %3278
    %3282 = vrot.lane.b32.xlu0 %v2279, 64
    %v3283 = vpop.permute.xlu0 %3282
    %3286 = vrot.lane.b32.xlu0 %v2390, 96
    %v3287 = vpop.permute.xlu0 %3286
    %3290 = vrot.lane.b32.xlu0 %v2609, 32
    %v3291 = vpop.permute.xlu0 %3290
    %3294 = vrot.lane.b32.xlu0 %v2720, 64
    %v3295 = vpop.permute.xlu0 %3294
    %3298 = vrot.lane.b32.xlu0 %v2831, 96
    %v3299 = vpop.permute.xlu0 %3298
    %3302 = vrot.lane.b32.xlu0 %v3050, 32
    %v3303 = vpop.permute.xlu0 %3302
    %3306 = vrot.lane.b32.xlu0 %v3161, 64
    %v3307 = vpop.permute.xlu0 %3306
    %3310 = vrot.lane.b32.xlu0 %v3272, 96
    %v3311 = vpop.permute.xlu0 %3310
    %v3313 = vsel %vm1951, %v2054, %v3279
    %vm3314 = vcmask 523264
    %v3315 = vsel %vm3314, %v3313, %v3283
    %vm3316 = vcmask 785408
    %v3317 = vsel %vm3316, %v3315, %v3287
    %v3318 = vsel %vm1951, %v2495, %v3291
    %v3319 = vsel %vm3314, %v3318, %v3295
    %v3320 = vsel %vm3316, %v3319, %v3299
    %v3321 = vsel %vm1951, %v2936, %v3303
    %v3322 = vsel %vm3314, %v3321, %v3307
    %v3323 = vsel %vm3316, %v3322, %v3311
    %v3324 = vpack.c.bf16 %v1598, %v1598
    %v3325 = vpack.c.bf16 %v1600, %v1600
    %v3326 = vpack.c.bf16 %v1684, %v1684
    %v3327 = vpack.c.bf16 %v1686, %v1686
    %v3328 = vpack.c.bf16 %v1770, %v1770
    %v3329 = vpack.c.bf16 %v1772, %v1772
    %v3330 = vpack.c.bf16 %v1856, %v1856
    %v3331 = vpack.c.bf16 %v1858, %v1858
    %v3332 = vpack.c.bf16 %v1939, %v1939
    %v3334 = vsel %vm1951, %v3324, 0
    %v3337 = vsel %vm1951, %v3327, 0
    %3339 = vmatprep.subr.bf16.mxu0 0
    %3340 = vmatpush1.bf16.xpose.msra.mxu0 %v3337
    %3341 = vmatprep.subr.bf16.mxu0 0
    %3342 = vmatpush1.bf16.xpose.msra.mxu0 0
    %3343 = vmatprep.subr.bf16.mxu0 0
    %3344 = vmatpush1.bf16.xpose.msra.mxu0 0
    %3345 = vmatprep.subr.bf16.mxu0 0
    %3346 = vmatpush1.bf16.xpose.msra.mxu0 0
    %3347 = vmatprep.subr.bf16.mxu0 0
    %3348 = vmatpush1.bf16.xpose.msra.mxu0 0
    %3349 = vmatprep.subr.bf16.mxu0 0
    %3350 = vmatpush1.bf16.xpose.msra.mxu0 0
    %3351 = vmatprep.subr.bf16.mxu0 0
    %3352 = vmatpush1.bf16.xpose.msra.mxu0 0
    %3353 = vmatprep.subr.bf16.mxu0 0
    %3354 = vmatpush1.bf16.xpose.msra.mxu0 0
    %3355 = vmatprep.subr.bf16.mxu0 0
    %3356 = vmatpush1.bf16.xpose.msra.mxu0 0
    %3357 = vmatprep.subr.bf16.mxu0 0
    %3358 = vmatpush1.bf16.xpose.msra.mxu0 0
    %3359 = vmatprep.subr.bf16.mxu0 0
    %3360 = vmatpush1.bf16.xpose.msra.mxu0 0
    %3361 = vmatprep.subr.bf16.mxu0 0
    %3362 = vmatpush1.bf16.xpose.msra.mxu0 0
    %3363 = vmatprep.subr.bf16.mxu0 0
    %3364 = vmatpush1.bf16.xpose.msra.mxu0 0
    %3365 = vmatprep.subr.bf16.mxu0 0
    %3366 = vmatpush1.bf16.xpose.msra.mxu0 0
    %3367 = vmatprep.subr.bf16.mxu0 0
    %3368 = vmatpush1.bf16.xpose.msra.mxu0 0
    %3369 = vmatprep.subr.bf16.mxu0 0
    %3370 = vmatpush1.bf16.xpose.msra.mxu0 0
    %3371 = vmatprep.mubr.bf16.mxu0 0
    %3372 = vmatmul.mubr.bf16.gmra.mrb[0].mxu0 %v3334
    %v3373 = vpop.f32.mrb[0].mxu0
    %v3374 = vadd.f32 0.0, %v3373
    %v3375 = vpop.f32.mrb[0].mxu0
    %v3376 = vpop.f32.mrb[0].mxu0
    %v3377 = vpop.f32.mrb[0].mxu0
    %3378 = vdwg.mxu0
    %v3379 = vmul.f32 %v3374, 0.17677669
    %v3380 = vsel %vm1999, %v3379, -inf
    %3381 = vmax.xlane.f32.xlu0 %v3380
    %v3382 = vpop.xlane.xlu0 %3381
    %v3383 = vsub.f32 %v3379, %v3382
    %v3384 = vmul.f32 %v3383, 1.442695
    %v3385 = vpow.pop %v3384
    %v3386 = vsel %vm1999, %v3385, 0.0
    %3387 = vadd.xlane.f32.xlu0 %v3386
    %v3388 = vpop.xlane.xlu0 %3387
    %v3389 = vrcp.pop %v3388
    %v3390 = vmul.f32 %v3385, %v3389
    %v3391 = vpack.c.bf16 %v3390, %v3390
    %v3393 = vsel %vm1999, %v3391, 0
    %v3396 = vsel %vm2015, %v3330, 0
    %3398 = vmatprep.subr.bf16.mxu0 0
    %3399 = vmatpush1.bf16.msra.mxu0 %v3396
    %3400 = vmatprep.subr.bf16.mxu0 0
    %3401 = vmatpush1.bf16.msra.mxu0 0
    %3402 = vmatprep.subr.bf16.mxu0 0
    %3403 = vmatpush1.bf16.msra.mxu0 0
    %3404 = vmatprep.subr.bf16.mxu0 0
    %3405 = vmatpush1.bf16.msra.mxu0 0
    %3406 = vmatprep.subr.bf16.mxu0 0
    %3407 = vmatpush1.bf16.msra.mxu0 0
    %3408 = vmatprep.subr.bf16.mxu0 0
    %3409 = vmatpush1.bf16.msra.mxu0 0
    %3410 = vmatprep.subr.bf16.mxu0 0
    %3411 = vmatpush1.bf16.msra.mxu0 0
    %3412 = vmatprep.subr.bf16.mxu0 0
    %3413 = vmatpush1.bf16.msra.mxu0 0
    %3414 = vmatprep.subr.bf16.mxu0 0
    %3415 = vmatpush1.bf16.msra.mxu0 0
    %3416 = vmatprep.subr.bf16.mxu0 0
    %3417 = vmatpush1.bf16.msra.mxu0 0
    %3418 = vmatprep.subr.bf16.mxu0 0
    %3419 = vmatpush1.bf16.msra.mxu0 0
    %3420 = vmatprep.subr.bf16.mxu0 0
    %3421 = vmatpush1.bf16.msra.mxu0 0
    %3422 = vmatprep.subr.bf16.mxu0 0
    %3423 = vmatpush1.bf16.msra.mxu0 0
    %3424 = vmatprep.subr.bf16.mxu0 0
    %3425 = vmatpush1.bf16.msra.mxu0 0
    %3426 = vmatprep.subr.bf16.mxu0 0
    %3427 = vmatpush1.bf16.msra.mxu0 0
    %3428 = vmatprep.subr.bf16.mxu0 0
    %3429 = vmatpush1.bf16.msra.mxu0 0
    %3430 = vmatprep.mubr.bf16.mxu0 0
    %3431 = vmatmul.mubr.bf16.gmra.mrb[0].mxu0 %v3393
    %v3432 = vpop.f32.mrb[0].mxu0
    %v3433 = vadd.f32 0.0, %v3432
    %v3434 = vpop.f32.mrb[0].mxu0
    %v3435 = vpop.f32.mrb[0].mxu0
    %v3436 = vpop.f32.mrb[0].mxu0
    %3437 = vdwg.mxu0
    %3439 = vrot.lane.b32.xlu0 %v3324, 96
    %v3440 = vpop.permute.xlu0 %3439
    %3442 = vrot.lane.b32.xlu0 %v3327, 96
    %v3443 = vpop.permute.xlu0 %3442
    %v3445 = vsel %vm1951, %v3440, 0
    %v3448 = vsel %vm1951, %v3443, 0
    %3450 = vmatprep.subr.bf16.mxu0 0
    %3451 = vmatpush1.bf16.xpose.msra.mxu0 %v3448
    %3452 = vmatprep.subr.bf16.mxu0 0
    %3453 = vmatpush1.bf16.xpose.msra.mxu0 0
    %3454 = vmatprep.subr.bf16.mxu0 0
    %3455 = vmatpush1.bf16.xpose.msra.mxu0 0
    %3456 = vmatprep.subr.bf16.mxu0 0
    %3457 = vmatpush1.bf16.xpose.msra.mxu0 0
    %3458 = vmatprep.subr.bf16.mxu0 0
    %3459 = vmatpush1.bf16.xpose.msra.mxu0 0
    %3460 = vmatprep.subr.bf16.mxu0 0
    %3461 = vmatpush1.bf16.xpose.msra.mxu0 0
    %3462 = vmatprep.subr.bf16.mxu0 0
    %3463 = vmatpush1.bf16.xpose.msra.mxu0 0
    %3464 = vmatprep.subr.bf16.mxu0 0
    %3465 = vmatpush1.bf16.xpose.msra.mxu0 0
    %3466 = vmatprep.subr.bf16.mxu0 0
    %3467 = vmatpush1.bf16.xpose.msra.mxu0 0
    %3468 = vmatprep.subr.bf16.mxu0 0
    %3469 = vmatpush1.bf16.xpose.msra.mxu0 0
    %3470 = vmatprep.subr.bf16.mxu0 0
    %3471 = vmatpush1.bf16.xpose.msra.mxu0 0
    %3472 = vmatprep.subr.bf16.mxu0 0
    %3473 = vmatpush1.bf16.xpose.msra.mxu0 0
    %3474 = vmatprep.subr.bf16.mxu0 0
    %3475 = vmatpush1.bf16.xpose.msra.mxu0 0
    %3476 = vmatprep.subr.bf16.mxu0 0
    %3477 = vmatpush1.bf16.xpose.msra.mxu0 0
    %3478 = vmatprep.subr.bf16.mxu0 0
    %3479 = vmatpush1.bf16.xpose.msra.mxu0 0
    %3480 = vmatprep.subr.bf16.mxu0 0
    %3481 = vmatpush1.bf16.xpose.msra.mxu0 0
    %3482 = vmatprep.mubr.bf16.mxu0 0
    %3483 = vmatmul.mubr.bf16.gmra.mrb[0].mxu0 %v3445
    %v3484 = vpop.f32.mrb[0].mxu0
    %v3485 = vadd.f32 0.0, %v3484
    %v3486 = vpop.f32.mrb[0].mxu0
    %v3487 = vpop.f32.mrb[0].mxu0
    %v3488 = vpop.f32.mrb[0].mxu0
    %3489 = vdwg.mxu0
    %v3490 = vmul.f32 %v3485, 0.17677669
    %v3491 = vsel %vm1999, %v3490, -inf
    %3492 = vmax.xlane.f32.xlu0 %v3491
    %v3493 = vpop.xlane.xlu0 %3492
    %v3494 = vsub.f32 %v3490, %v3493
    %v3495 = vmul.f32 %v3494, 1.442695
    %v3496 = vpow.pop %v3495
    %v3497 = vsel %vm1999, %v3496, 0.0
    %3498 = vadd.xlane.f32.xlu0 %v3497
    %v3499 = vpop.xlane.xlu0 %3498
    %v3500 = vrcp.pop %v3499
    %v3501 = vmul.f32 %v3496, %v3500
    %v3502 = vpack.c.bf16 %v3501, %v3501
    %3504 = vrot.lane.b32.xlu0 %v3330, 96
    %v3505 = vpop.permute.xlu0 %3504
    %v3507 = vsel %vm1999, %v3502, 0
    %v3510 = vsel %vm2015, %v3505, 0
    %3512 = vmatprep.subr.bf16.mxu0 0
    %3513 = vmatpush1.bf16.msra.mxu0 %v3510
    %3514 = vmatprep.subr.bf16.mxu0 0
    %3515 = vmatpush1.bf16.msra.mxu0 0
    %3516 = vmatprep.subr.bf16.mxu0 0
    %3517 = vmatpush1.bf16.msra.mxu0 0
    %3518 = vmatprep.subr.bf16.mxu0 0
    %3519 = vmatpush1.bf16.msra.mxu0 0
    %3520 = vmatprep.subr.bf16.mxu0 0
    %3521 = vmatpush1.bf16.msra.mxu0 0
    %3522 = vmatprep.subr.bf16.mxu0 0
    %3523 = vmatpush1.bf16.msra.mxu0 0
    %3524 = vmatprep.subr.bf16.mxu0 0
    %3525 = vmatpush1.bf16.msra.mxu0 0
    %3526 = vmatprep.subr.bf16.mxu0 0
    %3527 = vmatpush1.bf16.msra.mxu0 0
    %3528 = vmatprep.subr.bf16.mxu0 0
    %3529 = vmatpush1.bf16.msra.mxu0 0
    %3530 = vmatprep.subr.bf16.mxu0 0
    %3531 = vmatpush1.bf16.msra.mxu0 0
    %3532 = vmatprep.subr.bf16.mxu0 0
    %3533 = vmatpush1.bf16.msra.mxu0 0
    %3534 = vmatprep.subr.bf16.mxu0 0
    %3535 = vmatpush1.bf16.msra.mxu0 0
    %3536 = vmatprep.subr.bf16.mxu0 0
    %3537 = vmatpush1.bf16.msra.mxu0 0
    %3538 = vmatprep.subr.bf16.mxu0 0
    %3539 = vmatpush1.bf16.msra.mxu0 0
    %3540 = vmatprep.subr.bf16.mxu0 0
    %3541 = vmatpush1.bf16.msra.mxu0 0
    %3542 = vmatprep.subr.bf16.mxu0 0
    %3543 = vmatpush1.bf16.msra.mxu0 0
    %3544 = vmatprep.mubr.bf16.mxu0 0
    %3545 = vmatmul.mubr.bf16.gmra.mrb[0].mxu0 %v3507
    %v3546 = vpop.f32.mrb[0].mxu0
    %v3547 = vadd.f32 0.0, %v3546
    %v3548 = vpop.f32.mrb[0].mxu0
    %v3549 = vpop.f32.mrb[0].mxu0
    %v3550 = vpop.f32.mrb[0].mxu0
    %3551 = vdwg.mxu0
    %3552 = vrot.lane.b32.xlu0 %v3324, 64
    %v3553 = vpop.permute.xlu0 %3552
    %3554 = vrot.lane.b32.xlu0 %v3327, 64
    %v3555 = vpop.permute.xlu0 %3554
    %v3557 = vsel %vm1951, %v3553, 0
    %v3560 = vsel %vm1951, %v3555, 0
    %3562 = vmatprep.subr.bf16.mxu0 0
    %3563 = vmatpush1.bf16.xpose.msra.mxu0 %v3560
    %3564 = vmatprep.subr.bf16.mxu0 0
    %3565 = vmatpush1.bf16.xpose.msra.mxu0 0
    %3566 = vmatprep.subr.bf16.mxu0 0
    %3567 = vmatpush1.bf16.xpose.msra.mxu0 0
    %3568 = vmatprep.subr.bf16.mxu0 0
    %3569 = vmatpush1.bf16.xpose.msra.mxu0 0
    %3570 = vmatprep.subr.bf16.mxu0 0
    %3571 = vmatpush1.bf16.xpose.msra.mxu0 0
    %3572 = vmatprep.subr.bf16.mxu0 0
    %3573 = vmatpush1.bf16.xpose.msra.mxu0 0
    %3574 = vmatprep.subr.bf16.mxu0 0
    %3575 = vmatpush1.bf16.xpose.msra.mxu0 0
    %3576 = vmatprep.subr.bf16.mxu0 0
    %3577 = vmatpush1.bf16.xpose.msra.mxu0 0
    %3578 = vmatprep.subr.bf16.mxu0 0
    %3579 = vmatpush1.bf16.xpose.msra.mxu0 0
    %3580 = vmatprep.subr.bf16.mxu0 0
    %3581 = vmatpush1.bf16.xpose.msra.mxu0 0
    %3582 = vmatprep.subr.bf16.mxu0 0
    %3583 = vmatpush1.bf16.xpose.msra.mxu0 0
    %3584 = vmatprep.subr.bf16.mxu0 0
    %3585 = vmatpush1.bf16.xpose.msra.mxu0 0
    %3586 = vmatprep.subr.bf16.mxu0 0
    %3587 = vmatpush1.bf16.xpose.msra.mxu0 0
    %3588 = vmatprep.subr.bf16.mxu0 0
    %3589 = vmatpush1.bf16.xpose.msra.mxu0 0
    %3590 = vmatprep.subr.bf16.mxu0 0
    %3591 = vmatpush1.bf16.xpose.msra.mxu0 0
    %3592 = vmatprep.subr.bf16.mxu0 0
    %3593 = vmatpush1.bf16.xpose.msra.mxu0 0
    %3594 = vmatprep.mubr.bf16.mxu0 0
    %3595 = vmatmul.mubr.bf16.gmra.mrb[0].mxu0 %v3557
    %v3596 = vpop.f32.mrb[0].mxu0
    %v3597 = vadd.f32 0.0, %v3596
    %v3598 = vpop.f32.mrb[0].mxu0
    %v3599 = vpop.f32.mrb[0].mxu0
    %v3600 = vpop.f32.mrb[0].mxu0
    %3601 = vdwg.mxu0
    %v3602 = vmul.f32 %v3597, 0.17677669
    %v3603 = vsel %vm1999, %v3602, -inf
    %3604 = vmax.xlane.f32.xlu0 %v3603
    %v3605 = vpop.xlane.xlu0 %3604
    %v3606 = vsub.f32 %v3602, %v3605
    %v3607 = vmul.f32 %v3606, 1.442695
    %v3608 = vpow.pop %v3607
    %v3609 = vsel %vm1999, %v3608, 0.0
    %3610 = vadd.xlane.f32.xlu0 %v3609
    %v3611 = vpop.xlane.xlu0 %3610
    %v3612 = vrcp.pop %v3611
    %v3613 = vmul.f32 %v3608, %v3612
    %v3614 = vpack.c.bf16 %v3613, %v3613
    %3615 = vrot.lane.b32.xlu0 %v3330, 64
    %v3616 = vpop.permute.xlu0 %3615
    %v3618 = vsel %vm1999, %v3614, 0
    %v3621 = vsel %vm2015, %v3616, 0
    %3623 = vmatprep.subr.bf16.mxu0 0
    %3624 = vmatpush1.bf16.msra.mxu0 %v3621
    %3625 = vmatprep.subr.bf16.mxu0 0
    %3626 = vmatpush1.bf16.msra.mxu0 0
    %3627 = vmatprep.subr.bf16.mxu0 0
    %3628 = vmatpush1.bf16.msra.mxu0 0
    %3629 = vmatprep.subr.bf16.mxu0 0
    %3630 = vmatpush1.bf16.msra.mxu0 0
    %3631 = vmatprep.subr.bf16.mxu0 0
    %3632 = vmatpush1.bf16.msra.mxu0 0
    %3633 = vmatprep.subr.bf16.mxu0 0
    %3634 = vmatpush1.bf16.msra.mxu0 0
    %3635 = vmatprep.subr.bf16.mxu0 0
    %3636 = vmatpush1.bf16.msra.mxu0 0
    %3637 = vmatprep.subr.bf16.mxu0 0
    %3638 = vmatpush1.bf16.msra.mxu0 0
    %3639 = vmatprep.subr.bf16.mxu0 0
    %3640 = vmatpush1.bf16.msra.mxu0 0
    %3641 = vmatprep.subr.bf16.mxu0 0
    %3642 = vmatpush1.bf16.msra.mxu0 0
    %3643 = vmatprep.subr.bf16.mxu0 0
    %3644 = vmatpush1.bf16.msra.mxu0 0
    %3645 = vmatprep.subr.bf16.mxu0 0
    %3646 = vmatpush1.bf16.msra.mxu0 0
    %3647 = vmatprep.subr.bf16.mxu0 0
    %3648 = vmatpush1.bf16.msra.mxu0 0
    %3649 = vmatprep.subr.bf16.mxu0 0
    %3650 = vmatpush1.bf16.msra.mxu0 0
    %3651 = vmatprep.subr.bf16.mxu0 0
    %3652 = vmatpush1.bf16.msra.mxu0 0
    %3653 = vmatprep.subr.bf16.mxu0 0
    %3654 = vmatpush1.bf16.msra.mxu0 0
    %3655 = vmatprep.mubr.bf16.mxu0 0
    %3656 = vmatmul.mubr.bf16.gmra.mrb[0].mxu0 %v3618
    %v3657 = vpop.f32.mrb[0].mxu0
    %v3658 = vadd.f32 0.0, %v3657
    %v3659 = vpop.f32.mrb[0].mxu0
    %v3660 = vpop.f32.mrb[0].mxu0
    %v3661 = vpop.f32.mrb[0].mxu0
    %3662 = vdwg.mxu0
    %3663 = vrot.lane.b32.xlu0 %v3324, 32
    %v3664 = vpop.permute.xlu0 %3663
    %3665 = vrot.lane.b32.xlu0 %v3327, 32
    %v3666 = vpop.permute.xlu0 %3665
    %v3668 = vsel %vm1951, %v3664, 0
    %v3671 = vsel %vm1951, %v3666, 0
    %3673 = vmatprep.subr.bf16.mxu0 0
    %3674 = vmatpush1.bf16.xpose.msra.mxu0 %v3671
    %3675 = vmatprep.subr.bf16.mxu0 0
    %3676 = vmatpush1.bf16.xpose.msra.mxu0 0
    %3677 = vmatprep.subr.bf16.mxu0 0
    %3678 = vmatpush1.bf16.xpose.msra.mxu0 0
    %3679 = vmatprep.subr.bf16.mxu0 0
    %3680 = vmatpush1.bf16.xpose.msra.mxu0 0
    %3681 = vmatprep.subr.bf16.mxu0 0
    %3682 = vmatpush1.bf16.xpose.msra.mxu0 0
    %3683 = vmatprep.subr.bf16.mxu0 0
    %3684 = vmatpush1.bf16.xpose.msra.mxu0 0
    %3685 = vmatprep.subr.bf16.mxu0 0
    %3686 = vmatpush1.bf16.xpose.msra.mxu0 0
    %3687 = vmatprep.subr.bf16.mxu0 0
    %3688 = vmatpush1.bf16.xpose.msra.mxu0 0
    %3689 = vmatprep.subr.bf16.mxu0 0
    %3690 = vmatpush1.bf16.xpose.msra.mxu0 0
    %3691 = vmatprep.subr.bf16.mxu0 0
    %3692 = vmatpush1.bf16.xpose.msra.mxu0 0
    %3693 = vmatprep.subr.bf16.mxu0 0
    %3694 = vmatpush1.bf16.xpose.msra.mxu0 0
    %3695 = vmatprep.subr.bf16.mxu0 0
    %3696 = vmatpush1.bf16.xpose.msra.mxu0 0
    %3697 = vmatprep.subr.bf16.mxu0 0
    %3698 = vmatpush1.bf16.xpose.msra.mxu0 0
    %3699 = vmatprep.subr.bf16.mxu0 0
    %3700 = vmatpush1.bf16.xpose.msra.mxu0 0
    %3701 = vmatprep.subr.bf16.mxu0 0
    %3702 = vmatpush1.bf16.xpose.msra.mxu0 0
    %3703 = vmatprep.subr.bf16.mxu0 0
    %3704 = vmatpush1.bf16.xpose.msra.mxu0 0
    %3705 = vmatprep.mubr.bf16.mxu0 0
    %3706 = vmatmul.mubr.bf16.gmra.mrb[0].mxu0 %v3668
    %v3707 = vpop.f32.mrb[0].mxu0
    %v3708 = vadd.f32 0.0, %v3707
    %v3709 = vpop.f32.mrb[0].mxu0
    %v3710 = vpop.f32.mrb[0].mxu0
    %v3711 = vpop.f32.mrb[0].mxu0
    %3712 = vdwg.mxu0
    %v3713 = vmul.f32 %v3708, 0.17677669
    %v3714 = vsel %vm1999, %v3713, -inf
    %3715 = vmax.xlane.f32.xlu0 %v3714
    %v3716 = vpop.xlane.xlu0 %3715
    %v3717 = vsub.f32 %v3713, %v3716
    %v3718 = vmul.f32 %v3717, 1.442695
    %v3719 = vpow.pop %v3718
    %v3720 = vsel %vm1999, %v3719, 0.0
    %3721 = vadd.xlane.f32.xlu0 %v3720
    %v3722 = vpop.xlane.xlu0 %3721
    %v3723 = vrcp.pop %v3722
    %v3724 = vmul.f32 %v3719, %v3723
    %v3725 = vpack.c.bf16 %v3724, %v3724
    %3726 = vrot.lane.b32.xlu0 %v3330, 32
    %v3727 = vpop.permute.xlu0 %3726
    %v3729 = vsel %vm1999, %v3725, 0
    %v3732 = vsel %vm2015, %v3727, 0
    %3734 = vmatprep.subr.bf16.mxu0 0
    %3735 = vmatpush1.bf16.msra.mxu0 %v3732
    %3736 = vmatprep.subr.bf16.mxu0 0
    %3737 = vmatpush1.bf16.msra.mxu0 0
    %3738 = vmatprep.subr.bf16.mxu0 0
    %3739 = vmatpush1.bf16.msra.mxu0 0
    %3740 = vmatprep.subr.bf16.mxu0 0
    %3741 = vmatpush1.bf16.msra.mxu0 0
    %3742 = vmatprep.subr.bf16.mxu0 0
    %3743 = vmatpush1.bf16.msra.mxu0 0
    %3744 = vmatprep.subr.bf16.mxu0 0
    %3745 = vmatpush1.bf16.msra.mxu0 0
    %3746 = vmatprep.subr.bf16.mxu0 0
    %3747 = vmatpush1.bf16.msra.mxu0 0
    %3748 = vmatprep.subr.bf16.mxu0 0
    %3749 = vmatpush1.bf16.msra.mxu0 0
    %3750 = vmatprep.subr.bf16.mxu0 0
    %3751 = vmatpush1.bf16.msra.mxu0 0
    %3752 = vmatprep.subr.bf16.mxu0 0
    %3753 = vmatpush1.bf16.msra.mxu0 0
    %3754 = vmatprep.subr.bf16.mxu0 0
    %3755 = vmatpush1.bf16.msra.mxu0 0
    %3756 = vmatprep.subr.bf16.mxu0 0
    %3757 = vmatpush1.bf16.msra.mxu0 0
    %3758 = vmatprep.subr.bf16.mxu0 0
    %3759 = vmatpush1.bf16.msra.mxu0 0
    %3760 = vmatprep.subr.bf16.mxu0 0
    %3761 = vmatpush1.bf16.msra.mxu0 0
    %3762 = vmatprep.subr.bf16.mxu0 0
    %3763 = vmatpush1.bf16.msra.mxu0 0
    %3764 = vmatprep.subr.bf16.mxu0 0
    %3765 = vmatpush1.bf16.msra.mxu0 0
    %3766 = vmatprep.mubr.bf16.mxu0 0
    %3767 = vmatmul.mubr.bf16.gmra.mrb[0].mxu0 %v3729
    %v3768 = vpop.f32.mrb[0].mxu0
    %v3769 = vadd.f32 0.0, %v3768
    %v3770 = vpop.f32.mrb[0].mxu0
    %v3771 = vpop.f32.mrb[0].mxu0
    %v3772 = vpop.f32.mrb[0].mxu0
    %3773 = vdwg.mxu0
    %v3775 = vsel %vm1951, %v3325, 0
    %v3778 = vsel %vm1951, %v3328, 0
    %3780 = vmatprep.subr.bf16.mxu0 0
    %3781 = vmatpush1.bf16.xpose.msra.mxu0 %v3778
    %3782 = vmatprep.subr.bf16.mxu0 0
    %3783 = vmatpush1.bf16.xpose.msra.mxu0 0
    %3784 = vmatprep.subr.bf16.mxu0 0
    %3785 = vmatpush1.bf16.xpose.msra.mxu0 0
    %3786 = vmatprep.subr.bf16.mxu0 0
    %3787 = vmatpush1.bf16.xpose.msra.mxu0 0
    %3788 = vmatprep.subr.bf16.mxu0 0
    %3789 = vmatpush1.bf16.xpose.msra.mxu0 0
    %3790 = vmatprep.subr.bf16.mxu0 0
    %3791 = vmatpush1.bf16.xpose.msra.mxu0 0
    %3792 = vmatprep.subr.bf16.mxu0 0
    %3793 = vmatpush1.bf16.xpose.msra.mxu0 0
    %3794 = vmatprep.subr.bf16.mxu0 0
    %3795 = vmatpush1.bf16.xpose.msra.mxu0 0
    %3796 = vmatprep.subr.bf16.mxu0 0
    %3797 = vmatpush1.bf16.xpose.msra.mxu0 0
    %3798 = vmatprep.subr.bf16.mxu0 0
    %3799 = vmatpush1.bf16.xpose.msra.mxu0 0
    %3800 = vmatprep.subr.bf16.mxu0 0
    %3801 = vmatpush1.bf16.xpose.msra.mxu0 0
    %3802 = vmatprep.subr.bf16.mxu0 0
    %3803 = vmatpush1.bf16.xpose.msra.mxu0 0
    %3804 = vmatprep.subr.bf16.mxu0 0
    %3805 = vmatpush1.bf16.xpose.msra.mxu0 0
    %3806 = vmatprep.subr.bf16.mxu0 0
    %3807 = vmatpush1.bf16.xpose.msra.mxu0 0
    %3808 = vmatprep.subr.bf16.mxu0 0
    %3809 = vmatpush1.bf16.xpose.msra.mxu0 0
    %3810 = vmatprep.subr.bf16.mxu0 0
    %3811 = vmatpush1.bf16.xpose.msra.mxu0 0
    %3812 = vmatprep.mubr.bf16.mxu0 0
    %3813 = vmatmul.mubr.bf16.gmra.mrb[0].mxu0 %v3775
    %v3814 = vpop.f32.mrb[0].mxu0
    %v3815 = vadd.f32 0.0, %v3814
    %v3816 = vpop.f32.mrb[0].mxu0
    %v3817 = vpop.f32.mrb[0].mxu0
    %v3818 = vpop.f32.mrb[0].mxu0
    %3819 = vdwg.mxu0
    %v3820 = vmul.f32 %v3815, 0.17677669
    %v3821 = vsel %vm1999, %v3820, -inf
    %3822 = vmax.xlane.f32.xlu0 %v3821
    %v3823 = vpop.xlane.xlu0 %3822
    %v3824 = vsub.f32 %v3820, %v3823
    %v3825 = vmul.f32 %v3824, 1.442695
    %v3826 = vpow.pop %v3825
    %v3827 = vsel %vm1999, %v3826, 0.0
    %3828 = vadd.xlane.f32.xlu0 %v3827
    %v3829 = vpop.xlane.xlu0 %3828
    %v3830 = vrcp.pop %v3829
    %v3831 = vmul.f32 %v3826, %v3830
    %v3832 = vpack.c.bf16 %v3831, %v3831
    %v3834 = vsel %vm1999, %v3832, 0
    %v3837 = vsel %vm2015, %v3331, 0
    %3839 = vmatprep.subr.bf16.mxu0 0
    %3840 = vmatpush1.bf16.msra.mxu0 %v3837
    %3841 = vmatprep.subr.bf16.mxu0 0
    %3842 = vmatpush1.bf16.msra.mxu0 0
    %3843 = vmatprep.subr.bf16.mxu0 0
    %3844 = vmatpush1.bf16.msra.mxu0 0
    %3845 = vmatprep.subr.bf16.mxu0 0
    %3846 = vmatpush1.bf16.msra.mxu0 0
    %3847 = vmatprep.subr.bf16.mxu0 0
    %3848 = vmatpush1.bf16.msra.mxu0 0
    %3849 = vmatprep.subr.bf16.mxu0 0
    %3850 = vmatpush1.bf16.msra.mxu0 0
    %3851 = vmatprep.subr.bf16.mxu0 0
    %3852 = vmatpush1.bf16.msra.mxu0 0
    %3853 = vmatprep.subr.bf16.mxu0 0
    %3854 = vmatpush1.bf16.msra.mxu0 0
    %3855 = vmatprep.subr.bf16.mxu0 0
    %3856 = vmatpush1.bf16.msra.mxu0 0
    %3857 = vmatprep.subr.bf16.mxu0 0
    %3858 = vmatpush1.bf16.msra.mxu0 0
    %3859 = vmatprep.subr.bf16.mxu0 0
    %3860 = vmatpush1.bf16.msra.mxu0 0
    %3861 = vmatprep.subr.bf16.mxu0 0
    %3862 = vmatpush1.bf16.msra.mxu0 0
    %3863 = vmatprep.subr.bf16.mxu0 0
    %3864 = vmatpush1.bf16.msra.mxu0 0
    %3865 = vmatprep.subr.bf16.mxu0 0
    %3866 = vmatpush1.bf16.msra.mxu0 0
    %3867 = vmatprep.subr.bf16.mxu0 0
    %3868 = vmatpush1.bf16.msra.mxu0 0
    %3869 = vmatprep.subr.bf16.mxu0 0
    %3870 = vmatpush1.bf16.msra.mxu0 0
    %3871 = vmatprep.mubr.bf16.mxu0 0
    %3872 = vmatmul.mubr.bf16.gmra.mrb[0].mxu0 %v3834
    %v3873 = vpop.f32.mrb[0].mxu0
    %v3874 = vadd.f32 0.0, %v3873
    %v3875 = vpop.f32.mrb[0].mxu0
    %v3876 = vpop.f32.mrb[0].mxu0
    %v3877 = vpop.f32.mrb[0].mxu0
    %3878 = vdwg.mxu0
    %3880 = vrot.lane.b32.xlu0 %v3325, 96
    %v3881 = vpop.permute.xlu0 %3880
    %3883 = vrot.lane.b32.xlu0 %v3328, 96
    %v3884 = vpop.permute.xlu0 %3883
    %v3886 = vsel %vm1951, %v3881, 0
    %v3889 = vsel %vm1951, %v3884, 0
    %3891 = vmatprep.subr.bf16.mxu0 0
    %3892 = vmatpush1.bf16.xpose.msra.mxu0 %v3889
    %3893 = vmatprep.subr.bf16.mxu0 0
    %3894 = vmatpush1.bf16.xpose.msra.mxu0 0
    %3895 = vmatprep.subr.bf16.mxu0 0
    %3896 = vmatpush1.bf16.xpose.msra.mxu0 0
    %3897 = vmatprep.subr.bf16.mxu0 0
    %3898 = vmatpush1.bf16.xpose.msra.mxu0 0
    %3899 = vmatprep.subr.bf16.mxu0 0
    %3900 = vmatpush1.bf16.xpose.msra.mxu0 0
    %3901 = vmatprep.subr.bf16.mxu0 0
    %3902 = vmatpush1.bf16.xpose.msra.mxu0 0
    %3903 = vmatprep.subr.bf16.mxu0 0
    %3904 = vmatpush1.bf16.xpose.msra.mxu0 0
    %3905 = vmatprep.subr.bf16.mxu0 0
    %3906 = vmatpush1.bf16.xpose.msra.mxu0 0
    %3907 = vmatprep.subr.bf16.mxu0 0
    %3908 = vmatpush1.bf16.xpose.msra.mxu0 0
    %3909 = vmatprep.subr.bf16.mxu0 0
    %3910 = vmatpush1.bf16.xpose.msra.mxu0 0
    %3911 = vmatprep.subr.bf16.mxu0 0
    %3912 = vmatpush1.bf16.xpose.msra.mxu0 0
    %3913 = vmatprep.subr.bf16.mxu0 0
    %3914 = vmatpush1.bf16.xpose.msra.mxu0 0
    %3915 = vmatprep.subr.bf16.mxu0 0
    %3916 = vmatpush1.bf16.xpose.msra.mxu0 0
    %3917 = vmatprep.subr.bf16.mxu0 0
    %3918 = vmatpush1.bf16.xpose.msra.mxu0 0
    %3919 = vmatprep.subr.bf16.mxu0 0
    %3920 = vmatpush1.bf16.xpose.msra.mxu0 0
    %3921 = vmatprep.subr.bf16.mxu0 0
    %3922 = vmatpush1.bf16.xpose.msra.mxu0 0
    %3923 = vmatprep.mubr.bf16.mxu0 0
    %3924 = vmatmul.mubr.bf16.gmra.mrb[0].mxu0 %v3886
    %v3925 = vpop.f32.mrb[0].mxu0
    %v3926 = vadd.f32 0.0, %v3925
    %v3927 = vpop.f32.mrb[0].mxu0
    %v3928 = vpop.f32.mrb[0].mxu0
    %v3929 = vpop.f32.mrb[0].mxu0
    %3930 = vdwg.mxu0
    %v3931 = vmul.f32 %v3926, 0.17677669
    %v3932 = vsel %vm1999, %v3931, -inf
    %3933 = vmax.xlane.f32.xlu0 %v3932
    %v3934 = vpop.xlane.xlu0 %3933
    %v3935 = vsub.f32 %v3931, %v3934
    %v3936 = vmul.f32 %v3935, 1.442695
    %v3937 = vpow.pop %v3936
    %v3938 = vsel %vm1999, %v3937, 0.0
    %3939 = vadd.xlane.f32.xlu0 %v3938
    %v3940 = vpop.xlane.xlu0 %3939
    %v3941 = vrcp.pop %v3940
    %v3942 = vmul.f32 %v3937, %v3941
    %v3943 = vpack.c.bf16 %v3942, %v3942
    %3945 = vrot.lane.b32.xlu0 %v3331, 96
    %v3946 = vpop.permute.xlu0 %3945
    %v3948 = vsel %vm1999, %v3943, 0
    %v3951 = vsel %vm2015, %v3946, 0
    %3953 = vmatprep.subr.bf16.mxu0 0
    %3954 = vmatpush1.bf16.msra.mxu0 %v3951
    %3955 = vmatprep.subr.bf16.mxu0 0
    %3956 = vmatpush1.bf16.msra.mxu0 0
    %3957 = vmatprep.subr.bf16.mxu0 0
    %3958 = vmatpush1.bf16.msra.mxu0 0
    %3959 = vmatprep.subr.bf16.mxu0 0
    %3960 = vmatpush1.bf16.msra.mxu0 0
    %3961 = vmatprep.subr.bf16.mxu0 0
    %3962 = vmatpush1.bf16.msra.mxu0 0
    %3963 = vmatprep.subr.bf16.mxu0 0
    %3964 = vmatpush1.bf16.msra.mxu0 0
    %3965 = vmatprep.subr.bf16.mxu0 0
    %3966 = vmatpush1.bf16.msra.mxu0 0
    %3967 = vmatprep.subr.bf16.mxu0 0
    %3968 = vmatpush1.bf16.msra.mxu0 0
    %3969 = vmatprep.subr.bf16.mxu0 0
    %3970 = vmatpush1.bf16.msra.mxu0 0
    %3971 = vmatprep.subr.bf16.mxu0 0
    %3972 = vmatpush1.bf16.msra.mxu0 0
    %3973 = vmatprep.subr.bf16.mxu0 0
    %3974 = vmatpush1.bf16.msra.mxu0 0
    %3975 = vmatprep.subr.bf16.mxu0 0
    %3976 = vmatpush1.bf16.msra.mxu0 0
    %3977 = vmatprep.subr.bf16.mxu0 0
    %3978 = vmatpush1.bf16.msra.mxu0 0
    %3979 = vmatprep.subr.bf16.mxu0 0
    %3980 = vmatpush1.bf16.msra.mxu0 0
    %3981 = vmatprep.subr.bf16.mxu0 0
    %3982 = vmatpush1.bf16.msra.mxu0 0
    %3983 = vmatprep.subr.bf16.mxu0 0
    %3984 = vmatpush1.bf16.msra.mxu0 0
    %3985 = vmatprep.mubr.bf16.mxu0 0
    %3986 = vmatmul.mubr.bf16.gmra.mrb[0].mxu0 %v3948
    %v3987 = vpop.f32.mrb[0].mxu0
    %v3988 = vadd.f32 0.0, %v3987
    %v3989 = vpop.f32.mrb[0].mxu0
    %v3990 = vpop.f32.mrb[0].mxu0
    %v3991 = vpop.f32.mrb[0].mxu0
    %3992 = vdwg.mxu0
    %3993 = vrot.lane.b32.xlu0 %v3325, 64
    %v3994 = vpop.permute.xlu0 %3993
    %3995 = vrot.lane.b32.xlu0 %v3328, 64
    %v3996 = vpop.permute.xlu0 %3995
    %v3998 = vsel %vm1951, %v3994, 0
    %v4001 = vsel %vm1951, %v3996, 0
    %4003 = vmatprep.subr.bf16.mxu0 0
    %4004 = vmatpush1.bf16.xpose.msra.mxu0 %v4001
    %4005 = vmatprep.subr.bf16.mxu0 0
    %4006 = vmatpush1.bf16.xpose.msra.mxu0 0
    %4007 = vmatprep.subr.bf16.mxu0 0
    %4008 = vmatpush1.bf16.xpose.msra.mxu0 0
    %4009 = vmatprep.subr.bf16.mxu0 0
    %4010 = vmatpush1.bf16.xpose.msra.mxu0 0
    %4011 = vmatprep.subr.bf16.mxu0 0
    %4012 = vmatpush1.bf16.xpose.msra.mxu0 0
    %4013 = vmatprep.subr.bf16.mxu0 0
    %4014 = vmatpush1.bf16.xpose.msra.mxu0 0
    %4015 = vmatprep.subr.bf16.mxu0 0
    %4016 = vmatpush1.bf16.xpose.msra.mxu0 0
    %4017 = vmatprep.subr.bf16.mxu0 0
    %4018 = vmatpush1.bf16.xpose.msra.mxu0 0
    %4019 = vmatprep.subr.bf16.mxu0 0
    %4020 = vmatpush1.bf16.xpose.msra.mxu0 0
    %4021 = vmatprep.subr.bf16.mxu0 0
    %4022 = vmatpush1.bf16.xpose.msra.mxu0 0
    %4023 = vmatprep.subr.bf16.mxu0 0
    %4024 = vmatpush1.bf16.xpose.msra.mxu0 0
    %4025 = vmatprep.subr.bf16.mxu0 0
    %4026 = vmatpush1.bf16.xpose.msra.mxu0 0
    %4027 = vmatprep.subr.bf16.mxu0 0
    %4028 = vmatpush1.bf16.xpose.msra.mxu0 0
    %4029 = vmatprep.subr.bf16.mxu0 0
    %4030 = vmatpush1.bf16.xpose.msra.mxu0 0
    %4031 = vmatprep.subr.bf16.mxu0 0
    %4032 = vmatpush1.bf16.xpose.msra.mxu0 0
    %4033 = vmatprep.subr.bf16.mxu0 0
    %4034 = vmatpush1.bf16.xpose.msra.mxu0 0
    %4035 = vmatprep.mubr.bf16.mxu0 0
    %4036 = vmatmul.mubr.bf16.gmra.mrb[0].mxu0 %v3998
    %v4037 = vpop.f32.mrb[0].mxu0
    %v4038 = vadd.f32 0.0, %v4037
    %v4039 = vpop.f32.mrb[0].mxu0
    %v4040 = vpop.f32.mrb[0].mxu0
    %v4041 = vpop.f32.mrb[0].mxu0
    %4042 = vdwg.mxu0
    %v4043 = vmul.f32 %v4038, 0.17677669
    %v4044 = vsel %vm1999, %v4043, -inf
    %4045 = vmax.xlane.f32.xlu0 %v4044
    %v4046 = vpop.xlane.xlu0 %4045
    %v4047 = vsub.f32 %v4043, %v4046
    %v4048 = vmul.f32 %v4047, 1.442695
    %v4049 = vpow.pop %v4048
    %v4050 = vsel %vm1999, %v4049, 0.0
    %4051 = vadd.xlane.f32.xlu0 %v4050
    %v4052 = vpop.xlane.xlu0 %4051
    %v4053 = vrcp.pop %v4052
    %v4054 = vmul.f32 %v4049, %v4053
    %v4055 = vpack.c.bf16 %v4054, %v4054
    %4056 = vrot.lane.b32.xlu0 %v3331, 64
    %v4057 = vpop.permute.xlu0 %4056
    %v4059 = vsel %vm1999, %v4055, 0
    %v4062 = vsel %vm2015, %v4057, 0
    %4064 = vmatprep.subr.bf16.mxu0 0
    %4065 = vmatpush1.bf16.msra.mxu0 %v4062
    %4066 = vmatprep.subr.bf16.mxu0 0
    %4067 = vmatpush1.bf16.msra.mxu0 0
    %4068 = vmatprep.subr.bf16.mxu0 0
    %4069 = vmatpush1.bf16.msra.mxu0 0
    %4070 = vmatprep.subr.bf16.mxu0 0
    %4071 = vmatpush1.bf16.msra.mxu0 0
    %4072 = vmatprep.subr.bf16.mxu0 0
    %4073 = vmatpush1.bf16.msra.mxu0 0
    %4074 = vmatprep.subr.bf16.mxu0 0
    %4075 = vmatpush1.bf16.msra.mxu0 0
    %4076 = vmatprep.subr.bf16.mxu0 0
    %4077 = vmatpush1.bf16.msra.mxu0 0
    %4078 = vmatprep.subr.bf16.mxu0 0
    %4079 = vmatpush1.bf16.msra.mxu0 0
    %4080 = vmatprep.subr.bf16.mxu0 0
    %4081 = vmatpush1.bf16.msra.mxu0 0
    %4082 = vmatprep.subr.bf16.mxu0 0
    %4083 = vmatpush1.bf16.msra.mxu0 0
    %4084 = vmatprep.subr.bf16.mxu0 0
    %4085 = vmatpush1.bf16.msra.mxu0 0
    %4086 = vmatprep.subr.bf16.mxu0 0
    %4087 = vmatpush1.bf16.msra.mxu0 0
    %4088 = vmatprep.subr.bf16.mxu0 0
    %4089 = vmatpush1.bf16.msra.mxu0 0
    %4090 = vmatprep.subr.bf16.mxu0 0
    %4091 = vmatpush1.bf16.msra.mxu0 0
    %4092 = vmatprep.subr.bf16.mxu0 0
    %4093 = vmatpush1.bf16.msra.mxu0 0
    %4094 = vmatprep.subr.bf16.mxu0 0
    %4095 = vmatpush1.bf16.msra.mxu0 0
    %4096 = vmatprep.mubr.bf16.mxu0 0
    %4097 = vmatmul.mubr.bf16.gmra.mrb[0].mxu0 %v4059
    %v4098 = vpop.f32.mrb[0].mxu0
    %v4099 = vadd.f32 0.0, %v4098
    %v4100 = vpop.f32.mrb[0].mxu0
    %v4101 = vpop.f32.mrb[0].mxu0
    %v4102 = vpop.f32.mrb[0].mxu0
    %4103 = vdwg.mxu0
    %4104 = vrot.lane.b32.xlu0 %v3325, 32
    %v4105 = vpop.permute.xlu0 %4104
    %4106 = vrot.lane.b32.xlu0 %v3328, 32
    %v4107 = vpop.permute.xlu0 %4106
    %v4109 = vsel %vm1951, %v4105, 0
    %v4112 = vsel %vm1951, %v4107, 0
    %4114 = vmatprep.subr.bf16.mxu0 0
    %4115 = vmatpush1.bf16.xpose.msra.mxu0 %v4112
    %4116 = vmatprep.subr.bf16.mxu0 0
    %4117 = vmatpush1.bf16.xpose.msra.mxu0 0
    %4118 = vmatprep.subr.bf16.mxu0 0
    %4119 = vmatpush1.bf16.xpose.msra.mxu0 0
    %4120 = vmatprep.subr.bf16.mxu0 0
    %4121 = vmatpush1.bf16.xpose.msra.mxu0 0
    %4122 = vmatprep.subr.bf16.mxu0 0
    %4123 = vmatpush1.bf16.xpose.msra.mxu0 0
    %4124 = vmatprep.subr.bf16.mxu0 0
    %4125 = vmatpush1.bf16.xpose.msra.mxu0 0
    %4126 = vmatprep.subr.bf16.mxu0 0
    %4127 = vmatpush1.bf16.xpose.msra.mxu0 0
    %4128 = vmatprep.subr.bf16.mxu0 0
    %4129 = vmatpush1.bf16.xpose.msra.mxu0 0
    %4130 = vmatprep.subr.bf16.mxu0 0
    %4131 = vmatpush1.bf16.xpose.msra.mxu0 0
    %4132 = vmatprep.subr.bf16.mxu0 0
    %4133 = vmatpush1.bf16.xpose.msra.mxu0 0
    %4134 = vmatprep.subr.bf16.mxu0 0
    %4135 = vmatpush1.bf16.xpose.msra.mxu0 0
    %4136 = vmatprep.subr.bf16.mxu0 0
    %4137 = vmatpush1.bf16.xpose.msra.mxu0 0
    %4138 = vmatprep.subr.bf16.mxu0 0
    %4139 = vmatpush1.bf16.xpose.msra.mxu0 0
    %4140 = vmatprep.subr.bf16.mxu0 0
    %4141 = vmatpush1.bf16.xpose.msra.mxu0 0
    %4142 = vmatprep.subr.bf16.mxu0 0
    %4143 = vmatpush1.bf16.xpose.msra.mxu0 0
    %4144 = vmatprep.subr.bf16.mxu0 0
    %4145 = vmatpush1.bf16.xpose.msra.mxu0 0
    %4146 = vmatprep.mubr.bf16.mxu0 0
    %4147 = vmatmul.mubr.bf16.gmra.mrb[0].mxu0 %v4109
    %v4148 = vpop.f32.mrb[0].mxu0
    %v4149 = vadd.f32 0.0, %v4148
    %v4150 = vpop.f32.mrb[0].mxu0
    %v4151 = vpop.f32.mrb[0].mxu0
    %v4152 = vpop.f32.mrb[0].mxu0
    %4153 = vdwg.mxu0
    %v4154 = vmul.f32 %v4149, 0.17677669
    %v4155 = vsel %vm1999, %v4154, -inf
    %4156 = vmax.xlane.f32.xlu0 %v4155
    %v4157 = vpop.xlane.xlu0 %4156
    %v4158 = vsub.f32 %v4154, %v4157
    %v4159 = vmul.f32 %v4158, 1.442695
    %v4160 = vpow.pop %v4159
    %v4161 = vsel %vm1999, %v4160, 0.0
    %4162 = vadd.xlane.f32.xlu0 %v4161
    %v4163 = vpop.xlane.xlu0 %4162
    %v4164 = vrcp.pop %v4163
    %v4165 = vmul.f32 %v4160, %v4164
    %v4166 = vpack.c.bf16 %v4165, %v4165
    %4167 = vrot.lane.b32.xlu0 %v3331, 32
    %v4168 = vpop.permute.xlu0 %4167
    %v4170 = vsel %vm1999, %v4166, 0
    %v4173 = vsel %vm2015, %v4168, 0
    %4175 = vmatprep.subr.bf16.mxu0 0
    %4176 = vmatpush1.bf16.msra.mxu0 %v4173
    %4177 = vmatprep.subr.bf16.mxu0 0
    %4178 = vmatpush1.bf16.msra.mxu0 0
    %4179 = vmatprep.subr.bf16.mxu0 0
    %4180 = vmatpush1.bf16.msra.mxu0 0
    %4181 = vmatprep.subr.bf16.mxu0 0
    %4182 = vmatpush1.bf16.msra.mxu0 0
    %4183 = vmatprep.subr.bf16.mxu0 0
    %4184 = vmatpush1.bf16.msra.mxu0 0
    %4185 = vmatprep.subr.bf16.mxu0 0
    %4186 = vmatpush1.bf16.msra.mxu0 0
    %4187 = vmatprep.subr.bf16.mxu0 0
    %4188 = vmatpush1.bf16.msra.mxu0 0
    %4189 = vmatprep.subr.bf16.mxu0 0
    %4190 = vmatpush1.bf16.msra.mxu0 0
    %4191 = vmatprep.subr.bf16.mxu0 0
    %4192 = vmatpush1.bf16.msra.mxu0 0
    %4193 = vmatprep.subr.bf16.mxu0 0
    %4194 = vmatpush1.bf16.msra.mxu0 0
    %4195 = vmatprep.subr.bf16.mxu0 0
    %4196 = vmatpush1.bf16.msra.mxu0 0
    %4197 = vmatprep.subr.bf16.mxu0 0
    %4198 = vmatpush1.bf16.msra.mxu0 0
    %4199 = vmatprep.subr.bf16.mxu0 0
    %4200 = vmatpush1.bf16.msra.mxu0 0
    %4201 = vmatprep.subr.bf16.mxu0 0
    %4202 = vmatpush1.bf16.msra.mxu0 0
    %4203 = vmatprep.subr.bf16.mxu0 0
    %4204 = vmatpush1.bf16.msra.mxu0 0
    %4205 = vmatprep.subr.bf16.mxu0 0
    %4206 = vmatpush1.bf16.msra.mxu0 0
    %4207 = vmatprep.mubr.bf16.mxu0 0
    %4208 = vmatmul.mubr.bf16.gmra.mrb[0].mxu0 %v4170
    %v4209 = vpop.f32.mrb[0].mxu0
    %v4210 = vadd.f32 0.0, %v4209
    %v4211 = vpop.f32.mrb[0].mxu0
    %v4212 = vpop.f32.mrb[0].mxu0
    %v4213 = vpop.f32.mrb[0].mxu0
    %4214 = vdwg.mxu0
    %v4216 = vsel %vm1951, %v3326, 0
    %v4219 = vsel %vm1951, %v3329, 0
    %4221 = vmatprep.subr.bf16.mxu0 0
    %4222 = vmatpush1.bf16.xpose.msra.mxu0 %v4219
    %4223 = vmatprep.subr.bf16.mxu0 0
    %4224 = vmatpush1.bf16.xpose.msra.mxu0 0
    %4225 = vmatprep.subr.bf16.mxu0 0
    %4226 = vmatpush1.bf16.xpose.msra.mxu0 0
    %4227 = vmatprep.subr.bf16.mxu0 0
    %4228 = vmatpush1.bf16.xpose.msra.mxu0 0
    %4229 = vmatprep.subr.bf16.mxu0 0
    %4230 = vmatpush1.bf16.xpose.msra.mxu0 0
    %4231 = vmatprep.subr.bf16.mxu0 0
    %4232 = vmatpush1.bf16.xpose.msra.mxu0 0
    %4233 = vmatprep.subr.bf16.mxu0 0
    %4234 = vmatpush1.bf16.xpose.msra.mxu0 0
    %4235 = vmatprep.subr.bf16.mxu0 0
    %4236 = vmatpush1.bf16.xpose.msra.mxu0 0
    %4237 = vmatprep.subr.bf16.mxu0 0
    %4238 = vmatpush1.bf16.xpose.msra.mxu0 0
    %4239 = vmatprep.subr.bf16.mxu0 0
    %4240 = vmatpush1.bf16.xpose.msra.mxu0 0
    %4241 = vmatprep.subr.bf16.mxu0 0
    %4242 = vmatpush1.bf16.xpose.msra.mxu0 0
    %4243 = vmatprep.subr.bf16.mxu0 0
    %4244 = vmatpush1.bf16.xpose.msra.mxu0 0
    %4245 = vmatprep.subr.bf16.mxu0 0
    %4246 = vmatpush1.bf16.xpose.msra.mxu0 0
    %4247 = vmatprep.subr.bf16.mxu0 0
    %4248 = vmatpush1.bf16.xpose.msra.mxu0 0
    %4249 = vmatprep.subr.bf16.mxu0 0
    %4250 = vmatpush1.bf16.xpose.msra.mxu0 0
    %4251 = vmatprep.subr.bf16.mxu0 0
    %4252 = vmatpush1.bf16.xpose.msra.mxu0 0
    %4253 = vmatprep.mubr.bf16.mxu0 0
    %4254 = vmatmul.mubr.bf16.gmra.mrb[0].mxu0 %v4216
    %v4255 = vpop.f32.mrb[0].mxu0
    %v4256 = vadd.f32 0.0, %v4255
    %v4257 = vpop.f32.mrb[0].mxu0
    %v4258 = vpop.f32.mrb[0].mxu0
    %v4259 = vpop.f32.mrb[0].mxu0
    %4260 = vdwg.mxu0
    %v4261 = vmul.f32 %v4256, 0.17677669
    %v4262 = vsel %vm1999, %v4261, -inf
    %4263 = vmax.xlane.f32.xlu0 %v4262
    %v4264 = vpop.xlane.xlu0 %4263
    %v4265 = vsub.f32 %v4261, %v4264
    %v4266 = vmul.f32 %v4265, 1.442695
    %v4267 = vpow.pop %v4266
    %v4268 = vsel %vm1999, %v4267, 0.0
    %4269 = vadd.xlane.f32.xlu0 %v4268
    %v4270 = vpop.xlane.xlu0 %4269
    %v4271 = vrcp.pop %v4270
    %v4272 = vmul.f32 %v4267, %v4271
    %v4273 = vpack.c.bf16 %v4272, %v4272
    %v4275 = vsel %vm1999, %v4273, 0
    %v4278 = vsel %vm2015, %v3332, 0
    %4280 = vmatprep.subr.bf16.mxu0 0
    %4281 = vmatpush1.bf16.msra.mxu0 %v4278
    %4282 = vmatprep.subr.bf16.mxu0 0
    %4283 = vmatpush1.bf16.msra.mxu0 0
    %4284 = vmatprep.subr.bf16.mxu0 0
    %4285 = vmatpush1.bf16.msra.mxu0 0
    %4286 = vmatprep.subr.bf16.mxu0 0
    %4287 = vmatpush1.bf16.msra.mxu0 0
    %4288 = vmatprep.subr.bf16.mxu0 0
    %4289 = vmatpush1.bf16.msra.mxu0 0
    %4290 = vmatprep.subr.bf16.mxu0 0
    %4291 = vmatpush1.bf16.msra.mxu0 0
    %4292 = vmatprep.subr.bf16.mxu0 0
    %4293 = vmatpush1.bf16.msra.mxu0 0
    %4294 = vmatprep.subr.bf16.mxu0 0
    %4295 = vmatpush1.bf16.msra.mxu0 0
    %4296 = vmatprep.subr.bf16.mxu0 0
    %4297 = vmatpush1.bf16.msra.mxu0 0
    %4298 = vmatprep.subr.bf16.mxu0 0
    %4299 = vmatpush1.bf16.msra.mxu0 0
    %4300 = vmatprep.subr.bf16.mxu0 0
    %4301 = vmatpush1.bf16.msra.mxu0 0
    %4302 = vmatprep.subr.bf16.mxu0 0
    %4303 = vmatpush1.bf16.msra.mxu0 0
    %4304 = vmatprep.subr.bf16.mxu0 0
    %4305 = vmatpush1.bf16.msra.mxu0 0
    %4306 = vmatprep.subr.bf16.mxu0 0
    %4307 = vmatpush1.bf16.msra.mxu0 0
    %4308 = vmatprep.subr.bf16.mxu0 0
    %4309 = vmatpush1.bf16.msra.mxu0 0
    %4310 = vmatprep.subr.bf16.mxu0 0
    %4311 = vmatpush1.bf16.msra.mxu0 0
    %4312 = vmatprep.mubr.bf16.mxu0 0
    %4313 = vmatmul.mubr.bf16.gmra.mrb[0].mxu0 %v4275
    %v4314 = vpop.f32.mrb[0].mxu0
    %v4315 = vadd.f32 0.0, %v4314
    %v4316 = vpop.f32.mrb[0].mxu0
    %v4317 = vpop.f32.mrb[0].mxu0
    %v4318 = vpop.f32.mrb[0].mxu0
    %4319 = vdwg.mxu0
    %4321 = vrot.lane.b32.xlu0 %v3326, 96
    %v4322 = vpop.permute.xlu0 %4321
    %4324 = vrot.lane.b32.xlu0 %v3329, 96
    %v4325 = vpop.permute.xlu0 %4324
    %v4327 = vsel %vm1951, %v4322, 0
    %v4330 = vsel %vm1951, %v4325, 0
    %4332 = vmatprep.subr.bf16.mxu0 0
    %4333 = vmatpush1.bf16.xpose.msra.mxu0 %v4330
    %4334 = vmatprep.subr.bf16.mxu0 0
    %4335 = vmatpush1.bf16.xpose.msra.mxu0 0
    %4336 = vmatprep.subr.bf16.mxu0 0
    %4337 = vmatpush1.bf16.xpose.msra.mxu0 0
    %4338 = vmatprep.subr.bf16.mxu0 0
    %4339 = vmatpush1.bf16.xpose.msra.mxu0 0
    %4340 = vmatprep.subr.bf16.mxu0 0
    %4341 = vmatpush1.bf16.xpose.msra.mxu0 0
    %4342 = vmatprep.subr.bf16.mxu0 0
    %4343 = vmatpush1.bf16.xpose.msra.mxu0 0
    %4344 = vmatprep.subr.bf16.mxu0 0
    %4345 = vmatpush1.bf16.xpose.msra.mxu0 0
    %4346 = vmatprep.subr.bf16.mxu0 0
    %4347 = vmatpush1.bf16.xpose.msra.mxu0 0
    %4348 = vmatprep.subr.bf16.mxu0 0
    %4349 = vmatpush1.bf16.xpose.msra.mxu0 0
    %4350 = vmatprep.subr.bf16.mxu0 0
    %4351 = vmatpush1.bf16.xpose.msra.mxu0 0
    %4352 = vmatprep.subr.bf16.mxu0 0
    %4353 = vmatpush1.bf16.xpose.msra.mxu0 0
    %4354 = vmatprep.subr.bf16.mxu0 0
    %4355 = vmatpush1.bf16.xpose.msra.mxu0 0
    %4356 = vmatprep.subr.bf16.mxu0 0
    %4357 = vmatpush1.bf16.xpose.msra.mxu0 0
    %4358 = vmatprep.subr.bf16.mxu0 0
    %4359 = vmatpush1.bf16.xpose.msra.mxu0 0
    %4360 = vmatprep.subr.bf16.mxu0 0
    %4361 = vmatpush1.bf16.xpose.msra.mxu0 0
    %4362 = vmatprep.subr.bf16.mxu0 0
    %4363 = vmatpush1.bf16.xpose.msra.mxu0 0
    %4364 = vmatprep.mubr.bf16.mxu0 0
    %4365 = vmatmul.mubr.bf16.gmra.mrb[0].mxu0 %v4327
    %v4366 = vpop.f32.mrb[0].mxu0
    %v4367 = vadd.f32 0.0, %v4366
    %v4368 = vpop.f32.mrb[0].mxu0
    %v4369 = vpop.f32.mrb[0].mxu0
    %v4370 = vpop.f32.mrb[0].mxu0
    %4371 = vdwg.mxu0
    %v4372 = vmul.f32 %v4367, 0.17677669
    %v4373 = vsel %vm1999, %v4372, -inf
    %4374 = vmax.xlane.f32.xlu0 %v4373
    %v4375 = vpop.xlane.xlu0 %4374
    %v4376 = vsub.f32 %v4372, %v4375
    %v4377 = vmul.f32 %v4376, 1.442695
    %v4378 = vpow.pop %v4377
    %v4379 = vsel %vm1999, %v4378, 0.0
    %4380 = vadd.xlane.f32.xlu0 %v4379
    %v4381 = vpop.xlane.xlu0 %4380
    %v4382 = vrcp.pop %v4381
    %v4383 = vmul.f32 %v4378, %v4382
    %v4384 = vpack.c.bf16 %v4383, %v4383
    %4386 = vrot.lane.b32.xlu0 %v3332, 96
    %v4387 = vpop.permute.xlu0 %4386
    %v4389 = vsel %vm1999, %v4384, 0
    %v4392 = vsel %vm2015, %v4387, 0
    %4394 = vmatprep.subr.bf16.mxu0 0
    %4395 = vmatpush1.bf16.msra.mxu0 %v4392
    %4396 = vmatprep.subr.bf16.mxu0 0
    %4397 = vmatpush1.bf16.msra.mxu0 0
    %4398 = vmatprep.subr.bf16.mxu0 0
    %4399 = vmatpush1.bf16.msra.mxu0 0
    %4400 = vmatprep.subr.bf16.mxu0 0
    %4401 = vmatpush1.bf16.msra.mxu0 0
    %4402 = vmatprep.subr.bf16.mxu0 0
    %4403 = vmatpush1.bf16.msra.mxu0 0
    %4404 = vmatprep.subr.bf16.mxu0 0
    %4405 = vmatpush1.bf16.msra.mxu0 0
    %4406 = vmatprep.subr.bf16.mxu0 0
    %4407 = vmatpush1.bf16.msra.mxu0 0
    %4408 = vmatprep.subr.bf16.mxu0 0
    %4409 = vmatpush1.bf16.msra.mxu0 0
    %4410 = vmatprep.subr.bf16.mxu0 0
    %4411 = vmatpush1.bf16.msra.mxu0 0
    %4412 = vmatprep.subr.bf16.mxu0 0
    %4413 = vmatpush1.bf16.msra.mxu0 0
    %4414 = vmatprep.subr.bf16.mxu0 0
    %4415 = vmatpush1.bf16.msra.mxu0 0
    %4416 = vmatprep.subr.bf16.mxu0 0
    %4417 = vmatpush1.bf16.msra.mxu0 0
    %4418 = vmatprep.subr.bf16.mxu0 0
    %4419 = vmatpush1.bf16.msra.mxu0 0
    %4420 = vmatprep.subr.bf16.mxu0 0
    %4421 = vmatpush1.bf16.msra.mxu0 0
    %4422 = vmatprep.subr.bf16.mxu0 0
    %4423 = vmatpush1.bf16.msra.mxu0 0
    %4424 = vmatprep.subr.bf16.mxu0 0
    %4425 = vmatpush1.bf16.msra.mxu0 0
    %4426 = vmatprep.mubr.bf16.mxu0 0
    %4427 = vmatmul.mubr.bf16.gmra.mrb[0].mxu0 %v4389
    %v4428 = vpop.f32.mrb[0].mxu0
    %v4429 = vadd.f32 0.0, %v4428
    %v4430 = vpop.f32.mrb[0].mxu0
    %v4431 = vpop.f32.mrb[0].mxu0
    %v4432 = vpop.f32.mrb[0].mxu0
    %4433 = vdwg.mxu0
    %4434 = vrot.lane.b32.xlu0 %v3326, 64
    %v4435 = vpop.permute.xlu0 %4434
    %4436 = vrot.lane.b32.xlu0 %v3329, 64
    %v4437 = vpop.permute.xlu0 %4436
    %v4439 = vsel %vm1951, %v4435, 0
    %v4442 = vsel %vm1951, %v4437, 0
    %4444 = vmatprep.subr.bf16.mxu0 0
    %4445 = vmatpush1.bf16.xpose.msra.mxu0 %v4442
    %4446 = vmatprep.subr.bf16.mxu0 0
    %4447 = vmatpush1.bf16.xpose.msra.mxu0 0
    %4448 = vmatprep.subr.bf16.mxu0 0
    %4449 = vmatpush1.bf16.xpose.msra.mxu0 0
    %4450 = vmatprep.subr.bf16.mxu0 0
    %4451 = vmatpush1.bf16.xpose.msra.mxu0 0
    %4452 = vmatprep.subr.bf16.mxu0 0
    %4453 = vmatpush1.bf16.xpose.msra.mxu0 0
    %4454 = vmatprep.subr.bf16.mxu0 0
    %4455 = vmatpush1.bf16.xpose.msra.mxu0 0
    %4456 = vmatprep.subr.bf16.mxu0 0
    %4457 = vmatpush1.bf16.xpose.msra.mxu0 0
    %4458 = vmatprep.subr.bf16.mxu0 0
    %4459 = vmatpush1.bf16.xpose.msra.mxu0 0
    %4460 = vmatprep.subr.bf16.mxu0 0
    %4461 = vmatpush1.bf16.xpose.msra.mxu0 0
    %4462 = vmatprep.subr.bf16.mxu0 0
    %4463 = vmatpush1.bf16.xpose.msra.mxu0 0
    %4464 = vmatprep.subr.bf16.mxu0 0
    %4465 = vmatpush1.bf16.xpose.msra.mxu0 0
    %4466 = vmatprep.subr.bf16.mxu0 0
    %4467 = vmatpush1.bf16.xpose.msra.mxu0 0
    %4468 = vmatprep.subr.bf16.mxu0 0
    %4469 = vmatpush1.bf16.xpose.msra.mxu0 0
    %4470 = vmatprep.subr.bf16.mxu0 0
    %4471 = vmatpush1.bf16.xpose.msra.mxu0 0
    %4472 = vmatprep.subr.bf16.mxu0 0
    %4473 = vmatpush1.bf16.xpose.msra.mxu0 0
    %4474 = vmatprep.subr.bf16.mxu0 0
    %4475 = vmatpush1.bf16.xpose.msra.mxu0 0
    %4476 = vmatprep.mubr.bf16.mxu0 0
    %4477 = vmatmul.mubr.bf16.gmra.mrb[0].mxu0 %v4439
    %v4478 = vpop.f32.mrb[0].mxu0
    %v4479 = vadd.f32 0.0, %v4478
    %v4480 = vpop.f32.mrb[0].mxu0
    %v4481 = vpop.f32.mrb[0].mxu0
    %v4482 = vpop.f32.mrb[0].mxu0
    %4483 = vdwg.mxu0
    %v4484 = vmul.f32 %v4479, 0.17677669
    %v4485 = vsel %vm1999, %v4484, -inf
    %4486 = vmax.xlane.f32.xlu0 %v4485
    %v4487 = vpop.xlane.xlu0 %4486
    %v4488 = vsub.f32 %v4484, %v4487
    %v4489 = vmul.f32 %v4488, 1.442695
    %v4490 = vpow.pop %v4489
    %v4491 = vsel %vm1999, %v4490, 0.0
    %4492 = vadd.xlane.f32.xlu0 %v4491
    %v4493 = vpop.xlane.xlu0 %4492
    %v4494 = vrcp.pop %v4493
    %v4495 = vmul.f32 %v4490, %v4494
    %v4496 = vpack.c.bf16 %v4495, %v4495
    %4497 = vrot.lane.b32.xlu0 %v3332, 64
    %v4498 = vpop.permute.xlu0 %4497
    %v4500 = vsel %vm1999, %v4496, 0
    %v4503 = vsel %vm2015, %v4498, 0
    %4505 = vmatprep.subr.bf16.mxu0 0
    %4506 = vmatpush1.bf16.msra.mxu0 %v4503
    %4507 = vmatprep.subr.bf16.mxu0 0
    %4508 = vmatpush1.bf16.msra.mxu0 0
    %4509 = vmatprep.subr.bf16.mxu0 0
    %4510 = vmatpush1.bf16.msra.mxu0 0
    %4511 = vmatprep.subr.bf16.mxu0 0
    %4512 = vmatpush1.bf16.msra.mxu0 0
    %4513 = vmatprep.subr.bf16.mxu0 0
    %4514 = vmatpush1.bf16.msra.mxu0 0
    %4515 = vmatprep.subr.bf16.mxu0 0
    %4516 = vmatpush1.bf16.msra.mxu0 0
    %4517 = vmatprep.subr.bf16.mxu0 0
    %4518 = vmatpush1.bf16.msra.mxu0 0
    %4519 = vmatprep.subr.bf16.mxu0 0
    %4520 = vmatpush1.bf16.msra.mxu0 0
    %4521 = vmatprep.subr.bf16.mxu0 0
    %4522 = vmatpush1.bf16.msra.mxu0 0
    %4523 = vmatprep.subr.bf16.mxu0 0
    %4524 = vmatpush1.bf16.msra.mxu0 0
    %4525 = vmatprep.subr.bf16.mxu0 0
    %4526 = vmatpush1.bf16.msra.mxu0 0
    %4527 = vmatprep.subr.bf16.mxu0 0
    %4528 = vmatpush1.bf16.msra.mxu0 0
    %4529 = vmatprep.subr.bf16.mxu0 0
    %4530 = vmatpush1.bf16.msra.mxu0 0
    %4531 = vmatprep.subr.bf16.mxu0 0
    %4532 = vmatpush1.bf16.msra.mxu0 0
    %4533 = vmatprep.subr.bf16.mxu0 0
    %4534 = vmatpush1.bf16.msra.mxu0 0
    %4535 = vmatprep.subr.bf16.mxu0 0
    %4536 = vmatpush1.bf16.msra.mxu0 0
    %4537 = vmatprep.mubr.bf16.mxu0 0
    %4538 = vmatmul.mubr.bf16.gmra.mrb[0].mxu0 %v4500
    %v4539 = vpop.f32.mrb[0].mxu0
    %v4540 = vadd.f32 0.0, %v4539
    %v4541 = vpop.f32.mrb[0].mxu0
    %v4542 = vpop.f32.mrb[0].mxu0
    %v4543 = vpop.f32.mrb[0].mxu0
    %4544 = vdwg.mxu0
    %4545 = vrot.lane.b32.xlu0 %v3326, 32
    %v4546 = vpop.permute.xlu0 %4545
    %4547 = vrot.lane.b32.xlu0 %v3329, 32
    %v4548 = vpop.permute.xlu0 %4547
    %v4550 = vsel %vm1951, %v4546, 0
    %v4553 = vsel %vm1951, %v4548, 0
    %4555 = vmatprep.subr.bf16.mxu0 0
    %4556 = vmatpush1.bf16.xpose.msra.mxu0 %v4553
    %4557 = vmatprep.subr.bf16.mxu0 0
    %4558 = vmatpush1.bf16.xpose.msra.mxu0 0
    %4559 = vmatprep.subr.bf16.mxu0 0
    %4560 = vmatpush1.bf16.xpose.msra.mxu0 0
    %4561 = vmatprep.subr.bf16.mxu0 0
    %4562 = vmatpush1.bf16.xpose.msra.mxu0 0
    %4563 = vmatprep.subr.bf16.mxu0 0
    %4564 = vmatpush1.bf16.xpose.msra.mxu0 0
    %4565 = vmatprep.subr.bf16.mxu0 0
    %4566 = vmatpush1.bf16.xpose.msra.mxu0 0
    %4567 = vmatprep.subr.bf16.mxu0 0
    %4568 = vmatpush1.bf16.xpose.msra.mxu0 0
    %4569 = vmatprep.subr.bf16.mxu0 0
    %4570 = vmatpush1.bf16.xpose.msra.mxu0 0
    %4571 = vmatprep.subr.bf16.mxu0 0
    %4572 = vmatpush1.bf16.xpose.msra.mxu0 0
    %4573 = vmatprep.subr.bf16.mxu0 0
    %4574 = vmatpush1.bf16.xpose.msra.mxu0 0
    %4575 = vmatprep.subr.bf16.mxu0 0
    %4576 = vmatpush1.bf16.xpose.msra.mxu0 0
    %4577 = vmatprep.subr.bf16.mxu0 0
    %4578 = vmatpush1.bf16.xpose.msra.mxu0 0
    %4579 = vmatprep.subr.bf16.mxu0 0
    %4580 = vmatpush1.bf16.xpose.msra.mxu0 0
    %4581 = vmatprep.subr.bf16.mxu0 0
    %4582 = vmatpush1.bf16.xpose.msra.mxu0 0
    %4583 = vmatprep.subr.bf16.mxu0 0
    %4584 = vmatpush1.bf16.xpose.msra.mxu0 0
    %4585 = vmatprep.subr.bf16.mxu0 0
    %4586 = vmatpush1.bf16.xpose.msra.mxu0 0
    %4587 = vmatprep.mubr.bf16.mxu0 0
    %4588 = vmatmul.mubr.bf16.gmra.mrb[0].mxu0 %v4550
    %v4589 = vpop.f32.mrb[0].mxu0
    %v4590 = vadd.f32 0.0, %v4589
    %v4591 = vpop.f32.mrb[0].mxu0
    %v4592 = vpop.f32.mrb[0].mxu0
    %v4593 = vpop.f32.mrb[0].mxu0
    %4594 = vdwg.mxu0
    %v4595 = vmul.f32 %v4590, 0.17677669
    %v4596 = vsel %vm1999, %v4595, -inf
    %4597 = vmax.xlane.f32.xlu0 %v4596
    %v4598 = vpop.xlane.xlu0 %4597
    %v4599 = vsub.f32 %v4595, %v4598
    %v4600 = vmul.f32 %v4599, 1.442695
    %v4601 = vpow.pop %v4600
    %v4602 = vsel %vm1999, %v4601, 0.0
    %4603 = vadd.xlane.f32.xlu0 %v4602
    %v4604 = vpop.xlane.xlu0 %4603
    %v4605 = vrcp.pop %v4604
    %v4606 = vmul.f32 %v4601, %v4605
    %v4607 = vpack.c.bf16 %v4606, %v4606
    %4608 = vrot.lane.b32.xlu0 %v3332, 32
    %v4609 = vpop.permute.xlu0 %4608
    %v4611 = vsel %vm1999, %v4607, 0
    %v4614 = vsel %vm2015, %v4609, 0
    %4616 = vmatprep.subr.bf16.mxu0 0
    %4617 = vmatpush1.bf16.msra.mxu0 %v4614
    %4618 = vmatprep.subr.bf16.mxu0 0
    %4619 = vmatpush1.bf16.msra.mxu0 0
    %4620 = vmatprep.subr.bf16.mxu0 0
    %4621 = vmatpush1.bf16.msra.mxu0 0
    %4622 = vmatprep.subr.bf16.mxu0 0
    %4623 = vmatpush1.bf16.msra.mxu0 0
    %4624 = vmatprep.subr.bf16.mxu0 0
    %4625 = vmatpush1.bf16.msra.mxu0 0
    %4626 = vmatprep.subr.bf16.mxu0 0
    %4627 = vmatpush1.bf16.msra.mxu0 0
    %4628 = vmatprep.subr.bf16.mxu0 0
    %4629 = vmatpush1.bf16.msra.mxu0 0
    %4630 = vmatprep.subr.bf16.mxu0 0
    %4631 = vmatpush1.bf16.msra.mxu0 0
    %4632 = vmatprep.subr.bf16.mxu0 0
    %4633 = vmatpush1.bf16.msra.mxu0 0
    %4634 = vmatprep.subr.bf16.mxu0 0
    %4635 = vmatpush1.bf16.msra.mxu0 0
    %4636 = vmatprep.subr.bf16.mxu0 0
    %4637 = vmatpush1.bf16.msra.mxu0 0
    %4638 = vmatprep.subr.bf16.mxu0 0
    %4639 = vmatpush1.bf16.msra.mxu0 0
    %4640 = vmatprep.subr.bf16.mxu0 0
    %4641 = vmatpush1.bf16.msra.mxu0 0
    %4642 = vmatprep.subr.bf16.mxu0 0
    %4643 = vmatpush1.bf16.msra.mxu0 0
    %4644 = vmatprep.subr.bf16.mxu0 0
    %4645 = vmatpush1.bf16.msra.mxu0 0
    %4646 = vmatprep.subr.bf16.mxu0 0
    %4647 = vmatpush1.bf16.msra.mxu0 0
    %4648 = vmatprep.mubr.bf16.mxu0 0
    %4649 = vmatmul.mubr.bf16.gmra.mrb[0].mxu0 %v4611
    %v4650 = vpop.f32.mrb[0].mxu0
    %v4651 = vadd.f32 0.0, %v4650
    %v4652 = vpop.f32.mrb[0].mxu0
    %v4653 = vpop.f32.mrb[0].mxu0
    %v4654 = vpop.f32.mrb[0].mxu0
    %4655 = vdwg.mxu0
    %4657 = vrot.lane.b32.xlu0 %v3547, 32
    %v4658 = vpop.permute.xlu0 %4657
    %4661 = vrot.lane.b32.xlu0 %v3658, 64
    %v4662 = vpop.permute.xlu0 %4661
    %4665 = vrot.lane.b32.xlu0 %v3769, 96
    %v4666 = vpop.permute.xlu0 %4665
    %4669 = vrot.lane.b32.xlu0 %v3988, 32
    %v4670 = vpop.permute.xlu0 %4669
    %4673 = vrot.lane.b32.xlu0 %v4099, 64
    %v4674 = vpop.permute.xlu0 %4673
    %4677 = vrot.lane.b32.xlu0 %v4210, 96
    %v4678 = vpop.permute.xlu0 %4677
    %4681 = vrot.lane.b32.xlu0 %v4429, 32
    %v4682 = vpop.permute.xlu0 %4681
    %4685 = vrot.lane.b32.xlu0 %v4540, 64
    %v4686 = vpop.permute.xlu0 %4685
    %4689 = vrot.lane.b32.xlu0 %v4651, 96
    %v4690 = vpop.permute.xlu0 %4689
    %v4692 = vsel %vm1951, %v3433, %v4658
    %v4693 = vsel %vm3314, %v4692, %v4662
    %v4694 = vsel %vm3316, %v4693, %v4666
    %v4695 = vsel %vm1951, %v3874, %v4670
    %v4696 = vsel %vm3314, %v4695, %v4674
    %v4697 = vsel %vm3316, %v4696, %v4678
    %v4698 = vsel %vm1951, %v4315, %v4682
    %v4699 = vsel %vm3314, %v4698, %v4686
    %v4700 = vsel %vm3316, %v4699, %v4690
    %v4701 = vpack.c.bf16 %v4694, %v3317
    %v4702 = vpack.c.bf16 %v4697, %v3320
    %v4703 = vpack.c.bf16 %v4700, %v3323
    %v4704 = vld [vmem:[#allocation7] sm:$0xff]
    %v4705 = vld [vmem:[#allocation7 + $0x8] sm:$0xf]
    %v4706 = vld [vmem:[#allocation7 + $0xc] sm:$0xff]
    %v4707 = vld [vmem:[#allocation7 + $0x14] sm:$0xf]
    %v4708 = vld [vmem:[#allocation7 + $0x18] sm:$0xff]
    %v4709 = vld [vmem:[#allocation7 + $0x20] sm:$0xf]
    %v4710 = vld [vmem:[#allocation7 + $0x24] sm:$0xff]
    %v4711 = vld [vmem:[#allocation7 + $0x2c] sm:$0xf]
    %v4712 = vld [vmem:[#allocation7 + $0x30] sm:$0xff]
    %v4713 = vld [vmem:[#allocation7 + $0x38] sm:$0xf]
    %v4714 = vld [vmem:[#allocation7 + $0x3c] sm:$0xff]
    %v4715 = vld [vmem:[#allocation7 + $0x44] sm:$0xf]
    %v4716 = vld [vmem:[#allocation7 + $0x48] sm:$0xff]
    %v4717 = vld [vmem:[#allocation7 + $0x50] sm:$0xf]
    %v4718 = vld [vmem:[#allocation7 + $0x54] sm:$0xff]
    %v4719 = vld [vmem:[#allocation7 + $0x5c] sm:$0xf]
    %v4720 = vld [vmem:[#allocation7 + $0x60] sm:$0xff]
    %v4721 = vld [vmem:[#allocation7 + $0x68] sm:$0xf]
    %v4722 = vld [vmem:[#allocation7 + $0x6c] sm:$0xff]
    %v4723 = vld [vmem:[#allocation7 + $0x74] sm:$0xf]
    %v4724 = vld [vmem:[#allocation7 + $0x78] sm:$0xff]
    %v4725 = vld [vmem:[#allocation7 + $0x80] sm:$0xf]
    %v4726 = vld [vmem:[#allocation7 + $0x84] sm:$0xff]
    %v4727 = vld [vmem:[#allocation7 + $0x8c] sm:$0xf]
    %v4728 = vld [vmem:[#allocation7 + $0x90] sm:$0xff]
    %v4729 = vld [vmem:[#allocation7 + $0x98] sm:$0xf]
    %v4730 = vld [vmem:[#allocation7 + $0x9c] sm:$0xff]
    %v4731 = vld [vmem:[#allocation7 + $0xa4] sm:$0xf]
    %v4732 = vld [vmem:[#allocation7 + $0xa8] sm:$0xff]
    %v4733 = vld [vmem:[#allocation7 + $0xb0] sm:$0xf]
    %v4734 = vld [vmem:[#allocation7 + $0xb4] sm:$0xff]
    %v4735 = vld [vmem:[#allocation7 + $0xbc] sm:$0xf]
    %v4736 = vld [vmem:[#allocation7 + $0xc0] sm:$0xff]
    %v4737 = vld [vmem:[#allocation7 + $0xc8] sm:$0xf]
    %v4738 = vld [vmem:[#allocation7 + $0xcc] sm:$0xff]
    %v4739 = vld [vmem:[#allocation7 + $0xd4] sm:$0xf]
    %v4740 = vld [vmem:[#allocation7 + $0xd8] sm:$0xff]
    %v4741 = vld [vmem:[#allocation7 + $0xe0] sm:$0xf]
    %v4742 = vld [vmem:[#allocation7 + $0xe4] sm:$0xff]
    %v4743 = vld [vmem:[#allocation7 + $0xec] sm:$0xf]
    %v4744 = vld [vmem:[#allocation7 + $0xf0] sm:$0xff]
    %v4745 = vld [vmem:[#allocation7 + $0xf8] sm:$0xf]
    %v4746 = vld [vmem:[#allocation7 + $0xfc] sm:$0xff]
    %v4747 = vld [vmem:[#allocation7 + $0x104] sm:$0xf]
    %v4748 = vld [vmem:[#allocation7 + $0x108] sm:$0xff]
    %v4749 = vld [vmem:[#allocation7 + $0x110] sm:$0xf]
    %v4750 = vld [vmem:[#allocation7 + $0x114] sm:$0xff]
    %v4751 = vld [vmem:[#allocation7 + $0x11c] sm:$0xf]
    %v4752 = vld [vmem:[#allocation7 + $0x120] sm:$0xff]
    %v4753 = vld [vmem:[#allocation7 + $0x128] sm:$0xf]
    %v4754 = vld [vmem:[#allocation7 + $0x12c] sm:$0xff]
    %v4755 = vld [vmem:[#allocation7 + $0x134] sm:$0xf]
    %v4756 = vld [vmem:[#allocation7 + $0x138] sm:$0xff]
    %v4757 = vld [vmem:[#allocation7 + $0x140] sm:$0xf]
    %v4758 = vld [vmem:[#allocation7 + $0x144] sm:$0xff]
    %v4759 = vld [vmem:[#allocation7 + $0x14c] sm:$0xf]
    %v4760 = vld [vmem:[#allocation7 + $0x150] sm:$0xff]
    %v4761 = vld [vmem:[#allocation7 + $0x158] sm:$0xf]
    %v4762 = vld [vmem:[#allocation7 + $0x15c] sm:$0xff]
    %v4763 = vld [vmem:[#allocation7 + $0x164] sm:$0xf]
    %v4764 = vld [vmem:[#allocation7 + $0x168] sm:$0xff]
    %v4765 = vld [vmem:[#allocation7 + $0x170] sm:$0xf]
    %v4766 = vld [vmem:[#allocation7 + $0x174] sm:$0xff]
    %v4767 = vld [vmem:[#allocation7 + $0x17c] sm:$0xf]
    %v4768 = vld [vmem:[#allocation7 + $0x180] sm:$0xff]
    %v4769 = vld [vmem:[#allocation7 + $0x188] sm:$0xf]
    %v4770 = vld [vmem:[#allocation7 + $0x18c] sm:$0xff]
    %v4771 = vld [vmem:[#allocation7 + $0x194] sm:$0xf]
    %v4772 = vld [vmem:[#allocation7 + $0x198] sm:$0xff]
    %v4773 = vld [vmem:[#allocation7 + $0x1a0] sm:$0xf]
    %v4774 = vld [vmem:[#allocation7 + $0x1a4] sm:$0xff]
    %v4775 = vld [vmem:[#allocation7 + $0x1ac] sm:$0xf]
    %v4776 = vld [vmem:[#allocation7 + $0x1b0] sm:$0xff]
    %v4777 = vld [vmem:[#allocation7 + $0x1b8] sm:$0xf]
    %v4778 = vld [vmem:[#allocation7 + $0x1bc] sm:$0xff]
    %v4779 = vld [vmem:[#allocation7 + $0x1c4] sm:$0xf]
    %v4780 = vld [vmem:[#allocation7 + $0x1c8] sm:$0xff]
    %v4781 = vld [vmem:[#allocation7 + $0x1d0] sm:$0xf]
    %v4782 = vld [vmem:[#allocation7 + $0x1d4] sm:$0xff]
    %v4783 = vld [vmem:[#allocation7 + $0x1dc] sm:$0xf]
    %v4784 = vld [vmem:[#allocation7 + $0x1e0] sm:$0xff]
    %v4785 = vld [vmem:[#allocation7 + $0x1e8] sm:$0xf]
    %v4786 = vld [vmem:[#allocation7 + $0x1ec] sm:$0xff]
    %v4787 = vld [vmem:[#allocation7 + $0x1f4] sm:$0xf]
    %v4788 = vld [vmem:[#allocation7 + $0x1f8] sm:$0xff]
    %v4789 = vld [vmem:[#allocation7 + $0x200] sm:$0xf]
    %v4790 = vld [vmem:[#allocation7 + $0x204] sm:$0xff]
    %v4791 = vld [vmem:[#allocation7 + $0x20c] sm:$0xf]
    %v4792 = vld [vmem:[#allocation7 + $0x210] sm:$0xff]
    %v4793 = vld [vmem:[#allocation7 + $0x218] sm:$0xf]
    %v4794 = vld [vmem:[#allocation7 + $0x21c] sm:$0xff]
    %v4795 = vld [vmem:[#allocation7 + $0x224] sm:$0xf]
    %v4796 = vld [vmem:[#allocation7 + $0x228] sm:$0xff]
    %v4797 = vld [vmem:[#allocation7 + $0x230] sm:$0xf]
    %v4798 = vld [vmem:[#allocation7 + $0x234] sm:$0xff]
    %v4799 = vld [vmem:[#allocation7 + $0x23c] sm:$0xf]
    %v4896 = vunpack.c.l.b16 %v4704
    %v4897 = vunpack.c.h.b16 %v4704
    %v4898 = vunpack.c.l.b16 %v4705
    %v4899 = vunpack.c.l.b16 %v4706
    %v4900 = vunpack.c.h.b16 %v4706
    %v4901 = vunpack.c.l.b16 %v4707
    %v4902 = vunpack.c.l.b16 %v4708
    %v4903 = vunpack.c.h.b16 %v4708
    %v4904 = vunpack.c.l.b16 %v4709
    %v4905 = vunpack.c.l.b16 %v4710
    %v4906 = vunpack.c.h.b16 %v4710
    %v4907 = vunpack.c.l.b16 %v4711
    %v4908 = vunpack.c.l.b16 %v4712
    %v4909 = vunpack.c.h.b16 %v4712
    %v4910 = vunpack.c.l.b16 %v4713
    %v4911 = vunpack.c.l.b16 %v4714
    %v4912 = vunpack.c.h.b16 %v4714
    %v4913 = vunpack.c.l.b16 %v4715
    %v4914 = vunpack.c.l.b16 %v4716
    %v4915 = vunpack.c.h.b16 %v4716
    %v4916 = vunpack.c.l.b16 %v4717
    %v4917 = vunpack.c.l.b16 %v4718
    %v4918 = vunpack.c.h.b16 %v4718
    %v4919 = vunpack.c.l.b16 %v4719
    %v4920 = vunpack.c.l.b16 %v4720
    %v4921 = vunpack.c.h.b16 %v4720
    %v4922 = vunpack.c.l.b16 %v4721
    %v4923 = vunpack.c.l.b16 %v4722
    %v4924 = vunpack.c.h.b16 %v4722
    %v4925 = vunpack.c.l.b16 %v4723
    %v4926 = vunpack.c.l.b16 %v4724
    %v4927 = vunpack.c.h.b16 %v4724
    %v4928 = vunpack.c.l.b16 %v4725
    %v4929 = vunpack.c.l.b16 %v4726
    %v4930 = vunpack.c.h.b16 %v4726
    %v4931 = vunpack.c.l.b16 %v4727
    %v4932 = vunpack.c.l.b16 %v4728
    %v4933 = vunpack.c.h.b16 %v4728
    %v4934 = vunpack.c.l.b16 %v4729
    %v4935 = vunpack.c.l.b16 %v4730
    %v4936 = vunpack.c.h.b16 %v4730
    %v4937 = vunpack.c.l.b16 %v4731
    %v4938 = vunpack.c.l.b16 %v4732
    %v4939 = vunpack.c.h.b16 %v4732
    %v4940 = vunpack.c.l.b16 %v4733
    %v4941 = vunpack.c.l.b16 %v4734
    %v4942 = vunpack.c.h.b16 %v4734
    %v4943 = vunpack.c.l.b16 %v4735
    %v4944 = vunpack.c.l.b16 %v4736
    %v4945 = vunpack.c.h.b16 %v4736
    %v4946 = vunpack.c.l.b16 %v4737
    %v4947 = vunpack.c.l.b16 %v4738
    %v4948 = vunpack.c.h.b16 %v4738
    %v4949 = vunpack.c.l.b16 %v4739
    %v4950 = vunpack.c.l.b16 %v4740
    %v4951 = vunpack.c.h.b16 %v4740
    %v4952 = vunpack.c.l.b16 %v4741
    %v4953 = vunpack.c.l.b16 %v4742
    %v4954 = vunpack.c.h.b16 %v4742
    %v4955 = vunpack.c.l.b16 %v4743
    %v4956 = vunpack.c.l.b16 %v4744
    %v4957 = vunpack.c.h.b16 %v4744
    %v4958 = vunpack.c.l.b16 %v4745
    %v4959 = vunpack.c.l.b16 %v4746
    %v4960 = vunpack.c.h.b16 %v4746
    %v4961 = vunpack.c.l.b16 %v4747
    %v4962 = vunpack.c.l.b16 %v4748
    %v4963 = vunpack.c.h.b16 %v4748
    %v4964 = vunpack.c.l.b16 %v4749
    %v4965 = vunpack.c.l.b16 %v4750
    %v4966 = vunpack.c.h.b16 %v4750
    %v4967 = vunpack.c.l.b16 %v4751
    %v4968 = vunpack.c.l.b16 %v4752
    %v4969 = vunpack.c.h.b16 %v4752
    %v4970 = vunpack.c.l.b16 %v4753
    %v4971 = vunpack.c.l.b16 %v4754
    %v4972 = vunpack.c.h.b16 %v4754
    %v4973 = vunpack.c.l.b16 %v4755
    %v4974 = vunpack.c.l.b16 %v4756
    %v4975 = vunpack.c.h.b16 %v4756
    %v4976 = vunpack.c.l.b16 %v4757
    %v4977 = vunpack.c.l.b16 %v4758
    %v4978 = vunpack.c.h.b16 %v4758
    %v4979 = vunpack.c.l.b16 %v4759
    %v4980 = vunpack.c.l.b16 %v4760
    %v4981 = vunpack.c.h.b16 %v4760
    %v4982 = vunpack.c.l.b16 %v4761
    %v4983 = vunpack.c.l.b16 %v4762
    %v4984 = vunpack.c.h.b16 %v4762
    %v4985 = vunpack.c.l.b16 %v4763
    %v4986 = vunpack.c.l.b16 %v4764
    %v4987 = vunpack.c.h.b16 %v4764
    %v4988 = vunpack.c.l.b16 %v4765
    %v4989 = vunpack.c.l.b16 %v4766
    %v4990 = vunpack.c.h.b16 %v4766
    %v4991 = vunpack.c.l.b16 %v4767
    %v4992 = vunpack.c.l.b16 %v4768
    %v4993 = vunpack.c.h.b16 %v4768
    %v4994 = vunpack.c.l.b16 %v4769
    %v4995 = vunpack.c.l.b16 %v4770
    %v4996 = vunpack.c.h.b16 %v4770
    %v4997 = vunpack.c.l.b16 %v4771
    %v4998 = vunpack.c.l.b16 %v4772
    %v4999 = vunpack.c.h.b16 %v4772
    %v5000 = vunpack.c.l.b16 %v4773
    %v5001 = vunpack.c.l.b16 %v4774
    %v5002 = vunpack.c.h.b16 %v4774
    %v5003 = vunpack.c.l.b16 %v4775
    %v5004 = vunpack.c.l.b16 %v4776
    %v5005 = vunpack.c.h.b16 %v4776
    %v5006 = vunpack.c.l.b16 %v4777
    %v5007 = vunpack.c.l.b16 %v4778
    %v5008 = vunpack.c.h.b16 %v4778
    %v5009 = vunpack.c.l.b16 %v4779
    %v5010 = vunpack.c.l.b16 %v4780
    %v5011 = vunpack.c.h.b16 %v4780
    %v5012 = vunpack.c.l.b16 %v4781
    %v5013 = vunpack.c.l.b16 %v4782
    %v5014 = vunpack.c.h.b16 %v4782
    %v5015 = vunpack.c.l.b16 %v4783
    %v5016 = vunpack.c.l.b16 %v4784
    %v5017 = vunpack.c.h.b16 %v4784
    %v5018 = vunpack.c.l.b16 %v4785
    %v5019 = vunpack.c.l.b16 %v4786
    %v5020 = vunpack.c.h.b16 %v4786
    %v5021 = vunpack.c.l.b16 %v4787
    %v5022 = vunpack.c.l.b16 %v4788
    %v5023 = vunpack.c.h.b16 %v4788
    %v5024 = vunpack.c.l.b16 %v4789
    %v5025 = vunpack.c.l.b16 %v4790
    %v5026 = vunpack.c.h.b16 %v4790
    %v5027 = vunpack.c.l.b16 %v4791
    %v5028 = vunpack.c.l.b16 %v4792
    %v5029 = vunpack.c.h.b16 %v4792
    %v5030 = vunpack.c.l.b16 %v4793
    %v5031 = vunpack.c.l.b16 %v4794
    %v5032 = vunpack.c.h.b16 %v4794
    %v5033 = vunpack.c.l.b16 %v4795
    %v5034 = vunpack.c.l.b16 %v4796
    %v5035 = vunpack.c.h.b16 %v4796
    %v5036 = vunpack.c.l.b16 %v4797
    %v5037 = vunpack.c.l.b16 %v4798
    %v5038 = vunpack.c.h.b16 %v4798
    %v5039 = vunpack.c.l.b16 %v4799
    %v5040 = vpack.c.b16 %v4899, %v4896
    %v5041 = vpack.c.b16 %v4900, %v4897
    %v5042 = vpack.c.b16 %v4901, %v4898
    %v5043 = vpack.c.b16 %v4905, %v4902
    %v5044 = vpack.c.b16 %v4906, %v4903
    %v5045 = vpack.c.b16 %v4907, %v4904
    %v5046 = vpack.c.b16 %v4911, %v4908
    %v5047 = vpack.c.b16 %v4912, %v4909
    %v5048 = vpack.c.b16 %v4913, %v4910
    %v5049 = vpack.c.b16 %v4917, %v4914
    %v5050 = vpack.c.b16 %v4918, %v4915
    %v5051 = vpack.c.b16 %v4919, %v4916
    %v5052 = vpack.c.b16 %v4923, %v4920
    %v5053 = vpack.c.b16 %v4924, %v4921
    %v5054 = vpack.c.b16 %v4925, %v4922
    %v5055 = vpack.c.b16 %v4929, %v4926
    %v5056 = vpack.c.b16 %v4930, %v4927
    %v5057 = vpack.c.b16 %v4931, %v4928
    %v5058 = vpack.c.b16 %v4935, %v4932
    %v5059 = vpack.c.b16 %v4936, %v4933
    %v5060 = vpack.c.b16 %v4937, %v4934
    %v5061 = vpack.c.b16 %v4941, %v4938
    %v5062 = vpack.c.b16 %v4942, %v4939
    %v5063 = vpack.c.b16 %v4943, %v4940
    %v5064 = vpack.c.b16 %v4947, %v4944
    %v5065 = vpack.c.b16 %v4948, %v4945
    %v5066 = vpack.c.b16 %v4949, %v4946
    %v5067 = vpack.c.b16 %v4953, %v4950
    %v5068 = vpack.c.b16 %v4954, %v4951
    %v5069 = vpack.c.b16 %v4955, %v4952
    %v5070 = vpack.c.b16 %v4959, %v4956
    %v5071 = vpack.c.b16 %v4960, %v4957
    %v5072 = vpack.c.b16 %v4961, %v4958
    %v5073 = vpack.c.b16 %v4965, %v4962
    %v5074 = vpack.c.b16 %v4966, %v4963
    %v5075 = vpack.c.b16 %v4967, %v4964
    %v5076 = vpack.c.b16 %v4971, %v4968
    %v5077 = vpack.c.b16 %v4972, %v4969
    %v5078 = vpack.c.b16 %v4973, %v4970
    %v5079 = vpack.c.b16 %v4977, %v4974
    %v5080 = vpack.c.b16 %v4978, %v4975
    %v5081 = vpack.c.b16 %v4979, %v4976
    %v5082 = vpack.c.b16 %v4983, %v4980
    %v5083 = vpack.c.b16 %v4984, %v4981
    %v5084 = vpack.c.b16 %v4985, %v4982
    %v5085 = vpack.c.b16 %v4989, %v4986
    %v5086 = vpack.c.b16 %v4990, %v4987
    %v5087 = vpack.c.b16 %v4991, %v4988
    %v5088 = vpack.c.b16 %v4995, %v4992
    %v5089 = vpack.c.b16 %v4996, %v4993
    %v5090 = vpack.c.b16 %v4997, %v4994
    %v5091 = vpack.c.b16 %v5001, %v4998
    %v5092 = vpack.c.b16 %v5002, %v4999
    %v5093 = vpack.c.b16 %v5003, %v5000
    %v5094 = vpack.c.b16 %v5007, %v5004
    %v5095 = vpack.c.b16 %v5008, %v5005
    %v5096 = vpack.c.b16 %v5009, %v5006
    %v5097 = vpack.c.b16 %v5013, %v5010
    %v5098 = vpack.c.b16 %v5014, %v5011
    %v5099 = vpack.c.b16 %v5015, %v5012
    %v5100 = vpack.c.b16 %v5019, %v5016
    %v5101 = vpack.c.b16 %v5020, %v5017
    %v5102 = vpack.c.b16 %v5021, %v5018
    %v5103 = vpack.c.b16 %v5025, %v5022
    %v5104 = vpack.c.b16 %v5026, %v5023
    %v5105 = vpack.c.b16 %v5027, %v5024
    %v5106 = vpack.c.b16 %v5031, %v5028
    %v5107 = vpack.c.b16 %v5032, %v5029
    %v5108 = vpack.c.b16 %v5033, %v5030
    %v5109 = vpack.c.b16 %v5037, %v5034
    %v5110 = vpack.c.b16 %v5038, %v5035
    %v5111 = vpack.c.b16 %v5039, %v5036
    %5184 = vmatprep.subr.bf16.mxu0 %v5041
    %5185 = vmatpush1.bf16.msra.mxu0 %v5040
    %5186 = vmatprep.subr.bf16.mxu0 %v5044
    %5187 = vmatpush1.bf16.msra.mxu0 %v5043
    %5188 = vmatprep.subr.bf16.mxu0 %v5047
    %5189 = vmatpush1.bf16.msra.mxu0 %v5046
    %5190 = vmatprep.subr.bf16.mxu0 %v5050
    %5191 = vmatpush1.bf16.msra.mxu0 %v5049
    %5192 = vmatprep.subr.bf16.mxu0 %v5053
    %5193 = vmatpush1.bf16.msra.mxu0 %v5052
    %5194 = vmatprep.subr.bf16.mxu0 %v5056
    %5195 = vmatpush1.bf16.msra.mxu0 %v5055
    %5196 = vmatprep.subr.bf16.mxu0 %v5059
    %5197 = vmatpush1.bf16.msra.mxu0 %v5058
    %5198 = vmatprep.subr.bf16.mxu0 %v5062
    %5199 = vmatpush1.bf16.msra.mxu0 %v5061
    %5200 = vmatprep.subr.bf16.mxu0 %v5065
    %5201 = vmatpush1.bf16.msra.mxu0 %v5064
    %5202 = vmatprep.subr.bf16.mxu0 %v5068
    %5203 = vmatpush1.bf16.msra.mxu0 %v5067
    %5204 = vmatprep.subr.bf16.mxu0 %v5071
    %5205 = vmatpush1.bf16.msra.mxu0 %v5070
    %5206 = vmatprep.subr.bf16.mxu0 %v5074
    %5207 = vmatpush1.bf16.msra.mxu0 %v5073
    %5208 = vmatprep.subr.bf16.mxu0 %v5077
    %5209 = vmatpush1.bf16.msra.mxu0 %v5076
    %5210 = vmatprep.subr.bf16.mxu0 %v5080
    %5211 = vmatpush1.bf16.msra.mxu0 %v5079
    %5212 = vmatprep.subr.bf16.mxu0 %v5083
    %5213 = vmatpush1.bf16.msra.mxu0 %v5082
    %5214 = vmatprep.subr.bf16.mxu0 %v5086
    %5215 = vmatpush1.bf16.msra.mxu0 %v5085
    %5216 = vmatprep.mubr.bf16.mxu0 %v4702
    %5217 = vmatmul.mubr.bf16.gmra.mrb[0].mxu0 %v4701
    %v5218 = vpop.f32.mrb[0].mxu0
    %v5219 = vadd.f32 0.0, %v5218
    %v5220 = vpop.f32.mrb[0].mxu0
    %v5221 = vadd.f32 0.0, %v5220
    %v5222 = vpop.f32.mrb[0].mxu0
    %v5223 = vadd.f32 0.0, %v5222
    %v5224 = vpop.f32.mrb[0].mxu0
    %v5225 = vadd.f32 0.0, %v5224
    %5226 = vdwg.mxu0
    %5227 = vmatprep.subr.bf16.mxu0 %v5089
    %5228 = vmatpush1.bf16.msra.mxu0 %v5088
    %5229 = vmatprep.subr.bf16.mxu0 %v5092
    %5230 = vmatpush1.bf16.msra.mxu0 %v5091
    %5231 = vmatprep.subr.bf16.mxu0 %v5095
    %5232 = vmatpush1.bf16.msra.mxu0 %v5094
    %5233 = vmatprep.subr.bf16.mxu0 %v5098
    %5234 = vmatpush1.bf16.msra.mxu0 %v5097
    %5235 = vmatprep.subr.bf16.mxu0 %v5101
    %5236 = vmatpush1.bf16.msra.mxu0 %v5100
    %5237 = vmatprep.subr.bf16.mxu0 %v5104
    %5238 = vmatpush1.bf16.msra.mxu0 %v5103
    %5239 = vmatprep.subr.bf16.mxu0 %v5107
    %5240 = vmatpush1.bf16.msra.mxu0 %v5106
    %5241 = vmatprep.subr.bf16.mxu0 %v5110
    %5242 = vmatpush1.bf16.msra.mxu0 %v5109
    %5243 = vmatprep.subr.bf16.mxu0 0
    %5244 = vmatpush1.bf16.msra.mxu0 0
    %5245 = vmatprep.subr.bf16.mxu0 0
    %5246 = vmatpush1.bf16.msra.mxu0 0
    %5247 = vmatprep.subr.bf16.mxu0 0
    %5248 = vmatpush1.bf16.msra.mxu0 0
    %5249 = vmatprep.subr.bf16.mxu0 0
    %5250 = vmatpush1.bf16.msra.mxu0 0
    %5251 = vmatprep.subr.bf16.mxu0 0
    %5252 = vmatpush1.bf16.msra.mxu0 0
    %5253 = vmatprep.subr.bf16.mxu0 0
    %5254 = vmatpush1.bf16.msra.mxu0 0
    %5255 = vmatprep.subr.bf16.mxu0 0
    %5256 = vmatpush1.bf16.msra.mxu0 0
    %5257 = vmatprep.subr.bf16.mxu0 0
    %5258 = vmatpush1.bf16.msra.mxu0 0
    %5259 = vmatprep.mubr.bf16.mxu0 0
    %5260 = vmatmul.mubr.bf16.gmra.mrb[0].mxu0 %v4703
    %v5261 = vpop.f32.mrb[0].mxu0
    %v5262 = vadd.f32 %v5219, %v5261
    %v5263 = vpop.f32.mrb[0].mxu0
    %v5264 = vadd.f32 %v5221, %v5263
    %v5265 = vpop.f32.mrb[0].mxu0
    %v5266 = vadd.f32 %v5223, %v5265
    %v5267 = vpop.f32.mrb[0].mxu0
    %v5268 = vadd.f32 %v5225, %v5267
    %5269 = vdwg.mxu0
    %5270 = vmatprep.subr.bf16.mxu0 0
    %5271 = vmatpush1.bf16.msra.mxu0 %v5042
    %5272 = vmatprep.subr.bf16.mxu0 0
    %5273 = vmatpush1.bf16.msra.mxu0 %v5045
    %5274 = vmatprep.subr.bf16.mxu0 0
    %5275 = vmatpush1.bf16.msra.mxu0 %v5048
    %5276 = vmatprep.subr.bf16.mxu0 0
    %5277 = vmatpush1.bf16.msra.mxu0 %v5051
    %5278 = vmatprep.subr.bf16.mxu0 0
    %5279 = vmatpush1.bf16.msra.mxu0 %v5054
    %5280 = vmatprep.subr.bf16.mxu0 0
    %5281 = vmatpush1.bf16.msra.mxu0 %v5057
    %5282 = vmatprep.subr.bf16.mxu0 0
    %5283 = vmatpush1.bf16.msra.mxu0 %v5060
    %5284 = vmatprep.subr.bf16.mxu0 0
    %5285 = vmatpush1.bf16.msra.mxu0 %v5063
    %5286 = vmatprep.subr.bf16.mxu0 0
    %5287 = vmatpush1.bf16.msra.mxu0 %v5066
    %5288 = vmatprep.subr.bf16.mxu0 0
    %5289 = vmatpush1.bf16.msra.mxu0 %v5069
    %5290 = vmatprep.subr.bf16.mxu0 0
    %5291 = vmatpush1.bf16.msra.mxu0 %v5072
    %5292 = vmatprep.subr.bf16.mxu0 0
    %5293 = vmatpush1.bf16.msra.mxu0 %v5075
    %5294 = vmatprep.subr.bf16.mxu0 0
    %5295 = vmatpush1.bf16.msra.mxu0 %v5078
    %5296 = vmatprep.subr.bf16.mxu0 0
    %5297 = vmatpush1.bf16.msra.mxu0 %v5081
    %5298 = vmatprep.subr.bf16.mxu0 0
    %5299 = vmatpush1.bf16.msra.mxu0 %v5084
    %5300 = vmatprep.subr.bf16.mxu0 0
    %5301 = vmatpush1.bf16.msra.mxu0 %v5087
    %5302 = vmatprep.mubr.bf16.mxu0 %v4702
    %5303 = vmatmul.mubr.bf16.gmra.mrb[0].mxu0 %v4701
    %v5304 = vpop.f32.mrb[0].mxu0
    %v5305 = vadd.f32 0.0, %v5304
    %v5306 = vpop.f32.mrb[0].mxu0
    %v5307 = vpop.f32.mrb[0].mxu0
    %v5308 = vadd.f32 0.0, %v5307
    %v5309 = vpop.f32.mrb[0].mxu0
    %5310 = vdwg.mxu0
    %5311 = vmatprep.subr.bf16.mxu0 0
    %5312 = vmatpush1.bf16.msra.mxu0 %v5090
    %5313 = vmatprep.subr.bf16.mxu0 0
    %5314 = vmatpush1.bf16.msra.mxu0 %v5093
    %5315 = vmatprep.subr.bf16.mxu0 0
    %5316 = vmatpush1.bf16.msra.mxu0 %v5096
    %5317 = vmatprep.subr.bf16.mxu0 0
    %5318 = vmatpush1.bf16.msra.mxu0 %v5099
    %5319 = vmatprep.subr.bf16.mxu0 0
    %5320 = vmatpush1.bf16.msra.mxu0 %v5102
    %5321 = vmatprep.subr.bf16.mxu0 0
    %5322 = vmatpush1.bf16.msra.mxu0 %v5105
    %5323 = vmatprep.subr.bf16.mxu0 0
    %5324 = vmatpush1.bf16.msra.mxu0 %v5108
    %5325 = vmatprep.subr.bf16.mxu0 0
    %5326 = vmatpush1.bf16.msra.mxu0 %v5111
    %5327 = vmatprep.subr.bf16.mxu0 0
    %5328 = vmatpush1.bf16.msra.mxu0 0
    %5329 = vmatprep.subr.bf16.mxu0 0
    %5330 = vmatpush1.bf16.msra.mxu0 0
    %5331 = vmatprep.subr.bf16.mxu0 0
    %5332 = vmatpush1.bf16.msra.mxu0 0
    %5333 = vmatprep.subr.bf16.mxu0 0
    %5334 = vmatpush1.bf16.msra.mxu0 0
    %5335 = vmatprep.subr.bf16.mxu0 0
    %5336 = vmatpush1.bf16.msra.mxu0 0
    %5337 = vmatprep.subr.bf16.mxu0 0
    %5338 = vmatpush1.bf16.msra.mxu0 0
    %5339 = vmatprep.subr.bf16.mxu0 0
    %5340 = vmatpush1.bf16.msra.mxu0 0
    %5341 = vmatprep.subr.bf16.mxu0 0
    %5342 = vmatpush1.bf16.msra.mxu0 0
    %5343 = vmatprep.mubr.bf16.mxu0 0
    %5344 = vmatmul.mubr.bf16.gmra.mrb[0].mxu0 %v4703
    %v5345 = vpop.f32.mrb[0].mxu0
    %v5346 = vadd.f32 %v5305, %v5345
    %v5347 = vpop.f32.mrb[0].mxu0
    %v5348 = vpop.f32.mrb[0].mxu0
    %v5349 = vadd.f32 %v5308, %v5348
    %v5350 = vpop.f32.mrb[0].mxu0
    %5351 = vdwg.mxu0
    %v5352 = vadd.f32 %v114, %v5262
    %v5353 = vadd.f32 %v115, %v5264
    %v5354 = vadd.f32 %v116, %v5346
    %v5355 = vadd.f32 %v117, %v5266
    %v5356 = vadd.f32 %v118, %v5268
    %v5357 = vadd.f32 %v119, %v5349
    %v5358 = vld [vmem:[%s4] sm:$0x7]
    %v5360 = vlaneseq
    %v5361 = vshrl.u32 %v5360, 7
    %v5362 = vsub.s32 0, %v5361
    %v5363 = vrot.slane %v5358, %v5362
    %v5364 = vlaneseq
    %v5365 = vshrl.u32 %v5364, 7
    %v5366 = vsub.s32 1, %v5365
    %v5367 = vrot.slane %v5358, %v5366
    %v5368 = vlaneseq
    %v5369 = vshrl.u32 %v5368, 7
    %v5370 = vsub.s32 2, %v5369
    %v5371 = vrot.slane %v5358, %v5370
    %v5375 = vadd.f32 %v5352, %v5363
    %v5376 = vadd.f32 %v5353, %v5367
    %v5377 = vadd.f32 %v5354, %v5371
    %v5378 = vadd.f32 %v5355, %v5363
    %v5379 = vadd.f32 %v5356, %v5367
    %v5380 = vadd.f32 %v5357, %v5371
    %v5381 = vld [vmem:[%s9] sm:$0x7]
    %v5382 = vld [vmem:[%s10] sm:$0x7]
    %v5383 = vadd.f32 %v5375, %v5376
    %v5384 = vadd.f32 %v5383, %v5377
    %5385 = vadd.xlane.f32.xlu0 %v5384
    %v5386 = vpop.xlane.xlu0 %5385
    %v5387 = vadd.f32 %v5378, %v5379
    %v5388 = vadd.f32 %v5387, %v5380
    %5389 = vadd.xlane.f32.xlu0 %v5388
    %v5390 = vpop.xlane.xlu0 %5389
    %v5391 = vrcp.pop 384.0
    %v5392 = vmul.f32 %v5386, %v5391
    %v5393 = vmul.f32 %v5390, %v5391
    %v5394 = vsub.f32 %v5375, %v5392
    %v5395 = vsub.f32 %v5376, %v5392
    %v5396 = vsub.f32 %v5377, %v5392
    %v5397 = vsub.f32 %v5378, %v5393
    %v5398 = vsub.f32 %v5379, %v5393
    %v5399 = vsub.f32 %v5380, %v5393
    %v5400 = vmul.f32 %v5394, %v5394
    %v5401 = vmul.f32 %v5395, %v5395
    %v5402 = vmul.f32 %v5396, %v5396
    %v5403 = vmul.f32 %v5397, %v5397
    %v5404 = vmul.f32 %v5398, %v5398
    %v5405 = vmul.f32 %v5399, %v5399
    %v5406 = vadd.f32 %v5400, %v5401
    %v5407 = vadd.f32 %v5406, %v5402
    %5408 = vadd.xlane.f32.xlu0 %v5407
    %v5409 = vpop.xlane.xlu0 %5408
    %v5410 = vadd.f32 %v5403, %v5404
    %v5411 = vadd.f32 %v5410, %v5405
    %5412 = vadd.xlane.f32.xlu0 %v5411
    %v5413 = vpop.xlane.xlu0 %5412
    %v5414 = vmul.f32 %v5409, %v5391
    %v5415 = vmul.f32 %v5413, %v5391
    %v5416 = vadd.f32 %v5414, 1e-05
    %v5417 = vadd.f32 %v5415, 1e-05
    %v5418 = vrsqrt.pop %v5416
    %v5419 = vrsqrt.pop %v5417
    %v5420 = vmul.f32 %v5394, %v5418
    %v5421 = vmul.f32 %v5395, %v5418
    %v5422 = vmul.f32 %v5396, %v5418
    %v5423 = vmul.f32 %v5397, %v5419
    %v5424 = vmul.f32 %v5398, %v5419
    %v5425 = vmul.f32 %v5399, %v5419
    %v5427 = vlaneseq
    %v5428 = vshrl.u32 %v5427, 7
    %v5429 = vsub.s32 0, %v5428
    %v5430 = vrot.slane %v5381, %v5429
    %v5431 = vlaneseq
    %v5432 = vshrl.u32 %v5431, 7
    %v5433 = vsub.s32 1, %v5432
    %v5434 = vrot.slane %v5381, %v5433
    %v5435 = vlaneseq
    %v5436 = vshrl.u32 %v5435, 7
    %v5437 = vsub.s32 2, %v5436
    %v5438 = vrot.slane %v5381, %v5437
    %v5442 = vmul.f32 %v5420, %v5430
    %v5443 = vmul.f32 %v5421, %v5434
    %v5444 = vmul.f32 %v5422, %v5438
    %v5445 = vmul.f32 %v5423, %v5430
    %v5446 = vmul.f32 %v5424, %v5434
    %v5447 = vmul.f32 %v5425, %v5438
    %v5449 = vlaneseq
    %v5450 = vshrl.u32 %v5449, 7
    %v5451 = vsub.s32 0, %v5450
    %v5452 = vrot.slane %v5382, %v5451
    %v5453 = vlaneseq
    %v5454 = vshrl.u32 %v5453, 7
    %v5455 = vsub.s32 1, %v5454
    %v5456 = vrot.slane %v5382, %v5455
    %v5457 = vlaneseq
    %v5458 = vshrl.u32 %v5457, 7
    %v5459 = vsub.s32 2, %v5458
    %v5460 = vrot.slane %v5382, %v5459
    %v5464 = vadd.f32 %v5442, %v5452
    %v5465 = vadd.f32 %v5443, %v5456
    %v5466 = vadd.f32 %v5444, %v5460
    %v5467 = vadd.f32 %v5445, %v5452
    %v5468 = vadd.f32 %v5446, %v5456
    %v5469 = vadd.f32 %v5447, %v5460
    %v5470 = vpack.c.bf16 %v5467, %v5464
    %v5471 = vpack.c.bf16 %v5468, %v5465
    %v5472 = vpack.c.bf16 %v5469, %v5466
    %v5473 = vld [vmem:[#allocation8] sm:$0xff]
    %v5474 = vld [vmem:[#allocation8 + $0x8] sm:$0xff]
    %v5475 = vld [vmem:[#allocation8 + $0x10] sm:$0xff]
    %v5476 = vld [vmem:[#allocation8 + $0x18] sm:$0xff]
    %v5477 = vld [vmem:[#allocation8 + $0x20] sm:$0xff]
    %v5478 = vld [vmem:[#allocation8 + $0x28] sm:$0xff]
    %v5479 = vld [vmem:[#allocation8 + $0x30] sm:$0xff]
    %v5480 = vld [vmem:[#allocation8 + $0x38] sm:$0xff]
    %v5481 = vld [vmem:[#allocation8 + $0x40] sm:$0xff]
    %v5482 = vld [vmem:[#allocation8 + $0x48] sm:$0xff]
    %v5483 = vld [vmem:[#allocation8 + $0x50] sm:$0xff]
    %v5484 = vld [vmem:[#allocation8 + $0x58] sm:$0xff]
    %v5485 = vld [vmem:[#allocation8 + $0x60] sm:$0xff]
    %v5486 = vld [vmem:[#allocation8 + $0x68] sm:$0xff]
    %v5487 = vld [vmem:[#allocation8 + $0x70] sm:$0xff]
    %v5488 = vld [vmem:[#allocation8 + $0x78] sm:$0xff]
    %v5489 = vld [vmem:[#allocation8 + $0x80] sm:$0xff]
    %v5490 = vld [vmem:[#allocation8 + $0x88] sm:$0xff]
    %v5491 = vld [vmem:[#allocation8 + $0x90] sm:$0xff]
    %v5492 = vld [vmem:[#allocation8 + $0x98] sm:$0xff]
    %v5493 = vld [vmem:[#allocation8 + $0xa0] sm:$0xff]
    %v5494 = vld [vmem:[#allocation8 + $0xa8] sm:$0xff]
    %v5495 = vld [vmem:[#allocation8 + $0xb0] sm:$0xff]
    %v5496 = vld [vmem:[#allocation8 + $0xb8] sm:$0xff]
    %v5497 = vld [vmem:[#allocation8 + $0xc0] sm:$0xff]
    %v5498 = vld [vmem:[#allocation8 + $0xc8] sm:$0xff]
    %v5499 = vld [vmem:[#allocation8 + $0xd0] sm:$0xff]
    %v5500 = vld [vmem:[#allocation8 + $0xd8] sm:$0xff]
    %v5501 = vld [vmem:[#allocation8 + $0xe0] sm:$0xff]
    %v5502 = vld [vmem:[#allocation8 + $0xe8] sm:$0xff]
    %v5503 = vld [vmem:[#allocation8 + $0xf0] sm:$0xff]
    %v5504 = vld [vmem:[#allocation8 + $0xf8] sm:$0xff]
    %v5505 = vld [vmem:[#allocation8 + $0x100] sm:$0xff]
    %v5506 = vld [vmem:[#allocation8 + $0x108] sm:$0xff]
    %v5507 = vld [vmem:[#allocation8 + $0x110] sm:$0xff]
    %v5508 = vld [vmem:[#allocation8 + $0x118] sm:$0xff]
    %v5509 = vld [vmem:[#allocation8 + $0x120] sm:$0xff]
    %v5510 = vld [vmem:[#allocation8 + $0x128] sm:$0xff]
    %v5511 = vld [vmem:[#allocation8 + $0x130] sm:$0xff]
    %v5512 = vld [vmem:[#allocation8 + $0x138] sm:$0xff]
    %v5513 = vld [vmem:[#allocation8 + $0x140] sm:$0xff]
    %v5514 = vld [vmem:[#allocation8 + $0x148] sm:$0xff]
    %v5515 = vld [vmem:[#allocation8 + $0x150] sm:$0xff]
    %v5516 = vld [vmem:[#allocation8 + $0x158] sm:$0xff]
    %v5517 = vld [vmem:[#allocation8 + $0x160] sm:$0xff]
    %v5518 = vld [vmem:[#allocation8 + $0x168] sm:$0xff]
    %v5519 = vld [vmem:[#allocation8 + $0x170] sm:$0xff]
    %v5520 = vld [vmem:[#allocation8 + $0x178] sm:$0xff]
    %v5521 = vld [vmem:[#allocation8 + $0x180] sm:$0xff]
    %v5522 = vld [vmem:[#allocation8 + $0x188] sm:$0xff]
    %v5523 = vld [vmem:[#allocation8 + $0x190] sm:$0xff]
    %v5524 = vld [vmem:[#allocation8 + $0x198] sm:$0xff]
    %v5525 = vld [vmem:[#allocation8 + $0x1a0] sm:$0xff]
    %v5526 = vld [vmem:[#allocation8 + $0x1a8] sm:$0xff]
    %v5527 = vld [vmem:[#allocation8 + $0x1b0] sm:$0xff]
    %v5528 = vld [vmem:[#allocation8 + $0x1b8] sm:$0xff]
    %v5529 = vld [vmem:[#allocation8 + $0x1c0] sm:$0xff]
    %v5530 = vld [vmem:[#allocation8 + $0x1c8] sm:$0xff]
    %v5531 = vld [vmem:[#allocation8 + $0x1d0] sm:$0xff]
    %v5532 = vld [vmem:[#allocation8 + $0x1d8] sm:$0xff]
    %v5533 = vld [vmem:[#allocation8 + $0x1e0] sm:$0xff]
    %v5534 = vld [vmem:[#allocation8 + $0x1e8] sm:$0xff]
    %v5535 = vld [vmem:[#allocation8 + $0x1f0] sm:$0xff]
    %v5536 = vld [vmem:[#allocation8 + $0x1f8] sm:$0xff]
    %v5537 = vld [vmem:[#allocation8 + $0x200] sm:$0xff]
    %v5538 = vld [vmem:[#allocation8 + $0x208] sm:$0xff]
    %v5539 = vld [vmem:[#allocation8 + $0x210] sm:$0xff]
    %v5540 = vld [vmem:[#allocation8 + $0x218] sm:$0xff]
    %v5541 = vld [vmem:[#allocation8 + $0x220] sm:$0xff]
    %v5542 = vld [vmem:[#allocation8 + $0x228] sm:$0xff]
    %v5543 = vld [vmem:[#allocation8 + $0x230] sm:$0xff]
    %v5544 = vld [vmem:[#allocation8 + $0x238] sm:$0xff]
    %v5545 = vld [vmem:[#allocation8 + $0x240] sm:$0xff]
    %v5546 = vld [vmem:[#allocation8 + $0x248] sm:$0xff]
    %v5547 = vld [vmem:[#allocation8 + $0x250] sm:$0xff]
    %v5548 = vld [vmem:[#allocation8 + $0x258] sm:$0xff]
    %v5549 = vld [vmem:[#allocation8 + $0x260] sm:$0xff]
    %v5550 = vld [vmem:[#allocation8 + $0x268] sm:$0xff]
    %v5551 = vld [vmem:[#allocation8 + $0x270] sm:$0xff]
    %v5552 = vld [vmem:[#allocation8 + $0x278] sm:$0xff]
    %v5553 = vld [vmem:[#allocation8 + $0x280] sm:$0xff]
    %v5554 = vld [vmem:[#allocation8 + $0x288] sm:$0xff]
    %v5555 = vld [vmem:[#allocation8 + $0x290] sm:$0xff]
    %v5556 = vld [vmem:[#allocation8 + $0x298] sm:$0xff]
    %v5557 = vld [vmem:[#allocation8 + $0x2a0] sm:$0xff]
    %v5558 = vld [vmem:[#allocation8 + $0x2a8] sm:$0xff]
    %v5559 = vld [vmem:[#allocation8 + $0x2b0] sm:$0xff]
    %v5560 = vld [vmem:[#allocation8 + $0x2b8] sm:$0xff]
    %v5561 = vld [vmem:[#allocation8 + $0x2c0] sm:$0xff]
    %v5562 = vld [vmem:[#allocation8 + $0x2c8] sm:$0xff]
    %v5563 = vld [vmem:[#allocation8 + $0x2d0] sm:$0xff]
    %v5564 = vld [vmem:[#allocation8 + $0x2d8] sm:$0xff]
    %v5565 = vld [vmem:[#allocation8 + $0x2e0] sm:$0xff]
    %v5566 = vld [vmem:[#allocation8 + $0x2e8] sm:$0xff]
    %v5567 = vld [vmem:[#allocation8 + $0x2f0] sm:$0xff]
    %v5568 = vld [vmem:[#allocation8 + $0x2f8] sm:$0xff]
    %v5569 = vld [vmem:[#allocation8 + $0x300] sm:$0xff]
    %v5570 = vld [vmem:[#allocation8 + $0x308] sm:$0xff]
    %v5571 = vld [vmem:[#allocation8 + $0x310] sm:$0xff]
    %v5572 = vld [vmem:[#allocation8 + $0x318] sm:$0xff]
    %v5573 = vld [vmem:[#allocation8 + $0x320] sm:$0xff]
    %v5574 = vld [vmem:[#allocation8 + $0x328] sm:$0xff]
    %v5575 = vld [vmem:[#allocation8 + $0x330] sm:$0xff]
    %v5576 = vld [vmem:[#allocation8 + $0x338] sm:$0xff]
    %v5577 = vld [vmem:[#allocation8 + $0x340] sm:$0xff]
    %v5578 = vld [vmem:[#allocation8 + $0x348] sm:$0xff]
    %v5579 = vld [vmem:[#allocation8 + $0x350] sm:$0xff]
    %v5580 = vld [vmem:[#allocation8 + $0x358] sm:$0xff]
    %v5581 = vld [vmem:[#allocation8 + $0x360] sm:$0xff]
    %v5582 = vld [vmem:[#allocation8 + $0x368] sm:$0xff]
    %v5583 = vld [vmem:[#allocation8 + $0x370] sm:$0xff]
    %v5584 = vld [vmem:[#allocation8 + $0x378] sm:$0xff]
    %v5585 = vld [vmem:[#allocation8 + $0x380] sm:$0xff]
    %v5586 = vld [vmem:[#allocation8 + $0x388] sm:$0xff]
    %v5587 = vld [vmem:[#allocation8 + $0x390] sm:$0xff]
    %v5588 = vld [vmem:[#allocation8 + $0x398] sm:$0xff]
    %v5589 = vld [vmem:[#allocation8 + $0x3a0] sm:$0xff]
    %v5590 = vld [vmem:[#allocation8 + $0x3a8] sm:$0xff]
    %v5591 = vld [vmem:[#allocation8 + $0x3b0] sm:$0xff]
    %v5592 = vld [vmem:[#allocation8 + $0x3b8] sm:$0xff]
    %v5593 = vld [vmem:[#allocation8 + $0x3c0] sm:$0xff]
    %v5594 = vld [vmem:[#allocation8 + $0x3c8] sm:$0xff]
    %v5595 = vld [vmem:[#allocation8 + $0x3d0] sm:$0xff]
    %v5596 = vld [vmem:[#allocation8 + $0x3d8] sm:$0xff]
    %v5597 = vld [vmem:[#allocation8 + $0x3e0] sm:$0xff]
    %v5598 = vld [vmem:[#allocation8 + $0x3e8] sm:$0xff]
    %v5599 = vld [vmem:[#allocation8 + $0x3f0] sm:$0xff]
    %v5600 = vld [vmem:[#allocation8 + $0x3f8] sm:$0xff]
    %v5601 = vld [vmem:[#allocation8 + $0x400] sm:$0xff]
    %v5602 = vld [vmem:[#allocation8 + $0x408] sm:$0xff]
    %v5603 = vld [vmem:[#allocation8 + $0x410] sm:$0xff]
    %v5604 = vld [vmem:[#allocation8 + $0x418] sm:$0xff]
    %v5605 = vld [vmem:[#allocation8 + $0x420] sm:$0xff]
    %v5606 = vld [vmem:[#allocation8 + $0x428] sm:$0xff]
    %v5607 = vld [vmem:[#allocation8 + $0x430] sm:$0xff]
    %v5608 = vld [vmem:[#allocation8 + $0x438] sm:$0xff]
    %v5609 = vld [vmem:[#allocation8 + $0x440] sm:$0xff]
    %v5610 = vld [vmem:[#allocation8 + $0x448] sm:$0xff]
    %v5611 = vld [vmem:[#allocation8 + $0x450] sm:$0xff]
    %v5612 = vld [vmem:[#allocation8 + $0x458] sm:$0xff]
    %v5613 = vld [vmem:[#allocation8 + $0x460] sm:$0xff]
    %v5614 = vld [vmem:[#allocation8 + $0x468] sm:$0xff]
    %v5615 = vld [vmem:[#allocation8 + $0x470] sm:$0xff]
    %v5616 = vld [vmem:[#allocation8 + $0x478] sm:$0xff]
    %v5617 = vld [vmem:[#allocation8 + $0x480] sm:$0xff]
    %v5618 = vld [vmem:[#allocation8 + $0x488] sm:$0xff]
    %v5619 = vld [vmem:[#allocation8 + $0x490] sm:$0xff]
    %v5620 = vld [vmem:[#allocation8 + $0x498] sm:$0xff]
    %v5621 = vld [vmem:[#allocation8 + $0x4a0] sm:$0xff]
    %v5622 = vld [vmem:[#allocation8 + $0x4a8] sm:$0xff]
    %v5623 = vld [vmem:[#allocation8 + $0x4b0] sm:$0xff]
    %v5624 = vld [vmem:[#allocation8 + $0x4b8] sm:$0xff]
    %v5625 = vld [vmem:[#allocation8 + $0x4c0] sm:$0xff]
    %v5626 = vld [vmem:[#allocation8 + $0x4c8] sm:$0xff]
    %v5627 = vld [vmem:[#allocation8 + $0x4d0] sm:$0xff]
    %v5628 = vld [vmem:[#allocation8 + $0x4d8] sm:$0xff]
    %v5629 = vld [vmem:[#allocation8 + $0x4e0] sm:$0xff]
    %v5630 = vld [vmem:[#allocation8 + $0x4e8] sm:$0xff]
    %v5631 = vld [vmem:[#allocation8 + $0x4f0] sm:$0xff]
    %v5632 = vld [vmem:[#allocation8 + $0x4f8] sm:$0xff]
    %v5633 = vld [vmem:[#allocation8 + $0x500] sm:$0xff]
    %v5634 = vld [vmem:[#allocation8 + $0x508] sm:$0xff]
    %v5635 = vld [vmem:[#allocation8 + $0x510] sm:$0xff]
    %v5636 = vld [vmem:[#allocation8 + $0x518] sm:$0xff]
    %v5637 = vld [vmem:[#allocation8 + $0x520] sm:$0xff]
    %v5638 = vld [vmem:[#allocation8 + $0x528] sm:$0xff]
    %v5639 = vld [vmem:[#allocation8 + $0x530] sm:$0xff]
    %v5640 = vld [vmem:[#allocation8 + $0x538] sm:$0xff]
    %v5641 = vld [vmem:[#allocation8 + $0x540] sm:$0xff]
    %v5642 = vld [vmem:[#allocation8 + $0x548] sm:$0xff]
    %v5643 = vld [vmem:[#allocation8 + $0x550] sm:$0xff]
    %v5644 = vld [vmem:[#allocation8 + $0x558] sm:$0xff]
    %v5645 = vld [vmem:[#allocation8 + $0x560] sm:$0xff]
    %v5646 = vld [vmem:[#allocation8 + $0x568] sm:$0xff]
    %v5647 = vld [vmem:[#allocation8 + $0x570] sm:$0xff]
    %v5648 = vld [vmem:[#allocation8 + $0x578] sm:$0xff]
    %v5649 = vld [vmem:[#allocation8 + $0x580] sm:$0xff]
    %v5650 = vld [vmem:[#allocation8 + $0x588] sm:$0xff]
    %v5651 = vld [vmem:[#allocation8 + $0x590] sm:$0xff]
    %v5652 = vld [vmem:[#allocation8 + $0x598] sm:$0xff]
    %v5653 = vld [vmem:[#allocation8 + $0x5a0] sm:$0xff]
    %v5654 = vld [vmem:[#allocation8 + $0x5a8] sm:$0xff]
    %v5655 = vld [vmem:[#allocation8 + $0x5b0] sm:$0xff]
    %v5656 = vld [vmem:[#allocation8 + $0x5b8] sm:$0xff]
    %v5657 = vld [vmem:[#allocation8 + $0x5c0] sm:$0xff]
    %v5658 = vld [vmem:[#allocation8 + $0x5c8] sm:$0xff]
    %v5659 = vld [vmem:[#allocation8 + $0x5d0] sm:$0xff]
    %v5660 = vld [vmem:[#allocation8 + $0x5d8] sm:$0xff]
    %v5661 = vld [vmem:[#allocation8 + $0x5e0] sm:$0xff]
    %v5662 = vld [vmem:[#allocation8 + $0x5e8] sm:$0xff]
    %v5663 = vld [vmem:[#allocation8 + $0x5f0] sm:$0xff]
    %v5664 = vld [vmem:[#allocation8 + $0x5f8] sm:$0xff]
    %v5665 = vld [vmem:[#allocation8 + $0x600] sm:$0xff]
    %v5666 = vld [vmem:[#allocation8 + $0x608] sm:$0xff]
    %v5667 = vld [vmem:[#allocation8 + $0x610] sm:$0xff]
    %v5668 = vld [vmem:[#allocation8 + $0x618] sm:$0xff]
    %v5669 = vld [vmem:[#allocation8 + $0x620] sm:$0xff]
    %v5670 = vld [vmem:[#allocation8 + $0x628] sm:$0xff]
    %v5671 = vld [vmem:[#allocation8 + $0x630] sm:$0xff]
    %v5672 = vld [vmem:[#allocation8 + $0x638] sm:$0xff]
    %v5673 = vld [vmem:[#allocation8 + $0x640] sm:$0xff]
    %v5674 = vld [vmem:[#allocation8 + $0x648] sm:$0xff]
    %v5675 = vld [vmem:[#allocation8 + $0x650] sm:$0xff]
    %v5676 = vld [vmem:[#allocation8 + $0x658] sm:$0xff]
    %v5677 = vld [vmem:[#allocation8 + $0x660] sm:$0xff]
    %v5678 = vld [vmem:[#allocation8 + $0x668] sm:$0xff]
    %v5679 = vld [vmem:[#allocation8 + $0x670] sm:$0xff]
    %v5680 = vld [vmem:[#allocation8 + $0x678] sm:$0xff]
    %v5681 = vld [vmem:[#allocation8 + $0x680] sm:$0xff]
    %v5682 = vld [vmem:[#allocation8 + $0x688] sm:$0xff]
    %v5683 = vld [vmem:[#allocation8 + $0x690] sm:$0xff]
    %v5684 = vld [vmem:[#allocation8 + $0x698] sm:$0xff]
    %v5685 = vld [vmem:[#allocation8 + $0x6a0] sm:$0xff]
    %v5686 = vld [vmem:[#allocation8 + $0x6a8] sm:$0xff]
    %v5687 = vld [vmem:[#allocation8 + $0x6b0] sm:$0xff]
    %v5688 = vld [vmem:[#allocation8 + $0x6b8] sm:$0xff]
    %v5689 = vld [vmem:[#allocation8 + $0x6c0] sm:$0xff]
    %v5690 = vld [vmem:[#allocation8 + $0x6c8] sm:$0xff]
    %v5691 = vld [vmem:[#allocation8 + $0x6d0] sm:$0xff]
    %v5692 = vld [vmem:[#allocation8 + $0x6d8] sm:$0xff]
    %v5693 = vld [vmem:[#allocation8 + $0x6e0] sm:$0xff]
    %v5694 = vld [vmem:[#allocation8 + $0x6e8] sm:$0xff]
    %v5695 = vld [vmem:[#allocation8 + $0x6f0] sm:$0xff]
    %v5696 = vld [vmem:[#allocation8 + $0x6f8] sm:$0xff]
    %v5697 = vld [vmem:[#allocation8 + $0x700] sm:$0xff]
    %v5698 = vld [vmem:[#allocation8 + $0x708] sm:$0xff]
    %v5699 = vld [vmem:[#allocation8 + $0x710] sm:$0xff]
    %v5700 = vld [vmem:[#allocation8 + $0x718] sm:$0xff]
    %v5701 = vld [vmem:[#allocation8 + $0x720] sm:$0xff]
    %v5702 = vld [vmem:[#allocation8 + $0x728] sm:$0xff]
    %v5703 = vld [vmem:[#allocation8 + $0x730] sm:$0xff]
    %v5704 = vld [vmem:[#allocation8 + $0x738] sm:$0xff]
    %v5705 = vld [vmem:[#allocation8 + $0x740] sm:$0xff]
    %v5706 = vld [vmem:[#allocation8 + $0x748] sm:$0xff]
    %v5707 = vld [vmem:[#allocation8 + $0x750] sm:$0xff]
    %v5708 = vld [vmem:[#allocation8 + $0x758] sm:$0xff]
    %v5709 = vld [vmem:[#allocation8 + $0x760] sm:$0xff]
    %v5710 = vld [vmem:[#allocation8 + $0x768] sm:$0xff]
    %v5711 = vld [vmem:[#allocation8 + $0x770] sm:$0xff]
    %v5712 = vld [vmem:[#allocation8 + $0x778] sm:$0xff]
    %v5713 = vld [vmem:[#allocation8 + $0x780] sm:$0xff]
    %v5714 = vld [vmem:[#allocation8 + $0x788] sm:$0xff]
    %v5715 = vld [vmem:[#allocation8 + $0x790] sm:$0xff]
    %v5716 = vld [vmem:[#allocation8 + $0x798] sm:$0xff]
    %v5717 = vld [vmem:[#allocation8 + $0x7a0] sm:$0xff]
    %v5718 = vld [vmem:[#allocation8 + $0x7a8] sm:$0xff]
    %v5719 = vld [vmem:[#allocation8 + $0x7b0] sm:$0xff]
    %v5720 = vld [vmem:[#allocation8 + $0x7b8] sm:$0xff]
    %v5721 = vld [vmem:[#allocation8 + $0x7c0] sm:$0xff]
    %v5722 = vld [vmem:[#allocation8 + $0x7c8] sm:$0xff]
    %v5723 = vld [vmem:[#allocation8 + $0x7d0] sm:$0xff]
    %v5724 = vld [vmem:[#allocation8 + $0x7d8] sm:$0xff]
    %v5725 = vld [vmem:[#allocation8 + $0x7e0] sm:$0xff]
    %v5726 = vld [vmem:[#allocation8 + $0x7e8] sm:$0xff]
    %v5727 = vld [vmem:[#allocation8 + $0x7f0] sm:$0xff]
    %v5728 = vld [vmem:[#allocation8 + $0x7f8] sm:$0xff]
    %v5729 = vld [vmem:[#allocation8 + $0x800] sm:$0xff]
    %v5730 = vld [vmem:[#allocation8 + $0x808] sm:$0xff]
    %v5731 = vld [vmem:[#allocation8 + $0x810] sm:$0xff]
    %v5732 = vld [vmem:[#allocation8 + $0x818] sm:$0xff]
    %v5733 = vld [vmem:[#allocation8 + $0x820] sm:$0xff]
    %v5734 = vld [vmem:[#allocation8 + $0x828] sm:$0xff]
    %v5735 = vld [vmem:[#allocation8 + $0x830] sm:$0xff]
    %v5736 = vld [vmem:[#allocation8 + $0x838] sm:$0xff]
    %v5737 = vld [vmem:[#allocation8 + $0x840] sm:$0xff]
    %v5738 = vld [vmem:[#allocation8 + $0x848] sm:$0xff]
    %v5739 = vld [vmem:[#allocation8 + $0x850] sm:$0xff]
    %v5740 = vld [vmem:[#allocation8 + $0x858] sm:$0xff]
    %v5741 = vld [vmem:[#allocation8 + $0x860] sm:$0xff]
    %v5742 = vld [vmem:[#allocation8 + $0x868] sm:$0xff]
    %v5743 = vld [vmem:[#allocation8 + $0x870] sm:$0xff]
    %v5744 = vld [vmem:[#allocation8 + $0x878] sm:$0xff]
    %v5745 = vld [vmem:[#allocation8 + $0x880] sm:$0xff]
    %v5746 = vld [vmem:[#allocation8 + $0x888] sm:$0xff]
    %v5747 = vld [vmem:[#allocation8 + $0x890] sm:$0xff]
    %v5748 = vld [vmem:[#allocation8 + $0x898] sm:$0xff]
    %v5749 = vld [vmem:[#allocation8 + $0x8a0] sm:$0xff]
    %v5750 = vld [vmem:[#allocation8 + $0x8a8] sm:$0xff]
    %v5751 = vld [vmem:[#allocation8 + $0x8b0] sm:$0xff]
    %v5752 = vld [vmem:[#allocation8 + $0x8b8] sm:$0xff]
    %v5753 = vld [vmem:[#allocation8 + $0x8c0] sm:$0xff]
    %v5754 = vld [vmem:[#allocation8 + $0x8c8] sm:$0xff]
    %v5755 = vld [vmem:[#allocation8 + $0x8d0] sm:$0xff]
    %v5756 = vld [vmem:[#allocation8 + $0x8d8] sm:$0xff]
    %v5757 = vld [vmem:[#allocation8 + $0x8e0] sm:$0xff]
    %v5758 = vld [vmem:[#allocation8 + $0x8e8] sm:$0xff]
    %v5759 = vld [vmem:[#allocation8 + $0x8f0] sm:$0xff]
    %v5760 = vld [vmem:[#allocation8 + $0x8f8] sm:$0xff]
    %v5761 = vld [vmem:[%s6] sm:$0xff]
    %v5762 = vld [vmem:[%s6 + $0x8] sm:$0xf]
    %v5765 = vlaneseq
    %v5766 = vshrl.u32 %v5765, 7
    %v5767 = vsub.s32 0, %v5766
    %v5768 = vrot.slane %v5761, %v5767
    %v5769 = vlaneseq
    %v5770 = vshrl.u32 %v5769, 7
    %v5771 = vsub.s32 1, %v5770
    %v5772 = vrot.slane %v5761, %v5771
    %v5773 = vlaneseq
    %v5774 = vshrl.u32 %v5773, 7
    %v5775 = vsub.s32 2, %v5774
    %v5776 = vrot.slane %v5761, %v5775
    %v5777 = vlaneseq
    %v5778 = vshrl.u32 %v5777, 7
    %v5779 = vsub.s32 3, %v5778
    %v5780 = vrot.slane %v5761, %v5779
    %v5781 = vlaneseq
    %v5782 = vshrl.u32 %v5781, 7
    %v5783 = vsub.s32 4, %v5782
    %v5784 = vrot.slane %v5761, %v5783
    %v5785 = vlaneseq
    %v5786 = vshrl.u32 %v5785, 7
    %v5787 = vsub.s32 5, %v5786
    %v5788 = vrot.slane %v5761, %v5787
    %v5789 = vlaneseq
    %v5790 = vshrl.u32 %v5789, 7
    %v5791 = vsub.s32 6, %v5790
    %v5792 = vrot.slane %v5761, %v5791
    %v5793 = vlaneseq
    %v5794 = vshrl.u32 %v5793, 7
    %v5795 = vsub.s32 7, %v5794
    %v5796 = vrot.slane %v5761, %v5795
    %v5797 = vlaneseq
    %v5798 = vshrl.u32 %v5797, 7
    %v5799 = vsub.s32 0, %v5798
    %v5800 = vrot.slane %v5762, %v5799
    %v5801 = vlaneseq
    %v5802 = vshrl.u32 %v5801, 7
    %v5803 = vsub.s32 1, %v5802
    %v5804 = vrot.slane %v5762, %v5803
    %v5805 = vlaneseq
    %v5806 = vshrl.u32 %v5805, 7
    %v5807 = vsub.s32 2, %v5806
    %v5808 = vrot.slane %v5762, %v5807
    %v5809 = vlaneseq
    %v5810 = vshrl.u32 %v5809, 7
    %v5811 = vsub.s32 3, %v5810
    %v5812 = vrot.slane %v5762, %v5811
    %v6113 = vunpack.c.l.b16 %v5473
    %v6114 = vunpack.c.h.b16 %v5473
    %v6115 = vunpack.c.l.b16 %v5474
    %v6116 = vunpack.c.h.b16 %v5474
    %v6117 = vunpack.c.l.b16 %v5475
    %v6118 = vunpack.c.h.b16 %v5475
    %v6119 = vunpack.c.l.b16 %v5476
    %v6120 = vunpack.c.h.b16 %v5476
    %v6121 = vunpack.c.l.b16 %v5477
    %v6122 = vunpack.c.h.b16 %v5477
    %v6123 = vunpack.c.l.b16 %v5478
    %v6124 = vunpack.c.h.b16 %v5478
    %v6125 = vunpack.c.l.b16 %v5479
    %v6126 = vunpack.c.h.b16 %v5479
    %v6127 = vunpack.c.l.b16 %v5480
    %v6128 = vunpack.c.h.b16 %v5480
    %v6129 = vunpack.c.l.b16 %v5481
    %v6130 = vunpack.c.h.b16 %v5481
    %v6131 = vunpack.c.l.b16 %v5482
    %v6132 = vunpack.c.h.b16 %v5482
    %v6133 = vunpack.c.l.b16 %v5483
    %v6134 = vunpack.c.h.b16 %v5483
    %v6135 = vunpack.c.l.b16 %v5484
    %v6136 = vunpack.c.h.b16 %v5484
    %v6137 = vunpack.c.l.b16 %v5485
    %v6138 = vunpack.c.h.b16 %v5485
    %v6139 = vunpack.c.l.b16 %v5486
    %v6140 = vunpack.c.h.b16 %v5486
    %v6141 = vunpack.c.l.b16 %v5487
    %v6142 = vunpack.c.h.b16 %v5487
    %v6143 = vunpack.c.l.b16 %v5488
    %v6144 = vunpack.c.h.b16 %v5488
    %v6145 = vunpack.c.l.b16 %v5489
    %v6146 = vunpack.c.h.b16 %v5489
    %v6147 = vunpack.c.l.b16 %v5490
    %v6148 = vunpack.c.h.b16 %v5490
    %v6149 = vunpack.c.l.b16 %v5491
    %v6150 = vunpack.c.h.b16 %v5491
    %v6151 = vunpack.c.l.b16 %v5492
    %v6152 = vunpack.c.h.b16 %v5492
    %v6153 = vunpack.c.l.b16 %v5493
    %v6154 = vunpack.c.h.b16 %v5493
    %v6155 = vunpack.c.l.b16 %v5494
    %v6156 = vunpack.c.h.b16 %v5494
    %v6157 = vunpack.c.l.b16 %v5495
    %v6158 = vunpack.c.h.b16 %v5495
    %v6159 = vunpack.c.l.b16 %v5496
    %v6160 = vunpack.c.h.b16 %v5496
    %v6161 = vunpack.c.l.b16 %v5497
    %v6162 = vunpack.c.h.b16 %v5497
    %v6163 = vunpack.c.l.b16 %v5498
    %v6164 = vunpack.c.h.b16 %v5498
    %v6165 = vunpack.c.l.b16 %v5499
    %v6166 = vunpack.c.h.b16 %v5499
    %v6167 = vunpack.c.l.b16 %v5500
    %v6168 = vunpack.c.h.b16 %v5500
    %v6169 = vunpack.c.l.b16 %v5501
    %v6170 = vunpack.c.h.b16 %v5501
    %v6171 = vunpack.c.l.b16 %v5502
    %v6172 = vunpack.c.h.b16 %v5502
    %v6173 = vunpack.c.l.b16 %v5503
    %v6174 = vunpack.c.h.b16 %v5503
    %v6175 = vunpack.c.l.b16 %v5504
    %v6176 = vunpack.c.h.b16 %v5504
    %v6177 = vunpack.c.l.b16 %v5505
    %v6178 = vunpack.c.h.b16 %v5505
    %v6179 = vunpack.c.l.b16 %v5506
    %v6180 = vunpack.c.h.b16 %v5506
    %v6181 = vunpack.c.l.b16 %v5507
    %v6182 = vunpack.c.h.b16 %v5507
    %v6183 = vunpack.c.l.b16 %v5508
    %v6184 = vunpack.c.h.b16 %v5508
    %v6185 = vunpack.c.l.b16 %v5509
    %v6186 = vunpack.c.h.b16 %v5509
    %v6187 = vunpack.c.l.b16 %v5510
    %v6188 = vunpack.c.h.b16 %v5510
    %v6189 = vunpack.c.l.b16 %v5511
    %v6190 = vunpack.c.h.b16 %v5511
    %v6191 = vunpack.c.l.b16 %v5512
    %v6192 = vunpack.c.h.b16 %v5512
    %v6193 = vunpack.c.l.b16 %v5513
    %v6194 = vunpack.c.h.b16 %v5513
    %v6195 = vunpack.c.l.b16 %v5514
    %v6196 = vunpack.c.h.b16 %v5514
    %v6197 = vunpack.c.l.b16 %v5515
    %v6198 = vunpack.c.h.b16 %v5515
    %v6199 = vunpack.c.l.b16 %v5516
    %v6200 = vunpack.c.h.b16 %v5516
    %v6201 = vunpack.c.l.b16 %v5517
    %v6202 = vunpack.c.h.b16 %v5517
    %v6203 = vunpack.c.l.b16 %v5518
    %v6204 = vunpack.c.h.b16 %v5518
    %v6205 = vunpack.c.l.b16 %v5519
    %v6206 = vunpack.c.h.b16 %v5519
    %v6207 = vunpack.c.l.b16 %v5520
    %v6208 = vunpack.c.h.b16 %v5520
    %v6209 = vunpack.c.l.b16 %v5521
    %v6210 = vunpack.c.h.b16 %v5521
    %v6211 = vunpack.c.l.b16 %v5522
    %v6212 = vunpack.c.h.b16 %v5522
    %v6213 = vunpack.c.l.b16 %v5523
    %v6214 = vunpack.c.h.b16 %v5523
    %v6215 = vunpack.c.l.b16 %v5524
    %v6216 = vunpack.c.h.b16 %v5524
    %v6217 = vunpack.c.l.b16 %v5525
    %v6218 = vunpack.c.h.b16 %v5525
    %v6219 = vunpack.c.l.b16 %v5526
    %v6220 = vunpack.c.h.b16 %v5526
    %v6221 = vunpack.c.l.b16 %v5527
    %v6222 = vunpack.c.h.b16 %v5527
    %v6223 = vunpack.c.l.b16 %v5528
    %v6224 = vunpack.c.h.b16 %v5528
    %v6225 = vunpack.c.l.b16 %v5529
    %v6226 = vunpack.c.h.b16 %v5529
    %v6227 = vunpack.c.l.b16 %v5530
    %v6228 = vunpack.c.h.b16 %v5530
    %v6229 = vunpack.c.l.b16 %v5531
    %v6230 = vunpack.c.h.b16 %v5531
    %v6231 = vunpack.c.l.b16 %v5532
    %v6232 = vunpack.c.h.b16 %v5532
    %v6233 = vunpack.c.l.b16 %v5533
    %v6234 = vunpack.c.h.b16 %v5533
    %v6235 = vunpack.c.l.b16 %v5534
    %v6236 = vunpack.c.h.b16 %v5534
    %v6237 = vunpack.c.l.b16 %v5535
    %v6238 = vunpack.c.h.b16 %v5535
    %v6239 = vunpack.c.l.b16 %v5536
    %v6240 = vunpack.c.h.b16 %v5536
    %v6241 = vunpack.c.l.b16 %v5537
    %v6242 = vunpack.c.h.b16 %v5537
    %v6243 = vunpack.c.l.b16 %v5538
    %v6244 = vunpack.c.h.b16 %v5538
    %v6245 = vunpack.c.l.b16 %v5539
    %v6246 = vunpack.c.h.b16 %v5539
    %v6247 = vunpack.c.l.b16 %v5540
    %v6248 = vunpack.c.h.b16 %v5540
    %v6249 = vunpack.c.l.b16 %v5541
    %v6250 = vunpack.c.h.b16 %v5541
    %v6251 = vunpack.c.l.b16 %v5542
    %v6252 = vunpack.c.h.b16 %v5542
    %v6253 = vunpack.c.l.b16 %v5543
    %v6254 = vunpack.c.h.b16 %v5543
    %v6255 = vunpack.c.l.b16 %v5544
    %v6256 = vunpack.c.h.b16 %v5544
    %v6257 = vunpack.c.l.b16 %v5545
    %v6258 = vunpack.c.h.b16 %v5545
    %v6259 = vunpack.c.l.b16 %v5546
    %v6260 = vunpack.c.h.b16 %v5546
    %v6261 = vunpack.c.l.b16 %v5547
    %v6262 = vunpack.c.h.b16 %v5547
    %v6263 = vunpack.c.l.b16 %v5548
    %v6264 = vunpack.c.h.b16 %v5548
    %v6265 = vunpack.c.l.b16 %v5549
    %v6266 = vunpack.c.h.b16 %v5549
    %v6267 = vunpack.c.l.b16 %v5550
    %v6268 = vunpack.c.h.b16 %v5550
    %v6269 = vunpack.c.l.b16 %v5551
    %v6270 = vunpack.c.h.b16 %v5551
    %v6271 = vunpack.c.l.b16 %v5552
    %v6272 = vunpack.c.h.b16 %v5552
    %v6273 = vunpack.c.l.b16 %v5553
    %v6274 = vunpack.c.h.b16 %v5553
    %v6275 = vunpack.c.l.b16 %v5554
    %v6276 = vunpack.c.h.b16 %v5554
    %v6277 = vunpack.c.l.b16 %v5555
    %v6278 = vunpack.c.h.b16 %v5555
    %v6279 = vunpack.c.l.b16 %v5556
    %v6280 = vunpack.c.h.b16 %v5556
    %v6281 = vunpack.c.l.b16 %v5557
    %v6282 = vunpack.c.h.b16 %v5557
    %v6283 = vunpack.c.l.b16 %v5558
    %v6284 = vunpack.c.h.b16 %v5558
    %v6285 = vunpack.c.l.b16 %v5559
    %v6286 = vunpack.c.h.b16 %v5559
    %v6287 = vunpack.c.l.b16 %v5560
    %v6288 = vunpack.c.h.b16 %v5560
    %v6289 = vunpack.c.l.b16 %v5561
    %v6290 = vunpack.c.h.b16 %v5561
    %v6291 = vunpack.c.l.b16 %v5562
    %v6292 = vunpack.c.h.b16 %v5562
    %v6293 = vunpack.c.l.b16 %v5563
    %v6294 = vunpack.c.h.b16 %v5563
    %v6295 = vunpack.c.l.b16 %v5564
    %v6296 = vunpack.c.h.b16 %v5564
    %v6297 = vunpack.c.l.b16 %v5565
    %v6298 = vunpack.c.h.b16 %v5565
    %v6299 = vunpack.c.l.b16 %v5566
    %v6300 = vunpack.c.h.b16 %v5566
    %v6301 = vunpack.c.l.b16 %v5567
    %v6302 = vunpack.c.h.b16 %v5567
    %v6303 = vunpack.c.l.b16 %v5568
    %v6304 = vunpack.c.h.b16 %v5568
    %v6305 = vunpack.c.l.b16 %v5569
    %v6306 = vunpack.c.h.b16 %v5569
    %v6307 = vunpack.c.l.b16 %v5570
    %v6308 = vunpack.c.h.b16 %v5570
    %v6309 = vunpack.c.l.b16 %v5571
    %v6310 = vunpack.c.h.b16 %v5571
    %v6311 = vunpack.c.l.b16 %v5572
    %v6312 = vunpack.c.h.b16 %v5572
    %v6313 = vunpack.c.l.b16 %v5573
    %v6314 = vunpack.c.h.b16 %v5573
    %v6315 = vunpack.c.l.b16 %v5574
    %v6316 = vunpack.c.h.b16 %v5574
    %v6317 = vunpack.c.l.b16 %v5575
    %v6318 = vunpack.c.h.b16 %v5575
    %v6319 = vunpack.c.l.b16 %v5576
    %v6320 = vunpack.c.h.b16 %v5576
    %v6321 = vunpack.c.l.b16 %v5577
    %v6322 = vunpack.c.h.b16 %v5577
    %v6323 = vunpack.c.l.b16 %v5578
    %v6324 = vunpack.c.h.b16 %v5578
    %v6325 = vunpack.c.l.b16 %v5579
    %v6326 = vunpack.c.h.b16 %v5579
    %v6327 = vunpack.c.l.b16 %v5580
    %v6328 = vunpack.c.h.b16 %v5580
    %v6329 = vunpack.c.l.b16 %v5581
    %v6330 = vunpack.c.h.b16 %v5581
    %v6331 = vunpack.c.l.b16 %v5582
    %v6332 = vunpack.c.h.b16 %v5582
    %v6333 = vunpack.c.l.b16 %v5583
    %v6334 = vunpack.c.h.b16 %v5583
    %v6335 = vunpack.c.l.b16 %v5584
    %v6336 = vunpack.c.h.b16 %v5584
    %v6337 = vunpack.c.l.b16 %v5585
    %v6338 = vunpack.c.h.b16 %v5585
    %v6339 = vunpack.c.l.b16 %v5586
    %v6340 = vunpack.c.h.b16 %v5586
    %v6341 = vunpack.c.l.b16 %v5587
    %v6342 = vunpack.c.h.b16 %v5587
    %v6343 = vunpack.c.l.b16 %v5588
    %v6344 = vunpack.c.h.b16 %v5588
    %v6345 = vunpack.c.l.b16 %v5589
    %v6346 = vunpack.c.h.b16 %v5589
    %v6347 = vunpack.c.l.b16 %v5590
    %v6348 = vunpack.c.h.b16 %v5590
    %v6349 = vunpack.c.l.b16 %v5591
    %v6350 = vunpack.c.h.b16 %v5591
    %v6351 = vunpack.c.l.b16 %v5592
    %v6352 = vunpack.c.h.b16 %v5592
    %v6353 = vunpack.c.l.b16 %v5593
    %v6354 = vunpack.c.h.b16 %v5593
    %v6355 = vunpack.c.l.b16 %v5594
    %v6356 = vunpack.c.h.b16 %v5594
    %v6357 = vunpack.c.l.b16 %v5595
    %v6358 = vunpack.c.h.b16 %v5595
    %v6359 = vunpack.c.l.b16 %v5596
    %v6360 = vunpack.c.h.b16 %v5596
    %v6361 = vunpack.c.l.b16 %v5597
    %v6362 = vunpack.c.h.b16 %v5597
    %v6363 = vunpack.c.l.b16 %v5598
    %v6364 = vunpack.c.h.b16 %v5598
    %v6365 = vunpack.c.l.b16 %v5599
    %v6366 = vunpack.c.h.b16 %v5599
    %v6367 = vunpack.c.l.b16 %v5600
    %v6368 = vunpack.c.h.b16 %v5600
    %v6369 = vunpack.c.l.b16 %v5601
    %v6370 = vunpack.c.h.b16 %v5601
    %v6371 = vunpack.c.l.b16 %v5602
    %v6372 = vunpack.c.h.b16 %v5602
    %v6373 = vunpack.c.l.b16 %v5603
    %v6374 = vunpack.c.h.b16 %v5603
    %v6375 = vunpack.c.l.b16 %v5604
    %v6376 = vunpack.c.h.b16 %v5604
    %v6377 = vunpack.c.l.b16 %v5605
    %v6378 = vunpack.c.h.b16 %v5605
    %v6379 = vunpack.c.l.b16 %v5606
    %v6380 = vunpack.c.h.b16 %v5606
    %v6381 = vunpack.c.l.b16 %v5607
    %v6382 = vunpack.c.h.b16 %v5607
    %v6383 = vunpack.c.l.b16 %v5608
    %v6384 = vunpack.c.h.b16 %v5608
    %v6385 = vunpack.c.l.b16 %v5609
    %v6386 = vunpack.c.h.b16 %v5609
    %v6387 = vunpack.c.l.b16 %v5610
    %v6388 = vunpack.c.h.b16 %v5610
    %v6389 = vunpack.c.l.b16 %v5611
    %v6390 = vunpack.c.h.b16 %v5611
    %v6391 = vunpack.c.l.b16 %v5612
    %v6392 = vunpack.c.h.b16 %v5612
    %v6393 = vunpack.c.l.b16 %v5613
    %v6394 = vunpack.c.h.b16 %v5613
    %v6395 = vunpack.c.l.b16 %v5614
    %v6396 = vunpack.c.h.b16 %v5614
    %v6397 = vunpack.c.l.b16 %v5615
    %v6398 = vunpack.c.h.b16 %v5615
    %v6399 = vunpack.c.l.b16 %v5616
    %v6400 = vunpack.c.h.b16 %v5616
    %v6401 = vunpack.c.l.b16 %v5617
    %v6402 = vunpack.c.h.b16 %v5617
    %v6403 = vunpack.c.l.b16 %v5618
    %v6404 = vunpack.c.h.b16 %v5618
    %v6405 = vunpack.c.l.b16 %v5619
    %v6406 = vunpack.c.h.b16 %v5619
    %v6407 = vunpack.c.l.b16 %v5620
    %v6408 = vunpack.c.h.b16 %v5620
    %v6409 = vunpack.c.l.b16 %v5621
    %v6410 = vunpack.c.h.b16 %v5621
    %v6411 = vunpack.c.l.b16 %v5622
    %v6412 = vunpack.c.h.b16 %v5622
    %v6413 = vunpack.c.l.b16 %v5623
    %v6414 = vunpack.c.h.b16 %v5623
    %v6415 = vunpack.c.l.b16 %v5624
    %v6416 = vunpack.c.h.b16 %v5624
    %v6417 = vunpack.c.l.b16 %v5625
    %v6418 = vunpack.c.h.b16 %v5625
    %v6419 = vunpack.c.l.b16 %v5626
    %v6420 = vunpack.c.h.b16 %v5626
    %v6421 = vunpack.c.l.b16 %v5627
    %v6422 = vunpack.c.h.b16 %v5627
    %v6423 = vunpack.c.l.b16 %v5628
    %v6424 = vunpack.c.h.b16 %v5628
    %v6425 = vunpack.c.l.b16 %v5629
    %v6426 = vunpack.c.h.b16 %v5629
    %v6427 = vunpack.c.l.b16 %v5630
    %v6428 = vunpack.c.h.b16 %v5630
    %v6429 = vunpack.c.l.b16 %v5631
    %v6430 = vunpack.c.h.b16 %v5631
    %v6431 = vunpack.c.l.b16 %v5632
    %v6432 = vunpack.c.h.b16 %v5632
    %v6433 = vunpack.c.l.b16 %v5633
    %v6434 = vunpack.c.h.b16 %v5633
    %v6435 = vunpack.c.l.b16 %v5634
    %v6436 = vunpack.c.h.b16 %v5634
    %v6437 = vunpack.c.l.b16 %v5635
    %v6438 = vunpack.c.h.b16 %v5635
    %v6439 = vunpack.c.l.b16 %v5636
    %v6440 = vunpack.c.h.b16 %v5636
    %v6441 = vunpack.c.l.b16 %v5637
    %v6442 = vunpack.c.h.b16 %v5637
    %v6443 = vunpack.c.l.b16 %v5638
    %v6444 = vunpack.c.h.b16 %v5638
    %v6445 = vunpack.c.l.b16 %v5639
    %v6446 = vunpack.c.h.b16 %v5639
    %v6447 = vunpack.c.l.b16 %v5640
    %v6448 = vunpack.c.h.b16 %v5640
    %v6449 = vunpack.c.l.b16 %v5641
    %v6450 = vunpack.c.h.b16 %v5641
    %v6451 = vunpack.c.l.b16 %v5642
    %v6452 = vunpack.c.h.b16 %v5642
    %v6453 = vunpack.c.l.b16 %v5643
    %v6454 = vunpack.c.h.b16 %v5643
    %v6455 = vunpack.c.l.b16 %v5644
    %v6456 = vunpack.c.h.b16 %v5644
    %v6457 = vunpack.c.l.b16 %v5645
    %v6458 = vunpack.c.h.b16 %v5645
    %v6459 = vunpack.c.l.b16 %v5646
    %v6460 = vunpack.c.h.b16 %v5646
    %v6461 = vunpack.c.l.b16 %v5647
    %v6462 = vunpack.c.h.b16 %v5647
    %v6463 = vunpack.c.l.b16 %v5648
    %v6464 = vunpack.c.h.b16 %v5648
    %v6465 = vunpack.c.l.b16 %v5649
    %v6466 = vunpack.c.h.b16 %v5649
    %v6467 = vunpack.c.l.b16 %v5650
    %v6468 = vunpack.c.h.b16 %v5650
    %v6469 = vunpack.c.l.b16 %v5651
    %v6470 = vunpack.c.h.b16 %v5651
    %v6471 = vunpack.c.l.b16 %v5652
    %v6472 = vunpack.c.h.b16 %v5652
    %v6473 = vunpack.c.l.b16 %v5653
    %v6474 = vunpack.c.h.b16 %v5653
    %v6475 = vunpack.c.l.b16 %v5654
    %v6476 = vunpack.c.h.b16 %v5654
    %v6477 = vunpack.c.l.b16 %v5655
    %v6478 = vunpack.c.h.b16 %v5655
    %v6479 = vunpack.c.l.b16 %v5656
    %v6480 = vunpack.c.h.b16 %v5656
    %v6481 = vunpack.c.l.b16 %v5657
    %v6482 = vunpack.c.h.b16 %v5657
    %v6483 = vunpack.c.l.b16 %v5658
    %v6484 = vunpack.c.h.b16 %v5658
    %v6485 = vunpack.c.l.b16 %v5659
    %v6486 = vunpack.c.h.b16 %v5659
    %v6487 = vunpack.c.l.b16 %v5660
    %v6488 = vunpack.c.h.b16 %v5660
    %v6489 = vunpack.c.l.b16 %v5661
    %v6490 = vunpack.c.h.b16 %v5661
    %v6491 = vunpack.c.l.b16 %v5662
    %v6492 = vunpack.c.h.b16 %v5662
    %v6493 = vunpack.c.l.b16 %v5663
    %v6494 = vunpack.c.h.b16 %v5663
    %v6495 = vunpack.c.l.b16 %v5664
    %v6496 = vunpack.c.h.b16 %v5664
    %v6497 = vunpack.c.l.b16 %v5665
    %v6498 = vunpack.c.h.b16 %v5665
    %v6499 = vunpack.c.l.b16 %v5666
    %v6500 = vunpack.c.h.b16 %v5666
    %v6501 = vunpack.c.l.b16 %v5667
    %v6502 = vunpack.c.h.b16 %v5667
    %v6503 = vunpack.c.l.b16 %v5668
    %v6504 = vunpack.c.h.b16 %v5668
    %v6505 = vunpack.c.l.b16 %v5669
    %v6506 = vunpack.c.h.b16 %v5669
    %v6507 = vunpack.c.l.b16 %v5670
    %v6508 = vunpack.c.h.b16 %v5670
    %v6509 = vunpack.c.l.b16 %v5671
    %v6510 = vunpack.c.h.b16 %v5671
    %v6511 = vunpack.c.l.b16 %v5672
    %v6512 = vunpack.c.h.b16 %v5672
    %v6513 = vunpack.c.l.b16 %v5673
    %v6514 = vunpack.c.h.b16 %v5673
    %v6515 = vunpack.c.l.b16 %v5674
    %v6516 = vunpack.c.h.b16 %v5674
    %v6517 = vunpack.c.l.b16 %v5675
    %v6518 = vunpack.c.h.b16 %v5675
    %v6519 = vunpack.c.l.b16 %v5676
    %v6520 = vunpack.c.h.b16 %v5676
    %v6521 = vunpack.c.l.b16 %v5677
    %v6522 = vunpack.c.h.b16 %v5677
    %v6523 = vunpack.c.l.b16 %v5678
    %v6524 = vunpack.c.h.b16 %v5678
    %v6525 = vunpack.c.l.b16 %v5679
    %v6526 = vunpack.c.h.b16 %v5679
    %v6527 = vunpack.c.l.b16 %v5680
    %v6528 = vunpack.c.h.b16 %v5680
    %v6529 = vunpack.c.l.b16 %v5681
    %v6530 = vunpack.c.h.b16 %v5681
    %v6531 = vunpack.c.l.b16 %v5682
    %v6532 = vunpack.c.h.b16 %v5682
    %v6533 = vunpack.c.l.b16 %v5683
    %v6534 = vunpack.c.h.b16 %v5683
    %v6535 = vunpack.c.l.b16 %v5684
    %v6536 = vunpack.c.h.b16 %v5684
    %v6537 = vunpack.c.l.b16 %v5685
    %v6538 = vunpack.c.h.b16 %v5685
    %v6539 = vunpack.c.l.b16 %v5686
    %v6540 = vunpack.c.h.b16 %v5686
    %v6541 = vunpack.c.l.b16 %v5687
    %v6542 = vunpack.c.h.b16 %v5687
    %v6543 = vunpack.c.l.b16 %v5688
    %v6544 = vunpack.c.h.b16 %v5688
    %v6545 = vunpack.c.l.b16 %v5689
    %v6546 = vunpack.c.h.b16 %v5689
    %v6547 = vunpack.c.l.b16 %v5690
    %v6548 = vunpack.c.h.b16 %v5690
    %v6549 = vunpack.c.l.b16 %v5691
    %v6550 = vunpack.c.h.b16 %v5691
    %v6551 = vunpack.c.l.b16 %v5692
    %v6552 = vunpack.c.h.b16 %v5692
    %v6553 = vunpack.c.l.b16 %v5693
    %v6554 = vunpack.c.h.b16 %v5693
    %v6555 = vunpack.c.l.b16 %v5694
    %v6556 = vunpack.c.h.b16 %v5694
    %v6557 = vunpack.c.l.b16 %v5695
    %v6558 = vunpack.c.h.b16 %v5695
    %v6559 = vunpack.c.l.b16 %v5696
    %v6560 = vunpack.c.h.b16 %v5696
    %v6561 = vunpack.c.l.b16 %v5697
    %v6562 = vunpack.c.h.b16 %v5697
    %v6563 = vunpack.c.l.b16 %v5698
    %v6564 = vunpack.c.h.b16 %v5698
    %v6565 = vunpack.c.l.b16 %v5699
    %v6566 = vunpack.c.h.b16 %v5699
    %v6567 = vunpack.c.l.b16 %v5700
    %v6568 = vunpack.c.h.b16 %v5700
    %v6569 = vunpack.c.l.b16 %v5701
    %v6570 = vunpack.c.h.b16 %v5701
    %v6571 = vunpack.c.l.b16 %v5702
    %v6572 = vunpack.c.h.b16 %v5702
    %v6573 = vunpack.c.l.b16 %v5703
    %v6574 = vunpack.c.h.b16 %v5703
    %v6575 = vunpack.c.l.b16 %v5704
    %v6576 = vunpack.c.h.b16 %v5704
    %v6577 = vunpack.c.l.b16 %v5705
    %v6578 = vunpack.c.h.b16 %v5705
    %v6579 = vunpack.c.l.b16 %v5706
    %v6580 = vunpack.c.h.b16 %v5706
    %v6581 = vunpack.c.l.b16 %v5707
    %v6582 = vunpack.c.h.b16 %v5707
    %v6583 = vunpack.c.l.b16 %v5708
    %v6584 = vunpack.c.h.b16 %v5708
    %v6585 = vunpack.c.l.b16 %v5709
    %v6586 = vunpack.c.h.b16 %v5709
    %v6587 = vunpack.c.l.b16 %v5710
    %v6588 = vunpack.c.h.b16 %v5710
    %v6589 = vunpack.c.l.b16 %v5711
    %v6590 = vunpack.c.h.b16 %v5711
    %v6591 = vunpack.c.l.b16 %v5712
    %v6592 = vunpack.c.h.b16 %v5712
    %v6593 = vunpack.c.l.b16 %v5713
    %v6594 = vunpack.c.h.b16 %v5713
    %v6595 = vunpack.c.l.b16 %v5714
    %v6596 = vunpack.c.h.b16 %v5714
    %v6597 = vunpack.c.l.b16 %v5715
    %v6598 = vunpack.c.h.b16 %v5715
    %v6599 = vunpack.c.l.b16 %v5716
    %v6600 = vunpack.c.h.b16 %v5716
    %v6601 = vunpack.c.l.b16 %v5717
    %v6602 = vunpack.c.h.b16 %v5717
    %v6603 = vunpack.c.l.b16 %v5718
    %v6604 = vunpack.c.h.b16 %v5718
    %v6605 = vunpack.c.l.b16 %v5719
    %v6606 = vunpack.c.h.b16 %v5719
    %v6607 = vunpack.c.l.b16 %v5720
    %v6608 = vunpack.c.h.b16 %v5720
    %v6609 = vunpack.c.l.b16 %v5721
    %v6610 = vunpack.c.h.b16 %v5721
    %v6611 = vunpack.c.l.b16 %v5722
    %v6612 = vunpack.c.h.b16 %v5722
    %v6613 = vunpack.c.l.b16 %v5723
    %v6614 = vunpack.c.h.b16 %v5723
    %v6615 = vunpack.c.l.b16 %v5724
    %v6616 = vunpack.c.h.b16 %v5724
    %v6617 = vunpack.c.l.b16 %v5725
    %v6618 = vunpack.c.h.b16 %v5725
    %v6619 = vunpack.c.l.b16 %v5726
    %v6620 = vunpack.c.h.b16 %v5726
    %v6621 = vunpack.c.l.b16 %v5727
    %v6622 = vunpack.c.h.b16 %v5727
    %v6623 = vunpack.c.l.b16 %v5728
    %v6624 = vunpack.c.h.b16 %v5728
    %v6625 = vunpack.c.l.b16 %v5729
    %v6626 = vunpack.c.h.b16 %v5729
    %v6627 = vunpack.c.l.b16 %v5730
    %v6628 = vunpack.c.h.b16 %v5730
    %v6629 = vunpack.c.l.b16 %v5731
    %v6630 = vunpack.c.h.b16 %v5731
    %v6631 = vunpack.c.l.b16 %v5732
    %v6632 = vunpack.c.h.b16 %v5732
    %v6633 = vunpack.c.l.b16 %v5733
    %v6634 = vunpack.c.h.b16 %v5733
    %v6635 = vunpack.c.l.b16 %v5734
    %v6636 = vunpack.c.h.b16 %v5734
    %v6637 = vunpack.c.l.b16 %v5735
    %v6638 = vunpack.c.h.b16 %v5735
    %v6639 = vunpack.c.l.b16 %v5736
    %v6640 = vunpack.c.h.b16 %v5736
    %v6641 = vunpack.c.l.b16 %v5737
    %v6642 = vunpack.c.h.b16 %v5737
    %v6643 = vunpack.c.l.b16 %v5738
    %v6644 = vunpack.c.h.b16 %v5738
    %v6645 = vunpack.c.l.b16 %v5739
    %v6646 = vunpack.c.h.b16 %v5739
    %v6647 = vunpack.c.l.b16 %v5740
    %v6648 = vunpack.c.h.b16 %v5740
    %v6649 = vunpack.c.l.b16 %v5741
    %v6650 = vunpack.c.h.b16 %v5741
    %v6651 = vunpack.c.l.b16 %v5742
    %v6652 = vunpack.c.h.b16 %v5742
    %v6653 = vunpack.c.l.b16 %v5743
    %v6654 = vunpack.c.h.b16 %v5743
    %v6655 = vunpack.c.l.b16 %v5744
    %v6656 = vunpack.c.h.b16 %v5744
    %v6657 = vunpack.c.l.b16 %v5745
    %v6658 = vunpack.c.h.b16 %v5745
    %v6659 = vunpack.c.l.b16 %v5746
    %v6660 = vunpack.c.h.b16 %v5746
    %v6661 = vunpack.c.l.b16 %v5747
    %v6662 = vunpack.c.h.b16 %v5747
    %v6663 = vunpack.c.l.b16 %v5748
    %v6664 = vunpack.c.h.b16 %v5748
    %v6665 = vunpack.c.l.b16 %v5749
    %v6666 = vunpack.c.h.b16 %v5749
    %v6667 = vunpack.c.l.b16 %v5750
    %v6668 = vunpack.c.h.b16 %v5750
    %v6669 = vunpack.c.l.b16 %v5751
    %v6670 = vunpack.c.h.b16 %v5751
    %v6671 = vunpack.c.l.b16 %v5752
    %v6672 = vunpack.c.h.b16 %v5752
    %v6673 = vunpack.c.l.b16 %v5753
    %v6674 = vunpack.c.h.b16 %v5753
    %v6675 = vunpack.c.l.b16 %v5754
    %v6676 = vunpack.c.h.b16 %v5754
    %v6677 = vunpack.c.l.b16 %v5755
    %v6678 = vunpack.c.h.b16 %v5755
    %v6679 = vunpack.c.l.b16 %v5756
    %v6680 = vunpack.c.h.b16 %v5756
    %v6681 = vunpack.c.l.b16 %v5757
    %v6682 = vunpack.c.h.b16 %v5757
    %v6683 = vunpack.c.l.b16 %v5758
    %v6684 = vunpack.c.h.b16 %v5758
    %v6685 = vunpack.c.l.b16 %v5759
    %v6686 = vunpack.c.h.b16 %v5759
    %v6687 = vunpack.c.l.b16 %v5760
    %v6688 = vunpack.c.h.b16 %v5760
    %v6689 = vpack.c.b16 %v6125, %v6113
    %v6690 = vpack.c.b16 %v6126, %v6114
    %v6691 = vpack.c.b16 %v6127, %v6115
    %v6692 = vpack.c.b16 %v6128, %v6116
    %v6693 = vpack.c.b16 %v6129, %v6117
    %v6694 = vpack.c.b16 %v6130, %v6118
    %v6695 = vpack.c.b16 %v6131, %v6119
    %v6696 = vpack.c.b16 %v6132, %v6120
    %v6697 = vpack.c.b16 %v6133, %v6121
    %v6698 = vpack.c.b16 %v6134, %v6122
    %v6699 = vpack.c.b16 %v6135, %v6123
    %v6700 = vpack.c.b16 %v6136, %v6124
    %v6701 = vpack.c.b16 %v6149, %v6137
    %v6702 = vpack.c.b16 %v6150, %v6138
    %v6703 = vpack.c.b16 %v6151, %v6139
    %v6704 = vpack.c.b16 %v6152, %v6140
    %v6705 = vpack.c.b16 %v6153, %v6141
    %v6706 = vpack.c.b16 %v6154, %v6142
    %v6707 = vpack.c.b16 %v6155, %v6143
    %v6708 = vpack.c.b16 %v6156, %v6144
    %v6709 = vpack.c.b16 %v6157, %v6145
    %v6710 = vpack.c.b16 %v6158, %v6146
    %v6711 = vpack.c.b16 %v6159, %v6147
    %v6712 = vpack.c.b16 %v6160, %v6148
    %v6713 = vpack.c.b16 %v6173, %v6161
    %v6714 = vpack.c.b16 %v6174, %v6162
    %v6715 = vpack.c.b16 %v6175, %v6163
    %v6716 = vpack.c.b16 %v6176, %v6164
    %v6717 = vpack.c.b16 %v6177, %v6165
    %v6718 = vpack.c.b16 %v6178, %v6166
    %v6719 = vpack.c.b16 %v6179, %v6167
    %v6720 = vpack.c.b16 %v6180, %v6168
    %v6721 = vpack.c.b16 %v6181, %v6169
    %v6722 = vpack.c.b16 %v6182, %v6170
    %v6723 = vpack.c.b16 %v6183, %v6171
    %v6724 = vpack.c.b16 %v6184, %v6172
    %v6725 = vpack.c.b16 %v6197, %v6185
    %v6726 = vpack.c.b16 %v6198, %v6186
    %v6727 = vpack.c.b16 %v6199, %v6187
    %v6728 = vpack.c.b16 %v6200, %v6188
    %v6729 = vpack.c.b16 %v6201, %v6189
    %v6730 = vpack.c.b16 %v6202, %v6190
    %v6731 = vpack.c.b16 %v6203, %v6191
    %v6732 = vpack.c.b16 %v6204, %v6192
    %v6733 = vpack.c.b16 %v6205, %v6193
    %v6734 = vpack.c.b16 %v6206, %v6194
    %v6735 = vpack.c.b16 %v6207, %v6195
    %v6736 = vpack.c.b16 %v6208, %v6196
    %v6737 = vpack.c.b16 %v6221, %v6209
    %v6738 = vpack.c.b16 %v6222, %v6210
    %v6739 = vpack.c.b16 %v6223, %v6211
    %v6740 = vpack.c.b16 %v6224, %v6212
    %v6741 = vpack.c.b16 %v6225, %v6213
    %v6742 = vpack.c.b16 %v6226, %v6214
    %v6743 = vpack.c.b16 %v6227, %v6215
    %v6744 = vpack.c.b16 %v6228, %v6216
    %v6745 = vpack.c.b16 %v6229, %v6217
    %v6746 = vpack.c.b16 %v6230, %v6218
    %v6747 = vpack.c.b16 %v6231, %v6219
    %v6748 = vpack.c.b16 %v6232, %v6220
    %v6749 = vpack.c.b16 %v6245, %v6233
    %v6750 = vpack.c.b16 %v6246, %v6234
    %v6751 = vpack.c.b16 %v6247, %v6235
    %v6752 = vpack.c.b16 %v6248, %v6236
    %v6753 = vpack.c.b16 %v6249, %v6237
    %v6754 = vpack.c.b16 %v6250, %v6238
    %v6755 = vpack.c.b16 %v6251, %v6239
    %v6756 = vpack.c.b16 %v6252, %v6240
    %v6757 = vpack.c.b16 %v6253, %v6241
    %v6758 = vpack.c.b16 %v6254, %v6242
    %v6759 = vpack.c.b16 %v6255, %v6243
    %v6760 = vpack.c.b16 %v6256, %v6244
    %v6761 = vpack.c.b16 %v6269, %v6257
    %v6762 = vpack.c.b16 %v6270, %v6258
    %v6763 = vpack.c.b16 %v6271, %v6259
    %v6764 = vpack.c.b16 %v6272, %v6260
    %v6765 = vpack.c.b16 %v6273, %v6261
    %v6766 = vpack.c.b16 %v6274, %v6262
    %v6767 = vpack.c.b16 %v6275, %v6263
    %v6768 = vpack.c.b16 %v6276, %v6264
    %v6769 = vpack.c.b16 %v6277, %v6265
    %v6770 = vpack.c.b16 %v6278, %v6266
    %v6771 = vpack.c.b16 %v6279, %v6267
    %v6772 = vpack.c.b16 %v6280, %v6268
    %v6773 = vpack.c.b16 %v6293, %v6281
    %v6774 = vpack.c.b16 %v6294, %v6282
    %v6775 = vpack.c.b16 %v6295, %v6283
    %v6776 = vpack.c.b16 %v6296, %v6284
    %v6777 = vpack.c.b16 %v6297, %v6285
    %v6778 = vpack.c.b16 %v6298, %v6286
    %v6779 = vpack.c.b16 %v6299, %v6287
    %v6780 = vpack.c.b16 %v6300, %v6288
    %v6781 = vpack.c.b16 %v6301, %v6289
    %v6782 = vpack.c.b16 %v6302, %v6290
    %v6783 = vpack.c.b16 %v6303, %v6291
    %v6784 = vpack.c.b16 %v6304, %v6292
    %v6785 = vpack.c.b16 %v6317, %v6305
    %v6786 = vpack.c.b16 %v6318, %v6306
    %v6787 = vpack.c.b16 %v6319, %v6307
    %v6788 = vpack.c.b16 %v6320, %v6308
    %v6789 = vpack.c.b16 %v6321, %v6309
    %v6790 = vpack.c.b16 %v6322, %v6310
    %v6791 = vpack.c.b16 %v6323, %v6311
    %v6792 = vpack.c.b16 %v6324, %v6312
    %v6793 = vpack.c.b16 %v6325, %v6313
    %v6794 = vpack.c.b16 %v6326, %v6314
    %v6795 = vpack.c.b16 %v6327, %v6315
    %v6796 = vpack.c.b16 %v6328, %v6316
    %v6797 = vpack.c.b16 %v6341, %v6329
    %v6798 = vpack.c.b16 %v6342, %v6330
    %v6799 = vpack.c.b16 %v6343, %v6331
    %v6800 = vpack.c.b16 %v6344, %v6332
    %v6801 = vpack.c.b16 %v6345, %v6333
    %v6802 = vpack.c.b16 %v6346, %v6334
    %v6803 = vpack.c.b16 %v6347, %v6335
    %v6804 = vpack.c.b16 %v6348, %v6336
    %v6805 = vpack.c.b16 %v6349, %v6337
    %v6806 = vpack.c.b16 %v6350, %v6338
    %v6807 = vpack.c.b16 %v6351, %v6339
    %v6808 = vpack.c.b16 %v6352, %v6340
    %v6809 = vpack.c.b16 %v6365, %v6353
    %v6810 = vpack.c.b16 %v6366, %v6354
    %v6811 = vpack.c.b16 %v6367, %v6355
    %v6812 = vpack.c.b16 %v6368, %v6356
    %v6813 = vpack.c.b16 %v6369, %v6357
    %v6814 = vpack.c.b16 %v6370, %v6358
    %v6815 = vpack.c.b16 %v6371, %v6359
    %v6816 = vpack.c.b16 %v6372, %v6360
    %v6817 = vpack.c.b16 %v6373, %v6361
    %v6818 = vpack.c.b16 %v6374, %v6362
    %v6819 = vpack.c.b16 %v6375, %v6363
    %v6820 = vpack.c.b16 %v6376, %v6364
    %v6821 = vpack.c.b16 %v6389, %v6377
    %v6822 = vpack.c.b16 %v6390, %v6378
    %v6823 = vpack.c.b16 %v6391, %v6379
    %v6824 = vpack.c.b16 %v6392, %v6380
    %v6825 = vpack.c.b16 %v6393, %v6381
    %v6826 = vpack.c.b16 %v6394, %v6382
    %v6827 = vpack.c.b16 %v6395, %v6383
    %v6828 = vpack.c.b16 %v6396, %v6384
    %v6829 = vpack.c.b16 %v6397, %v6385
    %v6830 = vpack.c.b16 %v6398, %v6386
    %v6831 = vpack.c.b16 %v6399, %v6387
    %v6832 = vpack.c.b16 %v6400, %v6388
    %v6833 = vpack.c.b16 %v6413, %v6401
    %v6834 = vpack.c.b16 %v6414, %v6402
    %v6835 = vpack.c.b16 %v6415, %v6403
    %v6836 = vpack.c.b16 %v6416, %v6404
    %v6837 = vpack.c.b16 %v6417, %v6405
    %v6838 = vpack.c.b16 %v6418, %v6406
    %v6839 = vpack.c.b16 %v6419, %v6407
    %v6840 = vpack.c.b16 %v6420, %v6408
    %v6841 = vpack.c.b16 %v6421, %v6409
    %v6842 = vpack.c.b16 %v6422, %v6410
    %v6843 = vpack.c.b16 %v6423, %v6411
    %v6844 = vpack.c.b16 %v6424, %v6412
    %v6845 = vpack.c.b16 %v6437, %v6425
    %v6846 = vpack.c.b16 %v6438, %v6426
    %v6847 = vpack.c.b16 %v6439, %v6427
    %v6848 = vpack.c.b16 %v6440, %v6428
    %v6849 = vpack.c.b16 %v6441, %v6429
    %v6850 = vpack.c.b16 %v6442, %v6430
    %v6851 = vpack.c.b16 %v6443, %v6431
    %v6852 = vpack.c.b16 %v6444, %v6432
    %v6853 = vpack.c.b16 %v6445, %v6433
    %v6854 = vpack.c.b16 %v6446, %v6434
    %v6855 = vpack.c.b16 %v6447, %v6435
    %v6856 = vpack.c.b16 %v6448, %v6436
    %v6857 = vpack.c.b16 %v6461, %v6449
    %v6858 = vpack.c.b16 %v6462, %v6450
    %v6859 = vpack.c.b16 %v6463, %v6451
    %v6860 = vpack.c.b16 %v6464, %v6452
    %v6861 = vpack.c.b16 %v6465, %v6453
    %v6862 = vpack.c.b16 %v6466, %v6454
    %v6863 = vpack.c.b16 %v6467, %v6455
    %v6864 = vpack.c.b16 %v6468, %v6456
    %v6865 = vpack.c.b16 %v6469, %v6457
    %v6866 = vpack.c.b16 %v6470, %v6458
    %v6867 = vpack.c.b16 %v6471, %v6459
    %v6868 = vpack.c.b16 %v6472, %v6460
    %v6869 = vpack.c.b16 %v6485, %v6473
    %v6870 = vpack.c.b16 %v6486, %v6474
    %v6871 = vpack.c.b16 %v6487, %v6475
    %v6872 = vpack.c.b16 %v6488, %v6476
    %v6873 = vpack.c.b16 %v6489, %v6477
    %v6874 = vpack.c.b16 %v6490, %v6478
    %v6875 = vpack.c.b16 %v6491, %v6479
    %v6876 = vpack.c.b16 %v6492, %v6480
    %v6877 = vpack.c.b16 %v6493, %v6481
    %v6878 = vpack.c.b16 %v6494, %v6482
    %v6879 = vpack.c.b16 %v6495, %v6483
    %v6880 = vpack.c.b16 %v6496, %v6484
    %v6881 = vpack.c.b16 %v6509, %v6497
    %v6882 = vpack.c.b16 %v6510, %v6498
    %v6883 = vpack.c.b16 %v6511, %v6499
    %v6884 = vpack.c.b16 %v6512, %v6500
    %v6885 = vpack.c.b16 %v6513, %v6501
    %v6886 = vpack.c.b16 %v6514, %v6502
    %v6887 = vpack.c.b16 %v6515, %v6503
    %v6888 = vpack.c.b16 %v6516, %v6504
    %v6889 = vpack.c.b16 %v6517, %v6505
    %v6890 = vpack.c.b16 %v6518, %v6506
    %v6891 = vpack.c.b16 %v6519, %v6507
    %v6892 = vpack.c.b16 %v6520, %v6508
    %v6893 = vpack.c.b16 %v6533, %v6521
    %v6894 = vpack.c.b16 %v6534, %v6522
    %v6895 = vpack.c.b16 %v6535, %v6523
    %v6896 = vpack.c.b16 %v6536, %v6524
    %v6897 = vpack.c.b16 %v6537, %v6525
    %v6898 = vpack.c.b16 %v6538, %v6526
    %v6899 = vpack.c.b16 %v6539, %v6527
    %v6900 = vpack.c.b16 %v6540, %v6528
    %v6901 = vpack.c.b16 %v6541, %v6529
    %v6902 = vpack.c.b16 %v6542, %v6530
    %v6903 = vpack.c.b16 %v6543, %v6531
    %v6904 = vpack.c.b16 %v6544, %v6532
    %v6905 = vpack.c.b16 %v6557, %v6545
    %v6906 = vpack.c.b16 %v6558, %v6546
    %v6907 = vpack.c.b16 %v6559, %v6547
    %v6908 = vpack.c.b16 %v6560, %v6548
    %v6909 = vpack.c.b16 %v6561, %v6549
    %v6910 = vpack.c.b16 %v6562, %v6550
    %v6911 = vpack.c.b16 %v6563, %v6551
    %v6912 = vpack.c.b16 %v6564, %v6552
    %v6913 = vpack.c.b16 %v6565, %v6553
    %v6914 = vpack.c.b16 %v6566, %v6554
    %v6915 = vpack.c.b16 %v6567, %v6555
    %v6916 = vpack.c.b16 %v6568, %v6556
    %v6917 = vpack.c.b16 %v6581, %v6569
    %v6918 = vpack.c.b16 %v6582, %v6570
    %v6919 = vpack.c.b16 %v6583, %v6571
    %v6920 = vpack.c.b16 %v6584, %v6572
    %v6921 = vpack.c.b16 %v6585, %v6573
    %v6922 = vpack.c.b16 %v6586, %v6574
    %v6923 = vpack.c.b16 %v6587, %v6575
    %v6924 = vpack.c.b16 %v6588, %v6576
    %v6925 = vpack.c.b16 %v6589, %v6577
    %v6926 = vpack.c.b16 %v6590, %v6578
    %v6927 = vpack.c.b16 %v6591, %v6579
    %v6928 = vpack.c.b16 %v6592, %v6580
    %v6929 = vpack.c.b16 %v6605, %v6593
    %v6930 = vpack.c.b16 %v6606, %v6594
    %v6931 = vpack.c.b16 %v6607, %v6595
    %v6932 = vpack.c.b16 %v6608, %v6596
    %v6933 = vpack.c.b16 %v6609, %v6597
    %v6934 = vpack.c.b16 %v6610, %v6598
    %v6935 = vpack.c.b16 %v6611, %v6599
    %v6936 = vpack.c.b16 %v6612, %v6600
    %v6937 = vpack.c.b16 %v6613, %v6601
    %v6938 = vpack.c.b16 %v6614, %v6602
    %v6939 = vpack.c.b16 %v6615, %v6603
    %v6940 = vpack.c.b16 %v6616, %v6604
    %v6941 = vpack.c.b16 %v6629, %v6617
    %v6942 = vpack.c.b16 %v6630, %v6618
    %v6943 = vpack.c.b16 %v6631, %v6619
    %v6944 = vpack.c.b16 %v6632, %v6620
    %v6945 = vpack.c.b16 %v6633, %v6621
    %v6946 = vpack.c.b16 %v6634, %v6622
    %v6947 = vpack.c.b16 %v6635, %v6623
    %v6948 = vpack.c.b16 %v6636, %v6624
    %v6949 = vpack.c.b16 %v6637, %v6625
    %v6950 = vpack.c.b16 %v6638, %v6626
    %v6951 = vpack.c.b16 %v6639, %v6627
    %v6952 = vpack.c.b16 %v6640, %v6628
    %v6953 = vpack.c.b16 %v6653, %v6641
    %v6954 = vpack.c.b16 %v6654, %v6642
    %v6955 = vpack.c.b16 %v6655, %v6643
    %v6956 = vpack.c.b16 %v6656, %v6644
    %v6957 = vpack.c.b16 %v6657, %v6645
    %v6958 = vpack.c.b16 %v6658, %v6646
    %v6959 = vpack.c.b16 %v6659, %v6647
    %v6960 = vpack.c.b16 %v6660, %v6648
    %v6961 = vpack.c.b16 %v6661, %v6649
    %v6962 = vpack.c.b16 %v6662, %v6650
    %v6963 = vpack.c.b16 %v6663, %v6651
    %v6964 = vpack.c.b16 %v6664, %v6652
    %v6965 = vpack.c.b16 %v6677, %v6665
    %v6966 = vpack.c.b16 %v6678, %v6666
    %v6967 = vpack.c.b16 %v6679, %v6667
    %v6968 = vpack.c.b16 %v6680, %v6668
    %v6969 = vpack.c.b16 %v6681, %v6669
    %v6970 = vpack.c.b16 %v6682, %v6670
    %v6971 = vpack.c.b16 %v6683, %v6671
    %v6972 = vpack.c.b16 %v6684, %v6672
    %v6973 = vpack.c.b16 %v6685, %v6673
    %v6974 = vpack.c.b16 %v6686, %v6674
    %v6975 = vpack.c.b16 %v6687, %v6675
    %v6976 = vpack.c.b16 %v6688, %v6676
    %7265 = vmatprep.subr.bf16.mxu0 %v6690
    %7266 = vmatpush1.bf16.msra.mxu0 %v6689
    %7267 = vmatprep.subr.bf16.mxu0 %v6702
    %7268 = vmatpush1.bf16.msra.mxu0 %v6701
    %7269 = vmatprep.subr.bf16.mxu0 %v6714
    %7270 = vmatpush1.bf16.msra.mxu0 %v6713
    %7271 = vmatprep.subr.bf16.mxu0 %v6726
    %7272 = vmatpush1.bf16.msra.mxu0 %v6725
    %7273 = vmatprep.subr.bf16.mxu0 %v6738
    %7274 = vmatpush1.bf16.msra.mxu0 %v6737
    %7275 = vmatprep.subr.bf16.mxu0 %v6750
    %7276 = vmatpush1.bf16.msra.mxu0 %v6749
    %7277 = vmatprep.subr.bf16.mxu0 %v6762
    %7278 = vmatpush1.bf16.msra.mxu0 %v6761
    %7279 = vmatprep.subr.bf16.mxu0 %v6774
    %7280 = vmatpush1.bf16.msra.mxu0 %v6773
    %7281 = vmatprep.subr.bf16.mxu0 %v6786
    %7282 = vmatpush1.bf16.msra.mxu0 %v6785
    %7283 = vmatprep.subr.bf16.mxu0 %v6798
    %7284 = vmatpush1.bf16.msra.mxu0 %v6797
    %7285 = vmatprep.subr.bf16.mxu0 %v6810
    %7286 = vmatpush1.bf16.msra.mxu0 %v6809
    %7287 = vmatprep.subr.bf16.mxu0 %v6822
    %7288 = vmatpush1.bf16.msra.mxu0 %v6821
    %7289 = vmatprep.subr.bf16.mxu0 %v6834
    %7290 = vmatpush1.bf16.msra.mxu0 %v6833
    %7291 = vmatprep.subr.bf16.mxu0 %v6846
    %7292 = vmatpush1.bf16.msra.mxu0 %v6845
    %7293 = vmatprep.subr.bf16.mxu0 %v6858
    %7294 = vmatpush1.bf16.msra.mxu0 %v6857
    %7295 = vmatprep.subr.bf16.mxu0 %v6870
    %7296 = vmatpush1.bf16.msra.mxu0 %v6869
    %7297 = vmatprep.mubr.bf16.mxu0 %v5471
    %7298 = vmatmul.mubr.bf16.gmra.mrb[0].mxu0 %v5470
    %v7299 = vpop.f32.mrb[0].mxu0
    %v7300 = vadd.f32 %v5768, %v7299
    %v7301 = vpop.f32.mrb[0].mxu0
    %v7302 = vadd.f32 %v5772, %v7301
    %v7303 = vpop.f32.mrb[0].mxu0
    %v7304 = vadd.f32 %v5768, %v7303
    %v7305 = vpop.f32.mrb[0].mxu0
    %v7306 = vadd.f32 %v5772, %v7305
    %7307 = vdwg.mxu0
    %7308 = vmatprep.subr.bf16.mxu0 %v6882
    %7309 = vmatpush1.bf16.msra.mxu0 %v6881
    %7310 = vmatprep.subr.bf16.mxu0 %v6894
    %7311 = vmatpush1.bf16.msra.mxu0 %v6893
    %7312 = vmatprep.subr.bf16.mxu0 %v6906
    %7313 = vmatpush1.bf16.msra.mxu0 %v6905
    %7314 = vmatprep.subr.bf16.mxu0 %v6918
    %7315 = vmatpush1.bf16.msra.mxu0 %v6917
    %7316 = vmatprep.subr.bf16.mxu0 %v6930
    %7317 = vmatpush1.bf16.msra.mxu0 %v6929
    %7318 = vmatprep.subr.bf16.mxu0 %v6942
    %7319 = vmatpush1.bf16.msra.mxu0 %v6941
    %7320 = vmatprep.subr.bf16.mxu0 %v6954
    %7321 = vmatpush1.bf16.msra.mxu0 %v6953
    %7322 = vmatprep.subr.bf16.mxu0 %v6966
    %7323 = vmatpush1.bf16.msra.mxu0 %v6965
    %7324 = vmatprep.subr.bf16.mxu0 0
    %7325 = vmatpush1.bf16.msra.mxu0 0
    %7326 = vmatprep.subr.bf16.mxu0 0
    %7327 = vmatpush1.bf16.msra.mxu0 0
    %7328 = vmatprep.subr.bf16.mxu0 0
    %7329 = vmatpush1.bf16.msra.mxu0 0
    %7330 = vmatprep.subr.bf16.mxu0 0
    %7331 = vmatpush1.bf16.msra.mxu0 0
    %7332 = vmatprep.subr.bf16.mxu0 0
    %7333 = vmatpush1.bf16.msra.mxu0 0
    %7334 = vmatprep.subr.bf16.mxu0 0
    %7335 = vmatpush1.bf16.msra.mxu0 0
    %7336 = vmatprep.subr.bf16.mxu0 0
    %7337 = vmatpush1.bf16.msra.mxu0 0
    %7338 = vmatprep.subr.bf16.mxu0 0
    %7339 = vmatpush1.bf16.msra.mxu0 0
    %7340 = vmatprep.mubr.bf16.mxu0 0
    %7341 = vmatmul.mubr.bf16.gmra.mrb[0].mxu0 %v5472
    %v7342 = vpop.f32.mrb[0].mxu0
    %v7343 = vadd.f32 %v7300, %v7342
    %v7344 = vpop.f32.mrb[0].mxu0
    %v7345 = vadd.f32 %v7302, %v7344
    %v7346 = vpop.f32.mrb[0].mxu0
    %v7347 = vadd.f32 %v7304, %v7346
    %v7348 = vpop.f32.mrb[0].mxu0
    %v7349 = vadd.f32 %v7306, %v7348
    %7350 = vdwg.mxu0
    %7351 = vmatprep.subr.bf16.mxu0 %v6692
    %7352 = vmatpush1.bf16.msra.mxu0 %v6691
    %7353 = vmatprep.subr.bf16.mxu0 %v6704
    %7354 = vmatpush1.bf16.msra.mxu0 %v6703
    %7355 = vmatprep.subr.bf16.mxu0 %v6716
    %7356 = vmatpush1.bf16.msra.mxu0 %v6715
    %7357 = vmatprep.subr.bf16.mxu0 %v6728
    %7358 = vmatpush1.bf16.msra.mxu0 %v6727
    %7359 = vmatprep.subr.bf16.mxu0 %v6740
    %7360 = vmatpush1.bf16.msra.mxu0 %v6739
    %7361 = vmatprep.subr.bf16.mxu0 %v6752
    %7362 = vmatpush1.bf16.msra.mxu0 %v6751
    %7363 = vmatprep.subr.bf16.mxu0 %v6764
    %7364 = vmatpush1.bf16.msra.mxu0 %v6763
    %7365 = vmatprep.subr.bf16.mxu0 %v6776
    %7366 = vmatpush1.bf16.msra.mxu0 %v6775
    %7367 = vmatprep.subr.bf16.mxu0 %v6788
    %7368 = vmatpush1.bf16.msra.mxu0 %v6787
    %7369 = vmatprep.subr.bf16.mxu0 %v6800
    %7370 = vmatpush1.bf16.msra.mxu0 %v6799
    %7371 = vmatprep.subr.bf16.mxu0 %v6812
    %7372 = vmatpush1.bf16.msra.mxu0 %v6811
    %7373 = vmatprep.subr.bf16.mxu0 %v6824
    %7374 = vmatpush1.bf16.msra.mxu0 %v6823
    %7375 = vmatprep.subr.bf16.mxu0 %v6836
    %7376 = vmatpush1.bf16.msra.mxu0 %v6835
    %7377 = vmatprep.subr.bf16.mxu0 %v6848
    %7378 = vmatpush1.bf16.msra.mxu0 %v6847
    %7379 = vmatprep.subr.bf16.mxu0 %v6860
    %7380 = vmatpush1.bf16.msra.mxu0 %v6859
    %7381 = vmatprep.subr.bf16.mxu0 %v6872
    %7382 = vmatpush1.bf16.msra.mxu0 %v6871
    %7383 = vmatprep.mubr.bf16.mxu0 %v5471
    %7384 = vmatmul.mubr.bf16.gmra.mrb[0].mxu0 %v5470
    %v7385 = vpop.f32.mrb[0].mxu0
    %v7386 = vadd.f32 %v5776, %v7385
    %v7387 = vpop.f32.mrb[0].mxu0
    %v7388 = vadd.f32 %v5780, %v7387
    %v7389 = vpop.f32.mrb[0].mxu0
    %v7390 = vadd.f32 %v5776, %v7389
    %v7391 = vpop.f32.mrb[0].mxu0
    %v7392 = vadd.f32 %v5780, %v7391
    %7393 = vdwg.mxu0
    %7394 = vmatprep.subr.bf16.mxu0 %v6884
    %7395 = vmatpush1.bf16.msra.mxu0 %v6883
    %7396 = vmatprep.subr.bf16.mxu0 %v6896
    %7397 = vmatpush1.bf16.msra.mxu0 %v6895
    %7398 = vmatprep.subr.bf16.mxu0 %v6908
    %7399 = vmatpush1.bf16.msra.mxu0 %v6907
    %7400 = vmatprep.subr.bf16.mxu0 %v6920
    %7401 = vmatpush1.bf16.msra.mxu0 %v6919
    %7402 = vmatprep.subr.bf16.mxu0 %v6932
    %7403 = vmatpush1.bf16.msra.mxu0 %v6931
    %7404 = vmatprep.subr.bf16.mxu0 %v6944
    %7405 = vmatpush1.bf16.msra.mxu0 %v6943
    %7406 = vmatprep.subr.bf16.mxu0 %v6956
    %7407 = vmatpush1.bf16.msra.mxu0 %v6955
    %7408 = vmatprep.subr.bf16.mxu0 %v6968
    %7409 = vmatpush1.bf16.msra.mxu0 %v6967
    %7410 = vmatprep.subr.bf16.mxu0 0
    %7411 = vmatpush1.bf16.msra.mxu0 0
    %7412 = vmatprep.subr.bf16.mxu0 0
    %7413 = vmatpush1.bf16.msra.mxu0 0
    %7414 = vmatprep.subr.bf16.mxu0 0
    %7415 = vmatpush1.bf16.msra.mxu0 0
    %7416 = vmatprep.subr.bf16.mxu0 0
    %7417 = vmatpush1.bf16.msra.mxu0 0
    %7418 = vmatprep.subr.bf16.mxu0 0
    %7419 = vmatpush1.bf16.msra.mxu0 0
    %7420 = vmatprep.subr.bf16.mxu0 0
    %7421 = vmatpush1.bf16.msra.mxu0 0
    %7422 = vmatprep.subr.bf16.mxu0 0
    %7423 = vmatpush1.bf16.msra.mxu0 0
    %7424 = vmatprep.subr.bf16.mxu0 0
    %7425 = vmatpush1.bf16.msra.mxu0 0
    %7426 = vmatprep.mubr.bf16.mxu0 0
    %7427 = vmatmul.mubr.bf16.gmra.mrb[0].mxu0 %v5472
    %v7428 = vpop.f32.mrb[0].mxu0
    %v7429 = vadd.f32 %v7386, %v7428
    %v7430 = vpop.f32.mrb[0].mxu0
    %v7431 = vadd.f32 %v7388, %v7430
    %v7432 = vpop.f32.mrb[0].mxu0
    %v7433 = vadd.f32 %v7390, %v7432
    %v7434 = vpop.f32.mrb[0].mxu0
    %v7435 = vadd.f32 %v7392, %v7434
    %7436 = vdwg.mxu0
    %7437 = vmatprep.subr.bf16.mxu0 %v6694
    %7438 = vmatpush1.bf16.msra.mxu0 %v6693
    %7439 = vmatprep.subr.bf16.mxu0 %v6706
    %7440 = vmatpush1.bf16.msra.mxu0 %v6705
    %7441 = vmatprep.subr.bf16.mxu0 %v6718
    %7442 = vmatpush1.bf16.msra.mxu0 %v6717
    %7443 = vmatprep.subr.bf16.mxu0 %v6730
    %7444 = vmatpush1.bf16.msra.mxu0 %v6729
    %7445 = vmatprep.subr.bf16.mxu0 %v6742
    %7446 = vmatpush1.bf16.msra.mxu0 %v6741
    %7447 = vmatprep.subr.bf16.mxu0 %v6754
    %7448 = vmatpush1.bf16.msra.mxu0 %v6753
    %7449 = vmatprep.subr.bf16.mxu0 %v6766
    %7450 = vmatpush1.bf16.msra.mxu0 %v6765
    %7451 = vmatprep.subr.bf16.mxu0 %v6778
    %7452 = vmatpush1.bf16.msra.mxu0 %v6777
    %7453 = vmatprep.subr.bf16.mxu0 %v6790
    %7454 = vmatpush1.bf16.msra.mxu0 %v6789
    %7455 = vmatprep.subr.bf16.mxu0 %v6802
    %7456 = vmatpush1.bf16.msra.mxu0 %v6801
    %7457 = vmatprep.subr.bf16.mxu0 %v6814
    %7458 = vmatpush1.bf16.msra.mxu0 %v6813
    %7459 = vmatprep.subr.bf16.mxu0 %v6826
    %7460 = vmatpush1.bf16.msra.mxu0 %v6825
    %7461 = vmatprep.subr.bf16.mxu0 %v6838
    %7462 = vmatpush1.bf16.msra.mxu0 %v6837
    %7463 = vmatprep.subr.bf16.mxu0 %v6850
    %7464 = vmatpush1.bf16.msra.mxu0 %v6849
    %7465 = vmatprep.subr.bf16.mxu0 %v6862
    %7466 = vmatpush1.bf16.msra.mxu0 %v6861
    %7467 = vmatprep.subr.bf16.mxu0 %v6874
    %7468 = vmatpush1.bf16.msra.mxu0 %v6873
    %7469 = vmatprep.mubr.bf16.mxu0 %v5471
    %7470 = vmatmul.mubr.bf16.gmra.mrb[0].mxu0 %v5470
    %v7471 = vpop.f32.mrb[0].mxu0
    %v7472 = vadd.f32 %v5784, %v7471
    %v7473 = vpop.f32.mrb[0].mxu0
    %v7474 = vadd.f32 %v5788, %v7473
    %v7475 = vpop.f32.mrb[0].mxu0
    %v7476 = vadd.f32 %v5784, %v7475
    %v7477 = vpop.f32.mrb[0].mxu0
    %v7478 = vadd.f32 %v5788, %v7477
    %7479 = vdwg.mxu0
    %7480 = vmatprep.subr.bf16.mxu0 %v6886
    %7481 = vmatpush1.bf16.msra.mxu0 %v6885
    %7482 = vmatprep.subr.bf16.mxu0 %v6898
    %7483 = vmatpush1.bf16.msra.mxu0 %v6897
    %7484 = vmatprep.subr.bf16.mxu0 %v6910
    %7485 = vmatpush1.bf16.msra.mxu0 %v6909
    %7486 = vmatprep.subr.bf16.mxu0 %v6922
    %7487 = vmatpush1.bf16.msra.mxu0 %v6921
    %7488 = vmatprep.subr.bf16.mxu0 %v6934
    %7489 = vmatpush1.bf16.msra.mxu0 %v6933
    %7490 = vmatprep.subr.bf16.mxu0 %v6946
    %7491 = vmatpush1.bf16.msra.mxu0 %v6945
    %7492 = vmatprep.subr.bf16.mxu0 %v6958
    %7493 = vmatpush1.bf16.msra.mxu0 %v6957
    %7494 = vmatprep.subr.bf16.mxu0 %v6970
    %7495 = vmatpush1.bf16.msra.mxu0 %v6969
    %7496 = vmatprep.subr.bf16.mxu0 0
    %7497 = vmatpush1.bf16.msra.mxu0 0
    %7498 = vmatprep.subr.bf16.mxu0 0
    %7499 = vmatpush1.bf16.msra.mxu0 0
    %7500 = vmatprep.subr.bf16.mxu0 0
    %7501 = vmatpush1.bf16.msra.mxu0 0
    %7502 = vmatprep.subr.bf16.mxu0 0
    %7503 = vmatpush1.bf16.msra.mxu0 0
    %7504 = vmatprep.subr.bf16.mxu0 0
    %7505 = vmatpush1.bf16.msra.mxu0 0
    %7506 = vmatprep.subr.bf16.mxu0 0
    %7507 = vmatpush1.bf16.msra.mxu0 0
    %7508 = vmatprep.subr.bf16.mxu0 0
    %7509 = vmatpush1.bf16.msra.mxu0 0
    %7510 = vmatprep.subr.bf16.mxu0 0
    %7511 = vmatpush1.bf16.msra.mxu0 0
    %7512 = vmatprep.mubr.bf16.mxu0 0
    %7513 = vmatmul.mubr.bf16.gmra.mrb[0].mxu0 %v5472
    %v7514 = vpop.f32.mrb[0].mxu0
    %v7515 = vadd.f32 %v7472, %v7514
    %v7516 = vpop.f32.mrb[0].mxu0
    %v7517 = vadd.f32 %v7474, %v7516
    %v7518 = vpop.f32.mrb[0].mxu0
    %v7519 = vadd.f32 %v7476, %v7518
    %v7520 = vpop.f32.mrb[0].mxu0
    %v7521 = vadd.f32 %v7478, %v7520
    %7522 = vdwg.mxu0
    %7523 = vmatprep.subr.bf16.mxu0 %v6696
    %7524 = vmatpush1.bf16.msra.mxu0 %v6695
    %7525 = vmatprep.subr.bf16.mxu0 %v6708
    %7526 = vmatpush1.bf16.msra.mxu0 %v6707
    %7527 = vmatprep.subr.bf16.mxu0 %v6720
    %7528 = vmatpush1.bf16.msra.mxu0 %v6719
    %7529 = vmatprep.subr.bf16.mxu0 %v6732
    %7530 = vmatpush1.bf16.msra.mxu0 %v6731
    %7531 = vmatprep.subr.bf16.mxu0 %v6744
    %7532 = vmatpush1.bf16.msra.mxu0 %v6743
    %7533 = vmatprep.subr.bf16.mxu0 %v6756
    %7534 = vmatpush1.bf16.msra.mxu0 %v6755
    %7535 = vmatprep.subr.bf16.mxu0 %v6768
    %7536 = vmatpush1.bf16.msra.mxu0 %v6767
    %7537 = vmatprep.subr.bf16.mxu0 %v6780
    %7538 = vmatpush1.bf16.msra.mxu0 %v6779
    %7539 = vmatprep.subr.bf16.mxu0 %v6792
    %7540 = vmatpush1.bf16.msra.mxu0 %v6791
    %7541 = vmatprep.subr.bf16.mxu0 %v6804
    %7542 = vmatpush1.bf16.msra.mxu0 %v6803
    %7543 = vmatprep.subr.bf16.mxu0 %v6816
    %7544 = vmatpush1.bf16.msra.mxu0 %v6815
    %7545 = vmatprep.subr.bf16.mxu0 %v6828
    %7546 = vmatpush1.bf16.msra.mxu0 %v6827
    %7547 = vmatprep.subr.bf16.mxu0 %v6840
    %7548 = vmatpush1.bf16.msra.mxu0 %v6839
    %7549 = vmatprep.subr.bf16.mxu0 %v6852
    %7550 = vmatpush1.bf16.msra.mxu0 %v6851
    %7551 = vmatprep.subr.bf16.mxu0 %v6864
    %7552 = vmatpush1.bf16.msra.mxu0 %v6863
    %7553 = vmatprep.subr.bf16.mxu0 %v6876
    %7554 = vmatpush1.bf16.msra.mxu0 %v6875
    %7555 = vmatprep.mubr.bf16.mxu0 %v5471
    %7556 = vmatmul.mubr.bf16.gmra.mrb[0].mxu0 %v5470
    %v7557 = vpop.f32.mrb[0].mxu0
    %v7558 = vadd.f32 %v5792, %v7557
    %v7559 = vpop.f32.mrb[0].mxu0
    %v7560 = vadd.f32 %v5796, %v7559
    %v7561 = vpop.f32.mrb[0].mxu0
    %v7562 = vadd.f32 %v5792, %v7561
    %v7563 = vpop.f32.mrb[0].mxu0
    %v7564 = vadd.f32 %v5796, %v7563
    %7565 = vdwg.mxu0
    %7566 = vmatprep.subr.bf16.mxu0 %v6888
    %7567 = vmatpush1.bf16.msra.mxu0 %v6887
    %7568 = vmatprep.subr.bf16.mxu0 %v6900
    %7569 = vmatpush1.bf16.msra.mxu0 %v6899
    %7570 = vmatprep.subr.bf16.mxu0 %v6912
    %7571 = vmatpush1.bf16.msra.mxu0 %v6911
    %7572 = vmatprep.subr.bf16.mxu0 %v6924
    %7573 = vmatpush1.bf16.msra.mxu0 %v6923
    %7574 = vmatprep.subr.bf16.mxu0 %v6936
    %7575 = vmatpush1.bf16.msra.mxu0 %v6935
    %7576 = vmatprep.subr.bf16.mxu0 %v6948
    %7577 = vmatpush1.bf16.msra.mxu0 %v6947
    %7578 = vmatprep.subr.bf16.mxu0 %v6960
    %7579 = vmatpush1.bf16.msra.mxu0 %v6959
    %7580 = vmatprep.subr.bf16.mxu0 %v6972
    %7581 = vmatpush1.bf16.msra.mxu0 %v6971
    %7582 = vmatprep.subr.bf16.mxu0 0
    %7583 = vmatpush1.bf16.msra.mxu0 0
    %7584 = vmatprep.subr.bf16.mxu0 0
    %7585 = vmatpush1.bf16.msra.mxu0 0
    %7586 = vmatprep.subr.bf16.mxu0 0
    %7587 = vmatpush1.bf16.msra.mxu0 0
    %7588 = vmatprep.subr.bf16.mxu0 0
    %7589 = vmatpush1.bf16.msra.mxu0 0
    %7590 = vmatprep.subr.bf16.mxu0 0
    %7591 = vmatpush1.bf16.msra.mxu0 0
    %7592 = vmatprep.subr.bf16.mxu0 0
    %7593 = vmatpush1.bf16.msra.mxu0 0
    %7594 = vmatprep.subr.bf16.mxu0 0
    %7595 = vmatpush1.bf16.msra.mxu0 0
    %7596 = vmatprep.subr.bf16.mxu0 0
    %7597 = vmatpush1.bf16.msra.mxu0 0
    %7598 = vmatprep.mubr.bf16.mxu0 0
    %7599 = vmatmul.mubr.bf16.gmra.mrb[0].mxu0 %v5472
    %v7600 = vpop.f32.mrb[0].mxu0
    %v7601 = vadd.f32 %v7558, %v7600
    %v7602 = vpop.f32.mrb[0].mxu0
    %v7603 = vadd.f32 %v7560, %v7602
    %v7604 = vpop.f32.mrb[0].mxu0
    %v7605 = vadd.f32 %v7562, %v7604
    %v7606 = vpop.f32.mrb[0].mxu0
    %v7607 = vadd.f32 %v7564, %v7606
    %7608 = vdwg.mxu0
    %7609 = vmatprep.subr.bf16.mxu0 %v6698
    %7610 = vmatpush1.bf16.msra.mxu0 %v6697
    %7611 = vmatprep.subr.bf16.mxu0 %v6710
    %7612 = vmatpush1.bf16.msra.mxu0 %v6709
    %7613 = vmatprep.subr.bf16.mxu0 %v6722
    %7614 = vmatpush1.bf16.msra.mxu0 %v6721
    %7615 = vmatprep.subr.bf16.mxu0 %v6734
    %7616 = vmatpush1.bf16.msra.mxu0 %v6733
    %7617 = vmatprep.subr.bf16.mxu0 %v6746
    %7618 = vmatpush1.bf16.msra.mxu0 %v6745
    %7619 = vmatprep.subr.bf16.mxu0 %v6758
    %7620 = vmatpush1.bf16.msra.mxu0 %v6757
    %7621 = vmatprep.subr.bf16.mxu0 %v6770
    %7622 = vmatpush1.bf16.msra.mxu0 %v6769
    %7623 = vmatprep.subr.bf16.mxu0 %v6782
    %7624 = vmatpush1.bf16.msra.mxu0 %v6781
    %7625 = vmatprep.subr.bf16.mxu0 %v6794
    %7626 = vmatpush1.bf16.msra.mxu0 %v6793
    %7627 = vmatprep.subr.bf16.mxu0 %v6806
    %7628 = vmatpush1.bf16.msra.mxu0 %v6805
    %7629 = vmatprep.subr.bf16.mxu0 %v6818
    %7630 = vmatpush1.bf16.msra.mxu0 %v6817
    %7631 = vmatprep.subr.bf16.mxu0 %v6830
    %7632 = vmatpush1.bf16.msra.mxu0 %v6829
    %7633 = vmatprep.subr.bf16.mxu0 %v6842
    %7634 = vmatpush1.bf16.msra.mxu0 %v6841
    %7635 = vmatprep.subr.bf16.mxu0 %v6854
    %7636 = vmatpush1.bf16.msra.mxu0 %v6853
    %7637 = vmatprep.subr.bf16.mxu0 %v6866
    %7638 = vmatpush1.bf16.msra.mxu0 %v6865
    %7639 = vmatprep.subr.bf16.mxu0 %v6878
    %7640 = vmatpush1.bf16.msra.mxu0 %v6877
    %7641 = vmatprep.mubr.bf16.mxu0 %v5471
    %7642 = vmatmul.mubr.bf16.gmra.mrb[0].mxu0 %v5470
    %v7643 = vpop.f32.mrb[0].mxu0
    %v7644 = vadd.f32 %v5800, %v7643
    %v7645 = vpop.f32.mrb[0].mxu0
    %v7646 = vadd.f32 %v5804, %v7645
    %v7647 = vpop.f32.mrb[0].mxu0
    %v7648 = vadd.f32 %v5800, %v7647
    %v7649 = vpop.f32.mrb[0].mxu0
    %v7650 = vadd.f32 %v5804, %v7649
    %7651 = vdwg.mxu0
    %7652 = vmatprep.subr.bf16.mxu0 %v6890
    %7653 = vmatpush1.bf16.msra.mxu0 %v6889
    %7654 = vmatprep.subr.bf16.mxu0 %v6902
    %7655 = vmatpush1.bf16.msra.mxu0 %v6901
    %7656 = vmatprep.subr.bf16.mxu0 %v6914
    %7657 = vmatpush1.bf16.msra.mxu0 %v6913
    %7658 = vmatprep.subr.bf16.mxu0 %v6926
    %7659 = vmatpush1.bf16.msra.mxu0 %v6925
    %7660 = vmatprep.subr.bf16.mxu0 %v6938
    %7661 = vmatpush1.bf16.msra.mxu0 %v6937
    %7662 = vmatprep.subr.bf16.mxu0 %v6950
    %7663 = vmatpush1.bf16.msra.mxu0 %v6949
    %7664 = vmatprep.subr.bf16.mxu0 %v6962
    %7665 = vmatpush1.bf16.msra.mxu0 %v6961
    %7666 = vmatprep.subr.bf16.mxu0 %v6974
    %7667 = vmatpush1.bf16.msra.mxu0 %v6973
    %7668 = vmatprep.subr.bf16.mxu0 0
    %7669 = vmatpush1.bf16.msra.mxu0 0
    %7670 = vmatprep.subr.bf16.mxu0 0
    %7671 = vmatpush1.bf16.msra.mxu0 0
    %7672 = vmatprep.subr.bf16.mxu0 0
    %7673 = vmatpush1.bf16.msra.mxu0 0
    %7674 = vmatprep.subr.bf16.mxu0 0
    %7675 = vmatpush1.bf16.msra.mxu0 0
    %7676 = vmatprep.subr.bf16.mxu0 0
    %7677 = vmatpush1.bf16.msra.mxu0 0
    %7678 = vmatprep.subr.bf16.mxu0 0
    %7679 = vmatpush1.bf16.msra.mxu0 0
    %7680 = vmatprep.subr.bf16.mxu0 0
    %7681 = vmatpush1.bf16.msra.mxu0 0
    %7682 = vmatprep.subr.bf16.mxu0 0
    %7683 = vmatpush1.bf16.msra.mxu0 0
    %7684 = vmatprep.mubr.bf16.mxu0 0
    %7685 = vmatmul.mubr.bf16.gmra.mrb[0].mxu0 %v5472
    %v7686 = vpop.f32.mrb[0].mxu0
    %v7687 = vadd.f32 %v7644, %v7686
    %v7688 = vpop.f32.mrb[0].mxu0
    %v7689 = vadd.f32 %v7646, %v7688
    %v7690 = vpop.f32.mrb[0].mxu0
    %v7691 = vadd.f32 %v7648, %v7690
    %v7692 = vpop.f32.mrb[0].mxu0
    %v7693 = vadd.f32 %v7650, %v7692
    %7694 = vdwg.mxu0
    %7695 = vmatprep.subr.bf16.mxu0 %v6700
    %7696 = vmatpush1.bf16.msra.mxu0 %v6699
    %7697 = vmatprep.subr.bf16.mxu0 %v6712
    %7698 = vmatpush1.bf16.msra.mxu0 %v6711
    %7699 = vmatprep.subr.bf16.mxu0 %v6724
    %7700 = vmatpush1.bf16.msra.mxu0 %v6723
    %7701 = vmatprep.subr.bf16.mxu0 %v6736
    %7702 = vmatpush1.bf16.msra.mxu0 %v6735
    %7703 = vmatprep.subr.bf16.mxu0 %v6748
    %7704 = vmatpush1.bf16.msra.mxu0 %v6747
    %7705 = vmatprep.subr.bf16.mxu0 %v6760
    %7706 = vmatpush1.bf16.msra.mxu0 %v6759
    %7707 = vmatprep.subr.bf16.mxu0 %v6772
    %7708 = vmatpush1.bf16.msra.mxu0 %v6771
    %7709 = vmatprep.subr.bf16.mxu0 %v6784
    %7710 = vmatpush1.bf16.msra.mxu0 %v6783
    %7711 = vmatprep.subr.bf16.mxu0 %v6796
    %7712 = vmatpush1.bf16.msra.mxu0 %v6795
    %7713 = vmatprep.subr.bf16.mxu0 %v6808
    %7714 = vmatpush1.bf16.msra.mxu0 %v6807
    %7715 = vmatprep.subr.bf16.mxu0 %v6820
    %7716 = vmatpush1.bf16.msra.mxu0 %v6819
    %7717 = vmatprep.subr.bf16.mxu0 %v6832
    %7718 = vmatpush1.bf16.msra.mxu0 %v6831
    %7719 = vmatprep.subr.bf16.mxu0 %v6844
    %7720 = vmatpush1.bf16.msra.mxu0 %v6843
    %7721 = vmatprep.subr.bf16.mxu0 %v6856
    %7722 = vmatpush1.bf16.msra.mxu0 %v6855
    %7723 = vmatprep.subr.bf16.mxu0 %v6868
    %7724 = vmatpush1.bf16.msra.mxu0 %v6867
    %7725 = vmatprep.subr.bf16.mxu0 %v6880
    %7726 = vmatpush1.bf16.msra.mxu0 %v6879
    %7727 = vmatprep.mubr.bf16.mxu0 %v5471
    %7728 = vmatmul.mubr.bf16.gmra.mrb[0].mxu0 %v5470
    %v7729 = vpop.f32.mrb[0].mxu0
    %v7730 = vadd.f32 %v5808, %v7729
    %v7731 = vpop.f32.mrb[0].mxu0
    %v7732 = vadd.f32 %v5812, %v7731
    %v7733 = vpop.f32.mrb[0].mxu0
    %v7734 = vadd.f32 %v5808, %v7733
    %v7735 = vpop.f32.mrb[0].mxu0
    %v7736 = vadd.f32 %v5812, %v7735
    %7737 = vdwg.mxu0
    %7738 = vmatprep.subr.bf16.mxu0 %v6892
    %7739 = vmatpush1.bf16.msra.mxu0 %v6891
    %7740 = vmatprep.subr.bf16.mxu0 %v6904
    %7741 = vmatpush1.bf16.msra.mxu0 %v6903
    %7742 = vmatprep.subr.bf16.mxu0 %v6916
    %7743 = vmatpush1.bf16.msra.mxu0 %v6915
    %7744 = vmatprep.subr.bf16.mxu0 %v6928
    %7745 = vmatpush1.bf16.msra.mxu0 %v6927
    %7746 = vmatprep.subr.bf16.mxu0 %v6940
    %7747 = vmatpush1.bf16.msra.mxu0 %v6939
    %7748 = vmatprep.subr.bf16.mxu0 %v6952
    %7749 = vmatpush1.bf16.msra.mxu0 %v6951
    %7750 = vmatprep.subr.bf16.mxu0 %v6964
    %7751 = vmatpush1.bf16.msra.mxu0 %v6963
    %7752 = vmatprep.subr.bf16.mxu0 %v6976
    %7753 = vmatpush1.bf16.msra.mxu0 %v6975
    %7754 = vmatprep.subr.bf16.mxu0 0
    %7755 = vmatpush1.bf16.msra.mxu0 0
    %7756 = vmatprep.subr.bf16.mxu0 0
    %7757 = vmatpush1.bf16.msra.mxu0 0
    %7758 = vmatprep.subr.bf16.mxu0 0
    %7759 = vmatpush1.bf16.msra.mxu0 0
    %7760 = vmatprep.subr.bf16.mxu0 0
    %7761 = vmatpush1.bf16.msra.mxu0 0
    %7762 = vmatprep.subr.bf16.mxu0 0
    %7763 = vmatpush1.bf16.msra.mxu0 0
    %7764 = vmatprep.subr.bf16.mxu0 0
    %7765 = vmatpush1.bf16.msra.mxu0 0
    %7766 = vmatprep.subr.bf16.mxu0 0
    %7767 = vmatpush1.bf16.msra.mxu0 0
    %7768 = vmatprep.subr.bf16.mxu0 0
    %7769 = vmatpush1.bf16.msra.mxu0 0
    %7770 = vmatprep.mubr.bf16.mxu0 0
    %7771 = vmatmul.mubr.bf16.gmra.mrb[0].mxu0 %v5472
    %v7772 = vpop.f32.mrb[0].mxu0
    %v7773 = vadd.f32 %v7730, %v7772
    %v7774 = vpop.f32.mrb[0].mxu0
    %v7775 = vadd.f32 %v7732, %v7774
    %v7776 = vpop.f32.mrb[0].mxu0
    %v7777 = vadd.f32 %v7734, %v7776
    %v7778 = vpop.f32.mrb[0].mxu0
    %v7779 = vadd.f32 %v7736, %v7778
    %7780 = vdwg.mxu0
    %v7781 = vmul.f32 %v7343, 0.5
    %v7782 = vmul.f32 %v7345, 0.5
    %v7783 = vmul.f32 %v7429, 0.5
    %v7784 = vmul.f32 %v7431, 0.5
    %v7785 = vmul.f32 %v7515, 0.5
    %v7786 = vmul.f32 %v7517, 0.5
    %v7787 = vmul.f32 %v7601, 0.5
    %v7788 = vmul.f32 %v7603, 0.5
    %v7789 = vmul.f32 %v7687, 0.5
    %v7790 = vmul.f32 %v7689, 0.5
    %v7791 = vmul.f32 %v7773, 0.5
    %v7792 = vmul.f32 %v7775, 0.5
    %v7793 = vmul.f32 %v7347, 0.5
    %v7794 = vmul.f32 %v7349, 0.5
    %v7795 = vmul.f32 %v7433, 0.5
    %v7796 = vmul.f32 %v7435, 0.5
    %v7797 = vmul.f32 %v7519, 0.5
    %v7798 = vmul.f32 %v7521, 0.5
    %v7799 = vmul.f32 %v7605, 0.5
    %v7800 = vmul.f32 %v7607, 0.5
    %v7801 = vmul.f32 %v7691, 0.5
    %v7802 = vmul.f32 %v7693, 0.5
    %v7803 = vmul.f32 %v7777, 0.5
    %v7804 = vmul.f32 %v7779, 0.5
    %v7805 = vmul.f32 %v7343, 0.70710677
    %v7806 = vmul.f32 %v7345, 0.70710677
    %v7807 = vmul.f32 %v7429, 0.70710677
    %v7808 = vmul.f32 %v7431, 0.70710677
    %v7809 = vmul.f32 %v7515, 0.70710677
    %v7810 = vmul.f32 %v7517, 0.70710677
    %v7811 = vmul.f32 %v7601, 0.70710677
    %v7812 = vmul.f32 %v7603, 0.70710677
    %v7813 = vmul.f32 %v7687, 0.70710677
    %v7814 = vmul.f32 %v7689, 0.70710677
    %v7815 = vmul.f32 %v7773, 0.70710677
    %v7816 = vmul.f32 %v7775, 0.70710677
    %v7817 = vmul.f32 %v7347, 0.70710677
    %v7818 = vmul.f32 %v7349, 0.70710677
    %v7819 = vmul.f32 %v7433, 0.70710677
    %v7820 = vmul.f32 %v7435, 0.70710677
    %v7821 = vmul.f32 %v7519, 0.70710677
    %v7822 = vmul.f32 %v7521, 0.70710677
    %v7823 = vmul.f32 %v7605, 0.70710677
    %v7824 = vmul.f32 %v7607, 0.70710677
    %v7825 = vmul.f32 %v7691, 0.70710677
    %v7826 = vmul.f32 %v7693, 0.70710677
    %v7827 = vmul.f32 %v7777, 0.70710677
    %v7828 = vmul.f32 %v7779, 0.70710677
    %v7829 = verf.f32.pop %v7805
    %v7830 = verf.f32.pop %v7806
    %v7831 = verf.f32.pop %v7807
    %v7832 = verf.f32.pop %v7808
    %v7833 = verf.f32.pop %v7809
    %v7834 = verf.f32.pop %v7810
    %v7835 = verf.f32.pop %v7811
    %v7836 = verf.f32.pop %v7812
    %v7837 = verf.f32.pop %v7813
    %v7838 = verf.f32.pop %v7814
    %v7839 = verf.f32.pop %v7815
    %v7840 = verf.f32.pop %v7816
    %v7841 = verf.f32.pop %v7817
    %v7842 = verf.f32.pop %v7818
    %v7843 = verf.f32.pop %v7819
    %v7844 = verf.f32.pop %v7820
    %v7845 = verf.f32.pop %v7821
    %v7846 = verf.f32.pop %v7822
    %v7847 = verf.f32.pop %v7823
    %v7848 = verf.f32.pop %v7824
    %v7849 = verf.f32.pop %v7825
    %v7850 = verf.f32.pop %v7826
    %v7851 = verf.f32.pop %v7827
    %v7852 = verf.f32.pop %v7828
    %v7853 = vadd.f32 %v7829, 1.0
    %v7854 = vadd.f32 %v7830, 1.0
    %v7855 = vadd.f32 %v7831, 1.0
    %v7856 = vadd.f32 %v7832, 1.0
    %v7857 = vadd.f32 %v7833, 1.0
    %v7858 = vadd.f32 %v7834, 1.0
    %v7859 = vadd.f32 %v7835, 1.0
    %v7860 = vadd.f32 %v7836, 1.0
    %v7861 = vadd.f32 %v7837, 1.0
    %v7862 = vadd.f32 %v7838, 1.0
    %v7863 = vadd.f32 %v7839, 1.0
    %v7864 = vadd.f32 %v7840, 1.0
    %v7865 = vadd.f32 %v7841, 1.0
    %v7866 = vadd.f32 %v7842, 1.0
    %v7867 = vadd.f32 %v7843, 1.0
    %v7868 = vadd.f32 %v7844, 1.0
    %v7869 = vadd.f32 %v7845, 1.0
    %v7870 = vadd.f32 %v7846, 1.0
    %v7871 = vadd.f32 %v7847, 1.0
    %v7872 = vadd.f32 %v7848, 1.0
    %v7873 = vadd.f32 %v7849, 1.0
    %v7874 = vadd.f32 %v7850, 1.0
    %v7875 = vadd.f32 %v7851, 1.0
    %v7876 = vadd.f32 %v7852, 1.0
    %v7877 = vmul.f32 %v7781, %v7853
    %v7878 = vmul.f32 %v7782, %v7854
    %v7879 = vmul.f32 %v7783, %v7855
    %v7880 = vmul.f32 %v7784, %v7856
    %v7881 = vmul.f32 %v7785, %v7857
    %v7882 = vmul.f32 %v7786, %v7858
    %v7883 = vmul.f32 %v7787, %v7859
    %v7884 = vmul.f32 %v7788, %v7860
    %v7885 = vmul.f32 %v7789, %v7861
    %v7886 = vmul.f32 %v7790, %v7862
    %v7887 = vmul.f32 %v7791, %v7863
    %v7888 = vmul.f32 %v7792, %v7864
    %v7889 = vmul.f32 %v7793, %v7865
    %v7890 = vmul.f32 %v7794, %v7866
    %v7891 = vmul.f32 %v7795, %v7867
    %v7892 = vmul.f32 %v7796, %v7868
    %v7893 = vmul.f32 %v7797, %v7869
    %v7894 = vmul.f32 %v7798, %v7870
    %v7895 = vmul.f32 %v7799, %v7871
    %v7896 = vmul.f32 %v7800, %v7872
    %v7897 = vmul.f32 %v7801, %v7873
    %v7898 = vmul.f32 %v7802, %v7874
    %v7899 = vmul.f32 %v7803, %v7875
    %v7900 = vmul.f32 %v7804, %v7876
    %v7901 = vpack.c.bf16 %v7889, %v7877
    %v7902 = vpack.c.bf16 %v7890, %v7878
    %v7903 = vpack.c.bf16 %v7891, %v7879
    %v7904 = vpack.c.bf16 %v7892, %v7880
    %v7905 = vpack.c.bf16 %v7893, %v7881
    %v7906 = vpack.c.bf16 %v7894, %v7882
    %v7907 = vpack.c.bf16 %v7895, %v7883
    %v7908 = vpack.c.bf16 %v7896, %v7884
    %v7909 = vpack.c.bf16 %v7897, %v7885
    %v7910 = vpack.c.bf16 %v7898, %v7886
    %v7911 = vpack.c.bf16 %v7899, %v7887
    %v7912 = vpack.c.bf16 %v7900, %v7888
    %v7913 = vld [vmem:[#allocation10] sm:$0xff]
    %v7914 = vld [vmem:[#allocation10 + $0x8] sm:$0xf]
    %v7915 = vld [vmem:[#allocation10 + $0xc] sm:$0xff]
    %v7916 = vld [vmem:[#allocation10 + $0x14] sm:$0xf]
    %v7917 = vld [vmem:[#allocation10 + $0x18] sm:$0xff]
    %v7918 = vld [vmem:[#allocation10 + $0x20] sm:$0xf]
    %v7919 = vld [vmem:[#allocation10 + $0x24] sm:$0xff]
    %v7920 = vld [vmem:[#allocation10 + $0x2c] sm:$0xf]
    %v7921 = vld [vmem:[#allocation10 + $0x30] sm:$0xff]
    %v7922 = vld [vmem:[#allocation10 + $0x38] sm:$0xf]
    %v7923 = vld [vmem:[#allocation10 + $0x3c] sm:$0xff]
    %v7924 = vld [vmem:[#allocation10 + $0x44] sm:$0xf]
    %v7925 = vld [vmem:[#allocation10 + $0x48] sm:$0xff]
    %v7926 = vld [vmem:[#allocation10 + $0x50] sm:$0xf]
    %v7927 = vld [vmem:[#allocation10 + $0x54] sm:$0xff]
    %v7928 = vld [vmem:[#allocation10 + $0x5c] sm:$0xf]
    %v7929 = vld [vmem:[#allocation10 + $0x60] sm:$0xff]
    %v7930 = vld [vmem:[#allocation10 + $0x68] sm:$0xf]
    %v7931 = vld [vmem:[#allocation10 + $0x6c] sm:$0xff]
    %v7932 = vld [vmem:[#allocation10 + $0x74] sm:$0xf]
    %v7933 = vld [vmem:[#allocation10 + $0x78] sm:$0xff]
    %v7934 = vld [vmem:[#allocation10 + $0x80] sm:$0xf]
    %v7935 = vld [vmem:[#allocation10 + $0x84] sm:$0xff]
    %v7936 = vld [vmem:[#allocation10 + $0x8c] sm:$0xf]
    %v7937 = vld [vmem:[#allocation10 + $0x90] sm:$0xff]
    %v7938 = vld [vmem:[#allocation10 + $0x98] sm:$0xf]
    %v7939 = vld [vmem:[#allocation10 + $0x9c] sm:$0xff]
    %v7940 = vld [vmem:[#allocation10 + $0xa4] sm:$0xf]
    %v7941 = vld [vmem:[#allocation10 + $0xa8] sm:$0xff]
    %v7942 = vld [vmem:[#allocation10 + $0xb0] sm:$0xf]
    %v7943 = vld [vmem:[#allocation10 + $0xb4] sm:$0xff]
    %v7944 = vld [vmem:[#allocation10 + $0xbc] sm:$0xf]
    %v7945 = vld [vmem:[#allocation10 + $0xc0] sm:$0xff]
    %v7946 = vld [vmem:[#allocation10 + $0xc8] sm:$0xf]
    %v7947 = vld [vmem:[#allocation10 + $0xcc] sm:$0xff]
    %v7948 = vld [vmem:[#allocation10 + $0xd4] sm:$0xf]
    %v7949 = vld [vmem:[#allocation10 + $0xd8] sm:$0xff]
    %v7950 = vld [vmem:[#allocation10 + $0xe0] sm:$0xf]
    %v7951 = vld [vmem:[#allocation10 + $0xe4] sm:$0xff]
    %v7952 = vld [vmem:[#allocation10 + $0xec] sm:$0xf]
    %v7953 = vld [vmem:[#allocation10 + $0xf0] sm:$0xff]
    %v7954 = vld [vmem:[#allocation10 + $0xf8] sm:$0xf]
    %v7955 = vld [vmem:[#allocation10 + $0xfc] sm:$0xff]
    %v7956 = vld [vmem:[#allocation10 + $0x104] sm:$0xf]
    %v7957 = vld [vmem:[#allocation10 + $0x108] sm:$0xff]
    %v7958 = vld [vmem:[#allocation10 + $0x110] sm:$0xf]
    %v7959 = vld [vmem:[#allocation10 + $0x114] sm:$0xff]
    %v7960 = vld [vmem:[#allocation10 + $0x11c] sm:$0xf]
    %v7961 = vld [vmem:[#allocation10 + $0x120] sm:$0xff]
    %v7962 = vld [vmem:[#allocation10 + $0x128] sm:$0xf]
    %v7963 = vld [vmem:[#allocation10 + $0x12c] sm:$0xff]
    %v7964 = vld [vmem:[#allocation10 + $0x134] sm:$0xf]
    %v7965 = vld [vmem:[#allocation10 + $0x138] sm:$0xff]
    %v7966 = vld [vmem:[#allocation10 + $0x140] sm:$0xf]
    %v7967 = vld [vmem:[#allocation10 + $0x144] sm:$0xff]
    %v7968 = vld [vmem:[#allocation10 + $0x14c] sm:$0xf]
    %v7969 = vld [vmem:[#allocation10 + $0x150] sm:$0xff]
    %v7970 = vld [vmem:[#allocation10 + $0x158] sm:$0xf]
    %v7971 = vld [vmem:[#allocation10 + $0x15c] sm:$0xff]
    %v7972 = vld [vmem:[#allocation10 + $0x164] sm:$0xf]
    %v7973 = vld [vmem:[#allocation10 + $0x168] sm:$0xff]
    %v7974 = vld [vmem:[#allocation10 + $0x170] sm:$0xf]
    %v7975 = vld [vmem:[#allocation10 + $0x174] sm:$0xff]
    %v7976 = vld [vmem:[#allocation10 + $0x17c] sm:$0xf]
    %v7977 = vld [vmem:[#allocation10 + $0x180] sm:$0xff]
    %v7978 = vld [vmem:[#allocation10 + $0x188] sm:$0xf]
    %v7979 = vld [vmem:[#allocation10 + $0x18c] sm:$0xff]
    %v7980 = vld [vmem:[#allocation10 + $0x194] sm:$0xf]
    %v7981 = vld [vmem:[#allocation10 + $0x198] sm:$0xff]
    %v7982 = vld [vmem:[#allocation10 + $0x1a0] sm:$0xf]
    %v7983 = vld [vmem:[#allocation10 + $0x1a4] sm:$0xff]
    %v7984 = vld [vmem:[#allocation10 + $0x1ac] sm:$0xf]
    %v7985 = vld [vmem:[#allocation10 + $0x1b0] sm:$0xff]
    %v7986 = vld [vmem:[#allocation10 + $0x1b8] sm:$0xf]
    %v7987 = vld [vmem:[#allocation10 + $0x1bc] sm:$0xff]
    %v7988 = vld [vmem:[#allocation10 + $0x1c4] sm:$0xf]
    %v7989 = vld [vmem:[#allocation10 + $0x1c8] sm:$0xff]
    %v7990 = vld [vmem:[#allocation10 + $0x1d0] sm:$0xf]
    %v7991 = vld [vmem:[#allocation10 + $0x1d4] sm:$0xff]
    %v7992 = vld [vmem:[#allocation10 + $0x1dc] sm:$0xf]
    %v7993 = vld [vmem:[#allocation10 + $0x1e0] sm:$0xff]
    %v7994 = vld [vmem:[#allocation10 + $0x1e8] sm:$0xf]
    %v7995 = vld [vmem:[#allocation10 + $0x1ec] sm:$0xff]
    %v7996 = vld [vmem:[#allocation10 + $0x1f4] sm:$0xf]
    %v7997 = vld [vmem:[#allocation10 + $0x1f8] sm:$0xff]
    %v7998 = vld [vmem:[#allocation10 + $0x200] sm:$0xf]
    %v7999 = vld [vmem:[#allocation10 + $0x204] sm:$0xff]
    %v8000 = vld [vmem:[#allocation10 + $0x20c] sm:$0xf]
    %v8001 = vld [vmem:[#allocation10 + $0x210] sm:$0xff]
    %v8002 = vld [vmem:[#allocation10 + $0x218] sm:$0xf]
    %v8003 = vld [vmem:[#allocation10 + $0x21c] sm:$0xff]
    %v8004 = vld [vmem:[#allocation10 + $0x224] sm:$0xf]
    %v8005 = vld [vmem:[#allocation10 + $0x228] sm:$0xff]
    %v8006 = vld [vmem:[#allocation10 + $0x230] sm:$0xf]
    %v8007 = vld [vmem:[#allocation10 + $0x234] sm:$0xff]
    %v8008 = vld [vmem:[#allocation10 + $0x23c] sm:$0xf]
    %v8009 = vld [vmem:[#allocation10 + $0x240] sm:$0xff]
    %v8010 = vld [vmem:[#allocation10 + $0x248] sm:$0xf]
    %v8011 = vld [vmem:[#allocation10 + $0x24c] sm:$0xff]
    %v8012 = vld [vmem:[#allocation10 + $0x254] sm:$0xf]
    %v8013 = vld [vmem:[#allocation10 + $0x258] sm:$0xff]
    %v8014 = vld [vmem:[#allocation10 + $0x260] sm:$0xf]
    %v8015 = vld [vmem:[#allocation10 + $0x264] sm:$0xff]
    %v8016 = vld [vmem:[#allocation10 + $0x26c] sm:$0xf]
    %v8017 = vld [vmem:[#allocation10 + $0x270] sm:$0xff]
    %v8018 = vld [vmem:[#allocation10 + $0x278] sm:$0xf]
    %v8019 = vld [vmem:[#allocation10 + $0x27c] sm:$0xff]
    %v8020 = vld [vmem:[#allocation10 + $0x284] sm:$0xf]
    %v8021 = vld [vmem:[#allocation10 + $0x288] sm:$0xff]
    %v8022 = vld [vmem:[#allocation10 + $0x290] sm:$0xf]
    %v8023 = vld [vmem:[#allocation10 + $0x294] sm:$0xff]
    %v8024 = vld [vmem:[#allocation10 + $0x29c] sm:$0xf]
    %v8025 = vld [vmem:[#allocation10 + $0x2a0] sm:$0xff]
    %v8026 = vld [vmem:[#allocation10 + $0x2a8] sm:$0xf]
    %v8027 = vld [vmem:[#allocation10 + $0x2ac] sm:$0xff]
    %v8028 = vld [vmem:[#allocation10 + $0x2b4] sm:$0xf]
    %v8029 = vld [vmem:[#allocation10 + $0x2b8] sm:$0xff]
    %v8030 = vld [vmem:[#allocation10 + $0x2c0] sm:$0xf]
    %v8031 = vld [vmem:[#allocation10 + $0x2c4] sm:$0xff]
    %v8032 = vld [vmem:[#allocation10 + $0x2cc] sm:$0xf]
    %v8033 = vld [vmem:[#allocation10 + $0x2d0] sm:$0xff]
    %v8034 = vld [vmem:[#allocation10 + $0x2d8] sm:$0xf]
    %v8035 = vld [vmem:[#allocation10 + $0x2dc] sm:$0xff]
    %v8036 = vld [vmem:[#allocation10 + $0x2e4] sm:$0xf]
    %v8037 = vld [vmem:[#allocation10 + $0x2e8] sm:$0xff]
    %v8038 = vld [vmem:[#allocation10 + $0x2f0] sm:$0xf]
    %v8039 = vld [vmem:[#allocation10 + $0x2f4] sm:$0xff]
    %v8040 = vld [vmem:[#allocation10 + $0x2fc] sm:$0xf]
    %v8041 = vld [vmem:[#allocation10 + $0x300] sm:$0xff]
    %v8042 = vld [vmem:[#allocation10 + $0x308] sm:$0xf]
    %v8043 = vld [vmem:[#allocation10 + $0x30c] sm:$0xff]
    %v8044 = vld [vmem:[#allocation10 + $0x314] sm:$0xf]
    %v8045 = vld [vmem:[#allocation10 + $0x318] sm:$0xff]
    %v8046 = vld [vmem:[#allocation10 + $0x320] sm:$0xf]
    %v8047 = vld [vmem:[#allocation10 + $0x324] sm:$0xff]
    %v8048 = vld [vmem:[#allocation10 + $0x32c] sm:$0xf]
    %v8049 = vld [vmem:[#allocation10 + $0x330] sm:$0xff]
    %v8050 = vld [vmem:[#allocation10 + $0x338] sm:$0xf]
    %v8051 = vld [vmem:[#allocation10 + $0x33c] sm:$0xff]
    %v8052 = vld [vmem:[#allocation10 + $0x344] sm:$0xf]
    %v8053 = vld [vmem:[#allocation10 + $0x348] sm:$0xff]
    %v8054 = vld [vmem:[#allocation10 + $0x350] sm:$0xf]
    %v8055 = vld [vmem:[#allocation10 + $0x354] sm:$0xff]
    %v8056 = vld [vmem:[#allocation10 + $0x35c] sm:$0xf]
    %v8057 = vld [vmem:[#allocation10 + $0x360] sm:$0xff]
    %v8058 = vld [vmem:[#allocation10 + $0x368] sm:$0xf]
    %v8059 = vld [vmem:[#allocation10 + $0x36c] sm:$0xff]
    %v8060 = vld [vmem:[#allocation10 + $0x374] sm:$0xf]
    %v8061 = vld [vmem:[#allocation10 + $0x378] sm:$0xff]
    %v8062 = vld [vmem:[#allocation10 + $0x380] sm:$0xf]
    %v8063 = vld [vmem:[#allocation10 + $0x384] sm:$0xff]
    %v8064 = vld [vmem:[#allocation10 + $0x38c] sm:$0xf]
    %v8065 = vld [vmem:[#allocation10 + $0x390] sm:$0xff]
    %v8066 = vld [vmem:[#allocation10 + $0x398] sm:$0xf]
    %v8067 = vld [vmem:[#allocation10 + $0x39c] sm:$0xff]
    %v8068 = vld [vmem:[#allocation10 + $0x3a4] sm:$0xf]
    %v8069 = vld [vmem:[#allocation10 + $0x3a8] sm:$0xff]
    %v8070 = vld [vmem:[#allocation10 + $0x3b0] sm:$0xf]
    %v8071 = vld [vmem:[#allocation10 + $0x3b4] sm:$0xff]
    %v8072 = vld [vmem:[#allocation10 + $0x3bc] sm:$0xf]
    %v8073 = vld [vmem:[#allocation10 + $0x3c0] sm:$0xff]
    %v8074 = vld [vmem:[#allocation10 + $0x3c8] sm:$0xf]
    %v8075 = vld [vmem:[#allocation10 + $0x3cc] sm:$0xff]
    %v8076 = vld [vmem:[#allocation10 + $0x3d4] sm:$0xf]
    %v8077 = vld [vmem:[#allocation10 + $0x3d8] sm:$0xff]
    %v8078 = vld [vmem:[#allocation10 + $0x3e0] sm:$0xf]
    %v8079 = vld [vmem:[#allocation10 + $0x3e4] sm:$0xff]
    %v8080 = vld [vmem:[#allocation10 + $0x3ec] sm:$0xf]
    %v8081 = vld [vmem:[#allocation10 + $0x3f0] sm:$0xff]
    %v8082 = vld [vmem:[#allocation10 + $0x3f8] sm:$0xf]
    %v8083 = vld [vmem:[#allocation10 + $0x3fc] sm:$0xff]
    %v8084 = vld [vmem:[#allocation10 + $0x404] sm:$0xf]
    %v8085 = vld [vmem:[#allocation10 + $0x408] sm:$0xff]
    %v8086 = vld [vmem:[#allocation10 + $0x410] sm:$0xf]
    %v8087 = vld [vmem:[#allocation10 + $0x414] sm:$0xff]
    %v8088 = vld [vmem:[#allocation10 + $0x41c] sm:$0xf]
    %v8089 = vld [vmem:[#allocation10 + $0x420] sm:$0xff]
    %v8090 = vld [vmem:[#allocation10 + $0x428] sm:$0xf]
    %v8091 = vld [vmem:[#allocation10 + $0x42c] sm:$0xff]
    %v8092 = vld [vmem:[#allocation10 + $0x434] sm:$0xf]
    %v8093 = vld [vmem:[#allocation10 + $0x438] sm:$0xff]
    %v8094 = vld [vmem:[#allocation10 + $0x440] sm:$0xf]
    %v8095 = vld [vmem:[#allocation10 + $0x444] sm:$0xff]
    %v8096 = vld [vmem:[#allocation10 + $0x44c] sm:$0xf]
    %v8097 = vld [vmem:[#allocation10 + $0x450] sm:$0xff]
    %v8098 = vld [vmem:[#allocation10 + $0x458] sm:$0xf]
    %v8099 = vld [vmem:[#allocation10 + $0x45c] sm:$0xff]
    %v8100 = vld [vmem:[#allocation10 + $0x464] sm:$0xf]
    %v8101 = vld [vmem:[#allocation10 + $0x468] sm:$0xff]
    %v8102 = vld [vmem:[#allocation10 + $0x470] sm:$0xf]
    %v8103 = vld [vmem:[#allocation10 + $0x474] sm:$0xff]
    %v8104 = vld [vmem:[#allocation10 + $0x47c] sm:$0xf]
    %v8105 = vld [vmem:[#allocation10 + $0x480] sm:$0xff]
    %v8106 = vld [vmem:[#allocation10 + $0x488] sm:$0xf]
    %v8107 = vld [vmem:[#allocation10 + $0x48c] sm:$0xff]
    %v8108 = vld [vmem:[#allocation10 + $0x494] sm:$0xf]
    %v8109 = vld [vmem:[#allocation10 + $0x498] sm:$0xff]
    %v8110 = vld [vmem:[#allocation10 + $0x4a0] sm:$0xf]
    %v8111 = vld [vmem:[#allocation10 + $0x4a4] sm:$0xff]
    %v8112 = vld [vmem:[#allocation10 + $0x4ac] sm:$0xf]
    %v8113 = vld [vmem:[#allocation10 + $0x4b0] sm:$0xff]
    %v8114 = vld [vmem:[#allocation10 + $0x4b8] sm:$0xf]
    %v8115 = vld [vmem:[#allocation10 + $0x4bc] sm:$0xff]
    %v8116 = vld [vmem:[#allocation10 + $0x4c4] sm:$0xf]
    %v8117 = vld [vmem:[#allocation10 + $0x4c8] sm:$0xff]
    %v8118 = vld [vmem:[#allocation10 + $0x4d0] sm:$0xf]
    %v8119 = vld [vmem:[#allocation10 + $0x4d4] sm:$0xff]
    %v8120 = vld [vmem:[#allocation10 + $0x4dc] sm:$0xf]
    %v8121 = vld [vmem:[#allocation10 + $0x4e0] sm:$0xff]
    %v8122 = vld [vmem:[#allocation10 + $0x4e8] sm:$0xf]
    %v8123 = vld [vmem:[#allocation10 + $0x4ec] sm:$0xff]
    %v8124 = vld [vmem:[#allocation10 + $0x4f4] sm:$0xf]
    %v8125 = vld [vmem:[#allocation10 + $0x4f8] sm:$0xff]
    %v8126 = vld [vmem:[#allocation10 + $0x500] sm:$0xf]
    %v8127 = vld [vmem:[#allocation10 + $0x504] sm:$0xff]
    %v8128 = vld [vmem:[#allocation10 + $0x50c] sm:$0xf]
    %v8129 = vld [vmem:[#allocation10 + $0x510] sm:$0xff]
    %v8130 = vld [vmem:[#allocation10 + $0x518] sm:$0xf]
    %v8131 = vld [vmem:[#allocation10 + $0x51c] sm:$0xff]
    %v8132 = vld [vmem:[#allocation10 + $0x524] sm:$0xf]
    %v8133 = vld [vmem:[#allocation10 + $0x528] sm:$0xff]
    %v8134 = vld [vmem:[#allocation10 + $0x530] sm:$0xf]
    %v8135 = vld [vmem:[#allocation10 + $0x534] sm:$0xff]
    %v8136 = vld [vmem:[#allocation10 + $0x53c] sm:$0xf]
    %v8137 = vld [vmem:[#allocation10 + $0x540] sm:$0xff]
    %v8138 = vld [vmem:[#allocation10 + $0x548] sm:$0xf]
    %v8139 = vld [vmem:[#allocation10 + $0x54c] sm:$0xff]
    %v8140 = vld [vmem:[#allocation10 + $0x554] sm:$0xf]
    %v8141 = vld [vmem:[#allocation10 + $0x558] sm:$0xff]
    %v8142 = vld [vmem:[#allocation10 + $0x560] sm:$0xf]
    %v8143 = vld [vmem:[#allocation10 + $0x564] sm:$0xff]
    %v8144 = vld [vmem:[#allocation10 + $0x56c] sm:$0xf]
    %v8145 = vld [vmem:[#allocation10 + $0x570] sm:$0xff]
    %v8146 = vld [vmem:[#allocation10 + $0x578] sm:$0xf]
    %v8147 = vld [vmem:[#allocation10 + $0x57c] sm:$0xff]
    %v8148 = vld [vmem:[#allocation10 + $0x584] sm:$0xf]
    %v8149 = vld [vmem:[#allocation10 + $0x588] sm:$0xff]
    %v8150 = vld [vmem:[#allocation10 + $0x590] sm:$0xf]
    %v8151 = vld [vmem:[#allocation10 + $0x594] sm:$0xff]
    %v8152 = vld [vmem:[#allocation10 + $0x59c] sm:$0xf]
    %v8153 = vld [vmem:[#allocation10 + $0x5a0] sm:$0xff]
    %v8154 = vld [vmem:[#allocation10 + $0x5a8] sm:$0xf]
    %v8155 = vld [vmem:[#allocation10 + $0x5ac] sm:$0xff]
    %v8156 = vld [vmem:[#allocation10 + $0x5b4] sm:$0xf]
    %v8157 = vld [vmem:[#allocation10 + $0x5b8] sm:$0xff]
    %v8158 = vld [vmem:[#allocation10 + $0x5c0] sm:$0xf]
    %v8159 = vld [vmem:[#allocation10 + $0x5c4] sm:$0xff]
    %v8160 = vld [vmem:[#allocation10 + $0x5cc] sm:$0xf]
    %v8161 = vld [vmem:[#allocation10 + $0x5d0] sm:$0xff]
    %v8162 = vld [vmem:[#allocation10 + $0x5d8] sm:$0xf]
    %v8163 = vld [vmem:[#allocation10 + $0x5dc] sm:$0xff]
    %v8164 = vld [vmem:[#allocation10 + $0x5e4] sm:$0xf]
    %v8165 = vld [vmem:[#allocation10 + $0x5e8] sm:$0xff]
    %v8166 = vld [vmem:[#allocation10 + $0x5f0] sm:$0xf]
    %v8167 = vld [vmem:[#allocation10 + $0x5f4] sm:$0xff]
    %v8168 = vld [vmem:[#allocation10 + $0x5fc] sm:$0xf]
    %v8169 = vld [vmem:[#allocation10 + $0x600] sm:$0xff]
    %v8170 = vld [vmem:[#allocation10 + $0x608] sm:$0xf]
    %v8171 = vld [vmem:[#allocation10 + $0x60c] sm:$0xff]
    %v8172 = vld [vmem:[#allocation10 + $0x614] sm:$0xf]
    %v8173 = vld [vmem:[#allocation10 + $0x618] sm:$0xff]
    %v8174 = vld [vmem:[#allocation10 + $0x620] sm:$0xf]
    %v8175 = vld [vmem:[#allocation10 + $0x624] sm:$0xff]
    %v8176 = vld [vmem:[#allocation10 + $0x62c] sm:$0xf]
    %v8177 = vld [vmem:[#allocation10 + $0x630] sm:$0xff]
    %v8178 = vld [vmem:[#allocation10 + $0x638] sm:$0xf]
    %v8179 = vld [vmem:[#allocation10 + $0x63c] sm:$0xff]
    %v8180 = vld [vmem:[#allocation10 + $0x644] sm:$0xf]
    %v8181 = vld [vmem:[#allocation10 + $0x648] sm:$0xff]
    %v8182 = vld [vmem:[#allocation10 + $0x650] sm:$0xf]
    %v8183 = vld [vmem:[#allocation10 + $0x654] sm:$0xff]
    %v8184 = vld [vmem:[#allocation10 + $0x65c] sm:$0xf]
    %v8185 = vld [vmem:[#allocation10 + $0x660] sm:$0xff]
    %v8186 = vld [vmem:[#allocation10 + $0x668] sm:$0xf]
    %v8187 = vld [vmem:[#allocation10 + $0x66c] sm:$0xff]
    %v8188 = vld [vmem:[#allocation10 + $0x674] sm:$0xf]
    %v8189 = vld [vmem:[#allocation10 + $0x678] sm:$0xff]
    %v8190 = vld [vmem:[#allocation10 + $0x680] sm:$0xf]
    %v8191 = vld [vmem:[#allocation10 + $0x684] sm:$0xff]
    %v8192 = vld [vmem:[#allocation10 + $0x68c] sm:$0xf]
    %v8193 = vld [vmem:[#allocation10 + $0x690] sm:$0xff]
    %v8194 = vld [vmem:[#allocation10 + $0x698] sm:$0xf]
    %v8195 = vld [vmem:[#allocation10 + $0x69c] sm:$0xff]
    %v8196 = vld [vmem:[#allocation10 + $0x6a4] sm:$0xf]
    %v8197 = vld [vmem:[#allocation10 + $0x6a8] sm:$0xff]
    %v8198 = vld [vmem:[#allocation10 + $0x6b0] sm:$0xf]
    %v8199 = vld [vmem:[#allocation10 + $0x6b4] sm:$0xff]
    %v8200 = vld [vmem:[#allocation10 + $0x6bc] sm:$0xf]
    %v8201 = vld [vmem:[#allocation10 + $0x6c0] sm:$0xff]
    %v8202 = vld [vmem:[#allocation10 + $0x6c8] sm:$0xf]
    %v8203 = vld [vmem:[#allocation10 + $0x6cc] sm:$0xff]
    %v8204 = vld [vmem:[#allocation10 + $0x6d4] sm:$0xf]
    %v8205 = vld [vmem:[#allocation10 + $0x6d8] sm:$0xff]
    %v8206 = vld [vmem:[#allocation10 + $0x6e0] sm:$0xf]
    %v8207 = vld [vmem:[#allocation10 + $0x6e4] sm:$0xff]
    %v8208 = vld [vmem:[#allocation10 + $0x6ec] sm:$0xf]
    %v8209 = vld [vmem:[#allocation10 + $0x6f0] sm:$0xff]
    %v8210 = vld [vmem:[#allocation10 + $0x6f8] sm:$0xf]
    %v8211 = vld [vmem:[#allocation10 + $0x6fc] sm:$0xff]
    %v8212 = vld [vmem:[#allocation10 + $0x704] sm:$0xf]
    %v8213 = vld [vmem:[#allocation10 + $0x708] sm:$0xff]
    %v8214 = vld [vmem:[#allocation10 + $0x710] sm:$0xf]
    %v8215 = vld [vmem:[#allocation10 + $0x714] sm:$0xff]
    %v8216 = vld [vmem:[#allocation10 + $0x71c] sm:$0xf]
    %v8217 = vld [vmem:[#allocation10 + $0x720] sm:$0xff]
    %v8218 = vld [vmem:[#allocation10 + $0x728] sm:$0xf]
    %v8219 = vld [vmem:[#allocation10 + $0x72c] sm:$0xff]
    %v8220 = vld [vmem:[#allocation10 + $0x734] sm:$0xf]
    %v8221 = vld [vmem:[#allocation10 + $0x738] sm:$0xff]
    %v8222 = vld [vmem:[#allocation10 + $0x740] sm:$0xf]
    %v8223 = vld [vmem:[#allocation10 + $0x744] sm:$0xff]
    %v8224 = vld [vmem:[#allocation10 + $0x74c] sm:$0xf]
    %v8225 = vld [vmem:[#allocation10 + $0x750] sm:$0xff]
    %v8226 = vld [vmem:[#allocation10 + $0x758] sm:$0xf]
    %v8227 = vld [vmem:[#allocation10 + $0x75c] sm:$0xff]
    %v8228 = vld [vmem:[#allocation10 + $0x764] sm:$0xf]
    %v8229 = vld [vmem:[#allocation10 + $0x768] sm:$0xff]
    %v8230 = vld [vmem:[#allocation10 + $0x770] sm:$0xf]
    %v8231 = vld [vmem:[#allocation10 + $0x774] sm:$0xff]
    %v8232 = vld [vmem:[#allocation10 + $0x77c] sm:$0xf]
    %v8233 = vld [vmem:[#allocation10 + $0x780] sm:$0xff]
    %v8234 = vld [vmem:[#allocation10 + $0x788] sm:$0xf]
    %v8235 = vld [vmem:[#allocation10 + $0x78c] sm:$0xff]
    %v8236 = vld [vmem:[#allocation10 + $0x794] sm:$0xf]
    %v8237 = vld [vmem:[#allocation10 + $0x798] sm:$0xff]
    %v8238 = vld [vmem:[#allocation10 + $0x7a0] sm:$0xf]
    %v8239 = vld [vmem:[#allocation10 + $0x7a4] sm:$0xff]
    %v8240 = vld [vmem:[#allocation10 + $0x7ac] sm:$0xf]
    %v8241 = vld [vmem:[#allocation10 + $0x7b0] sm:$0xff]
    %v8242 = vld [vmem:[#allocation10 + $0x7b8] sm:$0xf]
    %v8243 = vld [vmem:[#allocation10 + $0x7bc] sm:$0xff]
    %v8244 = vld [vmem:[#allocation10 + $0x7c4] sm:$0xf]
    %v8245 = vld [vmem:[#allocation10 + $0x7c8] sm:$0xff]
    %v8246 = vld [vmem:[#allocation10 + $0x7d0] sm:$0xf]
    %v8247 = vld [vmem:[#allocation10 + $0x7d4] sm:$0xff]
    %v8248 = vld [vmem:[#allocation10 + $0x7dc] sm:$0xf]
    %v8249 = vld [vmem:[#allocation10 + $0x7e0] sm:$0xff]
    %v8250 = vld [vmem:[#allocation10 + $0x7e8] sm:$0xf]
    %v8251 = vld [vmem:[#allocation10 + $0x7ec] sm:$0xff]
    %v8252 = vld [vmem:[#allocation10 + $0x7f4] sm:$0xf]
    %v8253 = vld [vmem:[#allocation10 + $0x7f8] sm:$0xff]
    %v8254 = vld [vmem:[#allocation10 + $0x800] sm:$0xf]
    %v8255 = vld [vmem:[#allocation10 + $0x804] sm:$0xff]
    %v8256 = vld [vmem:[#allocation10 + $0x80c] sm:$0xf]
    %v8257 = vld [vmem:[#allocation10 + $0x810] sm:$0xff]
    %v8258 = vld [vmem:[#allocation10 + $0x818] sm:$0xf]
    %v8259 = vld [vmem:[#allocation10 + $0x81c] sm:$0xff]
    %v8260 = vld [vmem:[#allocation10 + $0x824] sm:$0xf]
    %v8261 = vld [vmem:[#allocation10 + $0x828] sm:$0xff]
    %v8262 = vld [vmem:[#allocation10 + $0x830] sm:$0xf]
    %v8263 = vld [vmem:[#allocation10 + $0x834] sm:$0xff]
    %v8264 = vld [vmem:[#allocation10 + $0x83c] sm:$0xf]
    %v8265 = vld [vmem:[#allocation10 + $0x840] sm:$0xff]
    %v8266 = vld [vmem:[#allocation10 + $0x848] sm:$0xf]
    %v8267 = vld [vmem:[#allocation10 + $0x84c] sm:$0xff]
    %v8268 = vld [vmem:[#allocation10 + $0x854] sm:$0xf]
    %v8269 = vld [vmem:[#allocation10 + $0x858] sm:$0xff]
    %v8270 = vld [vmem:[#allocation10 + $0x860] sm:$0xf]
    %v8271 = vld [vmem:[#allocation10 + $0x864] sm:$0xff]
    %v8272 = vld [vmem:[#allocation10 + $0x86c] sm:$0xf]
    %v8273 = vld [vmem:[#allocation10 + $0x870] sm:$0xff]
    %v8274 = vld [vmem:[#allocation10 + $0x878] sm:$0xf]
    %v8275 = vld [vmem:[#allocation10 + $0x87c] sm:$0xff]
    %v8276 = vld [vmem:[#allocation10 + $0x884] sm:$0xf]
    %v8277 = vld [vmem:[#allocation10 + $0x888] sm:$0xff]
    %v8278 = vld [vmem:[#allocation10 + $0x890] sm:$0xf]
    %v8279 = vld [vmem:[#allocation10 + $0x894] sm:$0xff]
    %v8280 = vld [vmem:[#allocation10 + $0x89c] sm:$0xf]
    %v8281 = vld [vmem:[#allocation10 + $0x8a0] sm:$0xff]
    %v8282 = vld [vmem:[#allocation10 + $0x8a8] sm:$0xf]
    %v8283 = vld [vmem:[#allocation10 + $0x8ac] sm:$0xff]
    %v8284 = vld [vmem:[#allocation10 + $0x8b4] sm:$0xf]
    %v8285 = vld [vmem:[#allocation10 + $0x8b8] sm:$0xff]
    %v8286 = vld [vmem:[#allocation10 + $0x8c0] sm:$0xf]
    %v8287 = vld [vmem:[#allocation10 + $0x8c4] sm:$0xff]
    %v8288 = vld [vmem:[#allocation10 + $0x8cc] sm:$0xf]
    %v8289 = vld [vmem:[#allocation10 + $0x8d0] sm:$0xff]
    %v8290 = vld [vmem:[#allocation10 + $0x8d8] sm:$0xf]
    %v8291 = vld [vmem:[#allocation10 + $0x8dc] sm:$0xff]
    %v8292 = vld [vmem:[#allocation10 + $0x8e4] sm:$0xf]
    %v8293 = vld [vmem:[#allocation10 + $0x8e8] sm:$0xff]
    %v8294 = vld [vmem:[#allocation10 + $0x8f0] sm:$0xf]
    %v8295 = vld [vmem:[#allocation10 + $0x8f4] sm:$0xff]
    %v8296 = vld [vmem:[#allocation10 + $0x8fc] sm:$0xf]
    %v8681 = vunpack.c.l.b16 %v7913
    %v8682 = vunpack.c.h.b16 %v7913
    %v8683 = vunpack.c.l.b16 %v7914
    %v8684 = vunpack.c.l.b16 %v7915
    %v8685 = vunpack.c.h.b16 %v7915
    %v8686 = vunpack.c.l.b16 %v7916
    %v8687 = vunpack.c.l.b16 %v7917
    %v8688 = vunpack.c.h.b16 %v7917
    %v8689 = vunpack.c.l.b16 %v7918
    %v8690 = vunpack.c.l.b16 %v7919
    %v8691 = vunpack.c.h.b16 %v7919
    %v8692 = vunpack.c.l.b16 %v7920
    %v8693 = vunpack.c.l.b16 %v7921
    %v8694 = vunpack.c.h.b16 %v7921
    %v8695 = vunpack.c.l.b16 %v7922
    %v8696 = vunpack.c.l.b16 %v7923
    %v8697 = vunpack.c.h.b16 %v7923
    %v8698 = vunpack.c.l.b16 %v7924
    %v8699 = vunpack.c.l.b16 %v7925
    %v8700 = vunpack.c.h.b16 %v7925
    %v8701 = vunpack.c.l.b16 %v7926
    %v8702 = vunpack.c.l.b16 %v7927
    %v8703 = vunpack.c.h.b16 %v7927
    %v8704 = vunpack.c.l.b16 %v7928
    %v8705 = vunpack.c.l.b16 %v7929
    %v8706 = vunpack.c.h.b16 %v7929
    %v8707 = vunpack.c.l.b16 %v7930
    %v8708 = vunpack.c.l.b16 %v7931
    %v8709 = vunpack.c.h.b16 %v7931
    %v8710 = vunpack.c.l.b16 %v7932
    %v8711 = vunpack.c.l.b16 %v7933
    %v8712 = vunpack.c.h.b16 %v7933
    %v8713 = vunpack.c.l.b16 %v7934
    %v8714 = vunpack.c.l.b16 %v7935
    %v8715 = vunpack.c.h.b16 %v7935
    %v8716 = vunpack.c.l.b16 %v7936
    %v8717 = vunpack.c.l.b16 %v7937
    %v8718 = vunpack.c.h.b16 %v7937
    %v8719 = vunpack.c.l.b16 %v7938
    %v8720 = vunpack.c.l.b16 %v7939
    %v8721 = vunpack.c.h.b16 %v7939
    %v8722 = vunpack.c.l.b16 %v7940
    %v8723 = vunpack.c.l.b16 %v7941
    %v8724 = vunpack.c.h.b16 %v7941
    %v8725 = vunpack.c.l.b16 %v7942
    %v8726 = vunpack.c.l.b16 %v7943
    %v8727 = vunpack.c.h.b16 %v7943
    %v8728 = vunpack.c.l.b16 %v7944
    %v8729 = vunpack.c.l.b16 %v7945
    %v8730 = vunpack.c.h.b16 %v7945
    %v8731 = vunpack.c.l.b16 %v7946
    %v8732 = vunpack.c.l.b16 %v7947
    %v8733 = vunpack.c.h.b16 %v7947
    %v8734 = vunpack.c.l.b16 %v7948
    %v8735 = vunpack.c.l.b16 %v7949
    %v8736 = vunpack.c.h.b16 %v7949
    %v8737 = vunpack.c.l.b16 %v7950
    %v8738 = vunpack.c.l.b16 %v7951
    %v8739 = vunpack.c.h.b16 %v7951
    %v8740 = vunpack.c.l.b16 %v7952
    %v8741 = vunpack.c.l.b16 %v7953
    %v8742 = vunpack.c.h.b16 %v7953
    %v8743 = vunpack.c.l.b16 %v7954
    %v8744 = vunpack.c.l.b16 %v7955
    %v8745 = vunpack.c.h.b16 %v7955
    %v8746 = vunpack.c.l.b16 %v7956
    %v8747 = vunpack.c.l.b16 %v7957
    %v8748 = vunpack.c.h.b16 %v7957
    %v8749 = vunpack.c.l.b16 %v7958
    %v8750 = vunpack.c.l.b16 %v7959
    %v8751 = vunpack.c.h.b16 %v7959
    %v8752 = vunpack.c.l.b16 %v7960
    %v8753 = vunpack.c.l.b16 %v7961
    %v8754 = vunpack.c.h.b16 %v7961
    %v8755 = vunpack.c.l.b16 %v7962
    %v8756 = vunpack.c.l.b16 %v7963
    %v8757 = vunpack.c.h.b16 %v7963
    %v8758 = vunpack.c.l.b16 %v7964
    %v8759 = vunpack.c.l.b16 %v7965
    %v8760 = vunpack.c.h.b16 %v7965
    %v8761 = vunpack.c.l.b16 %v7966
    %v8762 = vunpack.c.l.b16 %v7967
    %v8763 = vunpack.c.h.b16 %v7967
    %v8764 = vunpack.c.l.b16 %v7968
    %v8765 = vunpack.c.l.b16 %v7969
    %v8766 = vunpack.c.h.b16 %v7969
    %v8767 = vunpack.c.l.b16 %v7970
    %v8768 = vunpack.c.l.b16 %v7971
    %v8769 = vunpack.c.h.b16 %v7971
    %v8770 = vunpack.c.l.b16 %v7972
    %v8771 = vunpack.c.l.b16 %v7973
    %v8772 = vunpack.c.h.b16 %v7973
    %v8773 = vunpack.c.l.b16 %v7974
    %v8774 = vunpack.c.l.b16 %v7975
    %v8775 = vunpack.c.h.b16 %v7975
    %v8776 = vunpack.c.l.b16 %v7976
    %v8777 = vunpack.c.l.b16 %v7977
    %v8778 = vunpack.c.h.b16 %v7977
    %v8779 = vunpack.c.l.b16 %v7978
    %v8780 = vunpack.c.l.b16 %v7979
    %v8781 = vunpack.c.h.b16 %v7979
    %v8782 = vunpack.c.l.b16 %v7980
    %v8783 = vunpack.c.l.b16 %v7981
    %v8784 = vunpack.c.h.b16 %v7981
    %v8785 = vunpack.c.l.b16 %v7982
    %v8786 = vunpack.c.l.b16 %v7983
    %v8787 = vunpack.c.h.b16 %v7983
    %v8788 = vunpack.c.l.b16 %v7984
    %v8789 = vunpack.c.l.b16 %v7985
    %v8790 = vunpack.c.h.b16 %v7985
    %v8791 = vunpack.c.l.b16 %v7986
    %v8792 = vunpack.c.l.b16 %v7987
    %v8793 = vunpack.c.h.b16 %v7987
    %v8794 = vunpack.c.l.b16 %v7988
    %v8795 = vunpack.c.l.b16 %v7989
    %v8796 = vunpack.c.h.b16 %v7989
    %v8797 = vunpack.c.l.b16 %v7990
    %v8798 = vunpack.c.l.b16 %v7991
    %v8799 = vunpack.c.h.b16 %v7991
    %v8800 = vunpack.c.l.b16 %v7992
    %v8801 = vunpack.c.l.b16 %v7993
    %v8802 = vunpack.c.h.b16 %v7993
    %v8803 = vunpack.c.l.b16 %v7994
    %v8804 = vunpack.c.l.b16 %v7995
    %v8805 = vunpack.c.h.b16 %v7995
    %v8806 = vunpack.c.l.b16 %v7996
    %v8807 = vunpack.c.l.b16 %v7997
    %v8808 = vunpack.c.h.b16 %v7997
    %v8809 = vunpack.c.l.b16 %v7998
    %v8810 = vunpack.c.l.b16 %v7999
    %v8811 = vunpack.c.h.b16 %v7999
    %v8812 = vunpack.c.l.b16 %v8000
    %v8813 = vunpack.c.l.b16 %v8001
    %v8814 = vunpack.c.h.b16 %v8001
    %v8815 = vunpack.c.l.b16 %v8002
    %v8816 = vunpack.c.l.b16 %v8003
    %v8817 = vunpack.c.h.b16 %v8003
    %v8818 = vunpack.c.l.b16 %v8004
    %v8819 = vunpack.c.l.b16 %v8005
    %v8820 = vunpack.c.h.b16 %v8005
    %v8821 = vunpack.c.l.b16 %v8006
    %v8822 = vunpack.c.l.b16 %v8007
    %v8823 = vunpack.c.h.b16 %v8007
    %v8824 = vunpack.c.l.b16 %v8008
    %v8825 = vunpack.c.l.b16 %v8009
    %v8826 = vunpack.c.h.b16 %v8009
    %v8827 = vunpack.c.l.b16 %v8010
    %v8828 = vunpack.c.l.b16 %v8011
    %v8829 = vunpack.c.h.b16 %v8011
    %v8830 = vunpack.c.l.b16 %v8012
    %v8831 = vunpack.c.l.b16 %v8013
    %v8832 = vunpack.c.h.b16 %v8013
    %v8833 = vunpack.c.l.b16 %v8014
    %v8834 = vunpack.c.l.b16 %v8015
    %v8835 = vunpack.c.h.b16 %v8015
    %v8836 = vunpack.c.l.b16 %v8016
    %v8837 = vunpack.c.l.b16 %v8017
    %v8838 = vunpack.c.h.b16 %v8017
    %v8839 = vunpack.c.l.b16 %v8018
    %v8840 = vunpack.c.l.b16 %v8019
    %v8841 = vunpack.c.h.b16 %v8019
    %v8842 = vunpack.c.l.b16 %v8020
    %v8843 = vunpack.c.l.b16 %v8021
    %v8844 = vunpack.c.h.b16 %v8021
    %v8845 = vunpack.c.l.b16 %v8022
    %v8846 = vunpack.c.l.b16 %v8023
    %v8847 = vunpack.c.h.b16 %v8023
    %v8848 = vunpack.c.l.b16 %v8024
    %v8849 = vunpack.c.l.b16 %v8025
    %v8850 = vunpack.c.h.b16 %v8025
    %v8851 = vunpack.c.l.b16 %v8026
    %v8852 = vunpack.c.l.b16 %v8027
    %v8853 = vunpack.c.h.b16 %v8027
    %v8854 = vunpack.c.l.b16 %v8028
    %v8855 = vunpack.c.l.b16 %v8029
    %v8856 = vunpack.c.h.b16 %v8029
    %v8857 = vunpack.c.l.b16 %v8030
    %v8858 = vunpack.c.l.b16 %v8031
    %v8859 = vunpack.c.h.b16 %v8031
    %v8860 = vunpack.c.l.b16 %v8032
    %v8861 = vunpack.c.l.b16 %v8033
    %v8862 = vunpack.c.h.b16 %v8033
    %v8863 = vunpack.c.l.b16 %v8034
    %v8864 = vunpack.c.l.b16 %v8035
    %v8865 = vunpack.c.h.b16 %v8035
    %v8866 = vunpack.c.l.b16 %v8036
    %v8867 = vunpack.c.l.b16 %v8037
    %v8868 = vunpack.c.h.b16 %v8037
    %v8869 = vunpack.c.l.b16 %v8038
    %v8870 = vunpack.c.l.b16 %v8039
    %v8871 = vunpack.c.h.b16 %v8039
    %v8872 = vunpack.c.l.b16 %v8040
    %v8873 = vunpack.c.l.b16 %v8041
    %v8874 = vunpack.c.h.b16 %v8041
    %v8875 = vunpack.c.l.b16 %v8042
    %v8876 = vunpack.c.l.b16 %v8043
    %v8877 = vunpack.c.h.b16 %v8043
    %v8878 = vunpack.c.l.b16 %v8044
    %v8879 = vunpack.c.l.b16 %v8045
    %v8880 = vunpack.c.h.b16 %v8045
    %v8881 = vunpack.c.l.b16 %v8046
    %v8882 = vunpack.c.l.b16 %v8047
    %v8883 = vunpack.c.h.b16 %v8047
    %v8884 = vunpack.c.l.b16 %v8048
    %v8885 = vunpack.c.l.b16 %v8049
    %v8886 = vunpack.c.h.b16 %v8049
    %v8887 = vunpack.c.l.b16 %v8050
    %v8888 = vunpack.c.l.b16 %v8051
    %v8889 = vunpack.c.h.b16 %v8051
    %v8890 = vunpack.c.l.b16 %v8052
    %v8891 = vunpack.c.l.b16 %v8053
    %v8892 = vunpack.c.h.b16 %v8053
    %v8893 = vunpack.c.l.b16 %v8054
    %v8894 = vunpack.c.l.b16 %v8055
    %v8895 = vunpack.c.h.b16 %v8055
    %v8896 = vunpack.c.l.b16 %v8056
    %v8897 = vunpack.c.l.b16 %v8057
    %v8898 = vunpack.c.h.b16 %v8057
    %v8899 = vunpack.c.l.b16 %v8058
    %v8900 = vunpack.c.l.b16 %v8059
    %v8901 = vunpack.c.h.b16 %v8059
    %v8902 = vunpack.c.l.b16 %v8060
    %v8903 = vunpack.c.l.b16 %v8061
    %v8904 = vunpack.c.h.b16 %v8061
    %v8905 = vunpack.c.l.b16 %v8062
    %v8906 = vunpack.c.l.b16 %v8063
    %v8907 = vunpack.c.h.b16 %v8063
    %v8908 = vunpack.c.l.b16 %v8064
    %v8909 = vunpack.c.l.b16 %v8065
    %v8910 = vunpack.c.h.b16 %v8065
    %v8911 = vunpack.c.l.b16 %v8066
    %v8912 = vunpack.c.l.b16 %v8067
    %v8913 = vunpack.c.h.b16 %v8067
    %v8914 = vunpack.c.l.b16 %v8068
    %v8915 = vunpack.c.l.b16 %v8069
    %v8916 = vunpack.c.h.b16 %v8069
    %v8917 = vunpack.c.l.b16 %v8070
    %v8918 = vunpack.c.l.b16 %v8071
    %v8919 = vunpack.c.h.b16 %v8071
    %v8920 = vunpack.c.l.b16 %v8072
    %v8921 = vunpack.c.l.b16 %v8073
    %v8922 = vunpack.c.h.b16 %v8073
    %v8923 = vunpack.c.l.b16 %v8074
    %v8924 = vunpack.c.l.b16 %v8075
    %v8925 = vunpack.c.h.b16 %v8075
    %v8926 = vunpack.c.l.b16 %v8076
    %v8927 = vunpack.c.l.b16 %v8077
    %v8928 = vunpack.c.h.b16 %v8077
    %v8929 = vunpack.c.l.b16 %v8078
    %v8930 = vunpack.c.l.b16 %v8079
    %v8931 = vunpack.c.h.b16 %v8079
    %v8932 = vunpack.c.l.b16 %v8080
    %v8933 = vunpack.c.l.b16 %v8081
    %v8934 = vunpack.c.h.b16 %v8081
    %v8935 = vunpack.c.l.b16 %v8082
    %v8936 = vunpack.c.l.b16 %v8083
    %v8937 = vunpack.c.h.b16 %v8083
    %v8938 = vunpack.c.l.b16 %v8084
    %v8939 = vunpack.c.l.b16 %v8085
    %v8940 = vunpack.c.h.b16 %v8085
    %v8941 = vunpack.c.l.b16 %v8086
    %v8942 = vunpack.c.l.b16 %v8087
    %v8943 = vunpack.c.h.b16 %v8087
    %v8944 = vunpack.c.l.b16 %v8088
    %v8945 = vunpack.c.l.b16 %v8089
    %v8946 = vunpack.c.h.b16 %v8089
    %v8947 = vunpack.c.l.b16 %v8090
    %v8948 = vunpack.c.l.b16 %v8091
    %v8949 = vunpack.c.h.b16 %v8091
    %v8950 = vunpack.c.l.b16 %v8092
    %v8951 = vunpack.c.l.b16 %v8093
    %v8952 = vunpack.c.h.b16 %v8093
    %v8953 = vunpack.c.l.b16 %v8094
    %v8954 = vunpack.c.l.b16 %v8095
    %v8955 = vunpack.c.h.b16 %v8095
    %v8956 = vunpack.c.l.b16 %v8096
    %v8957 = vunpack.c.l.b16 %v8097
    %v8958 = vunpack.c.h.b16 %v8097
    %v8959 = vunpack.c.l.b16 %v8098
    %v8960 = vunpack.c.l.b16 %v8099
    %v8961 = vunpack.c.h.b16 %v8099
    %v8962 = vunpack.c.l.b16 %v8100
    %v8963 = vunpack.c.l.b16 %v8101
    %v8964 = vunpack.c.h.b16 %v8101
    %v8965 = vunpack.c.l.b16 %v8102
    %v8966 = vunpack.c.l.b16 %v8103
    %v8967 = vunpack.c.h.b16 %v8103
    %v8968 = vunpack.c.l.b16 %v8104
    %v8969 = vunpack.c.l.b16 %v8105
    %v8970 = vunpack.c.h.b16 %v8105
    %v8971 = vunpack.c.l.b16 %v8106
    %v8972 = vunpack.c.l.b16 %v8107
    %v8973 = vunpack.c.h.b16 %v8107
    %v8974 = vunpack.c.l.b16 %v8108
    %v8975 = vunpack.c.l.b16 %v8109
    %v8976 = vunpack.c.h.b16 %v8109
    %v8977 = vunpack.c.l.b16 %v8110
    %v8978 = vunpack.c.l.b16 %v8111
    %v8979 = vunpack.c.h.b16 %v8111
    %v8980 = vunpack.c.l.b16 %v8112
    %v8981 = vunpack.c.l.b16 %v8113
    %v8982 = vunpack.c.h.b16 %v8113
    %v8983 = vunpack.c.l.b16 %v8114
    %v8984 = vunpack.c.l.b16 %v8115
    %v8985 = vunpack.c.h.b16 %v8115
    %v8986 = vunpack.c.l.b16 %v8116
    %v8987 = vunpack.c.l.b16 %v8117
    %v8988 = vunpack.c.h.b16 %v8117
    %v8989 = vunpack.c.l.b16 %v8118
    %v8990 = vunpack.c.l.b16 %v8119
    %v8991 = vunpack.c.h.b16 %v8119
    %v8992 = vunpack.c.l.b16 %v8120
    %v8993 = vunpack.c.l.b16 %v8121
    %v8994 = vunpack.c.h.b16 %v8121
    %v8995 = vunpack.c.l.b16 %v8122
    %v8996 = vunpack.c.l.b16 %v8123
    %v8997 = vunpack.c.h.b16 %v8123
    %v8998 = vunpack.c.l.b16 %v8124
    %v8999 = vunpack.c.l.b16 %v8125
    %v9000 = vunpack.c.h.b16 %v8125
    %v9001 = vunpack.c.l.b16 %v8126
    %v9002 = vunpack.c.l.b16 %v8127
    %v9003 = vunpack.c.h.b16 %v8127
    %v9004 = vunpack.c.l.b16 %v8128
    %v9005 = vunpack.c.l.b16 %v8129
    %v9006 = vunpack.c.h.b16 %v8129
    %v9007 = vunpack.c.l.b16 %v8130
    %v9008 = vunpack.c.l.b16 %v8131
    %v9009 = vunpack.c.h.b16 %v8131
    %v9010 = vunpack.c.l.b16 %v8132
    %v9011 = vunpack.c.l.b16 %v8133
    %v9012 = vunpack.c.h.b16 %v8133
    %v9013 = vunpack.c.l.b16 %v8134
    %v9014 = vunpack.c.l.b16 %v8135
    %v9015 = vunpack.c.h.b16 %v8135
    %v9016 = vunpack.c.l.b16 %v8136
    %v9017 = vunpack.c.l.b16 %v8137
    %v9018 = vunpack.c.h.b16 %v8137
    %v9019 = vunpack.c.l.b16 %v8138
    %v9020 = vunpack.c.l.b16 %v8139
    %v9021 = vunpack.c.h.b16 %v8139
    %v9022 = vunpack.c.l.b16 %v8140
    %v9023 = vunpack.c.l.b16 %v8141
    %v9024 = vunpack.c.h.b16 %v8141
    %v9025 = vunpack.c.l.b16 %v8142
    %v9026 = vunpack.c.l.b16 %v8143
    %v9027 = vunpack.c.h.b16 %v8143
    %v9028 = vunpack.c.l.b16 %v8144
    %v9029 = vunpack.c.l.b16 %v8145
    %v9030 = vunpack.c.h.b16 %v8145
    %v9031 = vunpack.c.l.b16 %v8146
    %v9032 = vunpack.c.l.b16 %v8147
    %v9033 = vunpack.c.h.b16 %v8147
    %v9034 = vunpack.c.l.b16 %v8148
    %v9035 = vunpack.c.l.b16 %v8149
    %v9036 = vunpack.c.h.b16 %v8149
    %v9037 = vunpack.c.l.b16 %v8150
    %v9038 = vunpack.c.l.b16 %v8151
    %v9039 = vunpack.c.h.b16 %v8151
    %v9040 = vunpack.c.l.b16 %v8152
    %v9041 = vunpack.c.l.b16 %v8153
    %v9042 = vunpack.c.h.b16 %v8153
    %v9043 = vunpack.c.l.b16 %v8154
    %v9044 = vunpack.c.l.b16 %v8155
    %v9045 = vunpack.c.h.b16 %v8155
    %v9046 = vunpack.c.l.b16 %v8156
    %v9047 = vunpack.c.l.b16 %v8157
    %v9048 = vunpack.c.h.b16 %v8157
    %v9049 = vunpack.c.l.b16 %v8158
    %v9050 = vunpack.c.l.b16 %v8159
    %v9051 = vunpack.c.h.b16 %v8159
    %v9052 = vunpack.c.l.b16 %v8160
    %v9053 = vunpack.c.l.b16 %v8161
    %v9054 = vunpack.c.h.b16 %v8161
    %v9055 = vunpack.c.l.b16 %v8162
    %v9056 = vunpack.c.l.b16 %v8163
    %v9057 = vunpack.c.h.b16 %v8163
    %v9058 = vunpack.c.l.b16 %v8164
    %v9059 = vunpack.c.l.b16 %v8165
    %v9060 = vunpack.c.h.b16 %v8165
    %v9061 = vunpack.c.l.b16 %v8166
    %v9062 = vunpack.c.l.b16 %v8167
    %v9063 = vunpack.c.h.b16 %v8167
    %v9064 = vunpack.c.l.b16 %v8168
    %v9065 = vunpack.c.l.b16 %v8169
    %v9066 = vunpack.c.h.b16 %v8169
    %v9067 = vunpack.c.l.b16 %v8170
    %v9068 = vunpack.c.l.b16 %v8171
    %v9069 = vunpack.c.h.b16 %v8171
    %v9070 = vunpack.c.l.b16 %v8172
    %v9071 = vunpack.c.l.b16 %v8173
    %v9072 = vunpack.c.h.b16 %v8173
    %v9073 = vunpack.c.l.b16 %v8174
    %v9074 = vunpack.c.l.b16 %v8175
    %v9075 = vunpack.c.h.b16 %v8175
    %v9076 = vunpack.c.l.b16 %v8176
    %v9077 = vunpack.c.l.b16 %v8177
    %v9078 = vunpack.c.h.b16 %v8177
    %v9079 = vunpack.c.l.b16 %v8178
    %v9080 = vunpack.c.l.b16 %v8179
    %v9081 = vunpack.c.h.b16 %v8179
    %v9082 = vunpack.c.l.b16 %v8180
    %v9083 = vunpack.c.l.b16 %v8181
    %v9084 = vunpack.c.h.b16 %v8181
    %v9085 = vunpack.c.l.b16 %v8182
    %v9086 = vunpack.c.l.b16 %v8183
    %v9087 = vunpack.c.h.b16 %v8183
    %v9088 = vunpack.c.l.b16 %v8184
    %v9089 = vunpack.c.l.b16 %v8185
    %v9090 = vunpack.c.h.b16 %v8185
    %v9091 = vunpack.c.l.b16 %v8186
    %v9092 = vunpack.c.l.b16 %v8187
    %v9093 = vunpack.c.h.b16 %v8187
    %v9094 = vunpack.c.l.b16 %v8188
    %v9095 = vunpack.c.l.b16 %v8189
    %v9096 = vunpack.c.h.b16 %v8189
    %v9097 = vunpack.c.l.b16 %v8190
    %v9098 = vunpack.c.l.b16 %v8191
    %v9099 = vunpack.c.h.b16 %v8191
    %v9100 = vunpack.c.l.b16 %v8192
    %v9101 = vunpack.c.l.b16 %v8193
    %v9102 = vunpack.c.h.b16 %v8193
    %v9103 = vunpack.c.l.b16 %v8194
    %v9104 = vunpack.c.l.b16 %v8195
    %v9105 = vunpack.c.h.b16 %v8195
    %v9106 = vunpack.c.l.b16 %v8196
    %v9107 = vunpack.c.l.b16 %v8197
    %v9108 = vunpack.c.h.b16 %v8197
    %v9109 = vunpack.c.l.b16 %v8198
    %v9110 = vunpack.c.l.b16 %v8199
    %v9111 = vunpack.c.h.b16 %v8199
    %v9112 = vunpack.c.l.b16 %v8200
    %v9113 = vunpack.c.l.b16 %v8201
    %v9114 = vunpack.c.h.b16 %v8201
    %v9115 = vunpack.c.l.b16 %v8202
    %v9116 = vunpack.c.l.b16 %v8203
    %v9117 = vunpack.c.h.b16 %v8203
    %v9118 = vunpack.c.l.b16 %v8204
    %v9119 = vunpack.c.l.b16 %v8205
    %v9120 = vunpack.c.h.b16 %v8205
    %v9121 = vunpack.c.l.b16 %v8206
    %v9122 = vunpack.c.l.b16 %v8207
    %v9123 = vunpack.c.h.b16 %v8207
    %v9124 = vunpack.c.l.b16 %v8208
    %v9125 = vunpack.c.l.b16 %v8209
    %v9126 = vunpack.c.h.b16 %v8209
    %v9127 = vunpack.c.l.b16 %v8210
    %v9128 = vunpack.c.l.b16 %v8211
    %v9129 = vunpack.c.h.b16 %v8211
    %v9130 = vunpack.c.l.b16 %v8212
    %v9131 = vunpack.c.l.b16 %v8213
    %v9132 = vunpack.c.h.b16 %v8213
    %v9133 = vunpack.c.l.b16 %v8214
    %v9134 = vunpack.c.l.b16 %v8215
    %v9135 = vunpack.c.h.b16 %v8215
    %v9136 = vunpack.c.l.b16 %v8216
    %v9137 = vunpack.c.l.b16 %v8217
    %v9138 = vunpack.c.h.b16 %v8217
    %v9139 = vunpack.c.l.b16 %v8218
    %v9140 = vunpack.c.l.b16 %v8219
    %v9141 = vunpack.c.h.b16 %v8219
    %v9142 = vunpack.c.l.b16 %v8220
    %v9143 = vunpack.c.l.b16 %v8221
    %v9144 = vunpack.c.h.b16 %v8221
    %v9145 = vunpack.c.l.b16 %v8222
    %v9146 = vunpack.c.l.b16 %v8223
    %v9147 = vunpack.c.h.b16 %v8223
    %v9148 = vunpack.c.l.b16 %v8224
    %v9149 = vunpack.c.l.b16 %v8225
    %v9150 = vunpack.c.h.b16 %v8225
    %v9151 = vunpack.c.l.b16 %v8226
    %v9152 = vunpack.c.l.b16 %v8227
    %v9153 = vunpack.c.h.b16 %v8227
    %v9154 = vunpack.c.l.b16 %v8228
    %v9155 = vunpack.c.l.b16 %v8229
    %v9156 = vunpack.c.h.b16 %v8229
    %v9157 = vunpack.c.l.b16 %v8230
    %v9158 = vunpack.c.l.b16 %v8231
    %v9159 = vunpack.c.h.b16 %v8231
    %v9160 = vunpack.c.l.b16 %v8232
    %v9161 = vunpack.c.l.b16 %v8233
    %v9162 = vunpack.c.h.b16 %v8233
    %v9163 = vunpack.c.l.b16 %v8234
    %v9164 = vunpack.c.l.b16 %v8235
    %v9165 = vunpack.c.h.b16 %v8235
    %v9166 = vunpack.c.l.b16 %v8236
    %v9167 = vunpack.c.l.b16 %v8237
    %v9168 = vunpack.c.h.b16 %v8237
    %v9169 = vunpack.c.l.b16 %v8238
    %v9170 = vunpack.c.l.b16 %v8239
    %v9171 = vunpack.c.h.b16 %v8239
    %v9172 = vunpack.c.l.b16 %v8240
    %v9173 = vunpack.c.l.b16 %v8241
    %v9174 = vunpack.c.h.b16 %v8241
    %v9175 = vunpack.c.l.b16 %v8242
    %v9176 = vunpack.c.l.b16 %v8243
    %v9177 = vunpack.c.h.b16 %v8243
    %v9178 = vunpack.c.l.b16 %v8244
    %v9179 = vunpack.c.l.b16 %v8245
    %v9180 = vunpack.c.h.b16 %v8245
    %v9181 = vunpack.c.l.b16 %v8246
    %v9182 = vunpack.c.l.b16 %v8247
    %v9183 = vunpack.c.h.b16 %v8247
    %v9184 = vunpack.c.l.b16 %v8248
    %v9185 = vunpack.c.l.b16 %v8249
    %v9186 = vunpack.c.h.b16 %v8249
    %v9187 = vunpack.c.l.b16 %v8250
    %v9188 = vunpack.c.l.b16 %v8251
    %v9189 = vunpack.c.h.b16 %v8251
    %v9190 = vunpack.c.l.b16 %v8252
    %v9191 = vunpack.c.l.b16 %v8253
    %v9192 = vunpack.c.h.b16 %v8253
    %v9193 = vunpack.c.l.b16 %v8254
    %v9194 = vunpack.c.l.b16 %v8255
    %v9195 = vunpack.c.h.b16 %v8255
    %v9196 = vunpack.c.l.b16 %v8256
    %v9197 = vunpack.c.l.b16 %v8257
    %v9198 = vunpack.c.h.b16 %v8257
    %v9199 = vunpack.c.l.b16 %v8258
    %v9200 = vunpack.c.l.b16 %v8259
    %v9201 = vunpack.c.h.b16 %v8259
    %v9202 = vunpack.c.l.b16 %v8260
    %v9203 = vunpack.c.l.b16 %v8261
    %v9204 = vunpack.c.h.b16 %v8261
    %v9205 = vunpack.c.l.b16 %v8262
    %v9206 = vunpack.c.l.b16 %v8263
    %v9207 = vunpack.c.h.b16 %v8263
    %v9208 = vunpack.c.l.b16 %v8264
    %v9209 = vunpack.c.l.b16 %v8265
    %v9210 = vunpack.c.h.b16 %v8265
    %v9211 = vunpack.c.l.b16 %v8266
    %v9212 = vunpack.c.l.b16 %v8267
    %v9213 = vunpack.c.h.b16 %v8267
    %v9214 = vunpack.c.l.b16 %v8268
    %v9215 = vunpack.c.l.b16 %v8269
    %v9216 = vunpack.c.h.b16 %v8269
    %v9217 = vunpack.c.l.b16 %v8270
    %v9218 = vunpack.c.l.b16 %v8271
    %v9219 = vunpack.c.h.b16 %v8271
    %v9220 = vunpack.c.l.b16 %v8272
    %v9221 = vunpack.c.l.b16 %v8273
    %v9222 = vunpack.c.h.b16 %v8273
    %v9223 = vunpack.c.l.b16 %v8274
    %v9224 = vunpack.c.l.b16 %v8275
    %v9225 = vunpack.c.h.b16 %v8275
    %v9226 = vunpack.c.l.b16 %v8276
    %v9227 = vunpack.c.l.b16 %v8277
    %v9228 = vunpack.c.h.b16 %v8277
    %v9229 = vunpack.c.l.b16 %v8278
    %v9230 = vunpack.c.l.b16 %v8279
    %v9231 = vunpack.c.h.b16 %v8279
    %v9232 = vunpack.c.l.b16 %v8280
    %v9233 = vunpack.c.l.b16 %v8281
    %v9234 = vunpack.c.h.b16 %v8281
    %v9235 = vunpack.c.l.b16 %v8282
    %v9236 = vunpack.c.l.b16 %v8283
    %v9237 = vunpack.c.h.b16 %v8283
    %v9238 = vunpack.c.l.b16 %v8284
    %v9239 = vunpack.c.l.b16 %v8285
    %v9240 = vunpack.c.h.b16 %v8285
    %v9241 = vunpack.c.l.b16 %v8286
    %v9242 = vunpack.c.l.b16 %v8287
    %v9243 = vunpack.c.h.b16 %v8287
    %v9244 = vunpack.c.l.b16 %v8288
    %v9245 = vunpack.c.l.b16 %v8289
    %v9246 = vunpack.c.h.b16 %v8289
    %v9247 = vunpack.c.l.b16 %v8290
    %v9248 = vunpack.c.l.b16 %v8291
    %v9249 = vunpack.c.h.b16 %v8291
    %v9250 = vunpack.c.l.b16 %v8292
    %v9251 = vunpack.c.l.b16 %v8293
    %v9252 = vunpack.c.h.b16 %v8293
    %v9253 = vunpack.c.l.b16 %v8294
    %v9254 = vunpack.c.l.b16 %v8295
    %v9255 = vunpack.c.h.b16 %v8295
    %v9256 = vunpack.c.l.b16 %v8296
    %v9257 = vpack.c.b16 %v8684, %v8681
    %v9258 = vpack.c.b16 %v8685, %v8682
    %v9259 = vpack.c.b16 %v8686, %v8683
    %v9260 = vpack.c.b16 %v8690, %v8687
    %v9261 = vpack.c.b16 %v8691, %v8688
    %v9262 = vpack.c.b16 %v8692, %v8689
    %v9263 = vpack.c.b16 %v8696, %v8693
    %v9264 = vpack.c.b16 %v8697, %v8694
    %v9265 = vpack.c.b16 %v8698, %v8695
    %v9266 = vpack.c.b16 %v8702, %v8699
    %v9267 = vpack.c.b16 %v8703, %v8700
    %v9268 = vpack.c.b16 %v8704, %v8701
    %v9269 = vpack.c.b16 %v8708, %v8705
    %v9270 = vpack.c.b16 %v8709, %v8706
    %v9271 = vpack.c.b16 %v8710, %v8707
    %v9272 = vpack.c.b16 %v8714, %v8711
    %v9273 = vpack.c.b16 %v8715, %v8712
    %v9274 = vpack.c.b16 %v8716, %v8713
    %v9275 = vpack.c.b16 %v8720, %v8717
    %v9276 = vpack.c.b16 %v8721, %v8718
    %v9277 = vpack.c.b16 %v8722, %v8719
    %v9278 = vpack.c.b16 %v8726, %v8723
    %v9279 = vpack.c.b16 %v8727, %v8724
    %v9280 = vpack.c.b16 %v8728, %v8725
    %v9281 = vpack.c.b16 %v8732, %v8729
    %v9282 = vpack.c.b16 %v8733, %v8730
    %v9283 = vpack.c.b16 %v8734, %v8731
    %v9284 = vpack.c.b16 %v8738, %v8735
    %v9285 = vpack.c.b16 %v8739, %v8736
    %v9286 = vpack.c.b16 %v8740, %v8737
    %v9287 = vpack.c.b16 %v8744, %v8741
    %v9288 = vpack.c.b16 %v8745, %v8742
    %v9289 = vpack.c.b16 %v8746, %v8743
    %v9290 = vpack.c.b16 %v8750, %v8747
    %v9291 = vpack.c.b16 %v8751, %v8748
    %v9292 = vpack.c.b16 %v8752, %v8749
    %v9293 = vpack.c.b16 %v8756, %v8753
    %v9294 = vpack.c.b16 %v8757, %v8754
    %v9295 = vpack.c.b16 %v8758, %v8755
    %v9296 = vpack.c.b16 %v8762, %v8759
    %v9297 = vpack.c.b16 %v8763, %v8760
    %v9298 = vpack.c.b16 %v8764, %v8761
    %v9299 = vpack.c.b16 %v8768, %v8765
    %v9300 = vpack.c.b16 %v8769, %v8766
    %v9301 = vpack.c.b16 %v8770, %v8767
    %v9302 = vpack.c.b16 %v8774, %v8771
    %v9303 = vpack.c.b16 %v8775, %v8772
    %v9304 = vpack.c.b16 %v8776, %v8773
    %v9305 = vpack.c.b16 %v8780, %v8777
    %v9306 = vpack.c.b16 %v8781, %v8778
    %v9307 = vpack.c.b16 %v8782, %v8779
    %v9308 = vpack.c.b16 %v8786, %v8783
    %v9309 = vpack.c.b16 %v8787, %v8784
    %v9310 = vpack.c.b16 %v8788, %v8785
    %v9311 = vpack.c.b16 %v8792, %v8789
    %v9312 = vpack.c.b16 %v8793, %v8790
    %v9313 = vpack.c.b16 %v8794, %v8791
    %v9314 = vpack.c.b16 %v8798, %v8795
    %v9315 = vpack.c.b16 %v8799, %v8796
    %v9316 = vpack.c.b16 %v8800, %v8797
    %v9317 = vpack.c.b16 %v8804, %v8801
    %v9318 = vpack.c.b16 %v8805, %v8802
    %v9319 = vpack.c.b16 %v8806, %v8803
    %v9320 = vpack.c.b16 %v8810, %v8807
    %v9321 = vpack.c.b16 %v8811, %v8808
    %v9322 = vpack.c.b16 %v8812, %v8809
    %v9323 = vpack.c.b16 %v8816, %v8813
    %v9324 = vpack.c.b16 %v8817, %v8814
    %v9325 = vpack.c.b16 %v8818, %v8815
    %v9326 = vpack.c.b16 %v8822, %v8819
    %v9327 = vpack.c.b16 %v8823, %v8820
    %v9328 = vpack.c.b16 %v8824, %v8821
    %v9329 = vpack.c.b16 %v8828, %v8825
    %v9330 = vpack.c.b16 %v8829, %v8826
    %v9331 = vpack.c.b16 %v8830, %v8827
    %v9332 = vpack.c.b16 %v8834, %v8831
    %v9333 = vpack.c.b16 %v8835, %v8832
    %v9334 = vpack.c.b16 %v8836, %v8833
    %v9335 = vpack.c.b16 %v8840, %v8837
    %v9336 = vpack.c.b16 %v8841, %v8838
    %v9337 = vpack.c.b16 %v8842, %v8839
    %v9338 = vpack.c.b16 %v8846, %v8843
    %v9339 = vpack.c.b16 %v8847, %v8844
    %v9340 = vpack.c.b16 %v8848, %v8845
    %v9341 = vpack.c.b16 %v8852, %v8849
    %v9342 = vpack.c.b16 %v8853, %v8850
    %v9343 = vpack.c.b16 %v8854, %v8851
    %v9344 = vpack.c.b16 %v8858, %v8855
    %v9345 = vpack.c.b16 %v8859, %v8856
    %v9346 = vpack.c.b16 %v8860, %v8857
    %v9347 = vpack.c.b16 %v8864, %v8861
    %v9348 = vpack.c.b16 %v8865, %v8862
    %v9349 = vpack.c.b16 %v8866, %v8863
    %v9350 = vpack.c.b16 %v8870, %v8867
    %v9351 = vpack.c.b16 %v8871, %v8868
    %v9352 = vpack.c.b16 %v8872, %v8869
    %v9353 = vpack.c.b16 %v8876, %v8873
    %v9354 = vpack.c.b16 %v8877, %v8874
    %v9355 = vpack.c.b16 %v8878, %v8875
    %v9356 = vpack.c.b16 %v8882, %v8879
    %v9357 = vpack.c.b16 %v8883, %v8880
    %v9358 = vpack.c.b16 %v8884, %v8881
    %v9359 = vpack.c.b16 %v8888, %v8885
    %v9360 = vpack.c.b16 %v8889, %v8886
    %v9361 = vpack.c.b16 %v8890, %v8887
    %v9362 = vpack.c.b16 %v8894, %v8891
    %v9363 = vpack.c.b16 %v8895, %v8892
    %v9364 = vpack.c.b16 %v8896, %v8893
    %v9365 = vpack.c.b16 %v8900, %v8897
    %v9366 = vpack.c.b16 %v8901, %v8898
    %v9367 = vpack.c.b16 %v8902, %v8899
    %v9368 = vpack.c.b16 %v8906, %v8903
    %v9369 = vpack.c.b16 %v8907, %v8904
    %v9370 = vpack.c.b16 %v8908, %v8905
    %v9371 = vpack.c.b16 %v8912, %v8909
    %v9372 = vpack.c.b16 %v8913, %v8910
    %v9373 = vpack.c.b16 %v8914, %v8911
    %v9374 = vpack.c.b16 %v8918, %v8915
    %v9375 = vpack.c.b16 %v8919, %v8916
    %v9376 = vpack.c.b16 %v8920, %v8917
    %v9377 = vpack.c.b16 %v8924, %v8921
    %v9378 = vpack.c.b16 %v8925, %v8922
    %v9379 = vpack.c.b16 %v8926, %v8923
    %v9380 = vpack.c.b16 %v8930, %v8927
    %v9381 = vpack.c.b16 %v8931, %v8928
    %v9382 = vpack.c.b16 %v8932, %v8929
    %v9383 = vpack.c.b16 %v8936, %v8933
    %v9384 = vpack.c.b16 %v8937, %v8934
    %v9385 = vpack.c.b16 %v8938, %v8935
    %v9386 = vpack.c.b16 %v8942, %v8939
    %v9387 = vpack.c.b16 %v8943, %v8940
    %v9388 = vpack.c.b16 %v8944, %v8941
    %v9389 = vpack.c.b16 %v8948, %v8945
    %v9390 = vpack.c.b16 %v8949, %v8946
    %v9391 = vpack.c.b16 %v8950, %v8947
    %v9392 = vpack.c.b16 %v8954, %v8951
    %v9393 = vpack.c.b16 %v8955, %v8952
    %v9394 = vpack.c.b16 %v8956, %v8953
    %v9395 = vpack.c.b16 %v8960, %v8957
    %v9396 = vpack.c.b16 %v8961, %v8958
    %v9397 = vpack.c.b16 %v8962, %v8959
    %v9398 = vpack.c.b16 %v8966, %v8963
    %v9399 = vpack.c.b16 %v8967, %v8964
    %v9400 = vpack.c.b16 %v8968, %v8965
    %v9401 = vpack.c.b16 %v8972, %v8969
    %v9402 = vpack.c.b16 %v8973, %v8970
    %v9403 = vpack.c.b16 %v8974, %v8971
    %v9404 = vpack.c.b16 %v8978, %v8975
    %v9405 = vpack.c.b16 %v8979, %v8976
    %v9406 = vpack.c.b16 %v8980, %v8977
    %v9407 = vpack.c.b16 %v8984, %v8981
    %v9408 = vpack.c.b16 %v8985, %v8982
    %v9409 = vpack.c.b16 %v8986, %v8983
    %v9410 = vpack.c.b16 %v8990, %v8987
    %v9411 = vpack.c.b16 %v8991, %v8988
    %v9412 = vpack.c.b16 %v8992, %v8989
    %v9413 = vpack.c.b16 %v8996, %v8993
    %v9414 = vpack.c.b16 %v8997, %v8994
    %v9415 = vpack.c.b16 %v8998, %v8995
    %v9416 = vpack.c.b16 %v9002, %v8999
    %v9417 = vpack.c.b16 %v9003, %v9000
    %v9418 = vpack.c.b16 %v9004, %v9001
    %v9419 = vpack.c.b16 %v9008, %v9005
    %v9420 = vpack.c.b16 %v9009, %v9006
    %v9421 = vpack.c.b16 %v9010, %v9007
    %v9422 = vpack.c.b16 %v9014, %v9011
    %v9423 = vpack.c.b16 %v9015, %v9012
    %v9424 = vpack.c.b16 %v9016, %v9013
    %v9425 = vpack.c.b16 %v9020, %v9017
    %v9426 = vpack.c.b16 %v9021, %v9018
    %v9427 = vpack.c.b16 %v9022, %v9019
    %v9428 = vpack.c.b16 %v9026, %v9023
    %v9429 = vpack.c.b16 %v9027, %v9024
    %v9430 = vpack.c.b16 %v9028, %v9025
    %v9431 = vpack.c.b16 %v9032, %v9029
    %v9432 = vpack.c.b16 %v9033, %v9030
    %v9433 = vpack.c.b16 %v9034, %v9031
    %v9434 = vpack.c.b16 %v9038, %v9035
    %v9435 = vpack.c.b16 %v9039, %v9036
    %v9436 = vpack.c.b16 %v9040, %v9037
    %v9437 = vpack.c.b16 %v9044, %v9041
    %v9438 = vpack.c.b16 %v9045, %v9042
    %v9439 = vpack.c.b16 %v9046, %v9043
    %v9440 = vpack.c.b16 %v9050, %v9047
    %v9441 = vpack.c.b16 %v9051, %v9048
    %v9442 = vpack.c.b16 %v9052, %v9049
    %v9443 = vpack.c.b16 %v9056, %v9053
    %v9444 = vpack.c.b16 %v9057, %v9054
    %v9445 = vpack.c.b16 %v9058, %v9055
    %v9446 = vpack.c.b16 %v9062, %v9059
    %v9447 = vpack.c.b16 %v9063, %v9060
    %v9448 = vpack.c.b16 %v9064, %v9061
    %v9449 = vpack.c.b16 %v9068, %v9065
    %v9450 = vpack.c.b16 %v9069, %v9066
    %v9451 = vpack.c.b16 %v9070, %v9067
    %v9452 = vpack.c.b16 %v9074, %v9071
    %v9453 = vpack.c.b16 %v9075, %v9072
    %v9454 = vpack.c.b16 %v9076, %v9073
    %v9455 = vpack.c.b16 %v9080, %v9077
    %v9456 = vpack.c.b16 %v9081, %v9078
    %v9457 = vpack.c.b16 %v9082, %v9079
    %v9458 = vpack.c.b16 %v9086, %v9083
    %v9459 = vpack.c.b16 %v9087, %v9084
    %v9460 = vpack.c.b16 %v9088, %v9085
    %v9461 = vpack.c.b16 %v9092, %v9089
    %v9462 = vpack.c.b16 %v9093, %v9090
    %v9463 = vpack.c.b16 %v9094, %v9091
    %v9464 = vpack.c.b16 %v9098, %v9095
    %v9465 = vpack.c.b16 %v9099, %v9096
    %v9466 = vpack.c.b16 %v9100, %v9097
    %v9467 = vpack.c.b16 %v9104, %v9101
    %v9468 = vpack.c.b16 %v9105, %v9102
    %v9469 = vpack.c.b16 %v9106, %v9103
    %v9470 = vpack.c.b16 %v9110, %v9107
    %v9471 = vpack.c.b16 %v9111, %v9108
    %v9472 = vpack.c.b16 %v9112, %v9109
    %v9473 = vpack.c.b16 %v9116, %v9113
    %v9474 = vpack.c.b16 %v9117, %v9114
    %v9475 = vpack.c.b16 %v9118, %v9115
    %v9476 = vpack.c.b16 %v9122, %v9119
    %v9477 = vpack.c.b16 %v9123, %v9120
    %v9478 = vpack.c.b16 %v9124, %v9121
    %v9479 = vpack.c.b16 %v9128, %v9125
    %v9480 = vpack.c.b16 %v9129, %v9126
    %v9481 = vpack.c.b16 %v9130, %v9127
    %v9482 = vpack.c.b16 %v9134, %v9131
    %v9483 = vpack.c.b16 %v9135, %v9132
    %v9484 = vpack.c.b16 %v9136, %v9133
    %v9485 = vpack.c.b16 %v9140, %v9137
    %v9486 = vpack.c.b16 %v9141, %v9138
    %v9487 = vpack.c.b16 %v9142, %v9139
    %v9488 = vpack.c.b16 %v9146, %v9143
    %v9489 = vpack.c.b16 %v9147, %v9144
    %v9490 = vpack.c.b16 %v9148, %v9145
    %v9491 = vpack.c.b16 %v9152, %v9149
    %v9492 = vpack.c.b16 %v9153, %v9150
    %v9493 = vpack.c.b16 %v9154, %v9151
    %v9494 = vpack.c.b16 %v9158, %v9155
    %v9495 = vpack.c.b16 %v9159, %v9156
    %v9496 = vpack.c.b16 %v9160, %v9157
    %v9497 = vpack.c.b16 %v9164, %v9161
    %v9498 = vpack.c.b16 %v9165, %v9162
    %v9499 = vpack.c.b16 %v9166, %v9163
    %v9500 = vpack.c.b16 %v9170, %v9167
    %v9501 = vpack.c.b16 %v9171, %v9168
    %v9502 = vpack.c.b16 %v9172, %v9169
    %v9503 = vpack.c.b16 %v9176, %v9173
    %v9504 = vpack.c.b16 %v9177, %v9174
    %v9505 = vpack.c.b16 %v9178, %v9175
    %v9506 = vpack.c.b16 %v9182, %v9179
    %v9507 = vpack.c.b16 %v9183, %v9180
    %v9508 = vpack.c.b16 %v9184, %v9181
    %v9509 = vpack.c.b16 %v9188, %v9185
    %v9510 = vpack.c.b16 %v9189, %v9186
    %v9511 = vpack.c.b16 %v9190, %v9187
    %v9512 = vpack.c.b16 %v9194, %v9191
    %v9513 = vpack.c.b16 %v9195, %v9192
    %v9514 = vpack.c.b16 %v9196, %v9193
    %v9515 = vpack.c.b16 %v9200, %v9197
    %v9516 = vpack.c.b16 %v9201, %v9198
    %v9517 = vpack.c.b16 %v9202, %v9199
    %v9518 = vpack.c.b16 %v9206, %v9203
    %v9519 = vpack.c.b16 %v9207, %v9204
    %v9520 = vpack.c.b16 %v9208, %v9205
    %v9521 = vpack.c.b16 %v9212, %v9209
    %v9522 = vpack.c.b16 %v9213, %v9210
    %v9523 = vpack.c.b16 %v9214, %v9211
    %v9524 = vpack.c.b16 %v9218, %v9215
    %v9525 = vpack.c.b16 %v9219, %v9216
    %v9526 = vpack.c.b16 %v9220, %v9217
    %v9527 = vpack.c.b16 %v9224, %v9221
    %v9528 = vpack.c.b16 %v9225, %v9222
    %v9529 = vpack.c.b16 %v9226, %v9223
    %v9530 = vpack.c.b16 %v9230, %v9227
    %v9531 = vpack.c.b16 %v9231, %v9228
    %v9532 = vpack.c.b16 %v9232, %v9229
    %v9533 = vpack.c.b16 %v9236, %v9233
    %v9534 = vpack.c.b16 %v9237, %v9234
    %v9535 = vpack.c.b16 %v9238, %v9235
    %v9536 = vpack.c.b16 %v9242, %v9239
    %v9537 = vpack.c.b16 %v9243, %v9240
    %v9538 = vpack.c.b16 %v9244, %v9241
    %v9539 = vpack.c.b16 %v9248, %v9245
    %v9540 = vpack.c.b16 %v9249, %v9246
    %v9541 = vpack.c.b16 %v9250, %v9247
    %v9542 = vpack.c.b16 %v9254, %v9251
    %v9543 = vpack.c.b16 %v9255, %v9252
    %v9544 = vpack.c.b16 %v9256, %v9253
    %9833 = vmatprep.subr.bf16.mxu0 %v9258
    %9834 = vmatpush1.bf16.msra.mxu0 %v9257
    %9835 = vmatprep.subr.bf16.mxu0 %v9261
    %9836 = vmatpush1.bf16.msra.mxu0 %v9260
    %9837 = vmatprep.subr.bf16.mxu0 %v9264
    %9838 = vmatpush1.bf16.msra.mxu0 %v9263
    %9839 = vmatprep.subr.bf16.mxu0 %v9267
    %9840 = vmatpush1.bf16.msra.mxu0 %v9266
    %9841 = vmatprep.subr.bf16.mxu0 %v9270
    %9842 = vmatpush1.bf16.msra.mxu0 %v9269
    %9843 = vmatprep.subr.bf16.mxu0 %v9273
    %9844 = vmatpush1.bf16.msra.mxu0 %v9272
    %9845 = vmatprep.subr.bf16.mxu0 %v9276
    %9846 = vmatpush1.bf16.msra.mxu0 %v9275
    %9847 = vmatprep.subr.bf16.mxu0 %v9279
    %9848 = vmatpush1.bf16.msra.mxu0 %v9278
    %9849 = vmatprep.subr.bf16.mxu0 %v9282
    %9850 = vmatpush1.bf16.msra.mxu0 %v9281
    %9851 = vmatprep.subr.bf16.mxu0 %v9285
    %9852 = vmatpush1.bf16.msra.mxu0 %v9284
    %9853 = vmatprep.subr.bf16.mxu0 %v9288
    %9854 = vmatpush1.bf16.msra.mxu0 %v9287
    %9855 = vmatprep.subr.bf16.mxu0 %v9291
    %9856 = vmatpush1.bf16.msra.mxu0 %v9290
    %9857 = vmatprep.subr.bf16.mxu0 %v9294
    %9858 = vmatpush1.bf16.msra.mxu0 %v9293
    %9859 = vmatprep.subr.bf16.mxu0 %v9297
    %9860 = vmatpush1.bf16.msra.mxu0 %v9296
    %9861 = vmatprep.subr.bf16.mxu0 %v9300
    %9862 = vmatpush1.bf16.msra.mxu0 %v9299
    %9863 = vmatprep.subr.bf16.mxu0 %v9303
    %9864 = vmatpush1.bf16.msra.mxu0 %v9302
    %9865 = vmatprep.mubr.bf16.mxu0 %v7902
    %9866 = vmatmul.mubr.bf16.gmra.mrb[0].mxu0 %v7901
    %v9867 = vpop.f32.mrb[0].mxu0
    %v9868 = vadd.f32 0.0, %v9867
    %v9869 = vpop.f32.mrb[0].mxu0
    %v9870 = vadd.f32 0.0, %v9869
    %v9871 = vpop.f32.mrb[0].mxu0
    %v9872 = vadd.f32 0.0, %v9871
    %v9873 = vpop.f32.mrb[0].mxu0
    %v9874 = vadd.f32 0.0, %v9873
    %9875 = vdwg.mxu0
    %9876 = vmatprep.subr.bf16.mxu0 %v9306
    %9877 = vmatpush1.bf16.msra.mxu0 %v9305
    %9878 = vmatprep.subr.bf16.mxu0 %v9309
    %9879 = vmatpush1.bf16.msra.mxu0 %v9308
    %9880 = vmatprep.subr.bf16.mxu0 %v9312
    %9881 = vmatpush1.bf16.msra.mxu0 %v9311
    %9882 = vmatprep.subr.bf16.mxu0 %v9315
    %9883 = vmatpush1.bf16.msra.mxu0 %v9314
    %9884 = vmatprep.subr.bf16.mxu0 %v9318
    %9885 = vmatpush1.bf16.msra.mxu0 %v9317
    %9886 = vmatprep.subr.bf16.mxu0 %v9321
    %9887 = vmatpush1.bf16.msra.mxu0 %v9320
    %9888 = vmatprep.subr.bf16.mxu0 %v9324
    %9889 = vmatpush1.bf16.msra.mxu0 %v9323
    %9890 = vmatprep.subr.bf16.mxu0 %v9327
    %9891 = vmatpush1.bf16.msra.mxu0 %v9326
    %9892 = vmatprep.subr.bf16.mxu0 %v9330
    %9893 = vmatpush1.bf16.msra.mxu0 %v9329
    %9894 = vmatprep.subr.bf16.mxu0 %v9333
    %9895 = vmatpush1.bf16.msra.mxu0 %v9332
    %9896 = vmatprep.subr.bf16.mxu0 %v9336
    %9897 = vmatpush1.bf16.msra.mxu0 %v9335
    %9898 = vmatprep.subr.bf16.mxu0 %v9339
    %9899 = vmatpush1.bf16.msra.mxu0 %v9338
    %9900 = vmatprep.subr.bf16.mxu0 %v9342
    %9901 = vmatpush1.bf16.msra.mxu0 %v9341
    %9902 = vmatprep.subr.bf16.mxu0 %v9345
    %9903 = vmatpush1.bf16.msra.mxu0 %v9344
    %9904 = vmatprep.subr.bf16.mxu0 %v9348
    %9905 = vmatpush1.bf16.msra.mxu0 %v9347
    %9906 = vmatprep.subr.bf16.mxu0 %v9351
    %9907 = vmatpush1.bf16.msra.mxu0 %v9350
    %9908 = vmatprep.mubr.bf16.mxu0 %v7904
    %9909 = vmatmul.mubr.bf16.gmra.mrb[0].mxu0 %v7903
    %v9910 = vpop.f32.mrb[0].mxu0
    %v9911 = vadd.f32 %v9868, %v9910
    %v9912 = vpop.f32.mrb[0].mxu0
    %v9913 = vadd.f32 %v9870, %v9912
    %v9914 = vpop.f32.mrb[0].mxu0
    %v9915 = vadd.f32 %v9872, %v9914
    %v9916 = vpop.f32.mrb[0].mxu0
    %v9917 = vadd.f32 %v9874, %v9916
    %9918 = vdwg.mxu0
    %9919 = vmatprep.subr.bf16.mxu0 %v9354
    %9920 = vmatpush1.bf16.msra.mxu0 %v9353
    %9921 = vmatprep.subr.bf16.mxu0 %v9357
    %9922 = vmatpush1.bf16.msra.mxu0 %v9356
    %9923 = vmatprep.subr.bf16.mxu0 %v9360
    %9924 = vmatpush1.bf16.msra.mxu0 %v9359
    %9925 = vmatprep.subr.bf16.mxu0 %v9363
    %9926 = vmatpush1.bf16.msra.mxu0 %v9362
    %9927 = vmatprep.subr.bf16.mxu0 %v9366
    %9928 = vmatpush1.bf16.msra.mxu0 %v9365
    %9929 = vmatprep.subr.bf16.mxu0 %v9369
    %9930 = vmatpush1.bf16.msra.mxu0 %v9368
    %9931 = vmatprep.subr.bf16.mxu0 %v9372
    %9932 = vmatpush1.bf16.msra.mxu0 %v9371
    %9933 = vmatprep.subr.bf16.mxu0 %v9375
    %9934 = vmatpush1.bf16.msra.mxu0 %v9374
    %9935 = vmatprep.subr.bf16.mxu0 %v9378
    %9936 = vmatpush1.bf16.msra.mxu0 %v9377
    %9937 = vmatprep.subr.bf16.mxu0 %v9381
    %9938 = vmatpush1.bf16.msra.mxu0 %v9380
    %9939 = vmatprep.subr.bf16.mxu0 %v9384
    %9940 = vmatpush1.bf16.msra.mxu0 %v9383
    %9941 = vmatprep.subr.bf16.mxu0 %v9387
    %9942 = vmatpush1.bf16.msra.mxu0 %v9386
    %9943 = vmatprep.subr.bf16.mxu0 %v9390
    %9944 = vmatpush1.bf16.msra.mxu0 %v9389
    %9945 = vmatprep.subr.bf16.mxu0 %v9393
    %9946 = vmatpush1.bf16.msra.mxu0 %v9392
    %9947 = vmatprep.subr.bf16.mxu0 %v9396
    %9948 = vmatpush1.bf16.msra.mxu0 %v9395
    %9949 = vmatprep.subr.bf16.mxu0 %v9399
    %9950 = vmatpush1.bf16.msra.mxu0 %v9398
    %9951 = vmatprep.mubr.bf16.mxu0 %v7906
    %9952 = vmatmul.mubr.bf16.gmra.mrb[0].mxu0 %v7905
    %v9953 = vpop.f32.mrb[0].mxu0
    %v9954 = vadd.f32 %v9911, %v9953
    %v9955 = vpop.f32.mrb[0].mxu0
    %v9956 = vadd.f32 %v9913, %v9955
    %v9957 = vpop.f32.mrb[0].mxu0
    %v9958 = vadd.f32 %v9915, %v9957
    %v9959 = vpop.f32.mrb[0].mxu0
    %v9960 = vadd.f32 %v9917, %v9959
    %9961 = vdwg.mxu0
    %9962 = vmatprep.subr.bf16.mxu0 %v9402
    %9963 = vmatpush1.bf16.msra.mxu0 %v9401
    %9964 = vmatprep.subr.bf16.mxu0 %v9405
    %9965 = vmatpush1.bf16.msra.mxu0 %v9404
    %9966 = vmatprep.subr.bf16.mxu0 %v9408
    %9967 = vmatpush1.bf16.msra.mxu0 %v9407
    %9968 = vmatprep.subr.bf16.mxu0 %v9411
    %9969 = vmatpush1.bf16.msra.mxu0 %v9410
    %9970 = vmatprep.subr.bf16.mxu0 %v9414
    %9971 = vmatpush1.bf16.msra.mxu0 %v9413
    %9972 = vmatprep.subr.bf16.mxu0 %v9417
    %9973 = vmatpush1.bf16.msra.mxu0 %v9416
    %9974 = vmatprep.subr.bf16.mxu0 %v9420
    %9975 = vmatpush1.bf16.msra.mxu0 %v9419
    %9976 = vmatprep.subr.bf16.mxu0 %v9423
    %9977 = vmatpush1.bf16.msra.mxu0 %v9422
    %9978 = vmatprep.subr.bf16.mxu0 %v9426
    %9979 = vmatpush1.bf16.msra.mxu0 %v9425
    %9980 = vmatprep.subr.bf16.mxu0 %v9429
    %9981 = vmatpush1.bf16.msra.mxu0 %v9428
    %9982 = vmatprep.subr.bf16.mxu0 %v9432
    %9983 = vmatpush1.bf16.msra.mxu0 %v9431
    %9984 = vmatprep.subr.bf16.mxu0 %v9435
    %9985 = vmatpush1.bf16.msra.mxu0 %v9434
    %9986 = vmatprep.subr.bf16.mxu0 %v9438
    %9987 = vmatpush1.bf16.msra.mxu0 %v9437
    %9988 = vmatprep.subr.bf16.mxu0 %v9441
    %9989 = vmatpush1.bf16.msra.mxu0 %v9440
    %9990 = vmatprep.subr.bf16.mxu0 %v9444
    %9991 = vmatpush1.bf16.msra.mxu0 %v9443
    %9992 = vmatprep.subr.bf16.mxu0 %v9447
    %9993 = vmatpush1.bf16.msra.mxu0 %v9446
    %9994 = vmatprep.mubr.bf16.mxu0 %v7908
    %9995 = vmatmul.mubr.bf16.gmra.mrb[0].mxu0 %v7907
    %v9996 = vpop.f32.mrb[0].mxu0
    %v9997 = vadd.f32 %v9954, %v9996
    %v9998 = vpop.f32.mrb[0].mxu0
    %v9999 = vadd.f32 %v9956, %v9998
    %v10000 = vpop.f32.mrb[0].mxu0
    %v10001 = vadd.f32 %v9958, %v10000
    %v10002 = vpop.f32.mrb[0].mxu0
    %v10003 = vadd.f32 %v9960, %v10002
    %10004 = vdwg.mxu0
    %10005 = vmatprep.subr.bf16.mxu0 %v9450
    %10006 = vmatpush1.bf16.msra.mxu0 %v9449
    %10007 = vmatprep.subr.bf16.mxu0 %v9453
    %10008 = vmatpush1.bf16.msra.mxu0 %v9452
    %10009 = vmatprep.subr.bf16.mxu0 %v9456
    %10010 = vmatpush1.bf16.msra.mxu0 %v9455
    %10011 = vmatprep.subr.bf16.mxu0 %v9459
    %10012 = vmatpush1.bf16.msra.mxu0 %v9458
    %10013 = vmatprep.subr.bf16.mxu0 %v9462
    %10014 = vmatpush1.bf16.msra.mxu0 %v9461
    %10015 = vmatprep.subr.bf16.mxu0 %v9465
    %10016 = vmatpush1.bf16.msra.mxu0 %v9464
    %10017 = vmatprep.subr.bf16.mxu0 %v9468
    %10018 = vmatpush1.bf16.msra.mxu0 %v9467
    %10019 = vmatprep.subr.bf16.mxu0 %v9471
    %10020 = vmatpush1.bf16.msra.mxu0 %v9470
    %10021 = vmatprep.subr.bf16.mxu0 %v9474
    %10022 = vmatpush1.bf16.msra.mxu0 %v9473
    %10023 = vmatprep.subr.bf16.mxu0 %v9477
    %10024 = vmatpush1.bf16.msra.mxu0 %v9476
    %10025 = vmatprep.subr.bf16.mxu0 %v9480
    %10026 = vmatpush1.bf16.msra.mxu0 %v9479
    %10027 = vmatprep.subr.bf16.mxu0 %v9483
    %10028 = vmatpush1.bf16.msra.mxu0 %v9482
    %10029 = vmatprep.subr.bf16.mxu0 %v9486
    %10030 = vmatpush1.bf16.msra.mxu0 %v9485
    %10031 = vmatprep.subr.bf16.mxu0 %v9489
    %10032 = vmatpush1.bf16.msra.mxu0 %v9488
    %10033 = vmatprep.subr.bf16.mxu0 %v9492
    %10034 = vmatpush1.bf16.msra.mxu0 %v9491
    %10035 = vmatprep.subr.bf16.mxu0 %v9495
    %10036 = vmatpush1.bf16.msra.mxu0 %v9494
    %10037 = vmatprep.mubr.bf16.mxu0 %v7910
    %10038 = vmatmul.mubr.bf16.gmra.mrb[0].mxu0 %v7909
    %v10039 = vpop.f32.mrb[0].mxu0
    %v10040 = vadd.f32 %v9997, %v10039
    %v10041 = vpop.f32.mrb[0].mxu0
    %v10042 = vadd.f32 %v9999, %v10041
    %v10043 = vpop.f32.mrb[0].mxu0
    %v10044 = vadd.f32 %v10001, %v10043
    %v10045 = vpop.f32.mrb[0].mxu0
    %v10046 = vadd.f32 %v10003, %v10045
    %10047 = vdwg.mxu0
    %10048 = vmatprep.subr.bf16.mxu0 %v9498
    %10049 = vmatpush1.bf16.msra.mxu0 %v9497
    %10050 = vmatprep.subr.bf16.mxu0 %v9501
    %10051 = vmatpush1.bf16.msra.mxu0 %v9500
    %10052 = vmatprep.subr.bf16.mxu0 %v9504
    %10053 = vmatpush1.bf16.msra.mxu0 %v9503
    %10054 = vmatprep.subr.bf16.mxu0 %v9507
    %10055 = vmatpush1.bf16.msra.mxu0 %v9506
    %10056 = vmatprep.subr.bf16.mxu0 %v9510
    %10057 = vmatpush1.bf16.msra.mxu0 %v9509
    %10058 = vmatprep.subr.bf16.mxu0 %v9513
    %10059 = vmatpush1.bf16.msra.mxu0 %v9512
    %10060 = vmatprep.subr.bf16.mxu0 %v9516
    %10061 = vmatpush1.bf16.msra.mxu0 %v9515
    %10062 = vmatprep.subr.bf16.mxu0 %v9519
    %10063 = vmatpush1.bf16.msra.mxu0 %v9518
    %10064 = vmatprep.subr.bf16.mxu0 %v9522
    %10065 = vmatpush1.bf16.msra.mxu0 %v9521
    %10066 = vmatprep.subr.bf16.mxu0 %v9525
    %10067 = vmatpush1.bf16.msra.mxu0 %v9524
    %10068 = vmatprep.subr.bf16.mxu0 %v9528
    %10069 = vmatpush1.bf16.msra.mxu0 %v9527
    %10070 = vmatprep.subr.bf16.mxu0 %v9531
    %10071 = vmatpush1.bf16.msra.mxu0 %v9530
    %10072 = vmatprep.subr.bf16.mxu0 %v9534
    %10073 = vmatpush1.bf16.msra.mxu0 %v9533
    %10074 = vmatprep.subr.bf16.mxu0 %v9537
    %10075 = vmatpush1.bf16.msra.mxu0 %v9536
    %10076 = vmatprep.subr.bf16.mxu0 %v9540
    %10077 = vmatpush1.bf16.msra.mxu0 %v9539
    %10078 = vmatprep.subr.bf16.mxu0 %v9543
    %10079 = vmatpush1.bf16.msra.mxu0 %v9542
    %10080 = vmatprep.mubr.bf16.mxu0 %v7912
    %10081 = vmatmul.mubr.bf16.gmra.mrb[0].mxu0 %v7911
    %v10082 = vpop.f32.mrb[0].mxu0
    %v10083 = vadd.f32 %v10040, %v10082
    %v10084 = vpop.f32.mrb[0].mxu0
    %v10085 = vadd.f32 %v10042, %v10084
    %v10086 = vpop.f32.mrb[0].mxu0
    %v10087 = vadd.f32 %v10044, %v10086
    %v10088 = vpop.f32.mrb[0].mxu0
    %v10089 = vadd.f32 %v10046, %v10088
    %10090 = vdwg.mxu0
    %10091 = vmatprep.subr.bf16.mxu0 0
    %10092 = vmatpush1.bf16.msra.mxu0 %v9259
    %10093 = vmatprep.subr.bf16.mxu0 0
    %10094 = vmatpush1.bf16.msra.mxu0 %v9262
    %10095 = vmatprep.subr.bf16.mxu0 0
    %10096 = vmatpush1.bf16.msra.mxu0 %v9265
    %10097 = vmatprep.subr.bf16.mxu0 0
    %10098 = vmatpush1.bf16.msra.mxu0 %v9268
    %10099 = vmatprep.subr.bf16.mxu0 0
    %10100 = vmatpush1.bf16.msra.mxu0 %v9271
    %10101 = vmatprep.subr.bf16.mxu0 0
    %10102 = vmatpush1.bf16.msra.mxu0 %v9274
    %10103 = vmatprep.subr.bf16.mxu0 0
    %10104 = vmatpush1.bf16.msra.mxu0 %v9277
    %10105 = vmatprep.subr.bf16.mxu0 0
    %10106 = vmatpush1.bf16.msra.mxu0 %v9280
    %10107 = vmatprep.subr.bf16.mxu0 0
    %10108 = vmatpush1.bf16.msra.mxu0 %v9283
    %10109 = vmatprep.subr.bf16.mxu0 0
    %10110 = vmatpush1.bf16.msra.mxu0 %v9286
    %10111 = vmatprep.subr.bf16.mxu0 0
    %10112 = vmatpush1.bf16.msra.mxu0 %v9289
    %10113 = vmatprep.subr.bf16.mxu0 0
    %10114 = vmatpush1.bf16.msra.mxu0 %v9292
    %10115 = vmatprep.subr.bf16.mxu0 0
    %10116 = vmatpush1.bf16.msra.mxu0 %v9295
    %10117 = vmatprep.subr.bf16.mxu0 0
    %10118 = vmatpush1.bf16.msra.mxu0 %v9298
    %10119 = vmatprep.subr.bf16.mxu0 0
    %10120 = vmatpush1.bf16.msra.mxu0 %v9301
    %10121 = vmatprep.subr.bf16.mxu0 0
    %10122 = vmatpush1.bf16.msra.mxu0 %v9304
    %10123 = vmatprep.mubr.bf16.mxu0 %v7902
    %10124 = vmatmul.mubr.bf16.gmra.mrb[0].mxu0 %v7901
    %v10125 = vpop.f32.mrb[0].mxu0
    %v10126 = vadd.f32 0.0, %v10125
    %v10127 = vpop.f32.mrb[0].mxu0
    %v10128 = vpop.f32.mrb[0].mxu0
    %v10129 = vadd.f32 0.0, %v10128
    %v10130 = vpop.f32.mrb[0].mxu0
    %10131 = vdwg.mxu0
    %10132 = vmatprep.subr.bf16.mxu0 0
    %10133 = vmatpush1.bf16.msra.mxu0 %v9307
    %10134 = vmatprep.subr.bf16.mxu0 0
    %10135 = vmatpush1.bf16.msra.mxu0 %v9310
    %10136 = vmatprep.subr.bf16.mxu0 0
    %10137 = vmatpush1.bf16.msra.mxu0 %v9313
    %10138 = vmatprep.subr.bf16.mxu0 0
    %10139 = vmatpush1.bf16.msra.mxu0 %v9316
    %10140 = vmatprep.subr.bf16.mxu0 0
    %10141 = vmatpush1.bf16.msra.mxu0 %v9319
    %10142 = vmatprep.subr.bf16.mxu0 0
    %10143 = vmatpush1.bf16.msra.mxu0 %v9322
    %10144 = vmatprep.subr.bf16.mxu0 0
    %10145 = vmatpush1.bf16.msra.mxu0 %v9325
    %10146 = vmatprep.subr.bf16.mxu0 0
    %10147 = vmatpush1.bf16.msra.mxu0 %v9328
    %10148 = vmatprep.subr.bf16.mxu0 0
    %10149 = vmatpush1.bf16.msra.mxu0 %v9331
    %10150 = vmatprep.subr.bf16.mxu0 0
    %10151 = vmatpush1.bf16.msra.mxu0 %v9334
    %10152 = vmatprep.subr.bf16.mxu0 0
    %10153 = vmatpush1.bf16.msra.mxu0 %v9337
    %10154 = vmatprep.subr.bf16.mxu0 0
    %10155 = vmatpush1.bf16.msra.mxu0 %v9340
    %10156 = vmatprep.subr.bf16.mxu0 0
    %10157 = vmatpush1.bf16.msra.mxu0 %v9343
    %10158 = vmatprep.subr.bf16.mxu0 0
    %10159 = vmatpush1.bf16.msra.mxu0 %v9346
    %10160 = vmatprep.subr.bf16.mxu0 0
    %10161 = vmatpush1.bf16.msra.mxu0 %v9349
    %10162 = vmatprep.subr.bf16.mxu0 0
    %10163 = vmatpush1.bf16.msra.mxu0 %v9352
    %10164 = vmatprep.mubr.bf16.mxu0 %v7904
    %10165 = vmatmul.mubr.bf16.gmra.mrb[0].mxu0 %v7903
    %v10166 = vpop.f32.mrb[0].mxu0
    %v10167 = vadd.f32 %v10126, %v10166
    %v10168 = vpop.f32.mrb[0].mxu0
    %v10169 = vpop.f32.mrb[0].mxu0
    %v10170 = vadd.f32 %v10129, %v10169
    %v10171 = vpop.f32.mrb[0].mxu0
    %10172 = vdwg.mxu0
    %10173 = vmatprep.subr.bf16.mxu0 0
    %10174 = vmatpush1.bf16.msra.mxu0 %v9355
    %10175 = vmatprep.subr.bf16.mxu0 0
    %10176 = vmatpush1.bf16.msra.mxu0 %v9358
    %10177 = vmatprep.subr.bf16.mxu0 0
    %10178 = vmatpush1.bf16.msra.mxu0 %v9361
    %10179 = vmatprep.subr.bf16.mxu0 0
    %10180 = vmatpush1.bf16.msra.mxu0 %v9364
    %10181 = vmatprep.subr.bf16.mxu0 0
    %10182 = vmatpush1.bf16.msra.mxu0 %v9367
    %10183 = vmatprep.subr.bf16.mxu0 0
    %10184 = vmatpush1.bf16.msra.mxu0 %v9370
    %10185 = vmatprep.subr.bf16.mxu0 0
    %10186 = vmatpush1.bf16.msra.mxu0 %v9373
    %10187 = vmatprep.subr.bf16.mxu0 0
    %10188 = vmatpush1.bf16.msra.mxu0 %v9376
    %10189 = vmatprep.subr.bf16.mxu0 0
    %10190 = vmatpush1.bf16.msra.mxu0 %v9379
    %10191 = vmatprep.subr.bf16.mxu0 0
    %10192 = vmatpush1.bf16.msra.mxu0 %v9382
    %10193 = vmatprep.subr.bf16.mxu0 0
    %10194 = vmatpush1.bf16.msra.mxu0 %v9385
    %10195 = vmatprep.subr.bf16.mxu0 0
    %10196 = vmatpush1.bf16.msra.mxu0 %v9388
    %10197 = vmatprep.subr.bf16.mxu0 0
    %10198 = vmatpush1.bf16.msra.mxu0 %v9391
    %10199 = vmatprep.subr.bf16.mxu0 0
    %10200 = vmatpush1.bf16.msra.mxu0 %v9394
    %10201 = vmatprep.subr.bf16.mxu0 0
    %10202 = vmatpush1.bf16.msra.mxu0 %v9397
    %10203 = vmatprep.subr.bf16.mxu0 0
    %10204 = vmatpush1.bf16.msra.mxu0 %v9400
    %10205 = vmatprep.mubr.bf16.mxu0 %v7906
    %10206 = vmatmul.mubr.bf16.gmra.mrb[0].mxu0 %v7905
    %v10207 = vpop.f32.mrb[0].mxu0
    %v10208 = vadd.f32 %v10167, %v10207
    %v10209 = vpop.f32.mrb[0].mxu0
    %v10210 = vpop.f32.mrb[0].mxu0
    %v10211 = vadd.f32 %v10170, %v10210
    %v10212 = vpop.f32.mrb[0].mxu0
    %10213 = vdwg.mxu0
    %10214 = vmatprep.subr.bf16.mxu0 0
    %10215 = vmatpush1.bf16.msra.mxu0 %v9403
    %10216 = vmatprep.subr.bf16.mxu0 0
    %10217 = vmatpush1.bf16.msra.mxu0 %v9406
    %10218 = vmatprep.subr.bf16.mxu0 0
    %10219 = vmatpush1.bf16.msra.mxu0 %v9409
    %10220 = vmatprep.subr.bf16.mxu0 0
    %10221 = vmatpush1.bf16.msra.mxu0 %v9412
    %10222 = vmatprep.subr.bf16.mxu0 0
    %10223 = vmatpush1.bf16.msra.mxu0 %v9415
    %10224 = vmatprep.subr.bf16.mxu0 0
    %10225 = vmatpush1.bf16.msra.mxu0 %v9418
    %10226 = vmatprep.subr.bf16.mxu0 0
    %10227 = vmatpush1.bf16.msra.mxu0 %v9421
    %10228 = vmatprep.subr.bf16.mxu0 0
    %10229 = vmatpush1.bf16.msra.mxu0 %v9424
    %10230 = vmatprep.subr.bf16.mxu0 0
    %10231 = vmatpush1.bf16.msra.mxu0 %v9427
    %10232 = vmatprep.subr.bf16.mxu0 0
    %10233 = vmatpush1.bf16.msra.mxu0 %v9430
    %10234 = vmatprep.subr.bf16.mxu0 0
    %10235 = vmatpush1.bf16.msra.mxu0 %v9433
    %10236 = vmatprep.subr.bf16.mxu0 0
    %10237 = vmatpush1.bf16.msra.mxu0 %v9436
    %10238 = vmatprep.subr.bf16.mxu0 0
    %10239 = vmatpush1.bf16.msra.mxu0 %v9439
    %10240 = vmatprep.subr.bf16.mxu0 0
    %10241 = vmatpush1.bf16.msra.mxu0 %v9442
    %10242 = vmatprep.subr.bf16.mxu0 0
    %10243 = vmatpush1.bf16.msra.mxu0 %v9445
    %10244 = vmatprep.subr.bf16.mxu0 0
    %10245 = vmatpush1.bf16.msra.mxu0 %v9448
    %10246 = vmatprep.mubr.bf16.mxu0 %v7908
    %10247 = vmatmul.mubr.bf16.gmra.mrb[0].mxu0 %v7907
    %v10248 = vpop.f32.mrb[0].mxu0
    %v10249 = vadd.f32 %v10208, %v10248
    %v10250 = vpop.f32.mrb[0].mxu0
    %v10251 = vpop.f32.mrb[0].mxu0
    %v10252 = vadd.f32 %v10211, %v10251
    %v10253 = vpop.f32.mrb[0].mxu0
    %10254 = vdwg.mxu0
    %10255 = vmatprep.subr.bf16.mxu0 0
    %10256 = vmatpush1.bf16.msra.mxu0 %v9451
    %10257 = vmatprep.subr.bf16.mxu0 0
    %10258 = vmatpush1.bf16.msra.mxu0 %v9454
    %10259 = vmatprep.subr.bf16.mxu0 0
    %10260 = vmatpush1.bf16.msra.mxu0 %v9457
    %10261 = vmatprep.subr.bf16.mxu0 0
    %10262 = vmatpush1.bf16.msra.mxu0 %v9460
    %10263 = vmatprep.subr.bf16.mxu0 0
    %10264 = vmatpush1.bf16.msra.mxu0 %v9463
    %10265 = vmatprep.subr.bf16.mxu0 0
    %10266 = vmatpush1.bf16.msra.mxu0 %v9466
    %10267 = vmatprep.subr.bf16.mxu0 0
    %10268 = vmatpush1.bf16.msra.mxu0 %v9469
    %10269 = vmatprep.subr.bf16.mxu0 0
    %10270 = vmatpush1.bf16.msra.mxu0 %v9472
    %10271 = vmatprep.subr.bf16.mxu0 0
    %10272 = vmatpush1.bf16.msra.mxu0 %v9475
    %10273 = vmatprep.subr.bf16.mxu0 0
    %10274 = vmatpush1.bf16.msra.mxu0 %v9478
    %10275 = vmatprep.subr.bf16.mxu0 0
    %10276 = vmatpush1.bf16.msra.mxu0 %v9481
    %10277 = vmatprep.subr.bf16.mxu0 0
    %10278 = vmatpush1.bf16.msra.mxu0 %v9484
    %10279 = vmatprep.subr.bf16.mxu0 0
    %10280 = vmatpush1.bf16.msra.mxu0 %v9487
    %10281 = vmatprep.subr.bf16.mxu0 0
    %10282 = vmatpush1.bf16.msra.mxu0 %v9490
    %10283 = vmatprep.subr.bf16.mxu0 0
    %10284 = vmatpush1.bf16.msra.mxu0 %v9493
    %10285 = vmatprep.subr.bf16.mxu0 0
    %10286 = vmatpush1.bf16.msra.mxu0 %v9496
    %10287 = vmatprep.mubr.bf16.mxu0 %v7910
    %10288 = vmatmul.mubr.bf16.gmra.mrb[0].mxu0 %v7909
    %v10289 = vpop.f32.mrb[0].mxu0
    %v10290 = vadd.f32 %v10249, %v10289
    %v10291 = vpop.f32.mrb[0].mxu0
    %v10292 = vpop.f32.mrb[0].mxu0
    %v10293 = vadd.f32 %v10252, %v10292
    %v10294 = vpop.f32.mrb[0].mxu0
    %10295 = vdwg.mxu0
    %10296 = vmatprep.subr.bf16.mxu0 0
    %10297 = vmatpush1.bf16.msra.mxu0 %v9499
    %10298 = vmatprep.subr.bf16.mxu0 0
    %10299 = vmatpush1.bf16.msra.mxu0 %v9502
    %10300 = vmatprep.subr.bf16.mxu0 0
    %10301 = vmatpush1.bf16.msra.mxu0 %v9505
    %10302 = vmatprep.subr.bf16.mxu0 0
    %10303 = vmatpush1.bf16.msra.mxu0 %v9508
    %10304 = vmatprep.subr.bf16.mxu0 0
    %10305 = vmatpush1.bf16.msra.mxu0 %v9511
    %10306 = vmatprep.subr.bf16.mxu0 0
    %10307 = vmatpush1.bf16.msra.mxu0 %v9514
    %10308 = vmatprep.subr.bf16.mxu0 0
    %10309 = vmatpush1.bf16.msra.mxu0 %v9517
    %10310 = vmatprep.subr.bf16.mxu0 0
    %10311 = vmatpush1.bf16.msra.mxu0 %v9520
    %10312 = vmatprep.subr.bf16.mxu0 0
    %10313 = vmatpush1.bf16.msra.mxu0 %v9523
    %10314 = vmatprep.subr.bf16.mxu0 0
    %10315 = vmatpush1.bf16.msra.mxu0 %v9526
    %10316 = vmatprep.subr.bf16.mxu0 0
    %10317 = vmatpush1.bf16.msra.mxu0 %v9529
    %10318 = vmatprep.subr.bf16.mxu0 0
    %10319 = vmatpush1.bf16.msra.mxu0 %v9532
    %10320 = vmatprep.subr.bf16.mxu0 0
    %10321 = vmatpush1.bf16.msra.mxu0 %v9535
    %10322 = vmatprep.subr.bf16.mxu0 0
    %10323 = vmatpush1.bf16.msra.mxu0 %v9538
    %10324 = vmatprep.subr.bf16.mxu0 0
    %10325 = vmatpush1.bf16.msra.mxu0 %v9541
    %10326 = vmatprep.subr.bf16.mxu0 0
    %10327 = vmatpush1.bf16.msra.mxu0 %v9544
    %10328 = vmatprep.mubr.bf16.mxu0 %v7912
    %10329 = vmatmul.mubr.bf16.gmra.mrb[0].mxu0 %v7911
    %v10330 = vpop.f32.mrb[0].mxu0
    %v10331 = vadd.f32 %v10290, %v10330
    %v10332 = vpop.f32.mrb[0].mxu0
    %v10333 = vpop.f32.mrb[0].mxu0
    %v10334 = vadd.f32 %v10293, %v10333
    %v10335 = vpop.f32.mrb[0].mxu0
    %10336 = vdwg.mxu0
    %v10337 = vadd.f32 %v5375, %v10083
    %v10338 = vadd.f32 %v5376, %v10085
    %v10339 = vadd.f32 %v5377, %v10331
    %v10340 = vadd.f32 %v5378, %v10087
    %v10341 = vadd.f32 %v5379, %v10089
    %v10342 = vadd.f32 %v5380, %v10334
    %v10343 = vld [vmem:[%s8] sm:$0x7]
    %v10345 = vlaneseq
    %v10346 = vshrl.u32 %v10345, 7
    %v10347 = vsub.s32 0, %v10346
    %v10348 = vrot.slane %v10343, %v10347
    %v10349 = vlaneseq
    %v10350 = vshrl.u32 %v10349, 7
    %v10351 = vsub.s32 1, %v10350
    %v10352 = vrot.slane %v10343, %v10351
    %v10353 = vlaneseq
    %v10354 = vshrl.u32 %v10353, 7
    %v10355 = vsub.s32 2, %v10354
    %v10356 = vrot.slane %v10343, %v10355
    %v10360 = vadd.f32 %v10337, %v10348
    %v10361 = vadd.f32 %v10338, %v10352
    %v10362 = vadd.f32 %v10339, %v10356
    %v10363 = vadd.f32 %v10340, %v10348
    %v10364 = vadd.f32 %v10341, %v10352
    %v10365 = vadd.f32 %v10342, %v10356
    %v10366 = vld [vmem:[%s11] sm:$0x7]
    %v10367 = vld [vmem:[%s12] sm:$0x7]
    %v10368 = vadd.f32 %v10360, %v10361
    %v10369 = vadd.f32 %v10368, %v10362
    %10370 = vadd.xlane.f32.xlu0 %v10369
    %v10371 = vpop.xlane.xlu0 %10370
    %v10372 = vadd.f32 %v10363, %v10364
    %v10373 = vadd.f32 %v10372, %v10365
    %10374 = vadd.xlane.f32.xlu0 %v10373
    %v10375 = vpop.xlane.xlu0 %10374
    %v10376 = vmul.f32 %v10371, %v5391
    %v10377 = vmul.f32 %v10375, %v5391
    %v10378 = vsub.f32 %v10360, %v10376
    %v10379 = vsub.f32 %v10361, %v10376
    %v10380 = vsub.f32 %v10362, %v10376
    %v10381 = vsub.f32 %v10363, %v10377
    %v10382 = vsub.f32 %v10364, %v10377
    %v10383 = vsub.f32 %v10365, %v10377
    %v10384 = vmul.f32 %v10378, %v10378
    %v10385 = vmul.f32 %v10379, %v10379
    %v10386 = vmul.f32 %v10380, %v10380
    %v10387 = vmul.f32 %v10381, %v10381
    %v10388 = vmul.f32 %v10382, %v10382
    %v10389 = vmul.f32 %v10383, %v10383
    %v10390 = vadd.f32 %v10384, %v10385
    %v10391 = vadd.f32 %v10390, %v10386
    %10392 = vadd.xlane.f32.xlu0 %v10391
    %v10393 = vpop.xlane.xlu0 %10392
    %v10394 = vadd.f32 %v10387, %v10388
    %v10395 = vadd.f32 %v10394, %v10389
    %10396 = vadd.xlane.f32.xlu0 %v10395
    %v10397 = vpop.xlane.xlu0 %10396
    %v10398 = vmul.f32 %v10393, %v5391
    %v10399 = vmul.f32 %v10397, %v5391
    %v10400 = vadd.f32 %v10398, 1e-05
    %v10401 = vadd.f32 %v10399, 1e-05
    %v10402 = vrsqrt.pop %v10400
    %v10403 = vrsqrt.pop %v10401
    %v10404 = vmul.f32 %v10378, %v10402
    %v10405 = vmul.f32 %v10379, %v10402
    %v10406 = vmul.f32 %v10380, %v10402
    %v10407 = vmul.f32 %v10381, %v10403
    %v10408 = vmul.f32 %v10382, %v10403
    %v10409 = vmul.f32 %v10383, %v10403
    %v10411 = vlaneseq
    %v10412 = vshrl.u32 %v10411, 7
    %v10413 = vsub.s32 0, %v10412
    %v10414 = vrot.slane %v10366, %v10413
    %v10415 = vlaneseq
    %v10416 = vshrl.u32 %v10415, 7
    %v10417 = vsub.s32 1, %v10416
    %v10418 = vrot.slane %v10366, %v10417
    %v10419 = vlaneseq
    %v10420 = vshrl.u32 %v10419, 7
    %v10421 = vsub.s32 2, %v10420
    %v10422 = vrot.slane %v10366, %v10421
    %v10426 = vmul.f32 %v10404, %v10414
    %v10427 = vmul.f32 %v10405, %v10418
    %v10428 = vmul.f32 %v10406, %v10422
    %v10429 = vmul.f32 %v10407, %v10414
    %v10430 = vmul.f32 %v10408, %v10418
    %v10431 = vmul.f32 %v10409, %v10422
    %v10433 = vlaneseq
    %v10434 = vshrl.u32 %v10433, 7
    %v10435 = vsub.s32 0, %v10434
    %v10436 = vrot.slane %v10367, %v10435
    %v10437 = vlaneseq
    %v10438 = vshrl.u32 %v10437, 7
    %v10439 = vsub.s32 1, %v10438
    %v10440 = vrot.slane %v10367, %v10439
    %v10441 = vlaneseq
    %v10442 = vshrl.u32 %v10441, 7
    %v10443 = vsub.s32 2, %v10442
    %v10444 = vrot.slane %v10367, %v10443
    %v10448 = vadd.f32 %v10426, %v10436
    %v10449 = vadd.f32 %v10427, %v10440
    %v10450 = vadd.f32 %v10428, %v10444
    %v10451 = vadd.f32 %v10429, %v10436
    %v10452 = vadd.f32 %v10430, %v10440
    %v10453 = vadd.f32 %v10431, %v10444
    %10454 = vst [vmem:[#allocation11] sm:$0xff] %v10448
    %10455 = vst [vmem:[#allocation11 + $0x8] sm:$0xff] %v10449
    %10456 = vst [vmem:[#allocation11 + $0x10] sm:$0xff] %v10450
    %10457 = vst [vmem:[#allocation11 + $0x18] sm:$0xff] %v10451
    %10458 = vst [vmem:[#allocation11 + $0x20] sm:$0xff] %v10452
    %10459 = vst [vmem:[#allocation11 + $0x28] sm:$0xff] %v10453
    // Predicated region
    $region74: #{block_forward.1} parent=1 // pred_check
      _
    $region75: #{block_forward.1} parent=1 // pred_check_branch
      %10461 = sbr.rel (0) target = $region77
    $region76: #{block_forward.1} parent=1 // pred_region
      %s10463 = ssub.s32 768, 768
      %10464 = vsyncadd [#allocation4], %s10463
      %s10465 = sshll.u32 [#allocation11], 4
      %s10466 = int_to_ptr.vmem [resolvable:$true] %s10465
      %10471 = dma.vmem_to_hbm [thread:$0]  %s10466, 768, %s13, [#allocation4], 384, 384, 24
    $region77: #{block_forward.1} parent=1 // pred_fallthru
      _
    // Predicated region
    $region78: #{block_forward.1} parent=1 // pred_check
      _
    $region79: #{block_forward.1} parent=1 // pred_check_branch
      %10473 = sbr.rel (0) target = $region81
    $region80: #{block_forward.1} parent=1 // pred_region
      %10474 = dma.done [#allocation4], 768
    $region81: #{block_forward.1} parent=1 // pred_fallthru
      _
    %10475 = vsyncpa [#allocation3], 1
    %10476 = vsyncpa [#allocation6], 1
    %10477 = vsyncpa [#allocation9], 1
    %10478 = vsyncpa [#allocation4], 1

</llo_original>
